<compile_context>
chip_gen: v6e
topology: v6e:2x2x1
jax: 0.10.0
libtpu: 0.0.40
codegen_flags: <defaults>
</compile_context>

<pallas_src>
import jax
import jax.numpy as jnp
import numpy as np
from jax import lax
from jax.experimental import pallas as pl
from jax.experimental.pallas import tpu as pltpu


def _convgru_kernel(h_ref, hxp_ref, c_ref, wf_ref, wqh_ref, bf_ref,
                    out_ref, p1_scr, rhp_scr, pq_scr):
    # h_ref   : (1, HW, Chid)        f32   hidden state (flattened spatial)
    # hxp_ref : (1, H+2, W+2, Cpad)  bf16  zero-padded [h | x | ch-pad] slab
    # c_ref   : (1, HW, Gpad)        bf16  fused context biases [c0|c1|c2|pad]
    # wf_ref  : (9*Cpad, Gpad)       bf16  im2col fused weights [wz|wr|wq_x|pad]
    # wqh_ref : (9*Chid, Chid)       bf16  im2col hidden-channel slice of wq
    # bf_ref  : (1, Gpad)            bf16  fused conv biases [bz|br|bq|pad]
    # out_ref : (1, HW, Chid)        f32   updated hidden state
    # p1_scr  : VMEM (HW, 9*Cpad)    bf16  phase-1 im2col patch slab
    # rhp_scr : VMEM (H+2, W+2, Chid) f32  zero-bordered r*h slab
    # pq_scr  : VMEM (HW, 9*Chid)    bf16  phase-2 im2col patch slab
    _, HW, Chid = h_ref.shape
    _, Hp, Wp, Cpad = hxp_ref.shape
    H, W = Hp - 2, Wp - 2

    hxp = hxp_ref[0]                                     # (H+2, W+2, Cpad) bf16

    # ---- Phase 1: fused [z | r | q_x] conv as a single deep-K im2col matmul.
    for t in range(9):
        ky, kx = divmod(t, 3)
        p1_scr[:, t * Cpad:(t + 1) * Cpad] = (
            hxp[ky:ky + H, kx:kx + W, :].reshape(HW, Cpad))
    acc = jnp.dot(p1_scr[...], wf_ref[...],
                  preferred_element_type=jnp.float32)    # (HW, Gpad) f32
    acc = acc + bf_ref[...].astype(jnp.float32) + c_ref[0].astype(jnp.float32)

    zr = jax.nn.sigmoid(acc[:, :2 * Chid])               # f32 gate math
    z = zr[:, :Chid]
    r = zr[:, Chid:]
    q_pre = acc[:, 2 * Chid:3 * Chid]                    # conv_q(x) + b_q + c2

    h = h_ref[0]                                         # (HW, Chid) f32

    # ---- Phase 2: conv_q over r*h (hidden-channel weights only).
    # Re-zero only the 1-pixel border; the interior is fully overwritten below.
    rhp_scr[0:1, :, :] = jnp.zeros((1, Wp, Chid), jnp.float32)
    rhp_scr[H + 1:H + 2, :, :] = jnp.zeros((1, Wp, Chid), jnp.float32)
    rhp_scr[:, 0:1, :] = jnp.zeros((Hp, 1, Chid), jnp.float32)
    rhp_scr[:, W + 1:W + 2, :] = jnp.zeros((Hp, 1, Chid), jnp.float32)
    rhp_scr[1:H + 1, 1:W + 1, :] = (r * h).reshape(H, W, Chid)

    rhp = rhp_scr[...]
    for t in range(9):
        ky, kx = divmod(t, 3)
        pq_scr[:, t * Chid:(t + 1) * Chid] = (
            rhp[ky:ky + H, kx:kx + W, :].reshape(HW, Chid).astype(jnp.bfloat16))
    qh = jnp.dot(pq_scr[...], wqh_ref[...],
                 preferred_element_type=jnp.float32)     # (HW, Chid) f32

    q = jnp.tanh(q_pre + qh)
    out_ref[0] = ((1.0 - z) * h + z * q).astype(out_ref.dtype)


@jax.jit
def conv_gru_pallas(h_nchw, c_nchw, x_nchw, wz, bz, wr, br, wq, bq):
    """ConvGRU forward. h/x: (N, C, H, W); c: (3, N, Chid, H, W); weights HWIO."""
    N, Chid, H, W = h_nchw.shape
    Cin = x_nchw.shape[1]
    Ctot = Chid + Cin
    HW = H * W
    Cpad = ((Ctot + 127) // 128) * 128       # 96 -> 128 (lane-aligned K per tap)
    G = 3 * Chid
    Gpad = ((G + 127) // 128) * 128          # 96 -> 128 (lane-aligned fused N)

    # NCHW -> NHWC, concat, spatial + channel pad, bf16 for the MXU operand.
    h_nhwc = jnp.transpose(h_nchw, (0, 2, 3, 1))                  # (N, H, W, Chid)
    x_nhwc = jnp.transpose(x_nchw, (0, 2, 3, 1))                  # (N, H, W, Cin)
    hx = jnp.concatenate([h_nhwc, x_nhwc], axis=-1)               # (N, H, W, Ctot)
    hx_pad = jnp.pad(hx, ((0, 0), (1, 1), (1, 1), (0, Cpad - Ctot))
                     ).astype(jnp.bfloat16)                       # (N, H+2, W+2, Cpad)

    # h for r*h and the blend stays f32 (elementwise path accuracy, tiny DMA).
    h_flat = h_nhwc.reshape(N, HW, Chid)

    # Context: (3, N, Chid, H, W) -> (N, HW, 3*Chid) gate-major, pad, bf16.
    c_f = jnp.transpose(c_nchw, (1, 3, 4, 0, 2)).reshape(N, HW, G)
    c_f = jnp.pad(c_f, ((0, 0), (0, 0), (0, Gpad - G))).astype(jnp.bfloat16)

    # Fused phase-1 weights: [wz | wr | wq_x] with wq's hidden-channel rows
    # zeroed (that contribution is computed on r*h in phase 2). Pad K and N to
    # 128 and flatten to im2col layout (row = tap*Cpad + channel).
    wq_xonly = jnp.concatenate(
        [jnp.zeros((3, 3, Chid, Chid), wq.dtype), wq[:, :, Chid:, :]], axis=2)
    w_fused = jnp.concatenate([wz, wr, wq_xonly], axis=-1)        # (3,3,Ctot,G)
    w_fused = jnp.pad(w_fused,
                      ((0, 0), (0, 0), (0, Cpad - Ctot), (0, Gpad - G)))
    wf2d = w_fused.reshape(9 * Cpad, Gpad).astype(jnp.bfloat16)   # (1152, 128)

    # Phase-2 (hidden-channel) slice of wq, flattened for im2col.
    wqh2 = wq[:, :, :Chid, :].reshape(9 * Chid, Chid).astype(jnp.bfloat16)

    b_fused = jnp.concatenate([bz, br, bq])
    b_fused = jnp.pad(b_fused, (0, Gpad - G)).reshape(1, Gpad).astype(jnp.bfloat16)

    out_flat = pl.pallas_call(
        _convgru_kernel,
        out_shape=jax.ShapeDtypeStruct((N, HW, Chid), h_nchw.dtype),
        grid=(N,),
        in_specs=[
            pl.BlockSpec((1, HW, Chid), lambda n: (n, 0, 0)),
            pl.BlockSpec((1, H + 2, W + 2, Cpad), lambda n: (n, 0, 0, 0)),
            pl.BlockSpec((1, HW, Gpad), lambda n: (n, 0, 0)),
            pl.BlockSpec((9 * Cpad, Gpad), lambda n: (0, 0)),
            pl.BlockSpec((9 * Chid, Chid), lambda n: (0, 0)),
            pl.BlockSpec((1, Gpad), lambda n: (0, 0)),
        ],
        out_specs=pl.BlockSpec((1, HW, Chid), lambda n: (n, 0, 0)),
        scratch_shapes=[
            pltpu.VMEM((HW, 9 * Cpad), jnp.bfloat16),       # phase-1 im2col slab
            pltpu.VMEM((H + 2, W + 2, Chid), jnp.float32),  # zero-bordered r*h
            pltpu.VMEM((HW, 9 * Chid), jnp.bfloat16),       # phase-2 im2col slab
        ],
        compiler_params=pltpu.CompilerParams(
            dimension_semantics=("parallel",),   # batch is independent -> megacore
            vmem_limit_bytes=32 * 1024 * 1024),
    )(h_flat, hx_pad, c_f, wf2d, wqh2, b_fused)

    # (N, HW, Chid) -> (N, Chid, H, W)
    return jnp.transpose(out_flat.reshape(N, H, W, Chid), (0, 3, 1, 2))


def conv_gru_reference(h_nchw, c_nchw, x_nchw, wz, bz, wr, br, wq, bq):
    """Pure-JAX reference matching the PyTorch forward semantics."""
    h = jnp.transpose(h_nchw, (0, 2, 3, 1))
    x = jnp.transpose(x_nchw, (0, 2, 3, 1))
    c = jnp.transpose(c_nchw, (1, 0, 3, 4, 2))  # (N, 3, H, W, Chid)

    def conv(inp, w, b):
        y = lax.conv_general_dilated(
            inp, w, window_strides=(1, 1), padding="SAME",
            dimension_numbers=("NHWC", "HWIO", "NHWC"))
        return y + b

    hx = jnp.concatenate([h, x], axis=-1)
    z = jax.nn.sigmoid(conv(hx, wz, bz) + c[:, 0])
    r = jax.nn.sigmoid(conv(hx, wr, br) + c[:, 1])
    q = jnp.tanh(conv(jnp.concatenate([r * h, x], axis=-1), wq, bq) + c[:, 2])
    h_new = (1.0 - z) * h + z * q
    return jnp.transpose(h_new, (0, 3, 1, 2))


if __name__ == "__main__":
    # Small shapes consistent with the module: hidden_dim=32, input_dim=64,
    # kernel_size=3, batch=2, spatial 16x16.
    N, Chid, Cin, H, W = 2, 32, 64, 16, 16
    Ctot = Chid + Cin

    key = jax.random.PRNGKey(0)
    keys = jax.random.split(key, 10)
    h = jax.random.normal(keys[0], (N, Chid, H, W), jnp.float32) * 0.5
    x = jax.random.normal(keys[1], (N, Cin, H, W), jnp.float32) * 0.5
    c = jax.random.normal(keys[2], (3, N, Chid, H, W), jnp.float32) * 0.5

    # Deterministic synthetic conv parameters (HWIO layout).
    wz = jax.random.normal(keys[3], (3, 3, Ctot, Chid), jnp.float32) * 0.05
    wr = jax.random.normal(keys[4], (3, 3, Ctot, Chid), jnp.float32) * 0.05
    wq = jax.random.normal(keys[5], (3, 3, Ctot, Chid), jnp.float32) * 0.05
    bz = jax.random.normal(keys[6], (Chid,), jnp.float32) * 0.05
    br = jax.random.normal(keys[7], (Chid,), jnp.float32) * 0.05
    bq = jax.random.normal(keys[8], (Chid,), jnp.float32) * 0.05

    out = conv_gru_pallas(h, c, x, wz, bz, wr, br, wq, bq)
    out = jax.block_until_ready(out)

    ref = conv_gru_reference(h, c, x, wz, bz, wr, br, wq, bq)
    ref = jax.block_until_ready(ref)

    # Tolerance reflects bf16 operand storage + single-pass bf16 MXU matmuls in
    # the kernel vs an f32 reference; a real indexing/weight bug would be O(0.1+).
    np.testing.assert_allclose(np.asarray(out), np.asarray(ref),
                               rtol=3e-2, atol=3e-2)
    print("KERNEL_OK")
</pallas_src>

<mosaic_0001>
module attributes {stable_mosaic.version = 11 : i64} {
  func.func @_convgru_kernel(%arg0: i32, %arg1: memref<1x256x32xf32, #tpu.memory_space<vmem>>, %arg2: memref<1x18x18x128xbf16, #tpu.memory_space<vmem>>, %arg3: memref<1x256x128xbf16, #tpu.memory_space<vmem>>, %arg4: memref<1152x128xbf16, #tpu.memory_space<vmem>>, %arg5: memref<288x32xbf16, #tpu.memory_space<vmem>>, %arg6: memref<1x128xbf16, #tpu.memory_space<vmem>>, %arg7: memref<1x256x32xf32, #tpu.memory_space<vmem>>, %arg8: memref<256x1152xbf16, #tpu.memory_space<vmem>>, %arg9: memref<18x18x32xf32, #tpu.memory_space<vmem>>, %arg10: memref<256x288xbf16, #tpu.memory_space<vmem>>) attributes {dimension_semantics = [#tpu.dimension_semantics<parallel>], iteration_bounds = array<i64: 2>, scalar_prefetch = 0 : i64, scratch_operands = 3 : i64, tpu.core_type = #tpu.core_type<tc>, window_params = [{transform_indices = @transform_0, window_bounds = array<i64: 1, 256, 32>}, {transform_indices = @transform_1, window_bounds = array<i64: 1, 18, 18, 128>}, {transform_indices = @transform_2, window_bounds = array<i64: 1, 256, 128>}, {pipeline_mode = #tpu.pipeline_mode<synchronous>, transform_indices = @transform_3, window_bounds = array<i64: 1152, 128>}, {pipeline_mode = #tpu.pipeline_mode<synchronous>, transform_indices = @transform_4, window_bounds = array<i64: 288, 32>}, {pipeline_mode = #tpu.pipeline_mode<synchronous>, transform_indices = @transform_5, window_bounds = array<i64: 1, 128>}, {transform_indices = @transform_6, window_bounds = array<i64: 1, 256, 32>}]} {
    %c0 = arith.constant 0 : index
    %c0_0 = arith.constant 0 : index
    %c0_1 = arith.constant 0 : index
    %c0_2 = arith.constant 0 : index
    %0 = vector.load %arg2[%c0, %c0_0, %c0_1, %c0_2] : memref<1x18x18x128xbf16, #tpu.memory_space<vmem>>, vector<1x18x18x128xbf16>
    %1 = vector.shape_cast %0 : vector<1x18x18x128xbf16> to vector<18x18x128xbf16>
    %2 = vector.extract_strided_slice %1 {offsets = [0, 0, 0], sizes = [16, 16, 128], strides = [1, 1, 1]} : vector<18x18x128xbf16> to vector<16x16x128xbf16>
    %3 = vector.shape_cast %2 : vector<16x16x128xbf16> to vector<256x128xbf16>
    %c0_3 = arith.constant 0 : index
    %c0_4 = arith.constant 0 : index
    %4 = vector.load %arg8[%c0_3, %c0_4] : memref<256x1152xbf16, #tpu.memory_space<vmem>>, vector<256x128xbf16>
    tpu.vector_store %arg8[%c0_3, %c0_4], %3 {strides = array<i32>} : memref<256x1152xbf16, #tpu.memory_space<vmem>>, vector<256x128xbf16>,
    %5 = vector.extract_strided_slice %1 {offsets = [0, 1, 0], sizes = [16, 16, 128], strides = [1, 1, 1]} : vector<18x18x128xbf16> to vector<16x16x128xbf16>
    %6 = vector.shape_cast %5 : vector<16x16x128xbf16> to vector<256x128xbf16>
    %c0_5 = arith.constant 0 : index
    %c128 = arith.constant 128 : index
    %7 = vector.load %arg8[%c0_5, %c128] : memref<256x1152xbf16, #tpu.memory_space<vmem>>, vector<256x128xbf16>
    tpu.vector_store %arg8[%c0_5, %c128], %6 {strides = array<i32>} : memref<256x1152xbf16, #tpu.memory_space<vmem>>, vector<256x128xbf16>,
    %8 = vector.extract_strided_slice %1 {offsets = [0, 2, 0], sizes = [16, 16, 128], strides = [1, 1, 1]} : vector<18x18x128xbf16> to vector<16x16x128xbf16>
    %9 = vector.shape_cast %8 : vector<16x16x128xbf16> to vector<256x128xbf16>
    %c0_6 = arith.constant 0 : index
    %c256 = arith.constant 256 : index
    %10 = vector.load %arg8[%c0_6, %c256] : memref<256x1152xbf16, #tpu.memory_space<vmem>>, vector<256x128xbf16>
    tpu.vector_store %arg8[%c0_6, %c256], %9 {strides = array<i32>} : memref<256x1152xbf16, #tpu.memory_space<vmem>>, vector<256x128xbf16>,
    %11 = vector.extract_strided_slice %1 {offsets = [1, 0, 0], sizes = [16, 16, 128], strides = [1, 1, 1]} : vector<18x18x128xbf16> to vector<16x16x128xbf16>
    %12 = vector.shape_cast %11 : vector<16x16x128xbf16> to vector<256x128xbf16>
    %c0_7 = arith.constant 0 : index
    %c384 = arith.constant 384 : index
    %13 = vector.load %arg8[%c0_7, %c384] : memref<256x1152xbf16, #tpu.memory_space<vmem>>, vector<256x128xbf16>
    tpu.vector_store %arg8[%c0_7, %c384], %12 {strides = array<i32>} : memref<256x1152xbf16, #tpu.memory_space<vmem>>, vector<256x128xbf16>,
    %14 = vector.extract_strided_slice %1 {offsets = [1, 1, 0], sizes = [16, 16, 128], strides = [1, 1, 1]} : vector<18x18x128xbf16> to vector<16x16x128xbf16>
    %15 = vector.shape_cast %14 : vector<16x16x128xbf16> to vector<256x128xbf16>
    %c0_8 = arith.constant 0 : index
    %c512 = arith.constant 512 : index
    %16 = vector.load %arg8[%c0_8, %c512] : memref<256x1152xbf16, #tpu.memory_space<vmem>>, vector<256x128xbf16>
    tpu.vector_store %arg8[%c0_8, %c512], %15 {strides = array<i32>} : memref<256x1152xbf16, #tpu.memory_space<vmem>>, vector<256x128xbf16>,
    %17 = vector.extract_strided_slice %1 {offsets = [1, 2, 0], sizes = [16, 16, 128], strides = [1, 1, 1]} : vector<18x18x128xbf16> to vector<16x16x128xbf16>
    %18 = vector.shape_cast %17 : vector<16x16x128xbf16> to vector<256x128xbf16>
    %c0_9 = arith.constant 0 : index
    %c640 = arith.constant 640 : index
    %19 = vector.load %arg8[%c0_9, %c640] : memref<256x1152xbf16, #tpu.memory_space<vmem>>, vector<256x128xbf16>
    tpu.vector_store %arg8[%c0_9, %c640], %18 {strides = array<i32>} : memref<256x1152xbf16, #tpu.memory_space<vmem>>, vector<256x128xbf16>,
    %20 = vector.extract_strided_slice %1 {offsets = [2, 0, 0], sizes = [16, 16, 128], strides = [1, 1, 1]} : vector<18x18x128xbf16> to vector<16x16x128xbf16>
    %21 = vector.shape_cast %20 : vector<16x16x128xbf16> to vector<256x128xbf16>
    %c0_10 = arith.constant 0 : index
    %c768 = arith.constant 768 : index
    %22 = vector.load %arg8[%c0_10, %c768] : memref<256x1152xbf16, #tpu.memory_space<vmem>>, vector<256x128xbf16>
    tpu.vector_store %arg8[%c0_10, %c768], %21 {strides = array<i32>} : memref<256x1152xbf16, #tpu.memory_space<vmem>>, vector<256x128xbf16>,
    %23 = vector.extract_strided_slice %1 {offsets = [2, 1, 0], sizes = [16, 16, 128], strides = [1, 1, 1]} : vector<18x18x128xbf16> to vector<16x16x128xbf16>
    %24 = vector.shape_cast %23 : vector<16x16x128xbf16> to vector<256x128xbf16>
    %c0_11 = arith.constant 0 : index
    %c896 = arith.constant 896 : index
    %25 = vector.load %arg8[%c0_11, %c896] : memref<256x1152xbf16, #tpu.memory_space<vmem>>, vector<256x128xbf16>
    tpu.vector_store %arg8[%c0_11, %c896], %24 {strides = array<i32>} : memref<256x1152xbf16, #tpu.memory_space<vmem>>, vector<256x128xbf16>,
    %26 = vector.extract_strided_slice %1 {offsets = [2, 2, 0], sizes = [16, 16, 128], strides = [1, 1, 1]} : vector<18x18x128xbf16> to vector<16x16x128xbf16>
    %27 = vector.shape_cast %26 : vector<16x16x128xbf16> to vector<256x128xbf16>
    %c0_12 = arith.constant 0 : index
    %c1024 = arith.constant 1024 : index
    %28 = vector.load %arg8[%c0_12, %c1024] : memref<256x1152xbf16, #tpu.memory_space<vmem>>, vector<256x128xbf16>
    tpu.vector_store %arg8[%c0_12, %c1024], %27 {strides = array<i32>} : memref<256x1152xbf16, #tpu.memory_space<vmem>>, vector<256x128xbf16>,
    %c0_13 = arith.constant 0 : index
    %c0_14 = arith.constant 0 : index
    %29 = vector.load %arg8[%c0_13, %c0_14] : memref<256x1152xbf16, #tpu.memory_space<vmem>>, vector<256x1152xbf16>
    %c0_15 = arith.constant 0 : index
    %c0_16 = arith.constant 0 : index
    %30 = vector.load %arg4[%c0_15, %c0_16] : memref<1152x128xbf16, #tpu.memory_space<vmem>>, vector<1152x128xbf16>
    %cst = arith.constant dense<0.000000e+00> : vector<256x128xf32>
    %31 = tpu.matmul %29, %30, %cst {dimension_numbers = #tpu.dot_dimension_numbers<[1], [0], [0], [1], [0, 0, 1, 1], [], []>} : vector<256x1152xbf16>, vector<1152x128xbf16>, vector<256x128xf32> -> vector<256x128xf32>
    %c0_17 = arith.constant 0 : index
    %c0_18 = arith.constant 0 : index
    %32 = vector.load %arg6[%c0_17, %c0_18] : memref<1x128xbf16, #tpu.memory_space<vmem>>, vector<1x128xbf16>
    %33 = arith.extf %32 : vector<1x128xbf16> to vector<1x128xf32>
    %34 = vector.broadcast %33 : vector<1x128xf32> to vector<256x128xf32>
    %35 = arith.addf %31, %34 : vector<256x128xf32>
    %c0_19 = arith.constant 0 : index
    %c0_20 = arith.constant 0 : index
    %c0_21 = arith.constant 0 : index
    %36 = vector.load %arg3[%c0_19, %c0_20, %c0_21] : memref<1x256x128xbf16, #tpu.memory_space<vmem>>, vector<1x256x128xbf16>
    %37 = vector.shape_cast %36 : vector<1x256x128xbf16> to vector<256x128xbf16>
    %38 = arith.extf %37 : vector<256x128xbf16> to vector<256x128xf32>
    %39 = arith.addf %35, %38 : vector<256x128xf32>
    %40 = vector.extract_strided_slice %39 {offsets = [0, 0], sizes = [256, 64], strides = [1, 1]} : vector<256x128xf32> to vector<256x64xf32>
    %41 = arith.negf %40 : vector<256x64xf32>
    %42 = math.exp %41 : vector<256x64xf32>
    %cst_22 = arith.constant 1.000000e+00 : f32
    %43 = vector.broadcast %cst_22 : f32 to vector<256x64xf32>
    %44 = arith.addf %43, %42 : vector<256x64xf32>
    %45 = arith.divf %43, %44 : vector<256x64xf32>
    %46 = vector.extract_strided_slice %45 {offsets = [0, 0], sizes = [256, 32], strides = [1, 1]} : vector<256x64xf32> to vector<256x32xf32>
    %47 = vector.extract_strided_slice %45 {offsets = [0, 32], sizes = [256, 32], strides = [1, 1]} : vector<256x64xf32> to vector<256x32xf32>
    %48 = vector.extract_strided_slice %39 {offsets = [0, 64], sizes = [256, 32], strides = [1, 1]} : vector<256x128xf32> to vector<256x32xf32>
    %c0_23 = arith.constant 0 : index
    %c0_24 = arith.constant 0 : index
    %c0_25 = arith.constant 0 : index
    %49 = vector.load %arg1[%c0_23, %c0_24, %c0_25] : memref<1x256x32xf32, #tpu.memory_space<vmem>>, vector<1x256x32xf32>
    %50 = vector.shape_cast %49 : vector<1x256x32xf32> to vector<256x32xf32>
    %cst_26 = arith.constant 0.000000e+00 : f32
    %51 = vector.broadcast %cst_26 : f32 to vector<1x18x32xf32>
    %c0_27 = arith.constant 0 : index
    %c0_28 = arith.constant 0 : index
    %c0_29 = arith.constant 0 : index
    %52 = vector.load %arg9[%c0_27, %c0_28, %c0_29] : memref<18x18x32xf32, #tpu.memory_space<vmem>>, vector<1x18x32xf32>
    tpu.vector_store %arg9[%c0_27, %c0_28, %c0_29], %51 {strides = array<i32>} : memref<18x18x32xf32, #tpu.memory_space<vmem>>, vector<1x18x32xf32>,
    %cst_30 = arith.constant 0.000000e+00 : f32
    %53 = vector.broadcast %cst_30 : f32 to vector<1x18x32xf32>
    %c17 = arith.constant 17 : index
    %c0_31 = arith.constant 0 : index
    %c0_32 = arith.constant 0 : index
    %54 = vector.load %arg9[%c17, %c0_31, %c0_32] : memref<18x18x32xf32, #tpu.memory_space<vmem>>, vector<1x18x32xf32>
    tpu.vector_store %arg9[%c17, %c0_31, %c0_32], %53 {strides = array<i32>} : memref<18x18x32xf32, #tpu.memory_space<vmem>>, vector<1x18x32xf32>,
    %cst_33 = arith.constant 0.000000e+00 : f32
    %55 = vector.broadcast %cst_33 : f32 to vector<18x1x32xf32>
    %c0_34 = arith.constant 0 : index
    %c0_35 = arith.constant 0 : index
    %c0_36 = arith.constant 0 : index
    %56 = vector.load %arg9[%c0_34, %c0_35, %c0_36] : memref<18x18x32xf32, #tpu.memory_space<vmem>>, vector<18x1x32xf32>
    tpu.vector_store %arg9[%c0_34, %c0_35, %c0_36], %55 {strides = array<i32>} : memref<18x18x32xf32, #tpu.memory_space<vmem>>, vector<18x1x32xf32>,
    %cst_37 = arith.constant 0.000000e+00 : f32
    %57 = vector.broadcast %cst_37 : f32 to vector<18x1x32xf32>
    %c0_38 = arith.constant 0 : index
    %c17_39 = arith.constant 17 : index
    %c0_40 = arith.constant 0 : index
    %58 = vector.load %arg9[%c0_38, %c17_39, %c0_40] : memref<18x18x32xf32, #tpu.memory_space<vmem>>, vector<18x1x32xf32>
    tpu.vector_store %arg9[%c0_38, %c17_39, %c0_40], %57 {strides = array<i32>} : memref<18x18x32xf32, #tpu.memory_space<vmem>>, vector<18x1x32xf32>,
    %59 = arith.mulf %47, %50 : vector<256x32xf32>
    %60 = vector.shape_cast %59 : vector<256x32xf32> to vector<16x16x32xf32>
    %c1 = arith.constant 1 : index
    %c1_41 = arith.constant 1 : index
    %c0_42 = arith.constant 0 : index
    %61 = vector.load %arg9[%c1, %c1_41, %c0_42] : memref<18x18x32xf32, #tpu.memory_space<vmem>>, vector<16x16x32xf32>
    tpu.vector_store %arg9[%c1, %c1_41, %c0_42], %60 {strides = array<i32>} : memref<18x18x32xf32, #tpu.memory_space<vmem>>, vector<16x16x32xf32>,
    %c0_43 = arith.constant 0 : index
    %c0_44 = arith.constant 0 : index
    %c0_45 = arith.constant 0 : index
    %62 = vector.load %arg9[%c0_43, %c0_44, %c0_45] : memref<18x18x32xf32, #tpu.memory_space<vmem>>, vector<18x18x32xf32>
    %63 = vector.extract_strided_slice %62 {offsets = [0, 0, 0], sizes = [16, 16, 32], strides = [1, 1, 1]} : vector<18x18x32xf32> to vector<16x16x32xf32>
    %64 = vector.shape_cast %63 : vector<16x16x32xf32> to vector<256x32xf32>
    %65 = arith.truncf %64 : vector<256x32xf32> to vector<256x32xbf16>
    %c0_46 = arith.constant 0 : index
    %c0_47 = arith.constant 0 : index
    %66 = vector.load %arg10[%c0_46, %c0_47] : memref<256x288xbf16, #tpu.memory_space<vmem>>, vector<256x32xbf16>
    tpu.vector_store %arg10[%c0_46, %c0_47], %65 {strides = array<i32>} : memref<256x288xbf16, #tpu.memory_space<vmem>>, vector<256x32xbf16>,
    %67 = vector.extract_strided_slice %62 {offsets = [0, 1, 0], sizes = [16, 16, 32], strides = [1, 1, 1]} : vector<18x18x32xf32> to vector<16x16x32xf32>
    %68 = vector.shape_cast %67 : vector<16x16x32xf32> to vector<256x32xf32>
    %69 = arith.truncf %68 : vector<256x32xf32> to vector<256x32xbf16>
    %c0_48 = arith.constant 0 : index
    %c32 = arith.constant 32 : index
    %70 = vector.load %arg10[%c0_48, %c32] : memref<256x288xbf16, #tpu.memory_space<vmem>>, vector<256x32xbf16>
    tpu.vector_store %arg10[%c0_48, %c32], %69 {strides = array<i32>} : memref<256x288xbf16, #tpu.memory_space<vmem>>, vector<256x32xbf16>,
    %71 = vector.extract_strided_slice %62 {offsets = [0, 2, 0], sizes = [16, 16, 32], strides = [1, 1, 1]} : vector<18x18x32xf32> to vector<16x16x32xf32>
    %72 = vector.shape_cast %71 : vector<16x16x32xf32> to vector<256x32xf32>
    %73 = arith.truncf %72 : vector<256x32xf32> to vector<256x32xbf16>
    %c0_49 = arith.constant 0 : index
    %c64 = arith.constant 64 : index
    %74 = vector.load %arg10[%c0_49, %c64] : memref<256x288xbf16, #tpu.memory_space<vmem>>, vector<256x32xbf16>
    tpu.vector_store %arg10[%c0_49, %c64], %73 {strides = array<i32>} : memref<256x288xbf16, #tpu.memory_space<vmem>>, vector<256x32xbf16>,
    %75 = vector.extract_strided_slice %62 {offsets = [1, 0, 0], sizes = [16, 16, 32], strides = [1, 1, 1]} : vector<18x18x32xf32> to vector<16x16x32xf32>
    %76 = vector.shape_cast %75 : vector<16x16x32xf32> to vector<256x32xf32>
    %77 = arith.truncf %76 : vector<256x32xf32> to vector<256x32xbf16>
    %c0_50 = arith.constant 0 : index
    %c96 = arith.constant 96 : index
    %78 = vector.load %arg10[%c0_50, %c96] : memref<256x288xbf16, #tpu.memory_space<vmem>>, vector<256x32xbf16>
    tpu.vector_store %arg10[%c0_50, %c96], %77 {strides = array<i32>} : memref<256x288xbf16, #tpu.memory_space<vmem>>, vector<256x32xbf16>,
    %79 = vector.extract_strided_slice %62 {offsets = [1, 1, 0], sizes = [16, 16, 32], strides = [1, 1, 1]} : vector<18x18x32xf32> to vector<16x16x32xf32>
    %80 = vector.shape_cast %79 : vector<16x16x32xf32> to vector<256x32xf32>
    %81 = arith.truncf %80 : vector<256x32xf32> to vector<256x32xbf16>
    %c0_51 = arith.constant 0 : index
    %c128_52 = arith.constant 128 : index
    %82 = vector.load %arg10[%c0_51, %c128_52] : memref<256x288xbf16, #tpu.memory_space<vmem>>, vector<256x32xbf16>
    tpu.vector_store %arg10[%c0_51, %c128_52], %81 {strides = array<i32>} : memref<256x288xbf16, #tpu.memory_space<vmem>>, vector<256x32xbf16>,
    %83 = vector.extract_strided_slice %62 {offsets = [1, 2, 0], sizes = [16, 16, 32], strides = [1, 1, 1]} : vector<18x18x32xf32> to vector<16x16x32xf32>
    %84 = vector.shape_cast %83 : vector<16x16x32xf32> to vector<256x32xf32>
    %85 = arith.truncf %84 : vector<256x32xf32> to vector<256x32xbf16>
    %c0_53 = arith.constant 0 : index
    %c160 = arith.constant 160 : index
    %86 = vector.load %arg10[%c0_53, %c160] : memref<256x288xbf16, #tpu.memory_space<vmem>>, vector<256x32xbf16>
    tpu.vector_store %arg10[%c0_53, %c160], %85 {strides = array<i32>} : memref<256x288xbf16, #tpu.memory_space<vmem>>, vector<256x32xbf16>,
    %87 = vector.extract_strided_slice %62 {offsets = [2, 0, 0], sizes = [16, 16, 32], strides = [1, 1, 1]} : vector<18x18x32xf32> to vector<16x16x32xf32>
    %88 = vector.shape_cast %87 : vector<16x16x32xf32> to vector<256x32xf32>
    %89 = arith.truncf %88 : vector<256x32xf32> to vector<256x32xbf16>
    %c0_54 = arith.constant 0 : index
    %c192 = arith.constant 192 : index
    %90 = vector.load %arg10[%c0_54, %c192] : memref<256x288xbf16, #tpu.memory_space<vmem>>, vector<256x32xbf16>
    tpu.vector_store %arg10[%c0_54, %c192], %89 {strides = array<i32>} : memref<256x288xbf16, #tpu.memory_space<vmem>>, vector<256x32xbf16>,
    %91 = vector.extract_strided_slice %62 {offsets = [2, 1, 0], sizes = [16, 16, 32], strides = [1, 1, 1]} : vector<18x18x32xf32> to vector<16x16x32xf32>
    %92 = vector.shape_cast %91 : vector<16x16x32xf32> to vector<256x32xf32>
    %93 = arith.truncf %92 : vector<256x32xf32> to vector<256x32xbf16>
    %c0_55 = arith.constant 0 : index
    %c224 = arith.constant 224 : index
    %94 = vector.load %arg10[%c0_55, %c224] : memref<256x288xbf16, #tpu.memory_space<vmem>>, vector<256x32xbf16>
    tpu.vector_store %arg10[%c0_55, %c224], %93 {strides = array<i32>} : memref<256x288xbf16, #tpu.memory_space<vmem>>, vector<256x32xbf16>,
    %95 = vector.extract_strided_slice %62 {offsets = [2, 2, 0], sizes = [16, 16, 32], strides = [1, 1, 1]} : vector<18x18x32xf32> to vector<16x16x32xf32>
    %96 = vector.shape_cast %95 : vector<16x16x32xf32> to vector<256x32xf32>
    %97 = arith.truncf %96 : vector<256x32xf32> to vector<256x32xbf16>
    %c0_56 = arith.constant 0 : index
    %c256_57 = arith.constant 256 : index
    %98 = vector.load %arg10[%c0_56, %c256_57] : memref<256x288xbf16, #tpu.memory_space<vmem>>, vector<256x32xbf16>
    tpu.vector_store %arg10[%c0_56, %c256_57], %97 {strides = array<i32>} : memref<256x288xbf16, #tpu.memory_space<vmem>>, vector<256x32xbf16>,
    %c0_58 = arith.constant 0 : index
    %c0_59 = arith.constant 0 : index
    %99 = vector.load %arg10[%c0_58, %c0_59] : memref<256x288xbf16, #tpu.memory_space<vmem>>, vector<256x288xbf16>
    %c0_60 = arith.constant 0 : index
    %c0_61 = arith.constant 0 : index
    %100 = vector.load %arg5[%c0_60, %c0_61] : memref<288x32xbf16, #tpu.memory_space<vmem>>, vector<288x32xbf16>
    %cst_62 = arith.constant dense<0.000000e+00> : vector<256x32xf32>
    %101 = tpu.matmul %99, %100, %cst_62 {dimension_numbers = #tpu.dot_dimension_numbers<[1], [0], [0], [1], [0, 0, 1, 1], [], []>} : vector<256x288xbf16>, vector<288x32xbf16>, vector<256x32xf32> -> vector<256x32xf32>
    %102 = arith.addf %48, %101 : vector<256x32xf32>
    %103 = math.tanh %102 : vector<256x32xf32>
    %cst_63 = arith.constant 1.000000e+00 : f32
    %104 = vector.broadcast %cst_63 : f32 to vector<256x32xf32>
    %105 = arith.subf %104, %46 : vector<256x32xf32>
    %106 = arith.mulf %105, %50 : vector<256x32xf32>
    %107 = arith.mulf %46, %103 : vector<256x32xf32>
    %108 = arith.addf %106, %107 : vector<256x32xf32>
    %c0_64 = arith.constant 0 : index
    %c0_65 = arith.constant 0 : index
    %c0_66 = arith.constant 0 : index
    %109 = vector.load %arg7[%c0_64, %c0_65, %c0_66] : memref<1x256x32xf32, #tpu.memory_space<vmem>>, vector<1x256x32xf32>
    %110 = vector.shape_cast %109 : vector<1x256x32xf32> to vector<256x32xf32>
    %111 = vector.shape_cast %108 : vector<256x32xf32> to vector<1x256x32xf32>
    tpu.vector_store %arg7[%c0_64, %c0_65, %c0_66], %111 {strides = array<i32>} : memref<1x256x32xf32, #tpu.memory_space<vmem>>, vector<1x256x32xf32>,
    return
  }
  func.func @transform_0(%arg0: i32) -> (i32, i32, i32) {
    %c0_i32 = arith.constant 0 : i32
    %c0_i32_0 = arith.constant 0 : i32
    %c0_i32_1 = arith.constant 0 : i32
    return %arg0, %c0_i32, %c0_i32_0 : i32, i32, i32
  }
  func.func @transform_1(%arg0: i32) -> (i32, i32, i32, i32) {
    %c0_i32 = arith.constant 0 : i32
    %c0_i32_0 = arith.constant 0 : i32
    %c0_i32_1 = arith.constant 0 : i32
    %c0_i32_2 = arith.constant 0 : i32
    return %arg0, %c0_i32, %c0_i32_0, %c0_i32_1 : i32, i32, i32, i32
  }
  func.func @transform_2(%arg0: i32) -> (i32, i32, i32) {
    %c0_i32 = arith.constant 0 : i32
    %c0_i32_0 = arith.constant 0 : i32
    %c0_i32_1 = arith.constant 0 : i32
    return %arg0, %c0_i32, %c0_i32_0 : i32, i32, i32
  }
  func.func @transform_3(%arg0: i32) -> (i32, i32) {
    %c0_i32 = arith.constant 0 : i32
    %c0_i32_0 = arith.constant 0 : i32
    %c0_i32_1 = arith.constant 0 : i32
    return %c0_i32, %c0_i32_0 : i32, i32
  }
  func.func @transform_4(%arg0: i32) -> (i32, i32) {
    %c0_i32 = arith.constant 0 : i32
    %c0_i32_0 = arith.constant 0 : i32
    %c0_i32_1 = arith.constant 0 : i32
    return %c0_i32, %c0_i32_0 : i32, i32
  }
  func.func @transform_5(%arg0: i32) -> (i32, i32) {
    %c0_i32 = arith.constant 0 : i32
    %c0_i32_0 = arith.constant 0 : i32
    %c0_i32_1 = arith.constant 0 : i32
    return %c0_i32, %c0_i32_0 : i32, i32
  }
  func.func @transform_6(%arg0: i32) -> (i32, i32, i32) {
    %c0_i32 = arith.constant 0 : i32
    %c0_i32_0 = arith.constant 0 : i32
    %c0_i32_1 = arith.constant 0 : i32
    return %arg0, %c0_i32, %c0_i32_0 : i32, i32, i32
  }
}

</mosaic_0001>

<llo_original>
// kernel: conv_gru_pallas.1
$region0: #{conv_gru_pallas.1}
  #allocation0 [shape = 'u32[]', space=smem, size = 0x4, offset = 0x4, fixed_abs, tag = 'smem constant byte address 0x4 - core index']
  #allocation1 [shape = 'u32[144,128]{1,0:T(1,128)}', space=vmem, size = 0x12000, scoped, tag = 'internal scratch']
  #allocation2 [shape = 'bf16[256,1152]{1,0:T(8,128)(2,1)}', space=vmem, size = 0x90000, scoped, tag = 'scratch operand']
  #allocation3 [shape = 'f32[18,18,32]{2,1,0:T(8,128)}', space=vmem, size = 0x36000, scoped, tag = 'scratch operand']
  #allocation4 [shape = 'bf16[256,288]{1,0:T(8,128)(2,1)}', space=vmem, size = 0x30000, scoped, tag = 'scratch operand']
  %s0 = inlined_call_operand.vmem [shape: f32[2,256,32], index: 0, kind: input, shape index: {}]
  %s1 = inlined_call_operand.vmem [shape: bf16[2,18,18,128], index: 1, kind: input, shape index: {}]
  %s2 = inlined_call_operand.vmem [shape: bf16[2,256,128], index: 2, kind: input, shape index: {}]
  %s3 = inlined_call_operand.vmem [shape: bf16[1152,128], index: 3, kind: input, shape index: {}]
  %s4 = inlined_call_operand.vmem [shape: bf16[288,32], index: 4, kind: input, shape index: {}]
  %s5 = inlined_call_operand.vmem [shape: bf16[1,128], index: 5, kind: input, shape index: {}]
  %s6 = inlined_call_operand.hbm [shape: f32[2,256,32], index: 6, kind: output, shape index: {}]
  %s7 = sld [smem:[#allocation0]]
  $region57: #{conv_gru_pallas.1} parent=0
    _
  %s9 = ssub.s32 1, %s7
  %s10 = scalar_select 0, %s9, %s7
  $region1: #{conv_gru_pallas.1} parent=0
    #allocation5 [shape = 'u8[262144]{0}', space=vmem, size = 0x40000, scoped, tag = 'output window, operand 0']
    #allocation6 [shape = 's32[2]{0}', space=sflag, size = 0x8, scoped, tag = 'scoped memory for conv_gru_pallas.1']
    %11 = vsyncpa [#allocation6], 0
    %s12 = scalar_lea.sflag [#allocation6], 1
    %13 = vsyncpa %s12, 0
    loop: start=0, step=1, limit=4
    $region2: #{conv_gru_pallas.1} parent=1 // loop_pre_header
      _
    $region3: #{conv_gru_pallas.1} parent=1 // loop_header
      %s15 = sphi 0, %s19
      %p16 = scmp.ge.s32.totalorder %s15, 4
      %s25 = sphi 0, %s27
      %s28 = sphi 0, %s25
      %s29 = sphi 0, %s28
      %s45 = sphi 0, %s29
      %s51 = sphi 0, %s53
      %s54 = sphi 0, %s51
      %s55 = sphi 0, %s54
      %s71 = sphi 0, %s55
      %s77 = sphi 0, %s79
      %s80 = sphi 0, %s77
      %s81 = sphi 0, %s80
      %s97 = sphi 0, %s81
      %s101 = sphi 0, %s101
      %s103 = sphi 0, %s101
      %s104 = sphi 0, %s103
      %s118 = sphi 0, %s104
      %s122 = sphi 0, %s122
      %s124 = sphi 0, %s122
      %s125 = sphi 0, %s124
      %s139 = sphi 0, %s125
      %s143 = sphi 0, %s143
      %s145 = sphi 0, %s143
      %s146 = sphi 0, %s145
      %s160 = sphi 0, %s146
      %s166 = sphi 0, %s168
      %s169 = sphi 0, %s166
      %s170 = sphi 0, %s169
      %s186 = sphi 0, %s170
    $region4: #{conv_gru_pallas.1} parent=1 // loop_header_branch
      %18 = sbr.rel (%p16) target = $region8
    $region5: #{conv_gru_pallas.1} parent=1 // loop_body
      %s20 = ssub.s32 %s15, 1
      %s21 = ssub.s32 %s15, 2
      %s22 = sadd.s32 %s15, 1
      %s23 = ssub.s32 %s15, %s22
      %p24 = scmp.eq.s32.totalorder %s23, 0
      %s26 = sadd.s32 %s25, 1
      %s27 = scalar_select %p24, %s25, %s26
      %p30 = pneg %p24
      %p31 = scmp.eq.s32.totalorder %s15, 1
      %p32 = por %p30, %p31
      %p33 = scmp.ne.s32.totalorder %s25, %s28
      %p34 = scmp.eq.s32.totalorder %s15, 0
      %p35 = por %p33, %p34
      %p36 = scmp.ne.s32.totalorder %s25, %s28
      %p37 = scmp.eq.s32.totalorder %s20, 1
      %p38 = por %p36, %p37
      %p39 = scmp.ne.s32.totalorder %s28, %s29
      %p40 = scmp.eq.s32.totalorder %s20, 0
      %p41 = por %p39, %p40
      %p42 = scmp.ne.s32.totalorder %s28, %s29
      %p43 = scmp.eq.s32.totalorder %s21, 1
      %p44 = por %p42, %p43
      %p46 = scmp.ne.s32.totalorder %s29, %s45
      %p47 = scmp.eq.s32.totalorder %s21, 0
      %p48 = por %p46, %p47
      %s49 = ssub.s32 %s15, %s22
      %p50 = scmp.eq.s32.totalorder %s49, 0
      %s52 = sadd.s32 %s51, 1
      %s53 = scalar_select %p50, %s51, %s52
      %p56 = pneg %p50
      %p57 = scmp.eq.s32.totalorder %s15, 1
      %p58 = por %p56, %p57
      %p59 = scmp.ne.s32.totalorder %s51, %s54
      %p60 = scmp.eq.s32.totalorder %s15, 0
      %p61 = por %p59, %p60
      %p62 = scmp.ne.s32.totalorder %s51, %s54
      %p63 = scmp.eq.s32.totalorder %s20, 1
      %p64 = por %p62, %p63
      %p65 = scmp.ne.s32.totalorder %s54, %s55
      %p66 = scmp.eq.s32.totalorder %s20, 0
      %p67 = por %p65, %p66
      %p68 = scmp.ne.s32.totalorder %s54, %s55
      %p69 = scmp.eq.s32.totalorder %s21, 1
      %p70 = por %p68, %p69
      %p72 = scmp.ne.s32.totalorder %s55, %s71
      %p73 = scmp.eq.s32.totalorder %s21, 0
      %p74 = por %p72, %p73
      %s75 = ssub.s32 %s15, %s22
      %p76 = scmp.eq.s32.totalorder %s75, 0
      %s78 = sadd.s32 %s77, 1
      %s79 = scalar_select %p76, %s77, %s78
      %p82 = pneg %p76
      %p83 = scmp.eq.s32.totalorder %s15, 1
      %p84 = por %p82, %p83
      %p85 = scmp.ne.s32.totalorder %s77, %s80
      %p86 = scmp.eq.s32.totalorder %s15, 0
      %p87 = por %p85, %p86
      %p88 = scmp.ne.s32.totalorder %s77, %s80
      %p89 = scmp.eq.s32.totalorder %s20, 1
      %p90 = por %p88, %p89
      %p91 = scmp.ne.s32.totalorder %s80, %s81
      %p92 = scmp.eq.s32.totalorder %s20, 0
      %p93 = por %p91, %p92
      %p94 = scmp.ne.s32.totalorder %s80, %s81
      %p95 = scmp.eq.s32.totalorder %s21, 1
      %p96 = por %p94, %p95
      %p98 = scmp.ne.s32.totalorder %s81, %s97
      %p99 = scmp.eq.s32.totalorder %s21, 0
      %p100 = por %p98, %p99
      %s102 = sadd.s32 %s101, 1
      %p105 = scmp.eq.s32.totalorder %s15, 1
      %p106 = scmp.ne.s32.totalorder %s101, %s103
      %p107 = scmp.eq.s32.totalorder %s15, 0
      %p108 = por %p106, %p107
      %p109 = scmp.ne.s32.totalorder %s101, %s103
      %p110 = scmp.eq.s32.totalorder %s20, 1
      %p111 = por %p109, %p110
      %p112 = scmp.ne.s32.totalorder %s103, %s104
      %p113 = scmp.eq.s32.totalorder %s20, 0
      %p114 = por %p112, %p113
      %p115 = scmp.ne.s32.totalorder %s103, %s104
      %p116 = scmp.eq.s32.totalorder %s21, 1
      %p117 = por %p115, %p116
      %p119 = scmp.ne.s32.totalorder %s104, %s118
      %p120 = scmp.eq.s32.totalorder %s21, 0
      %p121 = por %p119, %p120
      %s123 = sadd.s32 %s122, 1
      %p126 = scmp.eq.s32.totalorder %s15, 1
      %p127 = scmp.ne.s32.totalorder %s122, %s124
      %p128 = scmp.eq.s32.totalorder %s15, 0
      %p129 = por %p127, %p128
      %p130 = scmp.ne.s32.totalorder %s122, %s124
      %p131 = scmp.eq.s32.totalorder %s20, 1
      %p132 = por %p130, %p131
      %p133 = scmp.ne.s32.totalorder %s124, %s125
      %p134 = scmp.eq.s32.totalorder %s20, 0
      %p135 = por %p133, %p134
      %p136 = scmp.ne.s32.totalorder %s124, %s125
      %p137 = scmp.eq.s32.totalorder %s21, 1
      %p138 = por %p136, %p137
      %p140 = scmp.ne.s32.totalorder %s125, %s139
      %p141 = scmp.eq.s32.totalorder %s21, 0
      %p142 = por %p140, %p141
      %s144 = sadd.s32 %s143, 1
      %p147 = scmp.eq.s32.totalorder %s15, 1
      %p148 = scmp.ne.s32.totalorder %s143, %s145
      %p149 = scmp.eq.s32.totalorder %s15, 0
      %p150 = por %p148, %p149
      %p151 = scmp.ne.s32.totalorder %s143, %s145
      %p152 = scmp.eq.s32.totalorder %s20, 1
      %p153 = por %p151, %p152
      %p154 = scmp.ne.s32.totalorder %s145, %s146
      %p155 = scmp.eq.s32.totalorder %s20, 0
      %p156 = por %p154, %p155
      %p157 = scmp.ne.s32.totalorder %s145, %s146
      %p158 = scmp.eq.s32.totalorder %s21, 1
      %p159 = por %p157, %p158
      %p161 = scmp.ne.s32.totalorder %s146, %s160
      %p162 = scmp.eq.s32.totalorder %s21, 0
      %p163 = por %p161, %p162
      %s164 = ssub.s32 %s15, %s22
      %p165 = scmp.eq.s32.totalorder %s164, 0
      %s167 = sadd.s32 %s166, 1
      %s168 = scalar_select %p165, %s166, %s167
      %p171 = pneg %p165
      %p172 = scmp.eq.s32.totalorder %s15, 1
      %p173 = por %p171, %p172
      %p174 = scmp.ne.s32.totalorder %s166, %s169
      %p175 = scmp.eq.s32.totalorder %s15, 0
      %p176 = por %p174, %p175
      %p177 = scmp.ne.s32.totalorder %s166, %s169
      %p178 = scmp.eq.s32.totalorder %s20, 1
      %p179 = por %p177, %p178
      %p180 = scmp.ne.s32.totalorder %s169, %s170
      %p181 = scmp.eq.s32.totalorder %s20, 0
      %p182 = por %p180, %p181
      %p183 = scmp.ne.s32.totalorder %s169, %s170
      %p184 = scmp.eq.s32.totalorder %s21, 1
      %p185 = por %p183, %p184
      %p187 = scmp.ne.s32.totalorder %s170, %s186
      %p188 = scmp.eq.s32.totalorder %s21, 0
      %p189 = por %p187, %p188
      %p190 = scmp.le.s32.totalorder 1, %s15
      %p191 = scmp.lt.s32.totalorder %s15, 3
      %p192 = pnand %p190, %p191
      %p193 = pneg %p192
      // Predicated region
      $region9: #{conv_gru_pallas.1} parent=5 // pred_check
        _
      $region10: #{conv_gru_pallas.1} parent=5 // pred_check_branch
        %195 = sbr.rel (%p192) target = $region12
      $region11: #{conv_gru_pallas.1} parent=5 // pred_region
        %s196 = ssub.s32 %s15, 1
        // Predicated region
        $region13: #{conv_gru_pallas.1} parent=11 // pred_check
          %p197 = pneg %p114
        $region14: #{conv_gru_pallas.1} parent=11 // pred_check_branch
          %199 = sbr.rel (%p197) target = $region16
        $region15: #{conv_gru_pallas.1} parent=11 // pred_region
          _
        $region16: #{conv_gru_pallas.1} parent=11 // pred_fallthru
          _
        // Predicated region
        $region17: #{conv_gru_pallas.1} parent=11 // pred_check
          %p200 = pneg %p135
        $region18: #{conv_gru_pallas.1} parent=11 // pred_check_branch
          %202 = sbr.rel (%p200) target = $region20
        $region19: #{conv_gru_pallas.1} parent=11 // pred_region
          _
        $region20: #{conv_gru_pallas.1} parent=11 // pred_fallthru
          _
        // Predicated region
        $region21: #{conv_gru_pallas.1} parent=11 // pred_check
          %p203 = pneg %p156
        $region22: #{conv_gru_pallas.1} parent=11 // pred_check_branch
          %205 = sbr.rel (%p203) target = $region24
        $region23: #{conv_gru_pallas.1} parent=11 // pred_region
          _
        $region24: #{conv_gru_pallas.1} parent=11 // pred_fallthru
          _
      $region12: #{conv_gru_pallas.1} parent=5 // pred_fallthru
        _
      %p206 = scmp.lt.s32.totalorder %s15, 2
      // Predicated region
      $region25: #{conv_gru_pallas.1} parent=5 // pred_check
        %p207 = pneg %p206
      $region26: #{conv_gru_pallas.1} parent=5 // pred_check_branch
        %209 = sbr.rel (%p207) target = $region28
      $region27: #{conv_gru_pallas.1} parent=5 // pred_region
        // Predicated region
        $region29: #{conv_gru_pallas.1} parent=27 // pred_check
          %p210 = pneg %p35
        $region30: #{conv_gru_pallas.1} parent=27 // pred_check_branch
          %212 = sbr.rel (%p210) target = $region32
        $region31: #{conv_gru_pallas.1} parent=27 // pred_region
          %p213 = scmp.lt.s32.totalorder %s15, 1
          %s214 = scalar_select %p213, %s15, 1
          %s215 = smul.addr %s214, 32
          %s216 = smul.addr %s215, 8
          %s217 = scalar_lea.vmem %s0, %s216
        $region32: #{conv_gru_pallas.1} parent=27 // pred_fallthru
          _
        // Predicated region
        $region33: #{conv_gru_pallas.1} parent=27 // pred_check
          %p218 = pneg %p61
        $region34: #{conv_gru_pallas.1} parent=27 // pred_check_branch
          %220 = sbr.rel (%p218) target = $region36
        $region35: #{conv_gru_pallas.1} parent=27 // pred_region
          %p221 = scmp.lt.s32.totalorder %s15, 1
          %s222 = scalar_select %p221, %s15, 1
          %s223 = smul.addr %s222, 54
          %s224 = smul.addr %s223, 4
          %s225 = scalar_lea.vmem %s1, %s224
        $region36: #{conv_gru_pallas.1} parent=27 // pred_fallthru
          _
        // Predicated region
        $region37: #{conv_gru_pallas.1} parent=27 // pred_check
          %p226 = pneg %p87
        $region38: #{conv_gru_pallas.1} parent=27 // pred_check_branch
          %228 = sbr.rel (%p226) target = $region40
        $region39: #{conv_gru_pallas.1} parent=27 // pred_region
          %p229 = scmp.lt.s32.totalorder %s15, 1
          %s230 = scalar_select %p229, %s15, 1
          %s231 = smul.addr %s230, 32
          %s232 = smul.addr %s231, 4
          %s233 = scalar_lea.vmem %s2, %s232
        $region40: #{conv_gru_pallas.1} parent=27 // pred_fallthru
          _
      $region28: #{conv_gru_pallas.1} parent=5 // pred_fallthru
        _
      %p234 = scmp.le.s32.totalorder 1, %s15
      %p235 = scmp.lt.s32.totalorder %s15, 3
      %p236 = pnand %p234, %p235
      %p237 = pneg %p236
      // Predicated region
      $region41: #{conv_gru_pallas.1} parent=5 // pred_check
        _
      $region42: #{conv_gru_pallas.1} parent=5 // pred_check_branch
        %239 = sbr.rel (%p236) target = $region44
      $region43: #{conv_gru_pallas.1} parent=5 // pred_region
        %s240 = ssub.s32 %s15, 1
        %p241 = scmp.lt.s32.totalorder %s20, 1
        %s242 = scalar_select %p241, %s20, 1
        %s243 = smul.addr %s242, 32
        %s244 = smul.addr %s243, 8
        %s245 = scalar_lea.vmem %s0, %s244
        %p246 = pneg %p41
        %p247 = pneg %p38
        %p248 = scmp.lt.s32.totalorder %s20, 1
        %s249 = scalar_select %p248, %s20, 1
        %s250 = smul.addr %s249, 54
        %s251 = smul.addr %s250, 4
        %s252 = scalar_lea.vmem %s1, %s251
        %p253 = pneg %p67
        %p254 = pneg %p64
        %p255 = scmp.lt.s32.totalorder %s20, 1
        %s256 = scalar_select %p255, %s20, 1
        %s257 = smul.addr %s256, 32
        %s258 = smul.addr %s257, 4
        %s259 = scalar_lea.vmem %s2, %s258
        %p260 = pneg %p93
        %p261 = pneg %p90
        %p262 = pneg %p114
        %p263 = pneg %p111
        %p264 = pneg %p135
        %p265 = pneg %p132
        %p266 = pneg %p156
        %p267 = pneg %p153
        %p268 = pneg %p182
        %p269 = pneg %p179
        %s270 = sand.u32 %s169, 1
        %s271 = scalar_lea.sflag [#allocation6], %s270
        %s272 = sand.u32 %s169, 1
        %s273 = smul.addr %s272, 256
        %s274 = scalar_lea.vmem [#allocation5], %s273
        %p275 = scmp.lt.s32.totalorder %s20, 1
        %s276 = scalar_select %p275, %s20, 1
        %s277 = smul.addr %s276, 32
        %s278 = smul.addr %s277, 8
        %s279 = scalar_lea.vmem %s0, %s278
        %p280 = scmp.lt.s32.totalorder %s20, 1
        %s281 = scalar_select %p280, %s20, 1
        %s282 = smul.addr %s281, 54
        %s283 = smul.addr %s282, 4
        %s284 = scalar_lea.vmem %s1, %s283
        %p285 = scmp.lt.s32.totalorder %s20, 1
        %s286 = scalar_select %p285, %s20, 1
        %s287 = smul.addr %s286, 32
        %s288 = smul.addr %s287, 4
        %s289 = scalar_lea.vmem %s2, %s288
        %v291 = vld [vmem:[%s284] sm:$0xf]
        %v292 = vld [vmem:[%s284 + $0x4] sm:$0xf]
        %v293 = vld [vmem:[%s284 + $0x8] sm:$0x1]
        %v294 = vld [vmem:[%s284 + $0xc] sm:$0xf]
        %v295 = vld [vmem:[%s284 + $0x10] sm:$0xf]
        %v296 = vld [vmem:[%s284 + $0x14] sm:$0x1]
        %v297 = vld [vmem:[%s284 + $0x18] sm:$0xf]
        %v298 = vld [vmem:[%s284 + $0x1c] sm:$0xf]
        %v299 = vld [vmem:[%s284 + $0x20] sm:$0x1]
        %v300 = vld [vmem:[%s284 + $0x24] sm:$0xf]
        %v301 = vld [vmem:[%s284 + $0x28] sm:$0xf]
        %v302 = vld [vmem:[%s284 + $0x2c] sm:$0x1]
        %v303 = vld [vmem:[%s284 + $0x30] sm:$0xf]
        %v304 = vld [vmem:[%s284 + $0x34] sm:$0xf]
        %v305 = vld [vmem:[%s284 + $0x38] sm:$0x1]
        %v306 = vld [vmem:[%s284 + $0x3c] sm:$0xf]
        %v307 = vld [vmem:[%s284 + $0x40] sm:$0xf]
        %v308 = vld [vmem:[%s284 + $0x44] sm:$0x1]
        %v309 = vld [vmem:[%s284 + $0x48] sm:$0xf]
        %v310 = vld [vmem:[%s284 + $0x4c] sm:$0xf]
        %v311 = vld [vmem:[%s284 + $0x50] sm:$0x1]
        %v312 = vld [vmem:[%s284 + $0x54] sm:$0xf]
        %v313 = vld [vmem:[%s284 + $0x58] sm:$0xf]
        %v314 = vld [vmem:[%s284 + $0x5c] sm:$0x1]
        %v315 = vld [vmem:[%s284 + $0x60] sm:$0xf]
        %v316 = vld [vmem:[%s284 + $0x64] sm:$0xf]
        %v317 = vld [vmem:[%s284 + $0x68] sm:$0x1]
        %v318 = vld [vmem:[%s284 + $0x6c] sm:$0xf]
        %v319 = vld [vmem:[%s284 + $0x70] sm:$0xf]
        %v320 = vld [vmem:[%s284 + $0x74] sm:$0x1]
        %v321 = vld [vmem:[%s284 + $0x78] sm:$0xf]
        %v322 = vld [vmem:[%s284 + $0x7c] sm:$0xf]
        %v323 = vld [vmem:[%s284 + $0x80] sm:$0x1]
        %v324 = vld [vmem:[%s284 + $0x84] sm:$0xf]
        %v325 = vld [vmem:[%s284 + $0x88] sm:$0xf]
        %v326 = vld [vmem:[%s284 + $0x8c] sm:$0x1]
        %v327 = vld [vmem:[%s284 + $0x90] sm:$0xf]
        %v328 = vld [vmem:[%s284 + $0x94] sm:$0xf]
        %v329 = vld [vmem:[%s284 + $0x98] sm:$0x1]
        %v330 = vld [vmem:[%s284 + $0x9c] sm:$0xf]
        %v331 = vld [vmem:[%s284 + $0xa0] sm:$0xf]
        %v332 = vld [vmem:[%s284 + $0xa4] sm:$0x1]
        %v333 = vld [vmem:[%s284 + $0xa8] sm:$0xf]
        %v334 = vld [vmem:[%s284 + $0xac] sm:$0xf]
        %v335 = vld [vmem:[%s284 + $0xb0] sm:$0x1]
        %v336 = vld [vmem:[%s284 + $0xb4] sm:$0xf]
        %v337 = vld [vmem:[%s284 + $0xb8] sm:$0xf]
        %v338 = vld [vmem:[%s284 + $0xbc] sm:$0x1]
        %v339 = vld [vmem:[%s284 + $0xc0] sm:$0xf]
        %v340 = vld [vmem:[%s284 + $0xc4] sm:$0xf]
        %v341 = vld [vmem:[%s284 + $0xc8] sm:$0x1]
        %v342 = vld [vmem:[%s284 + $0xcc] sm:$0xf]
        %v343 = vld [vmem:[%s284 + $0xd0] sm:$0xf]
        %v344 = vld [vmem:[%s284 + $0xd4] sm:$0x1]
        %345 = vst [vmem:[#allocation2] sm:$0xf] %v291
        %346 = vst [vmem:[#allocation2 + $0x24] sm:$0xf] %v292
        %347 = vst [vmem:[#allocation2 + $0x48] sm:$0xf] %v294
        %348 = vst [vmem:[#allocation2 + $0x6c] sm:$0xf] %v295
        %349 = vst [vmem:[#allocation2 + $0x90] sm:$0xf] %v297
        %350 = vst [vmem:[#allocation2 + $0xb4] sm:$0xf] %v298
        %351 = vst [vmem:[#allocation2 + $0xd8] sm:$0xf] %v300
        %352 = vst [vmem:[#allocation2 + $0xfc] sm:$0xf] %v301
        %353 = vst [vmem:[#allocation2 + $0x120] sm:$0xf] %v303
        %354 = vst [vmem:[#allocation2 + $0x144] sm:$0xf] %v304
        %355 = vst [vmem:[#allocation2 + $0x168] sm:$0xf] %v306
        %356 = vst [vmem:[#allocation2 + $0x18c] sm:$0xf] %v307
        %357 = vst [vmem:[#allocation2 + $0x1b0] sm:$0xf] %v309
        %358 = vst [vmem:[#allocation2 + $0x1d4] sm:$0xf] %v310
        %359 = vst [vmem:[#allocation2 + $0x1f8] sm:$0xf] %v312
        %360 = vst [vmem:[#allocation2 + $0x21c] sm:$0xf] %v313
        %361 = vst [vmem:[#allocation2 + $0x240] sm:$0xf] %v315
        %362 = vst [vmem:[#allocation2 + $0x264] sm:$0xf] %v316
        %363 = vst [vmem:[#allocation2 + $0x288] sm:$0xf] %v318
        %364 = vst [vmem:[#allocation2 + $0x2ac] sm:$0xf] %v319
        %365 = vst [vmem:[#allocation2 + $0x2d0] sm:$0xf] %v321
        %366 = vst [vmem:[#allocation2 + $0x2f4] sm:$0xf] %v322
        %367 = vst [vmem:[#allocation2 + $0x318] sm:$0xf] %v324
        %368 = vst [vmem:[#allocation2 + $0x33c] sm:$0xf] %v325
        %369 = vst [vmem:[#allocation2 + $0x360] sm:$0xf] %v327
        %370 = vst [vmem:[#allocation2 + $0x384] sm:$0xf] %v328
        %371 = vst [vmem:[#allocation2 + $0x3a8] sm:$0xf] %v330
        %372 = vst [vmem:[#allocation2 + $0x3cc] sm:$0xf] %v331
        %373 = vst [vmem:[#allocation2 + $0x3f0] sm:$0xf] %v333
        %374 = vst [vmem:[#allocation2 + $0x414] sm:$0xf] %v334
        %375 = vst [vmem:[#allocation2 + $0x438] sm:$0xf] %v336
        %376 = vst [vmem:[#allocation2 + $0x45c] sm:$0xf] %v337
        %vm377 = vsmask.f32 3328
        %vm378 = vsmask.f32 7440
        %vm379 = vmor %vm377, %vm378
        %v381 = vshrl.u32 %v291, 16
        %v383 = vrot.slane %v381, 4
        %v384 = vshll.u32 %v291, 16
        %v386 = vrot.slane %v384, 5
        %v387 = vor.u32 %v383, %v386
        %v388 = vrot.slane %v387, 4
        %v390 = vshll.u32 %v292, 16
        %v392 = vrot.slane %v390, 5
        %v393 = vsel %vm379, %v388, %v392
        %v394 = vshrl.u32 %v292, 16
        %v396 = vrot.slane %v394, 4
        %v397 = vor.u32 %v396, %v392
        %v398 = vrot.slane %v397, 4
        %v400 = vshll.u32 %v293, 16
        %v402 = vrot.slane %v400, 5
        %v403 = vsel %vm379, %v398, %v402
        %v405 = vshrl.u32 %v294, 16
        %v407 = vrot.slane %v405, 4
        %v408 = vshll.u32 %v294, 16
        %v410 = vrot.slane %v408, 5
        %v411 = vor.u32 %v407, %v410
        %v412 = vrot.slane %v411, 4
        %v414 = vshll.u32 %v295, 16
        %v416 = vrot.slane %v414, 5
        %v417 = vsel %vm379, %v412, %v416
        %v418 = vshrl.u32 %v295, 16
        %v420 = vrot.slane %v418, 4
        %v421 = vor.u32 %v420, %v416
        %v422 = vrot.slane %v421, 4
        %v424 = vshll.u32 %v296, 16
        %v426 = vrot.slane %v424, 5
        %v427 = vsel %vm379, %v422, %v426
        %v429 = vshrl.u32 %v297, 16
        %v431 = vrot.slane %v429, 4
        %v432 = vshll.u32 %v297, 16
        %v434 = vrot.slane %v432, 5
        %v435 = vor.u32 %v431, %v434
        %v436 = vrot.slane %v435, 4
        %v438 = vshll.u32 %v298, 16
        %v440 = vrot.slane %v438, 5
        %v441 = vsel %vm379, %v436, %v440
        %v442 = vshrl.u32 %v298, 16
        %v444 = vrot.slane %v442, 4
        %v445 = vor.u32 %v444, %v440
        %v446 = vrot.slane %v445, 4
        %v448 = vshll.u32 %v299, 16
        %v450 = vrot.slane %v448, 5
        %v451 = vsel %vm379, %v446, %v450
        %v453 = vshrl.u32 %v300, 16
        %v455 = vrot.slane %v453, 4
        %v456 = vshll.u32 %v300, 16
        %v458 = vrot.slane %v456, 5
        %v459 = vor.u32 %v455, %v458
        %v460 = vrot.slane %v459, 4
        %v462 = vshll.u32 %v301, 16
        %v464 = vrot.slane %v462, 5
        %v465 = vsel %vm379, %v460, %v464
        %v466 = vshrl.u32 %v301, 16
        %v468 = vrot.slane %v466, 4
        %v469 = vor.u32 %v468, %v464
        %v470 = vrot.slane %v469, 4
        %v472 = vshll.u32 %v302, 16
        %v474 = vrot.slane %v472, 5
        %v475 = vsel %vm379, %v470, %v474
        %v477 = vshrl.u32 %v303, 16
        %v479 = vrot.slane %v477, 4
        %v480 = vshll.u32 %v303, 16
        %v482 = vrot.slane %v480, 5
        %v483 = vor.u32 %v479, %v482
        %v484 = vrot.slane %v483, 4
        %v486 = vshll.u32 %v304, 16
        %v488 = vrot.slane %v486, 5
        %v489 = vsel %vm379, %v484, %v488
        %v490 = vshrl.u32 %v304, 16
        %v492 = vrot.slane %v490, 4
        %v493 = vor.u32 %v492, %v488
        %v494 = vrot.slane %v493, 4
        %v496 = vshll.u32 %v305, 16
        %v498 = vrot.slane %v496, 5
        %v499 = vsel %vm379, %v494, %v498
        %v501 = vshrl.u32 %v306, 16
        %v503 = vrot.slane %v501, 4
        %v504 = vshll.u32 %v306, 16
        %v506 = vrot.slane %v504, 5
        %v507 = vor.u32 %v503, %v506
        %v508 = vrot.slane %v507, 4
        %v510 = vshll.u32 %v307, 16
        %v512 = vrot.slane %v510, 5
        %v513 = vsel %vm379, %v508, %v512
        %v514 = vshrl.u32 %v307, 16
        %v516 = vrot.slane %v514, 4
        %v517 = vor.u32 %v516, %v512
        %v518 = vrot.slane %v517, 4
        %v520 = vshll.u32 %v308, 16
        %v522 = vrot.slane %v520, 5
        %v523 = vsel %vm379, %v518, %v522
        %v525 = vshrl.u32 %v309, 16
        %v527 = vrot.slane %v525, 4
        %v528 = vshll.u32 %v309, 16
        %v530 = vrot.slane %v528, 5
        %v531 = vor.u32 %v527, %v530
        %v532 = vrot.slane %v531, 4
        %v534 = vshll.u32 %v310, 16
        %v536 = vrot.slane %v534, 5
        %v537 = vsel %vm379, %v532, %v536
        %v538 = vshrl.u32 %v310, 16
        %v540 = vrot.slane %v538, 4
        %v541 = vor.u32 %v540, %v536
        %v542 = vrot.slane %v541, 4
        %v544 = vshll.u32 %v311, 16
        %v546 = vrot.slane %v544, 5
        %v547 = vsel %vm379, %v542, %v546
        %v549 = vshrl.u32 %v312, 16
        %v551 = vrot.slane %v549, 4
        %v552 = vshll.u32 %v312, 16
        %v554 = vrot.slane %v552, 5
        %v555 = vor.u32 %v551, %v554
        %v556 = vrot.slane %v555, 4
        %v558 = vshll.u32 %v313, 16
        %v560 = vrot.slane %v558, 5
        %v561 = vsel %vm379, %v556, %v560
        %v562 = vshrl.u32 %v313, 16
        %v564 = vrot.slane %v562, 4
        %v565 = vor.u32 %v564, %v560
        %v566 = vrot.slane %v565, 4
        %v568 = vshll.u32 %v314, 16
        %v570 = vrot.slane %v568, 5
        %v571 = vsel %vm379, %v566, %v570
        %v573 = vshrl.u32 %v315, 16
        %v575 = vrot.slane %v573, 4
        %v576 = vshll.u32 %v315, 16
        %v578 = vrot.slane %v576, 5
        %v579 = vor.u32 %v575, %v578
        %v580 = vrot.slane %v579, 4
        %v582 = vshll.u32 %v316, 16
        %v584 = vrot.slane %v582, 5
        %v585 = vsel %vm379, %v580, %v584
        %v586 = vshrl.u32 %v316, 16
        %v588 = vrot.slane %v586, 4
        %v589 = vor.u32 %v588, %v584
        %v590 = vrot.slane %v589, 4
        %v592 = vshll.u32 %v317, 16
        %v594 = vrot.slane %v592, 5
        %v595 = vsel %vm379, %v590, %v594
        %v597 = vshrl.u32 %v318, 16
        %v599 = vrot.slane %v597, 4
        %v600 = vshll.u32 %v318, 16
        %v602 = vrot.slane %v600, 5
        %v603 = vor.u32 %v599, %v602
        %v604 = vrot.slane %v603, 4
        %v606 = vshll.u32 %v319, 16
        %v608 = vrot.slane %v606, 5
        %v609 = vsel %vm379, %v604, %v608
        %v610 = vshrl.u32 %v319, 16
        %v612 = vrot.slane %v610, 4
        %v613 = vor.u32 %v612, %v608
        %v614 = vrot.slane %v613, 4
        %v616 = vshll.u32 %v320, 16
        %v618 = vrot.slane %v616, 5
        %v619 = vsel %vm379, %v614, %v618
        %v621 = vshrl.u32 %v321, 16
        %v623 = vrot.slane %v621, 4
        %v624 = vshll.u32 %v321, 16
        %v626 = vrot.slane %v624, 5
        %v627 = vor.u32 %v623, %v626
        %v628 = vrot.slane %v627, 4
        %v630 = vshll.u32 %v322, 16
        %v632 = vrot.slane %v630, 5
        %v633 = vsel %vm379, %v628, %v632
        %v634 = vshrl.u32 %v322, 16
        %v636 = vrot.slane %v634, 4
        %v637 = vor.u32 %v636, %v632
        %v638 = vrot.slane %v637, 4
        %v640 = vshll.u32 %v323, 16
        %v642 = vrot.slane %v640, 5
        %v643 = vsel %vm379, %v638, %v642
        %v645 = vshrl.u32 %v324, 16
        %v647 = vrot.slane %v645, 4
        %v648 = vshll.u32 %v324, 16
        %v650 = vrot.slane %v648, 5
        %v651 = vor.u32 %v647, %v650
        %v652 = vrot.slane %v651, 4
        %v654 = vshll.u32 %v325, 16
        %v656 = vrot.slane %v654, 5
        %v657 = vsel %vm379, %v652, %v656
        %v658 = vshrl.u32 %v325, 16
        %v660 = vrot.slane %v658, 4
        %v661 = vor.u32 %v660, %v656
        %v662 = vrot.slane %v661, 4
        %v664 = vshll.u32 %v326, 16
        %v666 = vrot.slane %v664, 5
        %v667 = vsel %vm379, %v662, %v666
        %v669 = vshrl.u32 %v327, 16
        %v671 = vrot.slane %v669, 4
        %v672 = vshll.u32 %v327, 16
        %v674 = vrot.slane %v672, 5
        %v675 = vor.u32 %v671, %v674
        %v676 = vrot.slane %v675, 4
        %v678 = vshll.u32 %v328, 16
        %v680 = vrot.slane %v678, 5
        %v681 = vsel %vm379, %v676, %v680
        %v682 = vshrl.u32 %v328, 16
        %v684 = vrot.slane %v682, 4
        %v685 = vor.u32 %v684, %v680
        %v686 = vrot.slane %v685, 4
        %v688 = vshll.u32 %v329, 16
        %v690 = vrot.slane %v688, 5
        %v691 = vsel %vm379, %v686, %v690
        %v693 = vshrl.u32 %v330, 16
        %v695 = vrot.slane %v693, 4
        %v696 = vshll.u32 %v330, 16
        %v698 = vrot.slane %v696, 5
        %v699 = vor.u32 %v695, %v698
        %v700 = vrot.slane %v699, 4
        %v702 = vshll.u32 %v331, 16
        %v704 = vrot.slane %v702, 5
        %v705 = vsel %vm379, %v700, %v704
        %v706 = vshrl.u32 %v331, 16
        %v708 = vrot.slane %v706, 4
        %v709 = vor.u32 %v708, %v704
        %v710 = vrot.slane %v709, 4
        %v712 = vshll.u32 %v332, 16
        %v714 = vrot.slane %v712, 5
        %v715 = vsel %vm379, %v710, %v714
        %v717 = vshrl.u32 %v333, 16
        %v719 = vrot.slane %v717, 4
        %v720 = vshll.u32 %v333, 16
        %v722 = vrot.slane %v720, 5
        %v723 = vor.u32 %v719, %v722
        %v724 = vrot.slane %v723, 4
        %v726 = vshll.u32 %v334, 16
        %v728 = vrot.slane %v726, 5
        %v729 = vsel %vm379, %v724, %v728
        %v730 = vshrl.u32 %v334, 16
        %v732 = vrot.slane %v730, 4
        %v733 = vor.u32 %v732, %v728
        %v734 = vrot.slane %v733, 4
        %v736 = vshll.u32 %v335, 16
        %v738 = vrot.slane %v736, 5
        %v739 = vsel %vm379, %v734, %v738
        %v741 = vshrl.u32 %v336, 16
        %v743 = vrot.slane %v741, 4
        %v744 = vshll.u32 %v336, 16
        %v746 = vrot.slane %v744, 5
        %v747 = vor.u32 %v743, %v746
        %v748 = vrot.slane %v747, 4
        %v750 = vshll.u32 %v337, 16
        %v752 = vrot.slane %v750, 5
        %v753 = vsel %vm379, %v748, %v752
        %v754 = vshrl.u32 %v337, 16
        %v756 = vrot.slane %v754, 4
        %v757 = vor.u32 %v756, %v752
        %v758 = vrot.slane %v757, 4
        %v760 = vshll.u32 %v338, 16
        %v762 = vrot.slane %v760, 5
        %v763 = vsel %vm379, %v758, %v762
        %796 = vst [vmem:[#allocation2 + $0x4] sm:$0xf] %v393
        %797 = vst [vmem:[#allocation2 + $0x28] sm:$0xf] %v403
        %798 = vst [vmem:[#allocation2 + $0x4c] sm:$0xf] %v417
        %799 = vst [vmem:[#allocation2 + $0x70] sm:$0xf] %v427
        %800 = vst [vmem:[#allocation2 + $0x94] sm:$0xf] %v441
        %801 = vst [vmem:[#allocation2 + $0xb8] sm:$0xf] %v451
        %802 = vst [vmem:[#allocation2 + $0xdc] sm:$0xf] %v465
        %803 = vst [vmem:[#allocation2 + $0x100] sm:$0xf] %v475
        %804 = vst [vmem:[#allocation2 + $0x124] sm:$0xf] %v489
        %805 = vst [vmem:[#allocation2 + $0x148] sm:$0xf] %v499
        %806 = vst [vmem:[#allocation2 + $0x16c] sm:$0xf] %v513
        %807 = vst [vmem:[#allocation2 + $0x190] sm:$0xf] %v523
        %808 = vst [vmem:[#allocation2 + $0x1b4] sm:$0xf] %v537
        %809 = vst [vmem:[#allocation2 + $0x1d8] sm:$0xf] %v547
        %810 = vst [vmem:[#allocation2 + $0x1fc] sm:$0xf] %v561
        %811 = vst [vmem:[#allocation2 + $0x220] sm:$0xf] %v571
        %812 = vst [vmem:[#allocation2 + $0x244] sm:$0xf] %v585
        %813 = vst [vmem:[#allocation2 + $0x268] sm:$0xf] %v595
        %814 = vst [vmem:[#allocation2 + $0x28c] sm:$0xf] %v609
        %815 = vst [vmem:[#allocation2 + $0x2b0] sm:$0xf] %v619
        %816 = vst [vmem:[#allocation2 + $0x2d4] sm:$0xf] %v633
        %817 = vst [vmem:[#allocation2 + $0x2f8] sm:$0xf] %v643
        %818 = vst [vmem:[#allocation2 + $0x31c] sm:$0xf] %v657
        %819 = vst [vmem:[#allocation2 + $0x340] sm:$0xf] %v667
        %820 = vst [vmem:[#allocation2 + $0x364] sm:$0xf] %v681
        %821 = vst [vmem:[#allocation2 + $0x388] sm:$0xf] %v691
        %822 = vst [vmem:[#allocation2 + $0x3ac] sm:$0xf] %v705
        %823 = vst [vmem:[#allocation2 + $0x3d0] sm:$0xf] %v715
        %824 = vst [vmem:[#allocation2 + $0x3f4] sm:$0xf] %v729
        %825 = vst [vmem:[#allocation2 + $0x418] sm:$0xf] %v739
        %826 = vst [vmem:[#allocation2 + $0x43c] sm:$0xf] %v753
        %827 = vst [vmem:[#allocation2 + $0x460] sm:$0xf] %v763
        %vm876 = vcmask 1042432
        %vm877 = vcmask 1046532
        %vm878 = vmor %vm876, %vm877
        %v879 = vrot.slane %v291, 5
        %v880 = vrot.slane %v879, 4
        %v881 = vrot.slane %v292, 5
        %v882 = vsel %vm878, %v880, %v881
        %v883 = vrot.slane %v881, 4
        %v884 = vrot.slane %v293, 5
        %v885 = vsel %vm878, %v883, %v884
        %v886 = vrot.slane %v294, 5
        %v887 = vrot.slane %v886, 4
        %v888 = vrot.slane %v295, 5
        %v889 = vsel %vm878, %v887, %v888
        %v890 = vrot.slane %v888, 4
        %v891 = vrot.slane %v296, 5
        %v892 = vsel %vm878, %v890, %v891
        %v893 = vrot.slane %v297, 5
        %v894 = vrot.slane %v893, 4
        %v895 = vrot.slane %v298, 5
        %v896 = vsel %vm878, %v894, %v895
        %v897 = vrot.slane %v895, 4
        %v898 = vrot.slane %v299, 5
        %v899 = vsel %vm878, %v897, %v898
        %v900 = vrot.slane %v300, 5
        %v901 = vrot.slane %v900, 4
        %v902 = vrot.slane %v301, 5
        %v903 = vsel %vm878, %v901, %v902
        %v904 = vrot.slane %v902, 4
        %v905 = vrot.slane %v302, 5
        %v906 = vsel %vm878, %v904, %v905
        %v907 = vrot.slane %v303, 5
        %v908 = vrot.slane %v907, 4
        %v909 = vrot.slane %v304, 5
        %v910 = vsel %vm878, %v908, %v909
        %v911 = vrot.slane %v909, 4
        %v912 = vrot.slane %v305, 5
        %v913 = vsel %vm878, %v911, %v912
        %v914 = vrot.slane %v306, 5
        %v915 = vrot.slane %v914, 4
        %v916 = vrot.slane %v307, 5
        %v917 = vsel %vm878, %v915, %v916
        %v918 = vrot.slane %v916, 4
        %v919 = vrot.slane %v308, 5
        %v920 = vsel %vm878, %v918, %v919
        %v921 = vrot.slane %v309, 5
        %v922 = vrot.slane %v921, 4
        %v923 = vrot.slane %v310, 5
        %v924 = vsel %vm878, %v922, %v923
        %v925 = vrot.slane %v923, 4
        %v926 = vrot.slane %v311, 5
        %v927 = vsel %vm878, %v925, %v926
        %v928 = vrot.slane %v312, 5
        %v929 = vrot.slane %v928, 4
        %v930 = vrot.slane %v313, 5
        %v931 = vsel %vm878, %v929, %v930
        %v932 = vrot.slane %v930, 4
        %v933 = vrot.slane %v314, 5
        %v934 = vsel %vm878, %v932, %v933
        %v935 = vrot.slane %v315, 5
        %v936 = vrot.slane %v935, 4
        %v937 = vrot.slane %v316, 5
        %v938 = vsel %vm878, %v936, %v937
        %v939 = vrot.slane %v937, 4
        %v940 = vrot.slane %v317, 5
        %v941 = vsel %vm878, %v939, %v940
        %v942 = vrot.slane %v318, 5
        %v943 = vrot.slane %v942, 4
        %v944 = vrot.slane %v319, 5
        %v945 = vsel %vm878, %v943, %v944
        %v946 = vrot.slane %v944, 4
        %v947 = vrot.slane %v320, 5
        %v948 = vsel %vm878, %v946, %v947
        %v949 = vrot.slane %v321, 5
        %v950 = vrot.slane %v949, 4
        %v951 = vrot.slane %v322, 5
        %v952 = vsel %vm878, %v950, %v951
        %v953 = vrot.slane %v951, 4
        %v954 = vrot.slane %v323, 5
        %v955 = vsel %vm878, %v953, %v954
        %v956 = vrot.slane %v324, 5
        %v957 = vrot.slane %v956, 4
        %v958 = vrot.slane %v325, 5
        %v959 = vsel %vm878, %v957, %v958
        %v960 = vrot.slane %v958, 4
        %v961 = vrot.slane %v326, 5
        %v962 = vsel %vm878, %v960, %v961
        %v963 = vrot.slane %v327, 5
        %v964 = vrot.slane %v963, 4
        %v965 = vrot.slane %v328, 5
        %v966 = vsel %vm878, %v964, %v965
        %v967 = vrot.slane %v965, 4
        %v968 = vrot.slane %v329, 5
        %v969 = vsel %vm878, %v967, %v968
        %v970 = vrot.slane %v330, 5
        %v971 = vrot.slane %v970, 4
        %v972 = vrot.slane %v331, 5
        %v973 = vsel %vm878, %v971, %v972
        %v974 = vrot.slane %v972, 4
        %v975 = vrot.slane %v332, 5
        %v976 = vsel %vm878, %v974, %v975
        %v977 = vrot.slane %v333, 5
        %v978 = vrot.slane %v977, 4
        %v979 = vrot.slane %v334, 5
        %v980 = vsel %vm878, %v978, %v979
        %v981 = vrot.slane %v979, 4
        %v982 = vrot.slane %v335, 5
        %v983 = vsel %vm878, %v981, %v982
        %v984 = vrot.slane %v336, 5
        %v985 = vrot.slane %v984, 4
        %v986 = vrot.slane %v337, 5
        %v987 = vsel %vm878, %v985, %v986
        %v988 = vrot.slane %v986, 4
        %v989 = vrot.slane %v338, 5
        %v990 = vsel %vm878, %v988, %v989
        %1023 = vst [vmem:[#allocation2 + $0x8] sm:$0xf] %v882
        %1024 = vst [vmem:[#allocation2 + $0x2c] sm:$0xf] %v885
        %1025 = vst [vmem:[#allocation2 + $0x50] sm:$0xf] %v889
        %1026 = vst [vmem:[#allocation2 + $0x74] sm:$0xf] %v892
        %1027 = vst [vmem:[#allocation2 + $0x98] sm:$0xf] %v896
        %1028 = vst [vmem:[#allocation2 + $0xbc] sm:$0xf] %v899
        %1029 = vst [vmem:[#allocation2 + $0xe0] sm:$0xf] %v903
        %1030 = vst [vmem:[#allocation2 + $0x104] sm:$0xf] %v906
        %1031 = vst [vmem:[#allocation2 + $0x128] sm:$0xf] %v910
        %1032 = vst [vmem:[#allocation2 + $0x14c] sm:$0xf] %v913
        %1033 = vst [vmem:[#allocation2 + $0x170] sm:$0xf] %v917
        %1034 = vst [vmem:[#allocation2 + $0x194] sm:$0xf] %v920
        %1035 = vst [vmem:[#allocation2 + $0x1b8] sm:$0xf] %v924
        %1036 = vst [vmem:[#allocation2 + $0x1dc] sm:$0xf] %v927
        %1037 = vst [vmem:[#allocation2 + $0x200] sm:$0xf] %v931
        %1038 = vst [vmem:[#allocation2 + $0x224] sm:$0xf] %v934
        %1039 = vst [vmem:[#allocation2 + $0x248] sm:$0xf] %v938
        %1040 = vst [vmem:[#allocation2 + $0x26c] sm:$0xf] %v941
        %1041 = vst [vmem:[#allocation2 + $0x290] sm:$0xf] %v945
        %1042 = vst [vmem:[#allocation2 + $0x2b4] sm:$0xf] %v948
        %1043 = vst [vmem:[#allocation2 + $0x2d8] sm:$0xf] %v952
        %1044 = vst [vmem:[#allocation2 + $0x2fc] sm:$0xf] %v955
        %1045 = vst [vmem:[#allocation2 + $0x320] sm:$0xf] %v959
        %1046 = vst [vmem:[#allocation2 + $0x344] sm:$0xf] %v962
        %1047 = vst [vmem:[#allocation2 + $0x368] sm:$0xf] %v966
        %1048 = vst [vmem:[#allocation2 + $0x38c] sm:$0xf] %v969
        %1049 = vst [vmem:[#allocation2 + $0x3b0] sm:$0xf] %v973
        %1050 = vst [vmem:[#allocation2 + $0x3d4] sm:$0xf] %v976
        %1051 = vst [vmem:[#allocation2 + $0x3f8] sm:$0xf] %v980
        %1052 = vst [vmem:[#allocation2 + $0x41c] sm:$0xf] %v983
        %1053 = vst [vmem:[#allocation2 + $0x440] sm:$0xf] %v987
        %1054 = vst [vmem:[#allocation2 + $0x464] sm:$0xf] %v990
        %1055 = vst [vmem:[#allocation2 + $0xc] sm:$0xf] %v294
        %1056 = vst [vmem:[#allocation2 + $0x30] sm:$0xf] %v295
        %1057 = vst [vmem:[#allocation2 + $0x54] sm:$0xf] %v297
        %1058 = vst [vmem:[#allocation2 + $0x78] sm:$0xf] %v298
        %1059 = vst [vmem:[#allocation2 + $0x9c] sm:$0xf] %v300
        %1060 = vst [vmem:[#allocation2 + $0xc0] sm:$0xf] %v301
        %1061 = vst [vmem:[#allocation2 + $0xe4] sm:$0xf] %v303
        %1062 = vst [vmem:[#allocation2 + $0x108] sm:$0xf] %v304
        %1063 = vst [vmem:[#allocation2 + $0x12c] sm:$0xf] %v306
        %1064 = vst [vmem:[#allocation2 + $0x150] sm:$0xf] %v307
        %1065 = vst [vmem:[#allocation2 + $0x174] sm:$0xf] %v309
        %1066 = vst [vmem:[#allocation2 + $0x198] sm:$0xf] %v310
        %1067 = vst [vmem:[#allocation2 + $0x1bc] sm:$0xf] %v312
        %1068 = vst [vmem:[#allocation2 + $0x1e0] sm:$0xf] %v313
        %1069 = vst [vmem:[#allocation2 + $0x204] sm:$0xf] %v315
        %1070 = vst [vmem:[#allocation2 + $0x228] sm:$0xf] %v316
        %1071 = vst [vmem:[#allocation2 + $0x24c] sm:$0xf] %v318
        %1072 = vst [vmem:[#allocation2 + $0x270] sm:$0xf] %v319
        %1073 = vst [vmem:[#allocation2 + $0x294] sm:$0xf] %v321
        %1074 = vst [vmem:[#allocation2 + $0x2b8] sm:$0xf] %v322
        %1075 = vst [vmem:[#allocation2 + $0x2dc] sm:$0xf] %v324
        %1076 = vst [vmem:[#allocation2 + $0x300] sm:$0xf] %v325
        %1077 = vst [vmem:[#allocation2 + $0x324] sm:$0xf] %v327
        %1078 = vst [vmem:[#allocation2 + $0x348] sm:$0xf] %v328
        %1079 = vst [vmem:[#allocation2 + $0x36c] sm:$0xf] %v330
        %1080 = vst [vmem:[#allocation2 + $0x390] sm:$0xf] %v331
        %1081 = vst [vmem:[#allocation2 + $0x3b4] sm:$0xf] %v333
        %1082 = vst [vmem:[#allocation2 + $0x3d8] sm:$0xf] %v334
        %1083 = vst [vmem:[#allocation2 + $0x3fc] sm:$0xf] %v336
        %1084 = vst [vmem:[#allocation2 + $0x420] sm:$0xf] %v337
        %1085 = vst [vmem:[#allocation2 + $0x444] sm:$0xf] %v339
        %1086 = vst [vmem:[#allocation2 + $0x468] sm:$0xf] %v340
        %v1088 = vshrl.u32 %v339, 16
        %v1090 = vrot.slane %v1088, 4
        %v1091 = vshll.u32 %v339, 16
        %v1093 = vrot.slane %v1091, 5
        %v1094 = vor.u32 %v1090, %v1093
        %v1095 = vrot.slane %v1094, 4
        %v1097 = vshll.u32 %v340, 16
        %v1099 = vrot.slane %v1097, 5
        %v1100 = vsel %vm379, %v1095, %v1099
        %v1101 = vshrl.u32 %v340, 16
        %v1103 = vrot.slane %v1101, 4
        %v1104 = vor.u32 %v1103, %v1099
        %v1105 = vrot.slane %v1104, 4
        %v1107 = vshll.u32 %v341, 16
        %v1109 = vrot.slane %v1107, 5
        %v1110 = vsel %vm379, %v1105, %v1109
        %1113 = vst [vmem:[#allocation2 + $0x10] sm:$0xf] %v417
        %1114 = vst [vmem:[#allocation2 + $0x34] sm:$0xf] %v427
        %1115 = vst [vmem:[#allocation2 + $0x58] sm:$0xf] %v441
        %1116 = vst [vmem:[#allocation2 + $0x7c] sm:$0xf] %v451
        %1117 = vst [vmem:[#allocation2 + $0xa0] sm:$0xf] %v465
        %1118 = vst [vmem:[#allocation2 + $0xc4] sm:$0xf] %v475
        %1119 = vst [vmem:[#allocation2 + $0xe8] sm:$0xf] %v489
        %1120 = vst [vmem:[#allocation2 + $0x10c] sm:$0xf] %v499
        %1121 = vst [vmem:[#allocation2 + $0x130] sm:$0xf] %v513
        %1122 = vst [vmem:[#allocation2 + $0x154] sm:$0xf] %v523
        %1123 = vst [vmem:[#allocation2 + $0x178] sm:$0xf] %v537
        %1124 = vst [vmem:[#allocation2 + $0x19c] sm:$0xf] %v547
        %1125 = vst [vmem:[#allocation2 + $0x1c0] sm:$0xf] %v561
        %1126 = vst [vmem:[#allocation2 + $0x1e4] sm:$0xf] %v571
        %1127 = vst [vmem:[#allocation2 + $0x208] sm:$0xf] %v585
        %1128 = vst [vmem:[#allocation2 + $0x22c] sm:$0xf] %v595
        %1129 = vst [vmem:[#allocation2 + $0x250] sm:$0xf] %v609
        %1130 = vst [vmem:[#allocation2 + $0x274] sm:$0xf] %v619
        %1131 = vst [vmem:[#allocation2 + $0x298] sm:$0xf] %v633
        %1132 = vst [vmem:[#allocation2 + $0x2bc] sm:$0xf] %v643
        %1133 = vst [vmem:[#allocation2 + $0x2e0] sm:$0xf] %v657
        %1134 = vst [vmem:[#allocation2 + $0x304] sm:$0xf] %v667
        %1135 = vst [vmem:[#allocation2 + $0x328] sm:$0xf] %v681
        %1136 = vst [vmem:[#allocation2 + $0x34c] sm:$0xf] %v691
        %1137 = vst [vmem:[#allocation2 + $0x370] sm:$0xf] %v705
        %1138 = vst [vmem:[#allocation2 + $0x394] sm:$0xf] %v715
        %1139 = vst [vmem:[#allocation2 + $0x3b8] sm:$0xf] %v729
        %1140 = vst [vmem:[#allocation2 + $0x3dc] sm:$0xf] %v739
        %1141 = vst [vmem:[#allocation2 + $0x400] sm:$0xf] %v753
        %1142 = vst [vmem:[#allocation2 + $0x424] sm:$0xf] %v763
        %1143 = vst [vmem:[#allocation2 + $0x448] sm:$0xf] %v1100
        %1144 = vst [vmem:[#allocation2 + $0x46c] sm:$0xf] %v1110
        %v1148 = vrot.slane %v339, 5
        %v1149 = vrot.slane %v1148, 4
        %v1150 = vrot.slane %v340, 5
        %v1151 = vsel %vm878, %v1149, %v1150
        %v1152 = vrot.slane %v1150, 4
        %v1153 = vrot.slane %v341, 5
        %v1154 = vsel %vm878, %v1152, %v1153
        %1157 = vst [vmem:[#allocation2 + $0x14] sm:$0xf] %v889
        %1158 = vst [vmem:[#allocation2 + $0x38] sm:$0xf] %v892
        %1159 = vst [vmem:[#allocation2 + $0x5c] sm:$0xf] %v896
        %1160 = vst [vmem:[#allocation2 + $0x80] sm:$0xf] %v899
        %1161 = vst [vmem:[#allocation2 + $0xa4] sm:$0xf] %v903
        %1162 = vst [vmem:[#allocation2 + $0xc8] sm:$0xf] %v906
        %1163 = vst [vmem:[#allocation2 + $0xec] sm:$0xf] %v910
        %1164 = vst [vmem:[#allocation2 + $0x110] sm:$0xf] %v913
        %1165 = vst [vmem:[#allocation2 + $0x134] sm:$0xf] %v917
        %1166 = vst [vmem:[#allocation2 + $0x158] sm:$0xf] %v920
        %1167 = vst [vmem:[#allocation2 + $0x17c] sm:$0xf] %v924
        %1168 = vst [vmem:[#allocation2 + $0x1a0] sm:$0xf] %v927
        %1169 = vst [vmem:[#allocation2 + $0x1c4] sm:$0xf] %v931
        %1170 = vst [vmem:[#allocation2 + $0x1e8] sm:$0xf] %v934
        %1171 = vst [vmem:[#allocation2 + $0x20c] sm:$0xf] %v938
        %1172 = vst [vmem:[#allocation2 + $0x230] sm:$0xf] %v941
        %1173 = vst [vmem:[#allocation2 + $0x254] sm:$0xf] %v945
        %1174 = vst [vmem:[#allocation2 + $0x278] sm:$0xf] %v948
        %1175 = vst [vmem:[#allocation2 + $0x29c] sm:$0xf] %v952
        %1176 = vst [vmem:[#allocation2 + $0x2c0] sm:$0xf] %v955
        %1177 = vst [vmem:[#allocation2 + $0x2e4] sm:$0xf] %v959
        %1178 = vst [vmem:[#allocation2 + $0x308] sm:$0xf] %v962
        %1179 = vst [vmem:[#allocation2 + $0x32c] sm:$0xf] %v966
        %1180 = vst [vmem:[#allocation2 + $0x350] sm:$0xf] %v969
        %1181 = vst [vmem:[#allocation2 + $0x374] sm:$0xf] %v973
        %1182 = vst [vmem:[#allocation2 + $0x398] sm:$0xf] %v976
        %1183 = vst [vmem:[#allocation2 + $0x3bc] sm:$0xf] %v980
        %1184 = vst [vmem:[#allocation2 + $0x3e0] sm:$0xf] %v983
        %1185 = vst [vmem:[#allocation2 + $0x404] sm:$0xf] %v987
        %1186 = vst [vmem:[#allocation2 + $0x428] sm:$0xf] %v990
        %1187 = vst [vmem:[#allocation2 + $0x44c] sm:$0xf] %v1151
        %1188 = vst [vmem:[#allocation2 + $0x470] sm:$0xf] %v1154
        %1189 = vst [vmem:[#allocation2 + $0x18] sm:$0xf] %v297
        %1190 = vst [vmem:[#allocation2 + $0x3c] sm:$0xf] %v298
        %1191 = vst [vmem:[#allocation2 + $0x60] sm:$0xf] %v300
        %1192 = vst [vmem:[#allocation2 + $0x84] sm:$0xf] %v301
        %1193 = vst [vmem:[#allocation2 + $0xa8] sm:$0xf] %v303
        %1194 = vst [vmem:[#allocation2 + $0xcc] sm:$0xf] %v304
        %1195 = vst [vmem:[#allocation2 + $0xf0] sm:$0xf] %v306
        %1196 = vst [vmem:[#allocation2 + $0x114] sm:$0xf] %v307
        %1197 = vst [vmem:[#allocation2 + $0x138] sm:$0xf] %v309
        %1198 = vst [vmem:[#allocation2 + $0x15c] sm:$0xf] %v310
        %1199 = vst [vmem:[#allocation2 + $0x180] sm:$0xf] %v312
        %1200 = vst [vmem:[#allocation2 + $0x1a4] sm:$0xf] %v313
        %1201 = vst [vmem:[#allocation2 + $0x1c8] sm:$0xf] %v315
        %1202 = vst [vmem:[#allocation2 + $0x1ec] sm:$0xf] %v316
        %1203 = vst [vmem:[#allocation2 + $0x210] sm:$0xf] %v318
        %1204 = vst [vmem:[#allocation2 + $0x234] sm:$0xf] %v319
        %1205 = vst [vmem:[#allocation2 + $0x258] sm:$0xf] %v321
        %1206 = vst [vmem:[#allocation2 + $0x27c] sm:$0xf] %v322
        %1207 = vst [vmem:[#allocation2 + $0x2a0] sm:$0xf] %v324
        %1208 = vst [vmem:[#allocation2 + $0x2c4] sm:$0xf] %v325
        %1209 = vst [vmem:[#allocation2 + $0x2e8] sm:$0xf] %v327
        %1210 = vst [vmem:[#allocation2 + $0x30c] sm:$0xf] %v328
        %1211 = vst [vmem:[#allocation2 + $0x330] sm:$0xf] %v330
        %1212 = vst [vmem:[#allocation2 + $0x354] sm:$0xf] %v331
        %1213 = vst [vmem:[#allocation2 + $0x378] sm:$0xf] %v333
        %1214 = vst [vmem:[#allocation2 + $0x39c] sm:$0xf] %v334
        %1215 = vst [vmem:[#allocation2 + $0x3c0] sm:$0xf] %v336
        %1216 = vst [vmem:[#allocation2 + $0x3e4] sm:$0xf] %v337
        %1217 = vst [vmem:[#allocation2 + $0x408] sm:$0xf] %v339
        %1218 = vst [vmem:[#allocation2 + $0x42c] sm:$0xf] %v340
        %1219 = vst [vmem:[#allocation2 + $0x450] sm:$0xf] %v342
        %1220 = vst [vmem:[#allocation2 + $0x474] sm:$0xf] %v343
        %v1222 = vshrl.u32 %v342, 16
        %v1224 = vrot.slane %v1222, 4
        %v1225 = vshll.u32 %v342, 16
        %v1227 = vrot.slane %v1225, 5
        %v1228 = vor.u32 %v1224, %v1227
        %v1229 = vrot.slane %v1228, 4
        %v1231 = vshll.u32 %v343, 16
        %v1233 = vrot.slane %v1231, 5
        %v1234 = vsel %vm379, %v1229, %v1233
        %v1235 = vshrl.u32 %v343, 16
        %v1237 = vrot.slane %v1235, 4
        %v1238 = vor.u32 %v1237, %v1233
        %v1239 = vrot.slane %v1238, 4
        %v1241 = vshll.u32 %v344, 16
        %v1243 = vrot.slane %v1241, 5
        %v1244 = vsel %vm379, %v1239, %v1243
        %1247 = vst [vmem:[#allocation2 + $0x1c] sm:$0xf] %v441
        %1248 = vst [vmem:[#allocation2 + $0x40] sm:$0xf] %v451
        %1249 = vst [vmem:[#allocation2 + $0x64] sm:$0xf] %v465
        %1250 = vst [vmem:[#allocation2 + $0x88] sm:$0xf] %v475
        %1251 = vst [vmem:[#allocation2 + $0xac] sm:$0xf] %v489
        %1252 = vst [vmem:[#allocation2 + $0xd0] sm:$0xf] %v499
        %1253 = vst [vmem:[#allocation2 + $0xf4] sm:$0xf] %v513
        %1254 = vst [vmem:[#allocation2 + $0x118] sm:$0xf] %v523
        %1255 = vst [vmem:[#allocation2 + $0x13c] sm:$0xf] %v537
        %1256 = vst [vmem:[#allocation2 + $0x160] sm:$0xf] %v547
        %1257 = vst [vmem:[#allocation2 + $0x184] sm:$0xf] %v561
        %1258 = vst [vmem:[#allocation2 + $0x1a8] sm:$0xf] %v571
        %1259 = vst [vmem:[#allocation2 + $0x1cc] sm:$0xf] %v585
        %1260 = vst [vmem:[#allocation2 + $0x1f0] sm:$0xf] %v595
        %1261 = vst [vmem:[#allocation2 + $0x214] sm:$0xf] %v609
        %1262 = vst [vmem:[#allocation2 + $0x238] sm:$0xf] %v619
        %1263 = vst [vmem:[#allocation2 + $0x25c] sm:$0xf] %v633
        %1264 = vst [vmem:[#allocation2 + $0x280] sm:$0xf] %v643
        %1265 = vst [vmem:[#allocation2 + $0x2a4] sm:$0xf] %v657
        %1266 = vst [vmem:[#allocation2 + $0x2c8] sm:$0xf] %v667
        %1267 = vst [vmem:[#allocation2 + $0x2ec] sm:$0xf] %v681
        %1268 = vst [vmem:[#allocation2 + $0x310] sm:$0xf] %v691
        %1269 = vst [vmem:[#allocation2 + $0x334] sm:$0xf] %v705
        %1270 = vst [vmem:[#allocation2 + $0x358] sm:$0xf] %v715
        %1271 = vst [vmem:[#allocation2 + $0x37c] sm:$0xf] %v729
        %1272 = vst [vmem:[#allocation2 + $0x3a0] sm:$0xf] %v739
        %1273 = vst [vmem:[#allocation2 + $0x3c4] sm:$0xf] %v753
        %1274 = vst [vmem:[#allocation2 + $0x3e8] sm:$0xf] %v763
        %1275 = vst [vmem:[#allocation2 + $0x40c] sm:$0xf] %v1100
        %1276 = vst [vmem:[#allocation2 + $0x430] sm:$0xf] %v1110
        %1277 = vst [vmem:[#allocation2 + $0x454] sm:$0xf] %v1234
        %1278 = vst [vmem:[#allocation2 + $0x478] sm:$0xf] %v1244
        %v1282 = vrot.slane %v342, 5
        %v1283 = vrot.slane %v1282, 4
        %v1284 = vrot.slane %v343, 5
        %v1285 = vsel %vm878, %v1283, %v1284
        %v1286 = vrot.slane %v1284, 4
        %v1287 = vrot.slane %v344, 5
        %v1288 = vsel %vm878, %v1286, %v1287
        %1291 = vst [vmem:[#allocation2 + $0x20] sm:$0xf] %v896
        %1292 = vst [vmem:[#allocation2 + $0x44] sm:$0xf] %v899
        %1293 = vst [vmem:[#allocation2 + $0x68] sm:$0xf] %v903
        %1294 = vst [vmem:[#allocation2 + $0x8c] sm:$0xf] %v906
        %1295 = vst [vmem:[#allocation2 + $0xb0] sm:$0xf] %v910
        %1296 = vst [vmem:[#allocation2 + $0xd4] sm:$0xf] %v913
        %1297 = vst [vmem:[#allocation2 + $0xf8] sm:$0xf] %v917
        %1298 = vst [vmem:[#allocation2 + $0x11c] sm:$0xf] %v920
        %1299 = vst [vmem:[#allocation2 + $0x140] sm:$0xf] %v924
        %1300 = vst [vmem:[#allocation2 + $0x164] sm:$0xf] %v927
        %1301 = vst [vmem:[#allocation2 + $0x188] sm:$0xf] %v931
        %1302 = vst [vmem:[#allocation2 + $0x1ac] sm:$0xf] %v934
        %1303 = vst [vmem:[#allocation2 + $0x1d0] sm:$0xf] %v938
        %1304 = vst [vmem:[#allocation2 + $0x1f4] sm:$0xf] %v941
        %1305 = vst [vmem:[#allocation2 + $0x218] sm:$0xf] %v945
        %1306 = vst [vmem:[#allocation2 + $0x23c] sm:$0xf] %v948
        %1307 = vst [vmem:[#allocation2 + $0x260] sm:$0xf] %v952
        %1308 = vst [vmem:[#allocation2 + $0x284] sm:$0xf] %v955
        %1309 = vst [vmem:[#allocation2 + $0x2a8] sm:$0xf] %v959
        %1310 = vst [vmem:[#allocation2 + $0x2cc] sm:$0xf] %v962
        %1311 = vst [vmem:[#allocation2 + $0x2f0] sm:$0xf] %v966
        %1312 = vst [vmem:[#allocation2 + $0x314] sm:$0xf] %v969
        %1313 = vst [vmem:[#allocation2 + $0x338] sm:$0xf] %v973
        %1314 = vst [vmem:[#allocation2 + $0x35c] sm:$0xf] %v976
        %1315 = vst [vmem:[#allocation2 + $0x380] sm:$0xf] %v980
        %1316 = vst [vmem:[#allocation2 + $0x3a4] sm:$0xf] %v983
        %1317 = vst [vmem:[#allocation2 + $0x3c8] sm:$0xf] %v987
        %1318 = vst [vmem:[#allocation2 + $0x3ec] sm:$0xf] %v990
        %1319 = vst [vmem:[#allocation2 + $0x410] sm:$0xf] %v1151
        %1320 = vst [vmem:[#allocation2 + $0x434] sm:$0xf] %v1154
        %1321 = vst [vmem:[#allocation2 + $0x458] sm:$0xf] %v1285
        %1322 = vst [vmem:[#allocation2 + $0x47c] sm:$0xf] %v1288
        %v1323 = vld [vmem:[#allocation2] sm:$0xff]
        %v1324 = vld [vmem:[#allocation2 + $0x8] sm:$0xff]
        %v1325 = vld [vmem:[#allocation2 + $0x10] sm:$0xff]
        %v1326 = vld [vmem:[#allocation2 + $0x18] sm:$0xff]
        %v1327 = vld [vmem:[#allocation2 + $0x20] sm:$0xf]
        %v1328 = vld [vmem:[#allocation2 + $0x24] sm:$0xff]
        %v1329 = vld [vmem:[#allocation2 + $0x2c] sm:$0xff]
        %v1330 = vld [vmem:[#allocation2 + $0x34] sm:$0xff]
        %v1331 = vld [vmem:[#allocation2 + $0x3c] sm:$0xff]
        %v1332 = vld [vmem:[#allocation2 + $0x44] sm:$0xf]
        %v1333 = vld [vmem:[#allocation2 + $0x48] sm:$0xff]
        %v1334 = vld [vmem:[#allocation2 + $0x50] sm:$0xff]
        %v1335 = vld [vmem:[#allocation2 + $0x58] sm:$0xff]
        %v1336 = vld [vmem:[#allocation2 + $0x60] sm:$0xff]
        %v1337 = vld [vmem:[#allocation2 + $0x68] sm:$0xf]
        %v1338 = vld [vmem:[#allocation2 + $0x6c] sm:$0xff]
        %v1339 = vld [vmem:[#allocation2 + $0x74] sm:$0xff]
        %v1340 = vld [vmem:[#allocation2 + $0x7c] sm:$0xff]
        %v1341 = vld [vmem:[#allocation2 + $0x84] sm:$0xff]
        %v1342 = vld [vmem:[#allocation2 + $0x8c] sm:$0xf]
        %v1343 = vld [vmem:[#allocation2 + $0x90] sm:$0xff]
        %v1344 = vld [vmem:[#allocation2 + $0x98] sm:$0xff]
        %v1345 = vld [vmem:[#allocation2 + $0xa0] sm:$0xff]
        %v1346 = vld [vmem:[#allocation2 + $0xa8] sm:$0xff]
        %v1347 = vld [vmem:[#allocation2 + $0xb0] sm:$0xf]
        %v1348 = vld [vmem:[#allocation2 + $0xb4] sm:$0xff]
        %v1349 = vld [vmem:[#allocation2 + $0xbc] sm:$0xff]
        %v1350 = vld [vmem:[#allocation2 + $0xc4] sm:$0xff]
        %v1351 = vld [vmem:[#allocation2 + $0xcc] sm:$0xff]
        %v1352 = vld [vmem:[#allocation2 + $0xd4] sm:$0xf]
        %v1353 = vld [vmem:[#allocation2 + $0xd8] sm:$0xff]
        %v1354 = vld [vmem:[#allocation2 + $0xe0] sm:$0xff]
        %v1355 = vld [vmem:[#allocation2 + $0xe8] sm:$0xff]
        %v1356 = vld [vmem:[#allocation2 + $0xf0] sm:$0xff]
        %v1357 = vld [vmem:[#allocation2 + $0xf8] sm:$0xf]
        %v1358 = vld [vmem:[#allocation2 + $0xfc] sm:$0xff]
        %v1359 = vld [vmem:[#allocation2 + $0x104] sm:$0xff]
        %v1360 = vld [vmem:[#allocation2 + $0x10c] sm:$0xff]
        %v1361 = vld [vmem:[#allocation2 + $0x114] sm:$0xff]
        %v1362 = vld [vmem:[#allocation2 + $0x11c] sm:$0xf]
        %v1363 = vld [vmem:[#allocation2 + $0x120] sm:$0xff]
        %v1364 = vld [vmem:[#allocation2 + $0x128] sm:$0xff]
        %v1365 = vld [vmem:[#allocation2 + $0x130] sm:$0xff]
        %v1366 = vld [vmem:[#allocation2 + $0x138] sm:$0xff]
        %v1367 = vld [vmem:[#allocation2 + $0x140] sm:$0xf]
        %v1368 = vld [vmem:[#allocation2 + $0x144] sm:$0xff]
        %v1369 = vld [vmem:[#allocation2 + $0x14c] sm:$0xff]
        %v1370 = vld [vmem:[#allocation2 + $0x154] sm:$0xff]
        %v1371 = vld [vmem:[#allocation2 + $0x15c] sm:$0xff]
        %v1372 = vld [vmem:[#allocation2 + $0x164] sm:$0xf]
        %v1373 = vld [vmem:[#allocation2 + $0x168] sm:$0xff]
        %v1374 = vld [vmem:[#allocation2 + $0x170] sm:$0xff]
        %v1375 = vld [vmem:[#allocation2 + $0x178] sm:$0xff]
        %v1376 = vld [vmem:[#allocation2 + $0x180] sm:$0xff]
        %v1377 = vld [vmem:[#allocation2 + $0x188] sm:$0xf]
        %v1378 = vld [vmem:[#allocation2 + $0x18c] sm:$0xff]
        %v1379 = vld [vmem:[#allocation2 + $0x194] sm:$0xff]
        %v1380 = vld [vmem:[#allocation2 + $0x19c] sm:$0xff]
        %v1381 = vld [vmem:[#allocation2 + $0x1a4] sm:$0xff]
        %v1382 = vld [vmem:[#allocation2 + $0x1ac] sm:$0xf]
        %v1383 = vld [vmem:[#allocation2 + $0x1b0] sm:$0xff]
        %v1384 = vld [vmem:[#allocation2 + $0x1b8] sm:$0xff]
        %v1385 = vld [vmem:[#allocation2 + $0x1c0] sm:$0xff]
        %v1386 = vld [vmem:[#allocation2 + $0x1c8] sm:$0xff]
        %v1387 = vld [vmem:[#allocation2 + $0x1d0] sm:$0xf]
        %v1388 = vld [vmem:[#allocation2 + $0x1d4] sm:$0xff]
        %v1389 = vld [vmem:[#allocation2 + $0x1dc] sm:$0xff]
        %v1390 = vld [vmem:[#allocation2 + $0x1e4] sm:$0xff]
        %v1391 = vld [vmem:[#allocation2 + $0x1ec] sm:$0xff]
        %v1392 = vld [vmem:[#allocation2 + $0x1f4] sm:$0xf]
        %v1393 = vld [vmem:[#allocation2 + $0x1f8] sm:$0xff]
        %v1394 = vld [vmem:[#allocation2 + $0x200] sm:$0xff]
        %v1395 = vld [vmem:[#allocation2 + $0x208] sm:$0xff]
        %v1396 = vld [vmem:[#allocation2 + $0x210] sm:$0xff]
        %v1397 = vld [vmem:[#allocation2 + $0x218] sm:$0xf]
        %v1398 = vld [vmem:[#allocation2 + $0x21c] sm:$0xff]
        %v1399 = vld [vmem:[#allocation2 + $0x224] sm:$0xff]
        %v1400 = vld [vmem:[#allocation2 + $0x22c] sm:$0xff]
        %v1401 = vld [vmem:[#allocation2 + $0x234] sm:$0xff]
        %v1402 = vld [vmem:[#allocation2 + $0x23c] sm:$0xf]
        %v1403 = vld [vmem:[#allocation2 + $0x240] sm:$0xff]
        %v1404 = vld [vmem:[#allocation2 + $0x248] sm:$0xff]
        %v1405 = vld [vmem:[#allocation2 + $0x250] sm:$0xff]
        %v1406 = vld [vmem:[#allocation2 + $0x258] sm:$0xff]
        %v1407 = vld [vmem:[#allocation2 + $0x260] sm:$0xf]
        %v1408 = vld [vmem:[#allocation2 + $0x264] sm:$0xff]
        %v1409 = vld [vmem:[#allocation2 + $0x26c] sm:$0xff]
        %v1410 = vld [vmem:[#allocation2 + $0x274] sm:$0xff]
        %v1411 = vld [vmem:[#allocation2 + $0x27c] sm:$0xff]
        %v1412 = vld [vmem:[#allocation2 + $0x284] sm:$0xf]
        %v1413 = vld [vmem:[#allocation2 + $0x288] sm:$0xff]
        %v1414 = vld [vmem:[#allocation2 + $0x290] sm:$0xff]
        %v1415 = vld [vmem:[#allocation2 + $0x298] sm:$0xff]
        %v1416 = vld [vmem:[#allocation2 + $0x2a0] sm:$0xff]
        %v1417 = vld [vmem:[#allocation2 + $0x2a8] sm:$0xf]
        %v1418 = vld [vmem:[#allocation2 + $0x2ac] sm:$0xff]
        %v1419 = vld [vmem:[#allocation2 + $0x2b4] sm:$0xff]
        %v1420 = vld [vmem:[#allocation2 + $0x2bc] sm:$0xff]
        %v1421 = vld [vmem:[#allocation2 + $0x2c4] sm:$0xff]
        %v1422 = vld [vmem:[#allocation2 + $0x2cc] sm:$0xf]
        %v1423 = vld [vmem:[#allocation2 + $0x2d0] sm:$0xff]
        %v1424 = vld [vmem:[#allocation2 + $0x2d8] sm:$0xff]
        %v1425 = vld [vmem:[#allocation2 + $0x2e0] sm:$0xff]
        %v1426 = vld [vmem:[#allocation2 + $0x2e8] sm:$0xff]
        %v1427 = vld [vmem:[#allocation2 + $0x2f0] sm:$0xf]
        %v1428 = vld [vmem:[#allocation2 + $0x2f4] sm:$0xff]
        %v1429 = vld [vmem:[#allocation2 + $0x2fc] sm:$0xff]
        %v1430 = vld [vmem:[#allocation2 + $0x304] sm:$0xff]
        %v1431 = vld [vmem:[#allocation2 + $0x30c] sm:$0xff]
        %v1432 = vld [vmem:[#allocation2 + $0x314] sm:$0xf]
        %v1433 = vld [vmem:[#allocation2 + $0x318] sm:$0xff]
        %v1434 = vld [vmem:[#allocation2 + $0x320] sm:$0xff]
        %v1435 = vld [vmem:[#allocation2 + $0x328] sm:$0xff]
        %v1436 = vld [vmem:[#allocation2 + $0x330] sm:$0xff]
        %v1437 = vld [vmem:[#allocation2 + $0x338] sm:$0xf]
        %v1438 = vld [vmem:[#allocation2 + $0x33c] sm:$0xff]
        %v1439 = vld [vmem:[#allocation2 + $0x344] sm:$0xff]
        %v1440 = vld [vmem:[#allocation2 + $0x34c] sm:$0xff]
        %v1441 = vld [vmem:[#allocation2 + $0x354] sm:$0xff]
        %v1442 = vld [vmem:[#allocation2 + $0x35c] sm:$0xf]
        %v1443 = vld [vmem:[#allocation2 + $0x360] sm:$0xff]
        %v1444 = vld [vmem:[#allocation2 + $0x368] sm:$0xff]
        %v1445 = vld [vmem:[#allocation2 + $0x370] sm:$0xff]
        %v1446 = vld [vmem:[#allocation2 + $0x378] sm:$0xff]
        %v1447 = vld [vmem:[#allocation2 + $0x380] sm:$0xf]
        %v1448 = vld [vmem:[#allocation2 + $0x384] sm:$0xff]
        %v1449 = vld [vmem:[#allocation2 + $0x38c] sm:$0xff]
        %v1450 = vld [vmem:[#allocation2 + $0x394] sm:$0xff]
        %v1451 = vld [vmem:[#allocation2 + $0x39c] sm:$0xff]
        %v1452 = vld [vmem:[#allocation2 + $0x3a4] sm:$0xf]
        %v1453 = vld [vmem:[#allocation2 + $0x3a8] sm:$0xff]
        %v1454 = vld [vmem:[#allocation2 + $0x3b0] sm:$0xff]
        %v1455 = vld [vmem:[#allocation2 + $0x3b8] sm:$0xff]
        %v1456 = vld [vmem:[#allocation2 + $0x3c0] sm:$0xff]
        %v1457 = vld [vmem:[#allocation2 + $0x3c8] sm:$0xf]
        %v1458 = vld [vmem:[#allocation2 + $0x3cc] sm:$0xff]
        %v1459 = vld [vmem:[#allocation2 + $0x3d4] sm:$0xff]
        %v1460 = vld [vmem:[#allocation2 + $0x3dc] sm:$0xff]
        %v1461 = vld [vmem:[#allocation2 + $0x3e4] sm:$0xff]
        %v1462 = vld [vmem:[#allocation2 + $0x3ec] sm:$0xf]
        %v1463 = vld [vmem:[#allocation2 + $0x3f0] sm:$0xff]
        %v1464 = vld [vmem:[#allocation2 + $0x3f8] sm:$0xff]
        %v1465 = vld [vmem:[#allocation2 + $0x400] sm:$0xff]
        %v1466 = vld [vmem:[#allocation2 + $0x408] sm:$0xff]
        %v1467 = vld [vmem:[#allocation2 + $0x410] sm:$0xf]
        %v1468 = vld [vmem:[#allocation2 + $0x414] sm:$0xff]
        %v1469 = vld [vmem:[#allocation2 + $0x41c] sm:$0xff]
        %v1470 = vld [vmem:[#allocation2 + $0x424] sm:$0xff]
        %v1471 = vld [vmem:[#allocation2 + $0x42c] sm:$0xff]
        %v1472 = vld [vmem:[#allocation2 + $0x434] sm:$0xf]
        %v1473 = vld [vmem:[#allocation2 + $0x438] sm:$0xff]
        %v1474 = vld [vmem:[#allocation2 + $0x440] sm:$0xff]
        %v1475 = vld [vmem:[#allocation2 + $0x448] sm:$0xff]
        %v1476 = vld [vmem:[#allocation2 + $0x450] sm:$0xff]
        %v1477 = vld [vmem:[#allocation2 + $0x458] sm:$0xf]
        %v1478 = vld [vmem:[#allocation2 + $0x45c] sm:$0xff]
        %v1479 = vld [vmem:[#allocation2 + $0x464] sm:$0xff]
        %v1480 = vld [vmem:[#allocation2 + $0x46c] sm:$0xff]
        %v1481 = vld [vmem:[#allocation2 + $0x474] sm:$0xff]
        %v1482 = vld [vmem:[#allocation2 + $0x47c] sm:$0xf]
        %v1483 = vld [vmem:[%s3] sm:$0xf]
        %v1484 = vld [vmem:[%s3 + $0x4] sm:$0xf]
        %v1485 = vld [vmem:[%s3 + $0x8] sm:$0xf]
        %v1486 = vld [vmem:[%s3 + $0xc] sm:$0xf]
        %v1487 = vld [vmem:[%s3 + $0x10] sm:$0xf]
        %v1488 = vld [vmem:[%s3 + $0x14] sm:$0xf]
        %v1489 = vld [vmem:[%s3 + $0x18] sm:$0xf]
        %v1490 = vld [vmem:[%s3 + $0x1c] sm:$0xf]
        %v1491 = vld [vmem:[%s3 + $0x20] sm:$0xf]
        %v1492 = vld [vmem:[%s3 + $0x24] sm:$0xf]
        %v1493 = vld [vmem:[%s3 + $0x28] sm:$0xf]
        %v1494 = vld [vmem:[%s3 + $0x2c] sm:$0xf]
        %v1495 = vld [vmem:[%s3 + $0x30] sm:$0xf]
        %v1496 = vld [vmem:[%s3 + $0x34] sm:$0xf]
        %v1497 = vld [vmem:[%s3 + $0x38] sm:$0xf]
        %v1498 = vld [vmem:[%s3 + $0x3c] sm:$0xf]
        %v1499 = vld [vmem:[%s3 + $0x40] sm:$0xf]
        %v1500 = vld [vmem:[%s3 + $0x44] sm:$0xf]
        %v1501 = vld [vmem:[%s3 + $0x48] sm:$0xf]
        %v1502 = vld [vmem:[%s3 + $0x4c] sm:$0xf]
        %v1503 = vld [vmem:[%s3 + $0x50] sm:$0xf]
        %v1504 = vld [vmem:[%s3 + $0x54] sm:$0xf]
        %v1505 = vld [vmem:[%s3 + $0x58] sm:$0xf]
        %v1506 = vld [vmem:[%s3 + $0x5c] sm:$0xf]
        %v1507 = vld [vmem:[%s3 + $0x60] sm:$0xf]
        %v1508 = vld [vmem:[%s3 + $0x64] sm:$0xf]
        %v1509 = vld [vmem:[%s3 + $0x68] sm:$0xf]
        %v1510 = vld [vmem:[%s3 + $0x6c] sm:$0xf]
        %v1511 = vld [vmem:[%s3 + $0x70] sm:$0xf]
        %v1512 = vld [vmem:[%s3 + $0x74] sm:$0xf]
        %v1513 = vld [vmem:[%s3 + $0x78] sm:$0xf]
        %v1514 = vld [vmem:[%s3 + $0x7c] sm:$0xf]
        %v1515 = vld [vmem:[%s3 + $0x80] sm:$0xf]
        %v1516 = vld [vmem:[%s3 + $0x84] sm:$0xf]
        %v1517 = vld [vmem:[%s3 + $0x88] sm:$0xf]
        %v1518 = vld [vmem:[%s3 + $0x8c] sm:$0xf]
        %v1519 = vld [vmem:[%s3 + $0x90] sm:$0xf]
        %v1520 = vld [vmem:[%s3 + $0x94] sm:$0xf]
        %v1521 = vld [vmem:[%s3 + $0x98] sm:$0xf]
        %v1522 = vld [vmem:[%s3 + $0x9c] sm:$0xf]
        %v1523 = vld [vmem:[%s3 + $0xa0] sm:$0xf]
        %v1524 = vld [vmem:[%s3 + $0xa4] sm:$0xf]
        %v1525 = vld [vmem:[%s3 + $0xa8] sm:$0xf]
        %v1526 = vld [vmem:[%s3 + $0xac] sm:$0xf]
        %v1527 = vld [vmem:[%s3 + $0xb0] sm:$0xf]
        %v1528 = vld [vmem:[%s3 + $0xb4] sm:$0xf]
        %v1529 = vld [vmem:[%s3 + $0xb8] sm:$0xf]
        %v1530 = vld [vmem:[%s3 + $0xbc] sm:$0xf]
        %v1531 = vld [vmem:[%s3 + $0xc0] sm:$0xf]
        %v1532 = vld [vmem:[%s3 + $0xc4] sm:$0xf]
        %v1533 = vld [vmem:[%s3 + $0xc8] sm:$0xf]
        %v1534 = vld [vmem:[%s3 + $0xcc] sm:$0xf]
        %v1535 = vld [vmem:[%s3 + $0xd0] sm:$0xf]
        %v1536 = vld [vmem:[%s3 + $0xd4] sm:$0xf]
        %v1537 = vld [vmem:[%s3 + $0xd8] sm:$0xf]
        %v1538 = vld [vmem:[%s3 + $0xdc] sm:$0xf]
        %v1539 = vld [vmem:[%s3 + $0xe0] sm:$0xf]
        %v1540 = vld [vmem:[%s3 + $0xe4] sm:$0xf]
        %v1541 = vld [vmem:[%s3 + $0xe8] sm:$0xf]
        %v1542 = vld [vmem:[%s3 + $0xec] sm:$0xf]
        %v1543 = vld [vmem:[%s3 + $0xf0] sm:$0xf]
        %v1544 = vld [vmem:[%s3 + $0xf4] sm:$0xf]
        %v1545 = vld [vmem:[%s3 + $0xf8] sm:$0xf]
        %v1546 = vld [vmem:[%s3 + $0xfc] sm:$0xf]
        %v1547 = vld [vmem:[%s3 + $0x100] sm:$0xf]
        %v1548 = vld [vmem:[%s3 + $0x104] sm:$0xf]
        %v1549 = vld [vmem:[%s3 + $0x108] sm:$0xf]
        %v1550 = vld [vmem:[%s3 + $0x10c] sm:$0xf]
        %v1551 = vld [vmem:[%s3 + $0x110] sm:$0xf]
        %v1552 = vld [vmem:[%s3 + $0x114] sm:$0xf]
        %v1553 = vld [vmem:[%s3 + $0x118] sm:$0xf]
        %v1554 = vld [vmem:[%s3 + $0x11c] sm:$0xf]
        %v1555 = vld [vmem:[%s3 + $0x120] sm:$0xf]
        %v1556 = vld [vmem:[%s3 + $0x124] sm:$0xf]
        %v1557 = vld [vmem:[%s3 + $0x128] sm:$0xf]
        %v1558 = vld [vmem:[%s3 + $0x12c] sm:$0xf]
        %v1559 = vld [vmem:[%s3 + $0x130] sm:$0xf]
        %v1560 = vld [vmem:[%s3 + $0x134] sm:$0xf]
        %v1561 = vld [vmem:[%s3 + $0x138] sm:$0xf]
        %v1562 = vld [vmem:[%s3 + $0x13c] sm:$0xf]
        %v1563 = vld [vmem:[%s3 + $0x140] sm:$0xf]
        %v1564 = vld [vmem:[%s3 + $0x144] sm:$0xf]
        %v1565 = vld [vmem:[%s3 + $0x148] sm:$0xf]
        %v1566 = vld [vmem:[%s3 + $0x14c] sm:$0xf]
        %v1567 = vld [vmem:[%s3 + $0x150] sm:$0xf]
        %v1568 = vld [vmem:[%s3 + $0x154] sm:$0xf]
        %v1569 = vld [vmem:[%s3 + $0x158] sm:$0xf]
        %v1570 = vld [vmem:[%s3 + $0x15c] sm:$0xf]
        %v1571 = vld [vmem:[%s3 + $0x160] sm:$0xf]
        %v1572 = vld [vmem:[%s3 + $0x164] sm:$0xf]
        %v1573 = vld [vmem:[%s3 + $0x168] sm:$0xf]
        %v1574 = vld [vmem:[%s3 + $0x16c] sm:$0xf]
        %v1575 = vld [vmem:[%s3 + $0x170] sm:$0xf]
        %v1576 = vld [vmem:[%s3 + $0x174] sm:$0xf]
        %v1577 = vld [vmem:[%s3 + $0x178] sm:$0xf]
        %v1578 = vld [vmem:[%s3 + $0x17c] sm:$0xf]
        %v1579 = vld [vmem:[%s3 + $0x180] sm:$0xf]
        %v1580 = vld [vmem:[%s3 + $0x184] sm:$0xf]
        %v1581 = vld [vmem:[%s3 + $0x188] sm:$0xf]
        %v1582 = vld [vmem:[%s3 + $0x18c] sm:$0xf]
        %v1583 = vld [vmem:[%s3 + $0x190] sm:$0xf]
        %v1584 = vld [vmem:[%s3 + $0x194] sm:$0xf]
        %v1585 = vld [vmem:[%s3 + $0x198] sm:$0xf]
        %v1586 = vld [vmem:[%s3 + $0x19c] sm:$0xf]
        %v1587 = vld [vmem:[%s3 + $0x1a0] sm:$0xf]
        %v1588 = vld [vmem:[%s3 + $0x1a4] sm:$0xf]
        %v1589 = vld [vmem:[%s3 + $0x1a8] sm:$0xf]
        %v1590 = vld [vmem:[%s3 + $0x1ac] sm:$0xf]
        %v1591 = vld [vmem:[%s3 + $0x1b0] sm:$0xf]
        %v1592 = vld [vmem:[%s3 + $0x1b4] sm:$0xf]
        %v1593 = vld [vmem:[%s3 + $0x1b8] sm:$0xf]
        %v1594 = vld [vmem:[%s3 + $0x1bc] sm:$0xf]
        %v1595 = vld [vmem:[%s3 + $0x1c0] sm:$0xf]
        %v1596 = vld [vmem:[%s3 + $0x1c4] sm:$0xf]
        %v1597 = vld [vmem:[%s3 + $0x1c8] sm:$0xf]
        %v1598 = vld [vmem:[%s3 + $0x1cc] sm:$0xf]
        %v1599 = vld [vmem:[%s3 + $0x1d0] sm:$0xf]
        %v1600 = vld [vmem:[%s3 + $0x1d4] sm:$0xf]
        %v1601 = vld [vmem:[%s3 + $0x1d8] sm:$0xf]
        %v1602 = vld [vmem:[%s3 + $0x1dc] sm:$0xf]
        %v1603 = vld [vmem:[%s3 + $0x1e0] sm:$0xf]
        %v1604 = vld [vmem:[%s3 + $0x1e4] sm:$0xf]
        %v1605 = vld [vmem:[%s3 + $0x1e8] sm:$0xf]
        %v1606 = vld [vmem:[%s3 + $0x1ec] sm:$0xf]
        %v1607 = vld [vmem:[%s3 + $0x1f0] sm:$0xf]
        %v1608 = vld [vmem:[%s3 + $0x1f4] sm:$0xf]
        %v1609 = vld [vmem:[%s3 + $0x1f8] sm:$0xf]
        %v1610 = vld [vmem:[%s3 + $0x1fc] sm:$0xf]
        %v1611 = vld [vmem:[%s3 + $0x200] sm:$0xf]
        %v1612 = vld [vmem:[%s3 + $0x204] sm:$0xf]
        %v1613 = vld [vmem:[%s3 + $0x208] sm:$0xf]
        %v1614 = vld [vmem:[%s3 + $0x20c] sm:$0xf]
        %v1615 = vld [vmem:[%s3 + $0x210] sm:$0xf]
        %v1616 = vld [vmem:[%s3 + $0x214] sm:$0xf]
        %v1617 = vld [vmem:[%s3 + $0x218] sm:$0xf]
        %v1618 = vld [vmem:[%s3 + $0x21c] sm:$0xf]
        %v1619 = vld [vmem:[%s3 + $0x220] sm:$0xf]
        %v1620 = vld [vmem:[%s3 + $0x224] sm:$0xf]
        %v1621 = vld [vmem:[%s3 + $0x228] sm:$0xf]
        %v1622 = vld [vmem:[%s3 + $0x22c] sm:$0xf]
        %v1623 = vld [vmem:[%s3 + $0x230] sm:$0xf]
        %v1624 = vld [vmem:[%s3 + $0x234] sm:$0xf]
        %v1625 = vld [vmem:[%s3 + $0x238] sm:$0xf]
        %v1626 = vld [vmem:[%s3 + $0x23c] sm:$0xf]
        %v1627 = vld [vmem:[%s5] sm:$0x1]
        %v1628 = vunpack.c.l.bf16 %v1627
        %v1629 = vlaneseq
        %v1630 = vshrl.u32 %v1629, 7
        %v1631 = vsub.s32 0, %v1630
        %v1632 = vrot.slane %v1628, %v1631
        %v1793 = vunpack.c.l.b16 %v1323
        %v1794 = vunpack.c.h.b16 %v1323
        %v1795 = vunpack.c.l.b16 %v1324
        %v1796 = vunpack.c.h.b16 %v1324
        %v1797 = vunpack.c.l.b16 %v1325
        %v1798 = vunpack.c.h.b16 %v1325
        %v1799 = vunpack.c.l.b16 %v1326
        %v1800 = vunpack.c.h.b16 %v1326
        %v1801 = vunpack.c.l.b16 %v1327
        %v1802 = vunpack.c.l.b16 %v1328
        %v1803 = vunpack.c.h.b16 %v1328
        %v1804 = vunpack.c.l.b16 %v1329
        %v1805 = vunpack.c.h.b16 %v1329
        %v1806 = vunpack.c.l.b16 %v1330
        %v1807 = vunpack.c.h.b16 %v1330
        %v1808 = vunpack.c.l.b16 %v1331
        %v1809 = vunpack.c.h.b16 %v1331
        %v1810 = vunpack.c.l.b16 %v1332
        %v1811 = vunpack.c.l.b16 %v1333
        %v1812 = vunpack.c.h.b16 %v1333
        %v1813 = vunpack.c.l.b16 %v1334
        %v1814 = vunpack.c.h.b16 %v1334
        %v1815 = vunpack.c.l.b16 %v1335
        %v1816 = vunpack.c.h.b16 %v1335
        %v1817 = vunpack.c.l.b16 %v1336
        %v1818 = vunpack.c.h.b16 %v1336
        %v1819 = vunpack.c.l.b16 %v1337
        %v1820 = vunpack.c.l.b16 %v1338
        %v1821 = vunpack.c.h.b16 %v1338
        %v1822 = vunpack.c.l.b16 %v1339
        %v1823 = vunpack.c.h.b16 %v1339
        %v1824 = vunpack.c.l.b16 %v1340
        %v1825 = vunpack.c.h.b16 %v1340
        %v1826 = vunpack.c.l.b16 %v1341
        %v1827 = vunpack.c.h.b16 %v1341
        %v1828 = vunpack.c.l.b16 %v1342
        %v1829 = vunpack.c.l.b16 %v1343
        %v1830 = vunpack.c.h.b16 %v1343
        %v1831 = vunpack.c.l.b16 %v1344
        %v1832 = vunpack.c.h.b16 %v1344
        %v1833 = vunpack.c.l.b16 %v1345
        %v1834 = vunpack.c.h.b16 %v1345
        %v1835 = vunpack.c.l.b16 %v1346
        %v1836 = vunpack.c.h.b16 %v1346
        %v1837 = vunpack.c.l.b16 %v1347
        %v1838 = vunpack.c.l.b16 %v1348
        %v1839 = vunpack.c.h.b16 %v1348
        %v1840 = vunpack.c.l.b16 %v1349
        %v1841 = vunpack.c.h.b16 %v1349
        %v1842 = vunpack.c.l.b16 %v1350
        %v1843 = vunpack.c.h.b16 %v1350
        %v1844 = vunpack.c.l.b16 %v1351
        %v1845 = vunpack.c.h.b16 %v1351
        %v1846 = vunpack.c.l.b16 %v1352
        %v1847 = vunpack.c.l.b16 %v1353
        %v1848 = vunpack.c.h.b16 %v1353
        %v1849 = vunpack.c.l.b16 %v1354
        %v1850 = vunpack.c.h.b16 %v1354
        %v1851 = vunpack.c.l.b16 %v1355
        %v1852 = vunpack.c.h.b16 %v1355
        %v1853 = vunpack.c.l.b16 %v1356
        %v1854 = vunpack.c.h.b16 %v1356
        %v1855 = vunpack.c.l.b16 %v1357
        %v1856 = vunpack.c.l.b16 %v1358
        %v1857 = vunpack.c.h.b16 %v1358
        %v1858 = vunpack.c.l.b16 %v1359
        %v1859 = vunpack.c.h.b16 %v1359
        %v1860 = vunpack.c.l.b16 %v1360
        %v1861 = vunpack.c.h.b16 %v1360
        %v1862 = vunpack.c.l.b16 %v1361
        %v1863 = vunpack.c.h.b16 %v1361
        %v1864 = vunpack.c.l.b16 %v1362
        %v1865 = vunpack.c.l.b16 %v1363
        %v1866 = vunpack.c.h.b16 %v1363
        %v1867 = vunpack.c.l.b16 %v1364
        %v1868 = vunpack.c.h.b16 %v1364
        %v1869 = vunpack.c.l.b16 %v1365
        %v1870 = vunpack.c.h.b16 %v1365
        %v1871 = vunpack.c.l.b16 %v1366
        %v1872 = vunpack.c.h.b16 %v1366
        %v1873 = vunpack.c.l.b16 %v1367
        %v1874 = vunpack.c.l.b16 %v1368
        %v1875 = vunpack.c.h.b16 %v1368
        %v1876 = vunpack.c.l.b16 %v1369
        %v1877 = vunpack.c.h.b16 %v1369
        %v1878 = vunpack.c.l.b16 %v1370
        %v1879 = vunpack.c.h.b16 %v1370
        %v1880 = vunpack.c.l.b16 %v1371
        %v1881 = vunpack.c.h.b16 %v1371
        %v1882 = vunpack.c.l.b16 %v1372
        %v1883 = vunpack.c.l.b16 %v1373
        %v1884 = vunpack.c.h.b16 %v1373
        %v1885 = vunpack.c.l.b16 %v1374
        %v1886 = vunpack.c.h.b16 %v1374
        %v1887 = vunpack.c.l.b16 %v1375
        %v1888 = vunpack.c.h.b16 %v1375
        %v1889 = vunpack.c.l.b16 %v1376
        %v1890 = vunpack.c.h.b16 %v1376
        %v1891 = vunpack.c.l.b16 %v1377
        %v1892 = vunpack.c.l.b16 %v1378
        %v1893 = vunpack.c.h.b16 %v1378
        %v1894 = vunpack.c.l.b16 %v1379
        %v1895 = vunpack.c.h.b16 %v1379
        %v1896 = vunpack.c.l.b16 %v1380
        %v1897 = vunpack.c.h.b16 %v1380
        %v1898 = vunpack.c.l.b16 %v1381
        %v1899 = vunpack.c.h.b16 %v1381
        %v1900 = vunpack.c.l.b16 %v1382
        %v1901 = vunpack.c.l.b16 %v1383
        %v1902 = vunpack.c.h.b16 %v1383
        %v1903 = vunpack.c.l.b16 %v1384
        %v1904 = vunpack.c.h.b16 %v1384
        %v1905 = vunpack.c.l.b16 %v1385
        %v1906 = vunpack.c.h.b16 %v1385
        %v1907 = vunpack.c.l.b16 %v1386
        %v1908 = vunpack.c.h.b16 %v1386
        %v1909 = vunpack.c.l.b16 %v1387
        %v1910 = vunpack.c.l.b16 %v1388
        %v1911 = vunpack.c.h.b16 %v1388
        %v1912 = vunpack.c.l.b16 %v1389
        %v1913 = vunpack.c.h.b16 %v1389
        %v1914 = vunpack.c.l.b16 %v1390
        %v1915 = vunpack.c.h.b16 %v1390
        %v1916 = vunpack.c.l.b16 %v1391
        %v1917 = vunpack.c.h.b16 %v1391
        %v1918 = vunpack.c.l.b16 %v1392
        %v1919 = vunpack.c.l.b16 %v1393
        %v1920 = vunpack.c.h.b16 %v1393
        %v1921 = vunpack.c.l.b16 %v1394
        %v1922 = vunpack.c.h.b16 %v1394
        %v1923 = vunpack.c.l.b16 %v1395
        %v1924 = vunpack.c.h.b16 %v1395
        %v1925 = vunpack.c.l.b16 %v1396
        %v1926 = vunpack.c.h.b16 %v1396
        %v1927 = vunpack.c.l.b16 %v1397
        %v1928 = vunpack.c.l.b16 %v1398
        %v1929 = vunpack.c.h.b16 %v1398
        %v1930 = vunpack.c.l.b16 %v1399
        %v1931 = vunpack.c.h.b16 %v1399
        %v1932 = vunpack.c.l.b16 %v1400
        %v1933 = vunpack.c.h.b16 %v1400
        %v1934 = vunpack.c.l.b16 %v1401
        %v1935 = vunpack.c.h.b16 %v1401
        %v1936 = vunpack.c.l.b16 %v1402
        %v1937 = vunpack.c.l.b16 %v1403
        %v1938 = vunpack.c.h.b16 %v1403
        %v1939 = vunpack.c.l.b16 %v1404
        %v1940 = vunpack.c.h.b16 %v1404
        %v1941 = vunpack.c.l.b16 %v1405
        %v1942 = vunpack.c.h.b16 %v1405
        %v1943 = vunpack.c.l.b16 %v1406
        %v1944 = vunpack.c.h.b16 %v1406
        %v1945 = vunpack.c.l.b16 %v1407
        %v1946 = vunpack.c.l.b16 %v1408
        %v1947 = vunpack.c.h.b16 %v1408
        %v1948 = vunpack.c.l.b16 %v1409
        %v1949 = vunpack.c.h.b16 %v1409
        %v1950 = vunpack.c.l.b16 %v1410
        %v1951 = vunpack.c.h.b16 %v1410
        %v1952 = vunpack.c.l.b16 %v1411
        %v1953 = vunpack.c.h.b16 %v1411
        %v1954 = vunpack.c.l.b16 %v1412
        %v1955 = vunpack.c.l.b16 %v1413
        %v1956 = vunpack.c.h.b16 %v1413
        %v1957 = vunpack.c.l.b16 %v1414
        %v1958 = vunpack.c.h.b16 %v1414
        %v1959 = vunpack.c.l.b16 %v1415
        %v1960 = vunpack.c.h.b16 %v1415
        %v1961 = vunpack.c.l.b16 %v1416
        %v1962 = vunpack.c.h.b16 %v1416
        %v1963 = vunpack.c.l.b16 %v1417
        %v1964 = vunpack.c.l.b16 %v1418
        %v1965 = vunpack.c.h.b16 %v1418
        %v1966 = vunpack.c.l.b16 %v1419
        %v1967 = vunpack.c.h.b16 %v1419
        %v1968 = vunpack.c.l.b16 %v1420
        %v1969 = vunpack.c.h.b16 %v1420
        %v1970 = vunpack.c.l.b16 %v1421
        %v1971 = vunpack.c.h.b16 %v1421
        %v1972 = vunpack.c.l.b16 %v1422
        %v1973 = vunpack.c.l.b16 %v1423
        %v1974 = vunpack.c.h.b16 %v1423
        %v1975 = vunpack.c.l.b16 %v1424
        %v1976 = vunpack.c.h.b16 %v1424
        %v1977 = vunpack.c.l.b16 %v1425
        %v1978 = vunpack.c.h.b16 %v1425
        %v1979 = vunpack.c.l.b16 %v1426
        %v1980 = vunpack.c.h.b16 %v1426
        %v1981 = vunpack.c.l.b16 %v1427
        %v1982 = vunpack.c.l.b16 %v1428
        %v1983 = vunpack.c.h.b16 %v1428
        %v1984 = vunpack.c.l.b16 %v1429
        %v1985 = vunpack.c.h.b16 %v1429
        %v1986 = vunpack.c.l.b16 %v1430
        %v1987 = vunpack.c.h.b16 %v1430
        %v1988 = vunpack.c.l.b16 %v1431
        %v1989 = vunpack.c.h.b16 %v1431
        %v1990 = vunpack.c.l.b16 %v1432
        %v1991 = vunpack.c.l.b16 %v1433
        %v1992 = vunpack.c.h.b16 %v1433
        %v1993 = vunpack.c.l.b16 %v1434
        %v1994 = vunpack.c.h.b16 %v1434
        %v1995 = vunpack.c.l.b16 %v1435
        %v1996 = vunpack.c.h.b16 %v1435
        %v1997 = vunpack.c.l.b16 %v1436
        %v1998 = vunpack.c.h.b16 %v1436
        %v1999 = vunpack.c.l.b16 %v1437
        %v2000 = vunpack.c.l.b16 %v1438
        %v2001 = vunpack.c.h.b16 %v1438
        %v2002 = vunpack.c.l.b16 %v1439
        %v2003 = vunpack.c.h.b16 %v1439
        %v2004 = vunpack.c.l.b16 %v1440
        %v2005 = vunpack.c.h.b16 %v1440
        %v2006 = vunpack.c.l.b16 %v1441
        %v2007 = vunpack.c.h.b16 %v1441
        %v2008 = vunpack.c.l.b16 %v1442
        %v2009 = vunpack.c.l.b16 %v1443
        %v2010 = vunpack.c.h.b16 %v1443
        %v2011 = vunpack.c.l.b16 %v1444
        %v2012 = vunpack.c.h.b16 %v1444
        %v2013 = vunpack.c.l.b16 %v1445
        %v2014 = vunpack.c.h.b16 %v1445
        %v2015 = vunpack.c.l.b16 %v1446
        %v2016 = vunpack.c.h.b16 %v1446
        %v2017 = vunpack.c.l.b16 %v1447
        %v2018 = vunpack.c.l.b16 %v1448
        %v2019 = vunpack.c.h.b16 %v1448
        %v2020 = vunpack.c.l.b16 %v1449
        %v2021 = vunpack.c.h.b16 %v1449
        %v2022 = vunpack.c.l.b16 %v1450
        %v2023 = vunpack.c.h.b16 %v1450
        %v2024 = vunpack.c.l.b16 %v1451
        %v2025 = vunpack.c.h.b16 %v1451
        %v2026 = vunpack.c.l.b16 %v1452
        %v2027 = vunpack.c.l.b16 %v1453
        %v2028 = vunpack.c.h.b16 %v1453
        %v2029 = vunpack.c.l.b16 %v1454
        %v2030 = vunpack.c.h.b16 %v1454
        %v2031 = vunpack.c.l.b16 %v1455
        %v2032 = vunpack.c.h.b16 %v1455
        %v2033 = vunpack.c.l.b16 %v1456
        %v2034 = vunpack.c.h.b16 %v1456
        %v2035 = vunpack.c.l.b16 %v1457
        %v2036 = vunpack.c.l.b16 %v1458
        %v2037 = vunpack.c.h.b16 %v1458
        %v2038 = vunpack.c.l.b16 %v1459
        %v2039 = vunpack.c.h.b16 %v1459
        %v2040 = vunpack.c.l.b16 %v1460
        %v2041 = vunpack.c.h.b16 %v1460
        %v2042 = vunpack.c.l.b16 %v1461
        %v2043 = vunpack.c.h.b16 %v1461
        %v2044 = vunpack.c.l.b16 %v1462
        %v2045 = vunpack.c.l.b16 %v1463
        %v2046 = vunpack.c.h.b16 %v1463
        %v2047 = vunpack.c.l.b16 %v1464
        %v2048 = vunpack.c.h.b16 %v1464
        %v2049 = vunpack.c.l.b16 %v1465
        %v2050 = vunpack.c.h.b16 %v1465
        %v2051 = vunpack.c.l.b16 %v1466
        %v2052 = vunpack.c.h.b16 %v1466
        %v2053 = vunpack.c.l.b16 %v1467
        %v2054 = vunpack.c.l.b16 %v1468
        %v2055 = vunpack.c.h.b16 %v1468
        %v2056 = vunpack.c.l.b16 %v1469
        %v2057 = vunpack.c.h.b16 %v1469
        %v2058 = vunpack.c.l.b16 %v1470
        %v2059 = vunpack.c.h.b16 %v1470
        %v2060 = vunpack.c.l.b16 %v1471
        %v2061 = vunpack.c.h.b16 %v1471
        %v2062 = vunpack.c.l.b16 %v1472
        %v2063 = vunpack.c.l.b16 %v1473
        %v2064 = vunpack.c.h.b16 %v1473
        %v2065 = vunpack.c.l.b16 %v1474
        %v2066 = vunpack.c.h.b16 %v1474
        %v2067 = vunpack.c.l.b16 %v1475
        %v2068 = vunpack.c.h.b16 %v1475
        %v2069 = vunpack.c.l.b16 %v1476
        %v2070 = vunpack.c.h.b16 %v1476
        %v2071 = vunpack.c.l.b16 %v1477
        %v2072 = vunpack.c.l.b16 %v1478
        %v2073 = vunpack.c.h.b16 %v1478
        %v2074 = vunpack.c.l.b16 %v1479
        %v2075 = vunpack.c.h.b16 %v1479
        %v2076 = vunpack.c.l.b16 %v1480
        %v2077 = vunpack.c.h.b16 %v1480
        %v2078 = vunpack.c.l.b16 %v1481
        %v2079 = vunpack.c.h.b16 %v1481
        %v2080 = vunpack.c.l.b16 %v1482
        %v2081 = vpack.c.b16 %v1802, %v1793
        %v2082 = vpack.c.b16 %v1803, %v1794
        %v2083 = vpack.c.b16 %v1804, %v1795
        %v2084 = vpack.c.b16 %v1805, %v1796
        %v2085 = vpack.c.b16 %v1806, %v1797
        %v2086 = vpack.c.b16 %v1807, %v1798
        %v2087 = vpack.c.b16 %v1808, %v1799
        %v2088 = vpack.c.b16 %v1809, %v1800
        %v2089 = vpack.c.b16 %v1810, %v1801
        %v2090 = vpack.c.b16 %v1820, %v1811
        %v2091 = vpack.c.b16 %v1821, %v1812
        %v2092 = vpack.c.b16 %v1822, %v1813
        %v2093 = vpack.c.b16 %v1823, %v1814
        %v2094 = vpack.c.b16 %v1824, %v1815
        %v2095 = vpack.c.b16 %v1825, %v1816
        %v2096 = vpack.c.b16 %v1826, %v1817
        %v2097 = vpack.c.b16 %v1827, %v1818
        %v2098 = vpack.c.b16 %v1828, %v1819
        %v2099 = vpack.c.b16 %v1838, %v1829
        %v2100 = vpack.c.b16 %v1839, %v1830
        %v2101 = vpack.c.b16 %v1840, %v1831
        %v2102 = vpack.c.b16 %v1841, %v1832
        %v2103 = vpack.c.b16 %v1842, %v1833
        %v2104 = vpack.c.b16 %v1843, %v1834
        %v2105 = vpack.c.b16 %v1844, %v1835
        %v2106 = vpack.c.b16 %v1845, %v1836
        %v2107 = vpack.c.b16 %v1846, %v1837
        %v2108 = vpack.c.b16 %v1856, %v1847
        %v2109 = vpack.c.b16 %v1857, %v1848
        %v2110 = vpack.c.b16 %v1858, %v1849
        %v2111 = vpack.c.b16 %v1859, %v1850
        %v2112 = vpack.c.b16 %v1860, %v1851
        %v2113 = vpack.c.b16 %v1861, %v1852
        %v2114 = vpack.c.b16 %v1862, %v1853
        %v2115 = vpack.c.b16 %v1863, %v1854
        %v2116 = vpack.c.b16 %v1864, %v1855
        %v2117 = vpack.c.b16 %v1874, %v1865
        %v2118 = vpack.c.b16 %v1875, %v1866
        %v2119 = vpack.c.b16 %v1876, %v1867
        %v2120 = vpack.c.b16 %v1877, %v1868
        %v2121 = vpack.c.b16 %v1878, %v1869
        %v2122 = vpack.c.b16 %v1879, %v1870
        %v2123 = vpack.c.b16 %v1880, %v1871
        %v2124 = vpack.c.b16 %v1881, %v1872
        %v2125 = vpack.c.b16 %v1882, %v1873
        %v2126 = vpack.c.b16 %v1892, %v1883
        %v2127 = vpack.c.b16 %v1893, %v1884
        %v2128 = vpack.c.b16 %v1894, %v1885
        %v2129 = vpack.c.b16 %v1895, %v1886
        %v2130 = vpack.c.b16 %v1896, %v1887
        %v2131 = vpack.c.b16 %v1897, %v1888
        %v2132 = vpack.c.b16 %v1898, %v1889
        %v2133 = vpack.c.b16 %v1899, %v1890
        %v2134 = vpack.c.b16 %v1900, %v1891
        %v2135 = vpack.c.b16 %v1910, %v1901
        %v2136 = vpack.c.b16 %v1911, %v1902
        %v2137 = vpack.c.b16 %v1912, %v1903
        %v2138 = vpack.c.b16 %v1913, %v1904
        %v2139 = vpack.c.b16 %v1914, %v1905
        %v2140 = vpack.c.b16 %v1915, %v1906
        %v2141 = vpack.c.b16 %v1916, %v1907
        %v2142 = vpack.c.b16 %v1917, %v1908
        %v2143 = vpack.c.b16 %v1918, %v1909
        %v2144 = vpack.c.b16 %v1928, %v1919
        %v2145 = vpack.c.b16 %v1929, %v1920
        %v2146 = vpack.c.b16 %v1930, %v1921
        %v2147 = vpack.c.b16 %v1931, %v1922
        %v2148 = vpack.c.b16 %v1932, %v1923
        %v2149 = vpack.c.b16 %v1933, %v1924
        %v2150 = vpack.c.b16 %v1934, %v1925
        %v2151 = vpack.c.b16 %v1935, %v1926
        %v2152 = vpack.c.b16 %v1936, %v1927
        %v2153 = vpack.c.b16 %v1946, %v1937
        %v2154 = vpack.c.b16 %v1947, %v1938
        %v2155 = vpack.c.b16 %v1948, %v1939
        %v2156 = vpack.c.b16 %v1949, %v1940
        %v2157 = vpack.c.b16 %v1950, %v1941
        %v2158 = vpack.c.b16 %v1951, %v1942
        %v2159 = vpack.c.b16 %v1952, %v1943
        %v2160 = vpack.c.b16 %v1953, %v1944
        %v2161 = vpack.c.b16 %v1954, %v1945
        %v2162 = vpack.c.b16 %v1964, %v1955
        %v2163 = vpack.c.b16 %v1965, %v1956
        %v2164 = vpack.c.b16 %v1966, %v1957
        %v2165 = vpack.c.b16 %v1967, %v1958
        %v2166 = vpack.c.b16 %v1968, %v1959
        %v2167 = vpack.c.b16 %v1969, %v1960
        %v2168 = vpack.c.b16 %v1970, %v1961
        %v2169 = vpack.c.b16 %v1971, %v1962
        %v2170 = vpack.c.b16 %v1972, %v1963
        %v2171 = vpack.c.b16 %v1982, %v1973
        %v2172 = vpack.c.b16 %v1983, %v1974
        %v2173 = vpack.c.b16 %v1984, %v1975
        %v2174 = vpack.c.b16 %v1985, %v1976
        %v2175 = vpack.c.b16 %v1986, %v1977
        %v2176 = vpack.c.b16 %v1987, %v1978
        %v2177 = vpack.c.b16 %v1988, %v1979
        %v2178 = vpack.c.b16 %v1989, %v1980
        %v2179 = vpack.c.b16 %v1990, %v1981
        %v2180 = vpack.c.b16 %v2000, %v1991
        %v2181 = vpack.c.b16 %v2001, %v1992
        %v2182 = vpack.c.b16 %v2002, %v1993
        %v2183 = vpack.c.b16 %v2003, %v1994
        %v2184 = vpack.c.b16 %v2004, %v1995
        %v2185 = vpack.c.b16 %v2005, %v1996
        %v2186 = vpack.c.b16 %v2006, %v1997
        %v2187 = vpack.c.b16 %v2007, %v1998
        %v2188 = vpack.c.b16 %v2008, %v1999
        %v2189 = vpack.c.b16 %v2018, %v2009
        %v2190 = vpack.c.b16 %v2019, %v2010
        %v2191 = vpack.c.b16 %v2020, %v2011
        %v2192 = vpack.c.b16 %v2021, %v2012
        %v2193 = vpack.c.b16 %v2022, %v2013
        %v2194 = vpack.c.b16 %v2023, %v2014
        %v2195 = vpack.c.b16 %v2024, %v2015
        %v2196 = vpack.c.b16 %v2025, %v2016
        %v2197 = vpack.c.b16 %v2026, %v2017
        %v2198 = vpack.c.b16 %v2036, %v2027
        %v2199 = vpack.c.b16 %v2037, %v2028
        %v2200 = vpack.c.b16 %v2038, %v2029
        %v2201 = vpack.c.b16 %v2039, %v2030
        %v2202 = vpack.c.b16 %v2040, %v2031
        %v2203 = vpack.c.b16 %v2041, %v2032
        %v2204 = vpack.c.b16 %v2042, %v2033
        %v2205 = vpack.c.b16 %v2043, %v2034
        %v2206 = vpack.c.b16 %v2044, %v2035
        %v2207 = vpack.c.b16 %v2054, %v2045
        %v2208 = vpack.c.b16 %v2055, %v2046
        %v2209 = vpack.c.b16 %v2056, %v2047
        %v2210 = vpack.c.b16 %v2057, %v2048
        %v2211 = vpack.c.b16 %v2058, %v2049
        %v2212 = vpack.c.b16 %v2059, %v2050
        %v2213 = vpack.c.b16 %v2060, %v2051
        %v2214 = vpack.c.b16 %v2061, %v2052
        %v2215 = vpack.c.b16 %v2062, %v2053
        %v2216 = vpack.c.b16 %v2072, %v2063
        %v2217 = vpack.c.b16 %v2073, %v2064
        %v2218 = vpack.c.b16 %v2074, %v2065
        %v2219 = vpack.c.b16 %v2075, %v2066
        %v2220 = vpack.c.b16 %v2076, %v2067
        %v2221 = vpack.c.b16 %v2077, %v2068
        %v2222 = vpack.c.b16 %v2078, %v2069
        %v2223 = vpack.c.b16 %v2079, %v2070
        %v2224 = vpack.c.b16 %v2080, %v2071
        %v2513 = vunpack.c.l.b16 %v1483
        %v2514 = vunpack.c.l.b16 %v1484
        %v2515 = vunpack.c.l.b16 %v1485
        %v2516 = vunpack.c.l.b16 %v1486
        %v2517 = vunpack.c.l.b16 %v1487
        %v2518 = vunpack.c.l.b16 %v1488
        %v2519 = vunpack.c.l.b16 %v1489
        %v2520 = vunpack.c.l.b16 %v1490
        %v2521 = vunpack.c.l.b16 %v1491
        %v2522 = vunpack.c.l.b16 %v1492
        %v2523 = vunpack.c.l.b16 %v1493
        %v2524 = vunpack.c.l.b16 %v1494
        %v2525 = vunpack.c.l.b16 %v1495
        %v2526 = vunpack.c.l.b16 %v1496
        %v2527 = vunpack.c.l.b16 %v1497
        %v2528 = vunpack.c.l.b16 %v1498
        %v2529 = vunpack.c.l.b16 %v1499
        %v2530 = vunpack.c.l.b16 %v1500
        %v2531 = vunpack.c.l.b16 %v1501
        %v2532 = vunpack.c.l.b16 %v1502
        %v2533 = vunpack.c.l.b16 %v1503
        %v2534 = vunpack.c.l.b16 %v1504
        %v2535 = vunpack.c.l.b16 %v1505
        %v2536 = vunpack.c.l.b16 %v1506
        %v2537 = vunpack.c.l.b16 %v1507
        %v2538 = vunpack.c.l.b16 %v1508
        %v2539 = vunpack.c.l.b16 %v1509
        %v2540 = vunpack.c.l.b16 %v1510
        %v2541 = vunpack.c.l.b16 %v1511
        %v2542 = vunpack.c.l.b16 %v1512
        %v2543 = vunpack.c.l.b16 %v1513
        %v2544 = vunpack.c.l.b16 %v1514
        %v2545 = vunpack.c.l.b16 %v1515
        %v2546 = vunpack.c.l.b16 %v1516
        %v2547 = vunpack.c.l.b16 %v1517
        %v2548 = vunpack.c.l.b16 %v1518
        %v2549 = vunpack.c.l.b16 %v1519
        %v2550 = vunpack.c.l.b16 %v1520
        %v2551 = vunpack.c.l.b16 %v1521
        %v2552 = vunpack.c.l.b16 %v1522
        %v2553 = vunpack.c.l.b16 %v1523
        %v2554 = vunpack.c.l.b16 %v1524
        %v2555 = vunpack.c.l.b16 %v1525
        %v2556 = vunpack.c.l.b16 %v1526
        %v2557 = vunpack.c.l.b16 %v1527
        %v2558 = vunpack.c.l.b16 %v1528
        %v2559 = vunpack.c.l.b16 %v1529
        %v2560 = vunpack.c.l.b16 %v1530
        %v2561 = vunpack.c.l.b16 %v1531
        %v2562 = vunpack.c.l.b16 %v1532
        %v2563 = vunpack.c.l.b16 %v1533
        %v2564 = vunpack.c.l.b16 %v1534
        %v2565 = vunpack.c.l.b16 %v1535
        %v2566 = vunpack.c.l.b16 %v1536
        %v2567 = vunpack.c.l.b16 %v1537
        %v2568 = vunpack.c.l.b16 %v1538
        %v2569 = vunpack.c.l.b16 %v1539
        %v2570 = vunpack.c.l.b16 %v1540
        %v2571 = vunpack.c.l.b16 %v1541
        %v2572 = vunpack.c.l.b16 %v1542
        %v2573 = vunpack.c.l.b16 %v1543
        %v2574 = vunpack.c.l.b16 %v1544
        %v2575 = vunpack.c.l.b16 %v1545
        %v2576 = vunpack.c.l.b16 %v1546
        %v2577 = vunpack.c.l.b16 %v1547
        %v2578 = vunpack.c.l.b16 %v1548
        %v2579 = vunpack.c.l.b16 %v1549
        %v2580 = vunpack.c.l.b16 %v1550
        %v2581 = vunpack.c.l.b16 %v1551
        %v2582 = vunpack.c.l.b16 %v1552
        %v2583 = vunpack.c.l.b16 %v1553
        %v2584 = vunpack.c.l.b16 %v1554
        %v2585 = vunpack.c.l.b16 %v1555
        %v2586 = vunpack.c.l.b16 %v1556
        %v2587 = vunpack.c.l.b16 %v1557
        %v2588 = vunpack.c.l.b16 %v1558
        %v2589 = vunpack.c.l.b16 %v1559
        %v2590 = vunpack.c.l.b16 %v1560
        %v2591 = vunpack.c.l.b16 %v1561
        %v2592 = vunpack.c.l.b16 %v1562
        %v2593 = vunpack.c.l.b16 %v1563
        %v2594 = vunpack.c.l.b16 %v1564
        %v2595 = vunpack.c.l.b16 %v1565
        %v2596 = vunpack.c.l.b16 %v1566
        %v2597 = vunpack.c.l.b16 %v1567
        %v2598 = vunpack.c.l.b16 %v1568
        %v2599 = vunpack.c.l.b16 %v1569
        %v2600 = vunpack.c.l.b16 %v1570
        %v2601 = vunpack.c.l.b16 %v1571
        %v2602 = vunpack.c.l.b16 %v1572
        %v2603 = vunpack.c.l.b16 %v1573
        %v2604 = vunpack.c.l.b16 %v1574
        %v2605 = vunpack.c.l.b16 %v1575
        %v2606 = vunpack.c.l.b16 %v1576
        %v2607 = vunpack.c.l.b16 %v1577
        %v2608 = vunpack.c.l.b16 %v1578
        %v2609 = vunpack.c.l.b16 %v1579
        %v2610 = vunpack.c.l.b16 %v1580
        %v2611 = vunpack.c.l.b16 %v1581
        %v2612 = vunpack.c.l.b16 %v1582
        %v2613 = vunpack.c.l.b16 %v1583
        %v2614 = vunpack.c.l.b16 %v1584
        %v2615 = vunpack.c.l.b16 %v1585
        %v2616 = vunpack.c.l.b16 %v1586
        %v2617 = vunpack.c.l.b16 %v1587
        %v2618 = vunpack.c.l.b16 %v1588
        %v2619 = vunpack.c.l.b16 %v1589
        %v2620 = vunpack.c.l.b16 %v1590
        %v2621 = vunpack.c.l.b16 %v1591
        %v2622 = vunpack.c.l.b16 %v1592
        %v2623 = vunpack.c.l.b16 %v1593
        %v2624 = vunpack.c.l.b16 %v1594
        %v2625 = vunpack.c.l.b16 %v1595
        %v2626 = vunpack.c.l.b16 %v1596
        %v2627 = vunpack.c.l.b16 %v1597
        %v2628 = vunpack.c.l.b16 %v1598
        %v2629 = vunpack.c.l.b16 %v1599
        %v2630 = vunpack.c.l.b16 %v1600
        %v2631 = vunpack.c.l.b16 %v1601
        %v2632 = vunpack.c.l.b16 %v1602
        %v2633 = vunpack.c.l.b16 %v1603
        %v2634 = vunpack.c.l.b16 %v1604
        %v2635 = vunpack.c.l.b16 %v1605
        %v2636 = vunpack.c.l.b16 %v1606
        %v2637 = vunpack.c.l.b16 %v1607
        %v2638 = vunpack.c.l.b16 %v1608
        %v2639 = vunpack.c.l.b16 %v1609
        %v2640 = vunpack.c.l.b16 %v1610
        %v2641 = vunpack.c.l.b16 %v1611
        %v2642 = vunpack.c.l.b16 %v1612
        %v2643 = vunpack.c.l.b16 %v1613
        %v2644 = vunpack.c.l.b16 %v1614
        %v2645 = vunpack.c.l.b16 %v1615
        %v2646 = vunpack.c.l.b16 %v1616
        %v2647 = vunpack.c.l.b16 %v1617
        %v2648 = vunpack.c.l.b16 %v1618
        %v2649 = vunpack.c.l.b16 %v1619
        %v2650 = vunpack.c.l.b16 %v1620
        %v2651 = vunpack.c.l.b16 %v1621
        %v2652 = vunpack.c.l.b16 %v1622
        %v2653 = vunpack.c.l.b16 %v1623
        %v2654 = vunpack.c.l.b16 %v1624
        %v2655 = vunpack.c.l.b16 %v1625
        %v2656 = vunpack.c.l.b16 %v1626
        %v2657 = vpack.c.b16 %v2514, %v2513
        %v2658 = vpack.c.b16 %v2516, %v2515
        %v2659 = vpack.c.b16 %v2518, %v2517
        %v2660 = vpack.c.b16 %v2520, %v2519
        %v2661 = vpack.c.b16 %v2522, %v2521
        %v2662 = vpack.c.b16 %v2524, %v2523
        %v2663 = vpack.c.b16 %v2526, %v2525
        %v2664 = vpack.c.b16 %v2528, %v2527
        %v2665 = vpack.c.b16 %v2530, %v2529
        %v2666 = vpack.c.b16 %v2532, %v2531
        %v2667 = vpack.c.b16 %v2534, %v2533
        %v2668 = vpack.c.b16 %v2536, %v2535
        %v2669 = vpack.c.b16 %v2538, %v2537
        %v2670 = vpack.c.b16 %v2540, %v2539
        %v2671 = vpack.c.b16 %v2542, %v2541
        %v2672 = vpack.c.b16 %v2544, %v2543
        %v2673 = vpack.c.b16 %v2546, %v2545
        %v2674 = vpack.c.b16 %v2548, %v2547
        %v2675 = vpack.c.b16 %v2550, %v2549
        %v2676 = vpack.c.b16 %v2552, %v2551
        %v2677 = vpack.c.b16 %v2554, %v2553
        %v2678 = vpack.c.b16 %v2556, %v2555
        %v2679 = vpack.c.b16 %v2558, %v2557
        %v2680 = vpack.c.b16 %v2560, %v2559
        %v2681 = vpack.c.b16 %v2562, %v2561
        %v2682 = vpack.c.b16 %v2564, %v2563
        %v2683 = vpack.c.b16 %v2566, %v2565
        %v2684 = vpack.c.b16 %v2568, %v2567
        %v2685 = vpack.c.b16 %v2570, %v2569
        %v2686 = vpack.c.b16 %v2572, %v2571
        %v2687 = vpack.c.b16 %v2574, %v2573
        %v2688 = vpack.c.b16 %v2576, %v2575
        %v2689 = vpack.c.b16 %v2578, %v2577
        %v2690 = vpack.c.b16 %v2580, %v2579
        %v2691 = vpack.c.b16 %v2582, %v2581
        %v2692 = vpack.c.b16 %v2584, %v2583
        %v2693 = vpack.c.b16 %v2586, %v2585
        %v2694 = vpack.c.b16 %v2588, %v2587
        %v2695 = vpack.c.b16 %v2590, %v2589
        %v2696 = vpack.c.b16 %v2592, %v2591
        %v2697 = vpack.c.b16 %v2594, %v2593
        %v2698 = vpack.c.b16 %v2596, %v2595
        %v2699 = vpack.c.b16 %v2598, %v2597
        %v2700 = vpack.c.b16 %v2600, %v2599
        %v2701 = vpack.c.b16 %v2602, %v2601
        %v2702 = vpack.c.b16 %v2604, %v2603
        %v2703 = vpack.c.b16 %v2606, %v2605
        %v2704 = vpack.c.b16 %v2608, %v2607
        %v2705 = vpack.c.b16 %v2610, %v2609
        %v2706 = vpack.c.b16 %v2612, %v2611
        %v2707 = vpack.c.b16 %v2614, %v2613
        %v2708 = vpack.c.b16 %v2616, %v2615
        %v2709 = vpack.c.b16 %v2618, %v2617
        %v2710 = vpack.c.b16 %v2620, %v2619
        %v2711 = vpack.c.b16 %v2622, %v2621
        %v2712 = vpack.c.b16 %v2624, %v2623
        %v2713 = vpack.c.b16 %v2626, %v2625
        %v2714 = vpack.c.b16 %v2628, %v2627
        %v2715 = vpack.c.b16 %v2630, %v2629
        %v2716 = vpack.c.b16 %v2632, %v2631
        %v2717 = vpack.c.b16 %v2634, %v2633
        %v2718 = vpack.c.b16 %v2636, %v2635
        %v2719 = vpack.c.b16 %v2638, %v2637
        %v2720 = vpack.c.b16 %v2640, %v2639
        %v2721 = vpack.c.b16 %v2642, %v2641
        %v2722 = vpack.c.b16 %v2644, %v2643
        %v2723 = vpack.c.b16 %v2646, %v2645
        %v2724 = vpack.c.b16 %v2648, %v2647
        %v2725 = vpack.c.b16 %v2650, %v2649
        %v2726 = vpack.c.b16 %v2652, %v2651
        %v2727 = vpack.c.b16 %v2654, %v2653
        %v2728 = vpack.c.b16 %v2656, %v2655
        %2801 = vmatprep.subr.bf16.mxu0 0
        %2802 = vmatpush1.bf16.msra.mxu0 %v2664
        %2803 = vmatprep.subr.bf16.mxu0 0
        %2804 = vmatpush1.bf16.msra.mxu0 %v2663
        %2805 = vmatprep.subr.bf16.mxu0 0
        %2806 = vmatpush1.bf16.msra.mxu0 %v2662
        %2807 = vmatprep.subr.bf16.mxu0 0
        %2808 = vmatpush1.bf16.msra.mxu0 %v2661
        %2809 = vmatprep.subr.bf16.mxu0 0
        %2810 = vmatpush1.bf16.msra.mxu0 %v2660
        %2811 = vmatprep.subr.bf16.mxu0 0
        %2812 = vmatpush1.bf16.msra.mxu0 %v2659
        %2813 = vmatprep.subr.bf16.mxu0 0
        %2814 = vmatpush1.bf16.msra.mxu0 %v2658
        %2815 = vmatprep.subr.bf16.mxu0 0
        %2816 = vmatpush1.bf16.msra.mxu0 %v2657
        %2817 = vmatprep.subr.bf16.mxu0 0
        %2818 = vmatpush2.bf16.msra.mxu0 %v2672
        %2819 = vmatprep.subr.bf16.mxu0 0
        %2820 = vmatpush2.bf16.msra.mxu0 %v2671
        %2821 = vmatprep.subr.bf16.mxu0 0
        %2822 = vmatpush2.bf16.msra.mxu0 %v2670
        %2823 = vmatprep.subr.bf16.mxu0 0
        %2824 = vmatpush2.bf16.msra.mxu0 %v2669
        %2825 = vmatprep.subr.bf16.mxu0 0
        %2826 = vmatpush2.bf16.msra.mxu0 %v2668
        %2827 = vmatprep.subr.bf16.mxu0 0
        %2828 = vmatpush2.bf16.msra.mxu0 %v2667
        %2829 = vmatprep.subr.bf16.mxu0 0
        %2830 = vmatpush2.bf16.msra.mxu0 %v2666
        %2831 = vmatprep.subr.bf16.mxu0 0
        %2832 = vmatpush2.bf16.msra.mxu0 %v2665
        %2833 = vmatprep.mubr.bf16.mxu0 %v2082
        %2834 = vmatmul.mubr.bf16.gmra.mxu0 %v2081
        %v2835 = vpop.f32.mrf.mxu0
        %v2836 = vadd.f32 %v1632, %v2835
        %v2837 = vpop.f32.mrf.mxu0
        %v2838 = vpop.f32.mrf.mxu0
        %v2839 = vadd.f32 %v1632, %v2838
        %v2840 = vpop.f32.mrf.mxu0
        %2841 = vmatprep.mubr.bf16.mxu0 %v2091
        %2842 = vmatmul.mubr.bf16.gmra.mxu0 %v2090
        %v2843 = vpop.f32.mrf.mxu0
        %v2844 = vadd.f32 %v1632, %v2843
        %v2845 = vpop.f32.mrf.mxu0
        %v2846 = vpop.f32.mrf.mxu0
        %v2847 = vadd.f32 %v1632, %v2846
        %v2848 = vpop.f32.mrf.mxu0
        %2849 = vmatprep.mubr.bf16.mxu0 %v2100
        %2850 = vmatmul.mubr.bf16.gmra.mxu0 %v2099
        %v2851 = vpop.f32.mrf.mxu0
        %v2852 = vadd.f32 %v1632, %v2851
        %v2853 = vpop.f32.mrf.mxu0
        %v2854 = vpop.f32.mrf.mxu0
        %v2855 = vadd.f32 %v1632, %v2854
        %v2856 = vpop.f32.mrf.mxu0
        %2857 = vmatprep.mubr.bf16.mxu0 %v2109
        %2858 = vmatmul.mubr.bf16.gmra.mxu0 %v2108
        %v2859 = vpop.f32.mrf.mxu0
        %v2860 = vadd.f32 %v1632, %v2859
        %v2861 = vpop.f32.mrf.mxu0
        %v2862 = vpop.f32.mrf.mxu0
        %v2863 = vadd.f32 %v1632, %v2862
        %v2864 = vpop.f32.mrf.mxu0
        %2865 = vmatprep.mubr.bf16.mxu0 %v2118
        %2866 = vmatmul.mubr.bf16.gmra.mxu0 %v2117
        %v2867 = vpop.f32.mrf.mxu0
        %v2868 = vadd.f32 %v1632, %v2867
        %v2869 = vpop.f32.mrf.mxu0
        %v2870 = vpop.f32.mrf.mxu0
        %v2871 = vadd.f32 %v1632, %v2870
        %v2872 = vpop.f32.mrf.mxu0
        %2873 = vmatprep.mubr.bf16.mxu0 %v2127
        %2874 = vmatmul.mubr.bf16.gmra.mxu0 %v2126
        %v2875 = vpop.f32.mrf.mxu0
        %v2876 = vadd.f32 %v1632, %v2875
        %v2877 = vpop.f32.mrf.mxu0
        %v2878 = vpop.f32.mrf.mxu0
        %v2879 = vadd.f32 %v1632, %v2878
        %v2880 = vpop.f32.mrf.mxu0
        %2881 = vmatprep.mubr.bf16.mxu0 %v2136
        %2882 = vmatmul.mubr.bf16.gmra.mxu0 %v2135
        %v2883 = vpop.f32.mrf.mxu0
        %v2884 = vadd.f32 %v1632, %v2883
        %v2885 = vpop.f32.mrf.mxu0
        %v2886 = vpop.f32.mrf.mxu0
        %v2887 = vadd.f32 %v1632, %v2886
        %v2888 = vpop.f32.mrf.mxu0
        %2889 = vmatprep.mubr.bf16.mxu0 %v2145
        %2890 = vmatmul.mubr.bf16.gmra.mxu0 %v2144
        %v2891 = vpop.f32.mrf.mxu0
        %v2892 = vadd.f32 %v1632, %v2891
        %v2893 = vpop.f32.mrf.mxu0
        %v2894 = vpop.f32.mrf.mxu0
        %v2895 = vadd.f32 %v1632, %v2894
        %v2896 = vpop.f32.mrf.mxu0
        %2897 = vmatprep.mubr.bf16.mxu0 %v2154
        %2898 = vmatmul.mubr.bf16.gmra.mxu0 %v2153
        %v2899 = vpop.f32.mrf.mxu0
        %v2900 = vadd.f32 %v1632, %v2899
        %v2901 = vpop.f32.mrf.mxu0
        %v2902 = vpop.f32.mrf.mxu0
        %v2903 = vadd.f32 %v1632, %v2902
        %v2904 = vpop.f32.mrf.mxu0
        %2905 = vmatprep.mubr.bf16.mxu0 %v2163
        %2906 = vmatmul.mubr.bf16.gmra.mxu0 %v2162
        %v2907 = vpop.f32.mrf.mxu0
        %v2908 = vadd.f32 %v1632, %v2907
        %v2909 = vpop.f32.mrf.mxu0
        %v2910 = vpop.f32.mrf.mxu0
        %v2911 = vadd.f32 %v1632, %v2910
        %v2912 = vpop.f32.mrf.mxu0
        %2913 = vmatprep.mubr.bf16.mxu0 %v2172
        %2914 = vmatmul.mubr.bf16.gmra.mxu0 %v2171
        %v2915 = vpop.f32.mrf.mxu0
        %v2916 = vadd.f32 %v1632, %v2915
        %v2917 = vpop.f32.mrf.mxu0
        %v2918 = vpop.f32.mrf.mxu0
        %v2919 = vadd.f32 %v1632, %v2918
        %v2920 = vpop.f32.mrf.mxu0
        %2921 = vmatprep.mubr.bf16.mxu0 %v2181
        %2922 = vmatmul.mubr.bf16.gmra.mxu0 %v2180
        %v2923 = vpop.f32.mrf.mxu0
        %v2924 = vadd.f32 %v1632, %v2923
        %v2925 = vpop.f32.mrf.mxu0
        %v2926 = vpop.f32.mrf.mxu0
        %v2927 = vadd.f32 %v1632, %v2926
        %v2928 = vpop.f32.mrf.mxu0
        %2929 = vmatprep.mubr.bf16.mxu0 %v2190
        %2930 = vmatmul.mubr.bf16.gmra.mxu0 %v2189
        %v2931 = vpop.f32.mrf.mxu0
        %v2932 = vadd.f32 %v1632, %v2931
        %v2933 = vpop.f32.mrf.mxu0
        %v2934 = vpop.f32.mrf.mxu0
        %v2935 = vadd.f32 %v1632, %v2934
        %v2936 = vpop.f32.mrf.mxu0
        %2937 = vmatprep.mubr.bf16.mxu0 %v2199
        %2938 = vmatmul.mubr.bf16.gmra.mxu0 %v2198
        %v2939 = vpop.f32.mrf.mxu0
        %v2940 = vadd.f32 %v1632, %v2939
        %v2941 = vpop.f32.mrf.mxu0
        %v2942 = vpop.f32.mrf.mxu0
        %v2943 = vadd.f32 %v1632, %v2942
        %v2944 = vpop.f32.mrf.mxu0
        %2945 = vmatprep.mubr.bf16.mxu0 %v2208
        %2946 = vmatmul.mubr.bf16.gmra.mxu0 %v2207
        %v2947 = vpop.f32.mrf.mxu0
        %v2948 = vadd.f32 %v1632, %v2947
        %v2949 = vpop.f32.mrf.mxu0
        %v2950 = vpop.f32.mrf.mxu0
        %v2951 = vadd.f32 %v1632, %v2950
        %v2952 = vpop.f32.mrf.mxu0
        %2953 = vmatprep.mubr.bf16.mxu0 %v2217
        %2954 = vmatmul.mubr.bf16.gmra.mxu0 %v2216
        %v2955 = vpop.f32.mrf.mxu0
        %v2956 = vadd.f32 %v1632, %v2955
        %v2957 = vpop.f32.mrf.mxu0
        %v2958 = vpop.f32.mrf.mxu0
        %v2959 = vadd.f32 %v1632, %v2958
        %v2960 = vpop.f32.mrf.mxu0
        %2961 = vdwg.mxu0
        %2962 = vmatprep.subr.bf16.mxu0 0
        %2963 = vmatpush1.bf16.msra.mxu0 %v2680
        %2964 = vmatprep.subr.bf16.mxu0 0
        %2965 = vmatpush1.bf16.msra.mxu0 %v2679
        %2966 = vmatprep.subr.bf16.mxu0 0
        %2967 = vmatpush1.bf16.msra.mxu0 %v2678
        %2968 = vmatprep.subr.bf16.mxu0 0
        %2969 = vmatpush1.bf16.msra.mxu0 %v2677
        %2970 = vmatprep.subr.bf16.mxu0 0
        %2971 = vmatpush1.bf16.msra.mxu0 %v2676
        %2972 = vmatprep.subr.bf16.mxu0 0
        %2973 = vmatpush1.bf16.msra.mxu0 %v2675
        %2974 = vmatprep.subr.bf16.mxu0 0
        %2975 = vmatpush1.bf16.msra.mxu0 %v2674
        %2976 = vmatprep.subr.bf16.mxu0 0
        %2977 = vmatpush1.bf16.msra.mxu0 %v2673
        %2978 = vmatprep.subr.bf16.mxu0 0
        %2979 = vmatpush2.bf16.msra.mxu0 %v2688
        %2980 = vmatprep.subr.bf16.mxu0 0
        %2981 = vmatpush2.bf16.msra.mxu0 %v2687
        %2982 = vmatprep.subr.bf16.mxu0 0
        %2983 = vmatpush2.bf16.msra.mxu0 %v2686
        %2984 = vmatprep.subr.bf16.mxu0 0
        %2985 = vmatpush2.bf16.msra.mxu0 %v2685
        %2986 = vmatprep.subr.bf16.mxu0 0
        %2987 = vmatpush2.bf16.msra.mxu0 %v2684
        %2988 = vmatprep.subr.bf16.mxu0 0
        %2989 = vmatpush2.bf16.msra.mxu0 %v2683
        %2990 = vmatprep.subr.bf16.mxu0 0
        %2991 = vmatpush2.bf16.msra.mxu0 %v2682
        %2992 = vmatprep.subr.bf16.mxu0 0
        %2993 = vmatpush2.bf16.msra.mxu0 %v2681
        %2994 = vmatprep.mubr.bf16.mxu0 %v2084
        %2995 = vmatmul.mubr.bf16.gmra.mxu0 %v2083
        %v2996 = vpop.f32.mrf.mxu0
        %v2997 = vadd.f32 %v2836, %v2996
        %v2998 = vpop.f32.mrf.mxu0
        %v2999 = vpop.f32.mrf.mxu0
        %v3000 = vadd.f32 %v2839, %v2999
        %v3001 = vpop.f32.mrf.mxu0
        %3002 = vmatprep.mubr.bf16.mxu0 %v2093
        %3003 = vmatmul.mubr.bf16.gmra.mxu0 %v2092
        %v3004 = vpop.f32.mrf.mxu0
        %v3005 = vadd.f32 %v2844, %v3004
        %v3006 = vpop.f32.mrf.mxu0
        %v3007 = vpop.f32.mrf.mxu0
        %v3008 = vadd.f32 %v2847, %v3007
        %v3009 = vpop.f32.mrf.mxu0
        %3010 = vmatprep.mubr.bf16.mxu0 %v2102
        %3011 = vmatmul.mubr.bf16.gmra.mxu0 %v2101
        %v3012 = vpop.f32.mrf.mxu0
        %v3013 = vadd.f32 %v2852, %v3012
        %v3014 = vpop.f32.mrf.mxu0
        %v3015 = vpop.f32.mrf.mxu0
        %v3016 = vadd.f32 %v2855, %v3015
        %v3017 = vpop.f32.mrf.mxu0
        %3018 = vmatprep.mubr.bf16.mxu0 %v2111
        %3019 = vmatmul.mubr.bf16.gmra.mxu0 %v2110
        %v3020 = vpop.f32.mrf.mxu0
        %v3021 = vadd.f32 %v2860, %v3020
        %v3022 = vpop.f32.mrf.mxu0
        %v3023 = vpop.f32.mrf.mxu0
        %v3024 = vadd.f32 %v2863, %v3023
        %v3025 = vpop.f32.mrf.mxu0
        %3026 = vmatprep.mubr.bf16.mxu0 %v2120
        %3027 = vmatmul.mubr.bf16.gmra.mxu0 %v2119
        %v3028 = vpop.f32.mrf.mxu0
        %v3029 = vadd.f32 %v2868, %v3028
        %v3030 = vpop.f32.mrf.mxu0
        %v3031 = vpop.f32.mrf.mxu0
        %v3032 = vadd.f32 %v2871, %v3031
        %v3033 = vpop.f32.mrf.mxu0
        %3034 = vmatprep.mubr.bf16.mxu0 %v2129
        %3035 = vmatmul.mubr.bf16.gmra.mxu0 %v2128
        %v3036 = vpop.f32.mrf.mxu0
        %v3037 = vadd.f32 %v2876, %v3036
        %v3038 = vpop.f32.mrf.mxu0
        %v3039 = vpop.f32.mrf.mxu0
        %v3040 = vadd.f32 %v2879, %v3039
        %v3041 = vpop.f32.mrf.mxu0
        %3042 = vmatprep.mubr.bf16.mxu0 %v2138
        %3043 = vmatmul.mubr.bf16.gmra.mxu0 %v2137
        %v3044 = vpop.f32.mrf.mxu0
        %v3045 = vadd.f32 %v2884, %v3044
        %v3046 = vpop.f32.mrf.mxu0
        %v3047 = vpop.f32.mrf.mxu0
        %v3048 = vadd.f32 %v2887, %v3047
        %v3049 = vpop.f32.mrf.mxu0
        %3050 = vmatprep.mubr.bf16.mxu0 %v2147
        %3051 = vmatmul.mubr.bf16.gmra.mxu0 %v2146
        %v3052 = vpop.f32.mrf.mxu0
        %v3053 = vadd.f32 %v2892, %v3052
        %v3054 = vpop.f32.mrf.mxu0
        %v3055 = vpop.f32.mrf.mxu0
        %v3056 = vadd.f32 %v2895, %v3055
        %v3057 = vpop.f32.mrf.mxu0
        %3058 = vmatprep.mubr.bf16.mxu0 %v2156
        %3059 = vmatmul.mubr.bf16.gmra.mxu0 %v2155
        %v3060 = vpop.f32.mrf.mxu0
        %v3061 = vadd.f32 %v2900, %v3060
        %v3062 = vpop.f32.mrf.mxu0
        %v3063 = vpop.f32.mrf.mxu0
        %v3064 = vadd.f32 %v2903, %v3063
        %v3065 = vpop.f32.mrf.mxu0
        %3066 = vmatprep.mubr.bf16.mxu0 %v2165
        %3067 = vmatmul.mubr.bf16.gmra.mxu0 %v2164
        %v3068 = vpop.f32.mrf.mxu0
        %v3069 = vadd.f32 %v2908, %v3068
        %v3070 = vpop.f32.mrf.mxu0
        %v3071 = vpop.f32.mrf.mxu0
        %v3072 = vadd.f32 %v2911, %v3071
        %v3073 = vpop.f32.mrf.mxu0
        %3074 = vmatprep.mubr.bf16.mxu0 %v2174
        %3075 = vmatmul.mubr.bf16.gmra.mxu0 %v2173
        %v3076 = vpop.f32.mrf.mxu0
        %v3077 = vadd.f32 %v2916, %v3076
        %v3078 = vpop.f32.mrf.mxu0
        %v3079 = vpop.f32.mrf.mxu0
        %v3080 = vadd.f32 %v2919, %v3079
        %v3081 = vpop.f32.mrf.mxu0
        %3082 = vmatprep.mubr.bf16.mxu0 %v2183
        %3083 = vmatmul.mubr.bf16.gmra.mxu0 %v2182
        %v3084 = vpop.f32.mrf.mxu0
        %v3085 = vadd.f32 %v2924, %v3084
        %v3086 = vpop.f32.mrf.mxu0
        %v3087 = vpop.f32.mrf.mxu0
        %v3088 = vadd.f32 %v2927, %v3087
        %v3089 = vpop.f32.mrf.mxu0
        %3090 = vmatprep.mubr.bf16.mxu0 %v2192
        %3091 = vmatmul.mubr.bf16.gmra.mxu0 %v2191
        %v3092 = vpop.f32.mrf.mxu0
        %v3093 = vadd.f32 %v2932, %v3092
        %v3094 = vpop.f32.mrf.mxu0
        %v3095 = vpop.f32.mrf.mxu0
        %v3096 = vadd.f32 %v2935, %v3095
        %v3097 = vpop.f32.mrf.mxu0
        %3098 = vmatprep.mubr.bf16.mxu0 %v2201
        %3099 = vmatmul.mubr.bf16.gmra.mxu0 %v2200
        %v3100 = vpop.f32.mrf.mxu0
        %v3101 = vadd.f32 %v2940, %v3100
        %v3102 = vpop.f32.mrf.mxu0
        %v3103 = vpop.f32.mrf.mxu0
        %v3104 = vadd.f32 %v2943, %v3103
        %v3105 = vpop.f32.mrf.mxu0
        %3106 = vmatprep.mubr.bf16.mxu0 %v2210
        %3107 = vmatmul.mubr.bf16.gmra.mxu0 %v2209
        %v3108 = vpop.f32.mrf.mxu0
        %v3109 = vadd.f32 %v2948, %v3108
        %v3110 = vpop.f32.mrf.mxu0
        %v3111 = vpop.f32.mrf.mxu0
        %v3112 = vadd.f32 %v2951, %v3111
        %v3113 = vpop.f32.mrf.mxu0
        %3114 = vmatprep.mubr.bf16.mxu0 %v2219
        %3115 = vmatmul.mubr.bf16.gmra.mxu0 %v2218
        %v3116 = vpop.f32.mrf.mxu0
        %v3117 = vadd.f32 %v2956, %v3116
        %v3118 = vpop.f32.mrf.mxu0
        %v3119 = vpop.f32.mrf.mxu0
        %v3120 = vadd.f32 %v2959, %v3119
        %v3121 = vpop.f32.mrf.mxu0
        %3122 = vdwg.mxu0
        %3123 = vmatprep.subr.bf16.mxu0 0
        %3124 = vmatpush1.bf16.msra.mxu0 %v2696
        %3125 = vmatprep.subr.bf16.mxu0 0
        %3126 = vmatpush1.bf16.msra.mxu0 %v2695
        %3127 = vmatprep.subr.bf16.mxu0 0
        %3128 = vmatpush1.bf16.msra.mxu0 %v2694
        %3129 = vmatprep.subr.bf16.mxu0 0
        %3130 = vmatpush1.bf16.msra.mxu0 %v2693
        %3131 = vmatprep.subr.bf16.mxu0 0
        %3132 = vmatpush1.bf16.msra.mxu0 %v2692
        %3133 = vmatprep.subr.bf16.mxu0 0
        %3134 = vmatpush1.bf16.msra.mxu0 %v2691
        %3135 = vmatprep.subr.bf16.mxu0 0
        %3136 = vmatpush1.bf16.msra.mxu0 %v2690
        %3137 = vmatprep.subr.bf16.mxu0 0
        %3138 = vmatpush1.bf16.msra.mxu0 %v2689
        %3139 = vmatprep.subr.bf16.mxu0 0
        %3140 = vmatpush2.bf16.msra.mxu0 %v2704
        %3141 = vmatprep.subr.bf16.mxu0 0
        %3142 = vmatpush2.bf16.msra.mxu0 %v2703
        %3143 = vmatprep.subr.bf16.mxu0 0
        %3144 = vmatpush2.bf16.msra.mxu0 %v2702
        %3145 = vmatprep.subr.bf16.mxu0 0
        %3146 = vmatpush2.bf16.msra.mxu0 %v2701
        %3147 = vmatprep.subr.bf16.mxu0 0
        %3148 = vmatpush2.bf16.msra.mxu0 %v2700
        %3149 = vmatprep.subr.bf16.mxu0 0
        %3150 = vmatpush2.bf16.msra.mxu0 %v2699
        %3151 = vmatprep.subr.bf16.mxu0 0
        %3152 = vmatpush2.bf16.msra.mxu0 %v2698
        %3153 = vmatprep.subr.bf16.mxu0 0
        %3154 = vmatpush2.bf16.msra.mxu0 %v2697
        %3155 = vmatprep.mubr.bf16.mxu0 %v2086
        %3156 = vmatmul.mubr.bf16.gmra.mxu0 %v2085
        %v3157 = vpop.f32.mrf.mxu0
        %v3158 = vadd.f32 %v2997, %v3157
        %v3159 = vpop.f32.mrf.mxu0
        %v3160 = vpop.f32.mrf.mxu0
        %v3161 = vadd.f32 %v3000, %v3160
        %v3162 = vpop.f32.mrf.mxu0
        %3163 = vmatprep.mubr.bf16.mxu0 %v2095
        %3164 = vmatmul.mubr.bf16.gmra.mxu0 %v2094
        %v3165 = vpop.f32.mrf.mxu0
        %v3166 = vadd.f32 %v3005, %v3165
        %v3167 = vpop.f32.mrf.mxu0
        %v3168 = vpop.f32.mrf.mxu0
        %v3169 = vadd.f32 %v3008, %v3168
        %v3170 = vpop.f32.mrf.mxu0
        %3171 = vmatprep.mubr.bf16.mxu0 %v2104
        %3172 = vmatmul.mubr.bf16.gmra.mxu0 %v2103
        %v3173 = vpop.f32.mrf.mxu0
        %v3174 = vadd.f32 %v3013, %v3173
        %v3175 = vpop.f32.mrf.mxu0
        %v3176 = vpop.f32.mrf.mxu0
        %v3177 = vadd.f32 %v3016, %v3176
        %v3178 = vpop.f32.mrf.mxu0
        %3179 = vmatprep.mubr.bf16.mxu0 %v2113
        %3180 = vmatmul.mubr.bf16.gmra.mxu0 %v2112
        %v3181 = vpop.f32.mrf.mxu0
        %v3182 = vadd.f32 %v3021, %v3181
        %v3183 = vpop.f32.mrf.mxu0
        %v3184 = vpop.f32.mrf.mxu0
        %v3185 = vadd.f32 %v3024, %v3184
        %v3186 = vpop.f32.mrf.mxu0
        %3187 = vmatprep.mubr.bf16.mxu0 %v2122
        %3188 = vmatmul.mubr.bf16.gmra.mxu0 %v2121
        %v3189 = vpop.f32.mrf.mxu0
        %v3190 = vadd.f32 %v3029, %v3189
        %v3191 = vpop.f32.mrf.mxu0
        %v3192 = vpop.f32.mrf.mxu0
        %v3193 = vadd.f32 %v3032, %v3192
        %v3194 = vpop.f32.mrf.mxu0
        %3195 = vmatprep.mubr.bf16.mxu0 %v2131
        %3196 = vmatmul.mubr.bf16.gmra.mxu0 %v2130
        %v3197 = vpop.f32.mrf.mxu0
        %v3198 = vadd.f32 %v3037, %v3197
        %v3199 = vpop.f32.mrf.mxu0
        %v3200 = vpop.f32.mrf.mxu0
        %v3201 = vadd.f32 %v3040, %v3200
        %v3202 = vpop.f32.mrf.mxu0
        %3203 = vmatprep.mubr.bf16.mxu0 %v2140
        %3204 = vmatmul.mubr.bf16.gmra.mxu0 %v2139
        %v3205 = vpop.f32.mrf.mxu0
        %v3206 = vadd.f32 %v3045, %v3205
        %v3207 = vpop.f32.mrf.mxu0
        %v3208 = vpop.f32.mrf.mxu0
        %v3209 = vadd.f32 %v3048, %v3208
        %v3210 = vpop.f32.mrf.mxu0
        %3211 = vmatprep.mubr.bf16.mxu0 %v2149
        %3212 = vmatmul.mubr.bf16.gmra.mxu0 %v2148
        %v3213 = vpop.f32.mrf.mxu0
        %v3214 = vadd.f32 %v3053, %v3213
        %v3215 = vpop.f32.mrf.mxu0
        %v3216 = vpop.f32.mrf.mxu0
        %v3217 = vadd.f32 %v3056, %v3216
        %v3218 = vpop.f32.mrf.mxu0
        %3219 = vmatprep.mubr.bf16.mxu0 %v2158
        %3220 = vmatmul.mubr.bf16.gmra.mxu0 %v2157
        %v3221 = vpop.f32.mrf.mxu0
        %v3222 = vadd.f32 %v3061, %v3221
        %v3223 = vpop.f32.mrf.mxu0
        %v3224 = vpop.f32.mrf.mxu0
        %v3225 = vadd.f32 %v3064, %v3224
        %v3226 = vpop.f32.mrf.mxu0
        %3227 = vmatprep.mubr.bf16.mxu0 %v2167
        %3228 = vmatmul.mubr.bf16.gmra.mxu0 %v2166
        %v3229 = vpop.f32.mrf.mxu0
        %v3230 = vadd.f32 %v3069, %v3229
        %v3231 = vpop.f32.mrf.mxu0
        %v3232 = vpop.f32.mrf.mxu0
        %v3233 = vadd.f32 %v3072, %v3232
        %v3234 = vpop.f32.mrf.mxu0
        %3235 = vmatprep.mubr.bf16.mxu0 %v2176
        %3236 = vmatmul.mubr.bf16.gmra.mxu0 %v2175
        %v3237 = vpop.f32.mrf.mxu0
        %v3238 = vadd.f32 %v3077, %v3237
        %v3239 = vpop.f32.mrf.mxu0
        %v3240 = vpop.f32.mrf.mxu0
        %v3241 = vadd.f32 %v3080, %v3240
        %v3242 = vpop.f32.mrf.mxu0
        %3243 = vmatprep.mubr.bf16.mxu0 %v2185
        %3244 = vmatmul.mubr.bf16.gmra.mxu0 %v2184
        %v3245 = vpop.f32.mrf.mxu0
        %v3246 = vadd.f32 %v3085, %v3245
        %v3247 = vpop.f32.mrf.mxu0
        %v3248 = vpop.f32.mrf.mxu0
        %v3249 = vadd.f32 %v3088, %v3248
        %v3250 = vpop.f32.mrf.mxu0
        %3251 = vmatprep.mubr.bf16.mxu0 %v2194
        %3252 = vmatmul.mubr.bf16.gmra.mxu0 %v2193
        %v3253 = vpop.f32.mrf.mxu0
        %v3254 = vadd.f32 %v3093, %v3253
        %v3255 = vpop.f32.mrf.mxu0
        %v3256 = vpop.f32.mrf.mxu0
        %v3257 = vadd.f32 %v3096, %v3256
        %v3258 = vpop.f32.mrf.mxu0
        %3259 = vmatprep.mubr.bf16.mxu0 %v2203
        %3260 = vmatmul.mubr.bf16.gmra.mxu0 %v2202
        %v3261 = vpop.f32.mrf.mxu0
        %v3262 = vadd.f32 %v3101, %v3261
        %v3263 = vpop.f32.mrf.mxu0
        %v3264 = vpop.f32.mrf.mxu0
        %v3265 = vadd.f32 %v3104, %v3264
        %v3266 = vpop.f32.mrf.mxu0
        %3267 = vmatprep.mubr.bf16.mxu0 %v2212
        %3268 = vmatmul.mubr.bf16.gmra.mxu0 %v2211
        %v3269 = vpop.f32.mrf.mxu0
        %v3270 = vadd.f32 %v3109, %v3269
        %v3271 = vpop.f32.mrf.mxu0
        %v3272 = vpop.f32.mrf.mxu0
        %v3273 = vadd.f32 %v3112, %v3272
        %v3274 = vpop.f32.mrf.mxu0
        %3275 = vmatprep.mubr.bf16.mxu0 %v2221
        %3276 = vmatmul.mubr.bf16.gmra.mxu0 %v2220
        %v3277 = vpop.f32.mrf.mxu0
        %v3278 = vadd.f32 %v3117, %v3277
        %v3279 = vpop.f32.mrf.mxu0
        %v3280 = vpop.f32.mrf.mxu0
        %v3281 = vadd.f32 %v3120, %v3280
        %v3282 = vpop.f32.mrf.mxu0
        %3283 = vdwg.mxu0
        %3284 = vmatprep.subr.bf16.mxu0 0
        %3285 = vmatpush1.bf16.msra.mxu0 %v2712
        %3286 = vmatprep.subr.bf16.mxu0 0
        %3287 = vmatpush1.bf16.msra.mxu0 %v2711
        %3288 = vmatprep.subr.bf16.mxu0 0
        %3289 = vmatpush1.bf16.msra.mxu0 %v2710
        %3290 = vmatprep.subr.bf16.mxu0 0
        %3291 = vmatpush1.bf16.msra.mxu0 %v2709
        %3292 = vmatprep.subr.bf16.mxu0 0
        %3293 = vmatpush1.bf16.msra.mxu0 %v2708
        %3294 = vmatprep.subr.bf16.mxu0 0
        %3295 = vmatpush1.bf16.msra.mxu0 %v2707
        %3296 = vmatprep.subr.bf16.mxu0 0
        %3297 = vmatpush1.bf16.msra.mxu0 %v2706
        %3298 = vmatprep.subr.bf16.mxu0 0
        %3299 = vmatpush1.bf16.msra.mxu0 %v2705
        %3300 = vmatprep.subr.bf16.mxu0 0
        %3301 = vmatpush2.bf16.msra.mxu0 %v2720
        %3302 = vmatprep.subr.bf16.mxu0 0
        %3303 = vmatpush2.bf16.msra.mxu0 %v2719
        %3304 = vmatprep.subr.bf16.mxu0 0
        %3305 = vmatpush2.bf16.msra.mxu0 %v2718
        %3306 = vmatprep.subr.bf16.mxu0 0
        %3307 = vmatpush2.bf16.msra.mxu0 %v2717
        %3308 = vmatprep.subr.bf16.mxu0 0
        %3309 = vmatpush2.bf16.msra.mxu0 %v2716
        %3310 = vmatprep.subr.bf16.mxu0 0
        %3311 = vmatpush2.bf16.msra.mxu0 %v2715
        %3312 = vmatprep.subr.bf16.mxu0 0
        %3313 = vmatpush2.bf16.msra.mxu0 %v2714
        %3314 = vmatprep.subr.bf16.mxu0 0
        %3315 = vmatpush2.bf16.msra.mxu0 %v2713
        %3316 = vmatprep.mubr.bf16.mxu0 %v2088
        %3317 = vmatmul.mubr.bf16.gmra.mxu0 %v2087
        %v3318 = vpop.f32.mrf.mxu0
        %v3319 = vadd.f32 %v3158, %v3318
        %v3320 = vpop.f32.mrf.mxu0
        %v3321 = vpop.f32.mrf.mxu0
        %v3322 = vadd.f32 %v3161, %v3321
        %v3323 = vpop.f32.mrf.mxu0
        %3324 = vmatprep.mubr.bf16.mxu0 %v2097
        %3325 = vmatmul.mubr.bf16.gmra.mxu0 %v2096
        %v3326 = vpop.f32.mrf.mxu0
        %v3327 = vadd.f32 %v3166, %v3326
        %v3328 = vpop.f32.mrf.mxu0
        %v3329 = vpop.f32.mrf.mxu0
        %v3330 = vadd.f32 %v3169, %v3329
        %v3331 = vpop.f32.mrf.mxu0
        %3332 = vmatprep.mubr.bf16.mxu0 %v2106
        %3333 = vmatmul.mubr.bf16.gmra.mxu0 %v2105
        %v3334 = vpop.f32.mrf.mxu0
        %v3335 = vadd.f32 %v3174, %v3334
        %v3336 = vpop.f32.mrf.mxu0
        %v3337 = vpop.f32.mrf.mxu0
        %v3338 = vadd.f32 %v3177, %v3337
        %v3339 = vpop.f32.mrf.mxu0
        %3340 = vmatprep.mubr.bf16.mxu0 %v2115
        %3341 = vmatmul.mubr.bf16.gmra.mxu0 %v2114
        %v3342 = vpop.f32.mrf.mxu0
        %v3343 = vadd.f32 %v3182, %v3342
        %v3344 = vpop.f32.mrf.mxu0
        %v3345 = vpop.f32.mrf.mxu0
        %v3346 = vadd.f32 %v3185, %v3345
        %v3347 = vpop.f32.mrf.mxu0
        %3348 = vmatprep.mubr.bf16.mxu0 %v2124
        %3349 = vmatmul.mubr.bf16.gmra.mxu0 %v2123
        %v3350 = vpop.f32.mrf.mxu0
        %v3351 = vadd.f32 %v3190, %v3350
        %v3352 = vpop.f32.mrf.mxu0
        %v3353 = vpop.f32.mrf.mxu0
        %v3354 = vadd.f32 %v3193, %v3353
        %v3355 = vpop.f32.mrf.mxu0
        %3356 = vmatprep.mubr.bf16.mxu0 %v2133
        %3357 = vmatmul.mubr.bf16.gmra.mxu0 %v2132
        %v3358 = vpop.f32.mrf.mxu0
        %v3359 = vadd.f32 %v3198, %v3358
        %v3360 = vpop.f32.mrf.mxu0
        %v3361 = vpop.f32.mrf.mxu0
        %v3362 = vadd.f32 %v3201, %v3361
        %v3363 = vpop.f32.mrf.mxu0
        %3364 = vmatprep.mubr.bf16.mxu0 %v2142
        %3365 = vmatmul.mubr.bf16.gmra.mxu0 %v2141
        %v3366 = vpop.f32.mrf.mxu0
        %v3367 = vadd.f32 %v3206, %v3366
        %v3368 = vpop.f32.mrf.mxu0
        %v3369 = vpop.f32.mrf.mxu0
        %v3370 = vadd.f32 %v3209, %v3369
        %v3371 = vpop.f32.mrf.mxu0
        %3372 = vmatprep.mubr.bf16.mxu0 %v2151
        %3373 = vmatmul.mubr.bf16.gmra.mxu0 %v2150
        %v3374 = vpop.f32.mrf.mxu0
        %v3375 = vadd.f32 %v3214, %v3374
        %v3376 = vpop.f32.mrf.mxu0
        %v3377 = vpop.f32.mrf.mxu0
        %v3378 = vadd.f32 %v3217, %v3377
        %v3379 = vpop.f32.mrf.mxu0
        %3380 = vmatprep.mubr.bf16.mxu0 %v2160
        %3381 = vmatmul.mubr.bf16.gmra.mxu0 %v2159
        %v3382 = vpop.f32.mrf.mxu0
        %v3383 = vadd.f32 %v3222, %v3382
        %v3384 = vpop.f32.mrf.mxu0
        %v3385 = vpop.f32.mrf.mxu0
        %v3386 = vadd.f32 %v3225, %v3385
        %v3387 = vpop.f32.mrf.mxu0
        %3388 = vmatprep.mubr.bf16.mxu0 %v2169
        %3389 = vmatmul.mubr.bf16.gmra.mxu0 %v2168
        %v3390 = vpop.f32.mrf.mxu0
        %v3391 = vadd.f32 %v3230, %v3390
        %v3392 = vpop.f32.mrf.mxu0
        %v3393 = vpop.f32.mrf.mxu0
        %v3394 = vadd.f32 %v3233, %v3393
        %v3395 = vpop.f32.mrf.mxu0
        %3396 = vmatprep.mubr.bf16.mxu0 %v2178
        %3397 = vmatmul.mubr.bf16.gmra.mxu0 %v2177
        %v3398 = vpop.f32.mrf.mxu0
        %v3399 = vadd.f32 %v3238, %v3398
        %v3400 = vpop.f32.mrf.mxu0
        %v3401 = vpop.f32.mrf.mxu0
        %v3402 = vadd.f32 %v3241, %v3401
        %v3403 = vpop.f32.mrf.mxu0
        %3404 = vmatprep.mubr.bf16.mxu0 %v2187
        %3405 = vmatmul.mubr.bf16.gmra.mxu0 %v2186
        %v3406 = vpop.f32.mrf.mxu0
        %v3407 = vadd.f32 %v3246, %v3406
        %v3408 = vpop.f32.mrf.mxu0
        %v3409 = vpop.f32.mrf.mxu0
        %v3410 = vadd.f32 %v3249, %v3409
        %v3411 = vpop.f32.mrf.mxu0
        %3412 = vmatprep.mubr.bf16.mxu0 %v2196
        %3413 = vmatmul.mubr.bf16.gmra.mxu0 %v2195
        %v3414 = vpop.f32.mrf.mxu0
        %v3415 = vadd.f32 %v3254, %v3414
        %v3416 = vpop.f32.mrf.mxu0
        %v3417 = vpop.f32.mrf.mxu0
        %v3418 = vadd.f32 %v3257, %v3417
        %v3419 = vpop.f32.mrf.mxu0
        %3420 = vmatprep.mubr.bf16.mxu0 %v2205
        %3421 = vmatmul.mubr.bf16.gmra.mxu0 %v2204
        %v3422 = vpop.f32.mrf.mxu0
        %v3423 = vadd.f32 %v3262, %v3422
        %v3424 = vpop.f32.mrf.mxu0
        %v3425 = vpop.f32.mrf.mxu0
        %v3426 = vadd.f32 %v3265, %v3425
        %v3427 = vpop.f32.mrf.mxu0
        %3428 = vmatprep.mubr.bf16.mxu0 %v2214
        %3429 = vmatmul.mubr.bf16.gmra.mxu0 %v2213
        %v3430 = vpop.f32.mrf.mxu0
        %v3431 = vadd.f32 %v3270, %v3430
        %v3432 = vpop.f32.mrf.mxu0
        %v3433 = vpop.f32.mrf.mxu0
        %v3434 = vadd.f32 %v3273, %v3433
        %v3435 = vpop.f32.mrf.mxu0
        %3436 = vmatprep.mubr.bf16.mxu0 %v2223
        %3437 = vmatmul.mubr.bf16.gmra.mxu0 %v2222
        %v3438 = vpop.f32.mrf.mxu0
        %v3439 = vadd.f32 %v3278, %v3438
        %v3440 = vpop.f32.mrf.mxu0
        %v3441 = vpop.f32.mrf.mxu0
        %v3442 = vadd.f32 %v3281, %v3441
        %v3443 = vpop.f32.mrf.mxu0
        %3444 = vdwg.mxu0
        %3445 = vmatprep.subr.bf16.mxu0 0
        %3446 = vmatpush1.bf16.msra.mxu0 %v2728
        %3447 = vmatprep.subr.bf16.mxu0 0
        %3448 = vmatpush1.bf16.msra.mxu0 %v2727
        %3449 = vmatprep.subr.bf16.mxu0 0
        %3450 = vmatpush1.bf16.msra.mxu0 %v2726
        %3451 = vmatprep.subr.bf16.mxu0 0
        %3452 = vmatpush1.bf16.msra.mxu0 %v2725
        %3453 = vmatprep.subr.bf16.mxu0 0
        %3454 = vmatpush1.bf16.msra.mxu0 %v2724
        %3455 = vmatprep.subr.bf16.mxu0 0
        %3456 = vmatpush1.bf16.msra.mxu0 %v2723
        %3457 = vmatprep.subr.bf16.mxu0 0
        %3458 = vmatpush1.bf16.msra.mxu0 %v2722
        %3459 = vmatprep.subr.bf16.mxu0 0
        %3460 = vmatpush1.bf16.msra.mxu0 %v2721
        %3461 = vmatprep.subr.bf16.mxu0 0
        %3462 = vmatpush2.bf16.msra.mxu0 0
        %3463 = vmatprep.subr.bf16.mxu0 0
        %3464 = vmatpush2.bf16.msra.mxu0 0
        %3465 = vmatprep.subr.bf16.mxu0 0
        %3466 = vmatpush2.bf16.msra.mxu0 0
        %3467 = vmatprep.subr.bf16.mxu0 0
        %3468 = vmatpush2.bf16.msra.mxu0 0
        %3469 = vmatprep.subr.bf16.mxu0 0
        %3470 = vmatpush2.bf16.msra.mxu0 0
        %3471 = vmatprep.subr.bf16.mxu0 0
        %3472 = vmatpush2.bf16.msra.mxu0 0
        %3473 = vmatprep.subr.bf16.mxu0 0
        %3474 = vmatpush2.bf16.msra.mxu0 0
        %3475 = vmatprep.subr.bf16.mxu0 0
        %3476 = vmatpush2.bf16.msra.mxu0 0
        %3477 = vmatprep.mubr.bf16.mxu0 0
        %3478 = vmatmul.mubr.bf16.gmra.mxu0 %v2089
        %v3479 = vpop.f32.mrf.mxu0
        %v3480 = vadd.f32 %v3319, %v3479
        %v3481 = vpop.f32.mrf.mxu0
        %v3482 = vpop.f32.mrf.mxu0
        %v3483 = vadd.f32 %v3322, %v3482
        %v3484 = vpop.f32.mrf.mxu0
        %3485 = vmatprep.mubr.bf16.mxu0 0
        %3486 = vmatmul.mubr.bf16.gmra.mxu0 %v2098
        %v3487 = vpop.f32.mrf.mxu0
        %v3488 = vadd.f32 %v3327, %v3487
        %v3489 = vpop.f32.mrf.mxu0
        %v3490 = vpop.f32.mrf.mxu0
        %v3491 = vadd.f32 %v3330, %v3490
        %v3492 = vpop.f32.mrf.mxu0
        %3493 = vmatprep.mubr.bf16.mxu0 0
        %3494 = vmatmul.mubr.bf16.gmra.mxu0 %v2107
        %v3495 = vpop.f32.mrf.mxu0
        %v3496 = vadd.f32 %v3335, %v3495
        %v3497 = vpop.f32.mrf.mxu0
        %v3498 = vpop.f32.mrf.mxu0
        %v3499 = vadd.f32 %v3338, %v3498
        %v3500 = vpop.f32.mrf.mxu0
        %3501 = vmatprep.mubr.bf16.mxu0 0
        %3502 = vmatmul.mubr.bf16.gmra.mxu0 %v2116
        %v3503 = vpop.f32.mrf.mxu0
        %v3504 = vadd.f32 %v3343, %v3503
        %v3505 = vpop.f32.mrf.mxu0
        %v3506 = vpop.f32.mrf.mxu0
        %v3507 = vadd.f32 %v3346, %v3506
        %v3508 = vpop.f32.mrf.mxu0
        %3509 = vmatprep.mubr.bf16.mxu0 0
        %3510 = vmatmul.mubr.bf16.gmra.mxu0 %v2125
        %v3511 = vpop.f32.mrf.mxu0
        %v3512 = vadd.f32 %v3351, %v3511
        %v3513 = vpop.f32.mrf.mxu0
        %v3514 = vpop.f32.mrf.mxu0
        %v3515 = vadd.f32 %v3354, %v3514
        %v3516 = vpop.f32.mrf.mxu0
        %3517 = vmatprep.mubr.bf16.mxu0 0
        %3518 = vmatmul.mubr.bf16.gmra.mxu0 %v2134
        %v3519 = vpop.f32.mrf.mxu0
        %v3520 = vadd.f32 %v3359, %v3519
        %v3521 = vpop.f32.mrf.mxu0
        %v3522 = vpop.f32.mrf.mxu0
        %v3523 = vadd.f32 %v3362, %v3522
        %v3524 = vpop.f32.mrf.mxu0
        %3525 = vmatprep.mubr.bf16.mxu0 0
        %3526 = vmatmul.mubr.bf16.gmra.mxu0 %v2143
        %v3527 = vpop.f32.mrf.mxu0
        %v3528 = vadd.f32 %v3367, %v3527
        %v3529 = vpop.f32.mrf.mxu0
        %v3530 = vpop.f32.mrf.mxu0
        %v3531 = vadd.f32 %v3370, %v3530
        %v3532 = vpop.f32.mrf.mxu0
        %3533 = vmatprep.mubr.bf16.mxu0 0
        %3534 = vmatmul.mubr.bf16.gmra.mxu0 %v2152
        %v3535 = vpop.f32.mrf.mxu0
        %v3536 = vadd.f32 %v3375, %v3535
        %v3537 = vpop.f32.mrf.mxu0
        %v3538 = vpop.f32.mrf.mxu0
        %v3539 = vadd.f32 %v3378, %v3538
        %v3540 = vpop.f32.mrf.mxu0
        %3541 = vmatprep.mubr.bf16.mxu0 0
        %3542 = vmatmul.mubr.bf16.gmra.mxu0 %v2161
        %v3543 = vpop.f32.mrf.mxu0
        %v3544 = vadd.f32 %v3383, %v3543
        %v3545 = vpop.f32.mrf.mxu0
        %v3546 = vpop.f32.mrf.mxu0
        %v3547 = vadd.f32 %v3386, %v3546
        %v3548 = vpop.f32.mrf.mxu0
        %3549 = vmatprep.mubr.bf16.mxu0 0
        %3550 = vmatmul.mubr.bf16.gmra.mxu0 %v2170
        %v3551 = vpop.f32.mrf.mxu0
        %v3552 = vadd.f32 %v3391, %v3551
        %v3553 = vpop.f32.mrf.mxu0
        %v3554 = vpop.f32.mrf.mxu0
        %v3555 = vadd.f32 %v3394, %v3554
        %v3556 = vpop.f32.mrf.mxu0
        %3557 = vmatprep.mubr.bf16.mxu0 0
        %3558 = vmatmul.mubr.bf16.gmra.mxu0 %v2179
        %v3559 = vpop.f32.mrf.mxu0
        %v3560 = vadd.f32 %v3399, %v3559
        %v3561 = vpop.f32.mrf.mxu0
        %v3562 = vpop.f32.mrf.mxu0
        %v3563 = vadd.f32 %v3402, %v3562
        %v3564 = vpop.f32.mrf.mxu0
        %3565 = vmatprep.mubr.bf16.mxu0 0
        %3566 = vmatmul.mubr.bf16.gmra.mxu0 %v2188
        %v3567 = vpop.f32.mrf.mxu0
        %v3568 = vadd.f32 %v3407, %v3567
        %v3569 = vpop.f32.mrf.mxu0
        %v3570 = vpop.f32.mrf.mxu0
        %v3571 = vadd.f32 %v3410, %v3570
        %v3572 = vpop.f32.mrf.mxu0
        %3573 = vmatprep.mubr.bf16.mxu0 0
        %3574 = vmatmul.mubr.bf16.gmra.mxu0 %v2197
        %v3575 = vpop.f32.mrf.mxu0
        %v3576 = vadd.f32 %v3415, %v3575
        %v3577 = vpop.f32.mrf.mxu0
        %v3578 = vpop.f32.mrf.mxu0
        %v3579 = vadd.f32 %v3418, %v3578
        %v3580 = vpop.f32.mrf.mxu0
        %3581 = vmatprep.mubr.bf16.mxu0 0
        %3582 = vmatmul.mubr.bf16.gmra.mxu0 %v2206
        %v3583 = vpop.f32.mrf.mxu0
        %v3584 = vadd.f32 %v3423, %v3583
        %v3585 = vpop.f32.mrf.mxu0
        %v3586 = vpop.f32.mrf.mxu0
        %v3587 = vadd.f32 %v3426, %v3586
        %v3588 = vpop.f32.mrf.mxu0
        %3589 = vmatprep.mubr.bf16.mxu0 0
        %3590 = vmatmul.mubr.bf16.gmra.mxu0 %v2215
        %v3591 = vpop.f32.mrf.mxu0
        %v3592 = vadd.f32 %v3431, %v3591
        %v3593 = vpop.f32.mrf.mxu0
        %v3594 = vpop.f32.mrf.mxu0
        %v3595 = vadd.f32 %v3434, %v3594
        %v3596 = vpop.f32.mrf.mxu0
        %3597 = vmatprep.mubr.bf16.mxu0 0
        %3598 = vmatmul.mubr.bf16.gmra.mxu0 %v2224
        %v3599 = vpop.f32.mrf.mxu0
        %v3600 = vadd.f32 %v3439, %v3599
        %v3601 = vpop.f32.mrf.mxu0
        %v3602 = vpop.f32.mrf.mxu0
        %v3603 = vadd.f32 %v3442, %v3602
        %v3604 = vpop.f32.mrf.mxu0
        %3605 = vdwg.mxu0
        %v3606 = vld [vmem:[%s289] sm:$0xf]
        %v3607 = vld [vmem:[%s289 + $0x4] sm:$0xf]
        %v3608 = vld [vmem:[%s289 + $0x8] sm:$0xf]
        %v3609 = vld [vmem:[%s289 + $0xc] sm:$0xf]
        %v3610 = vld [vmem:[%s289 + $0x10] sm:$0xf]
        %v3611 = vld [vmem:[%s289 + $0x14] sm:$0xf]
        %v3612 = vld [vmem:[%s289 + $0x18] sm:$0xf]
        %v3613 = vld [vmem:[%s289 + $0x1c] sm:$0xf]
        %v3614 = vld [vmem:[%s289 + $0x20] sm:$0xf]
        %v3615 = vld [vmem:[%s289 + $0x24] sm:$0xf]
        %v3616 = vld [vmem:[%s289 + $0x28] sm:$0xf]
        %v3617 = vld [vmem:[%s289 + $0x2c] sm:$0xf]
        %v3618 = vld [vmem:[%s289 + $0x30] sm:$0xf]
        %v3619 = vld [vmem:[%s289 + $0x34] sm:$0xf]
        %v3620 = vld [vmem:[%s289 + $0x38] sm:$0xf]
        %v3621 = vld [vmem:[%s289 + $0x3c] sm:$0xf]
        %v3622 = vld [vmem:[%s289 + $0x40] sm:$0xf]
        %v3623 = vld [vmem:[%s289 + $0x44] sm:$0xf]
        %v3624 = vld [vmem:[%s289 + $0x48] sm:$0xf]
        %v3625 = vld [vmem:[%s289 + $0x4c] sm:$0xf]
        %v3626 = vld [vmem:[%s289 + $0x50] sm:$0xf]
        %v3627 = vld [vmem:[%s289 + $0x54] sm:$0xf]
        %v3628 = vld [vmem:[%s289 + $0x58] sm:$0xf]
        %v3629 = vld [vmem:[%s289 + $0x5c] sm:$0xf]
        %v3630 = vld [vmem:[%s289 + $0x60] sm:$0xf]
        %v3631 = vld [vmem:[%s289 + $0x64] sm:$0xf]
        %v3632 = vld [vmem:[%s289 + $0x68] sm:$0xf]
        %v3633 = vld [vmem:[%s289 + $0x6c] sm:$0xf]
        %v3634 = vld [vmem:[%s289 + $0x70] sm:$0xf]
        %v3635 = vld [vmem:[%s289 + $0x74] sm:$0xf]
        %v3636 = vld [vmem:[%s289 + $0x78] sm:$0xf]
        %v3637 = vld [vmem:[%s289 + $0x7c] sm:$0xf]
        %v3638 = vunpack.c.l.bf16 %v3606
        %v3639 = vunpack.c.l.bf16 %v3607
        %v3640 = vunpack.c.l.bf16 %v3608
        %v3641 = vunpack.c.l.bf16 %v3609
        %v3642 = vunpack.c.l.bf16 %v3610
        %v3643 = vunpack.c.l.bf16 %v3611
        %v3644 = vunpack.c.l.bf16 %v3612
        %v3645 = vunpack.c.l.bf16 %v3613
        %v3646 = vunpack.c.l.bf16 %v3614
        %v3647 = vunpack.c.l.bf16 %v3615
        %v3648 = vunpack.c.l.bf16 %v3616
        %v3649 = vunpack.c.l.bf16 %v3617
        %v3650 = vunpack.c.l.bf16 %v3618
        %v3651 = vunpack.c.l.bf16 %v3619
        %v3652 = vunpack.c.l.bf16 %v3620
        %v3653 = vunpack.c.l.bf16 %v3621
        %v3654 = vunpack.c.l.bf16 %v3622
        %v3655 = vunpack.c.l.bf16 %v3623
        %v3656 = vunpack.c.l.bf16 %v3624
        %v3657 = vunpack.c.l.bf16 %v3625
        %v3658 = vunpack.c.l.bf16 %v3626
        %v3659 = vunpack.c.l.bf16 %v3627
        %v3660 = vunpack.c.l.bf16 %v3628
        %v3661 = vunpack.c.l.bf16 %v3629
        %v3662 = vunpack.c.l.bf16 %v3630
        %v3663 = vunpack.c.l.bf16 %v3631
        %v3664 = vunpack.c.l.bf16 %v3632
        %v3665 = vunpack.c.l.bf16 %v3633
        %v3666 = vunpack.c.l.bf16 %v3634
        %v3667 = vunpack.c.l.bf16 %v3635
        %v3668 = vunpack.c.l.bf16 %v3636
        %v3669 = vunpack.c.l.bf16 %v3637
        %v3670 = vadd.f32 %v3480, %v3638
        %v3671 = vadd.f32 %v3483, %v3639
        %v3672 = vadd.f32 %v3488, %v3640
        %v3673 = vadd.f32 %v3491, %v3641
        %v3674 = vadd.f32 %v3496, %v3642
        %v3675 = vadd.f32 %v3499, %v3643
        %v3676 = vadd.f32 %v3504, %v3644
        %v3677 = vadd.f32 %v3507, %v3645
        %v3678 = vadd.f32 %v3512, %v3646
        %v3679 = vadd.f32 %v3515, %v3647
        %v3680 = vadd.f32 %v3520, %v3648
        %v3681 = vadd.f32 %v3523, %v3649
        %v3682 = vadd.f32 %v3528, %v3650
        %v3683 = vadd.f32 %v3531, %v3651
        %v3684 = vadd.f32 %v3536, %v3652
        %v3685 = vadd.f32 %v3539, %v3653
        %v3686 = vadd.f32 %v3544, %v3654
        %v3687 = vadd.f32 %v3547, %v3655
        %v3688 = vadd.f32 %v3552, %v3656
        %v3689 = vadd.f32 %v3555, %v3657
        %v3690 = vadd.f32 %v3560, %v3658
        %v3691 = vadd.f32 %v3563, %v3659
        %v3692 = vadd.f32 %v3568, %v3660
        %v3693 = vadd.f32 %v3571, %v3661
        %v3694 = vadd.f32 %v3576, %v3662
        %v3695 = vadd.f32 %v3579, %v3663
        %v3696 = vadd.f32 %v3584, %v3664
        %v3697 = vadd.f32 %v3587, %v3665
        %v3698 = vadd.f32 %v3592, %v3666
        %v3699 = vadd.f32 %v3595, %v3667
        %v3700 = vadd.f32 %v3600, %v3668
        %v3701 = vadd.f32 %v3603, %v3669
        %v3702 = vxor.u32 %v3670, 2147483648
        %v3703 = vxor.u32 %v3671, 2147483648
        %v3704 = vxor.u32 %v3672, 2147483648
        %v3705 = vxor.u32 %v3673, 2147483648
        %v3706 = vxor.u32 %v3674, 2147483648
        %v3707 = vxor.u32 %v3675, 2147483648
        %v3708 = vxor.u32 %v3676, 2147483648
        %v3709 = vxor.u32 %v3677, 2147483648
        %v3710 = vxor.u32 %v3678, 2147483648
        %v3711 = vxor.u32 %v3679, 2147483648
        %v3712 = vxor.u32 %v3680, 2147483648
        %v3713 = vxor.u32 %v3681, 2147483648
        %v3714 = vxor.u32 %v3682, 2147483648
        %v3715 = vxor.u32 %v3683, 2147483648
        %v3716 = vxor.u32 %v3684, 2147483648
        %v3717 = vxor.u32 %v3685, 2147483648
        %v3718 = vxor.u32 %v3686, 2147483648
        %v3719 = vxor.u32 %v3687, 2147483648
        %v3720 = vxor.u32 %v3688, 2147483648
        %v3721 = vxor.u32 %v3689, 2147483648
        %v3722 = vxor.u32 %v3690, 2147483648
        %v3723 = vxor.u32 %v3691, 2147483648
        %v3724 = vxor.u32 %v3692, 2147483648
        %v3725 = vxor.u32 %v3693, 2147483648
        %v3726 = vxor.u32 %v3694, 2147483648
        %v3727 = vxor.u32 %v3695, 2147483648
        %v3728 = vxor.u32 %v3696, 2147483648
        %v3729 = vxor.u32 %v3697, 2147483648
        %v3730 = vxor.u32 %v3698, 2147483648
        %v3731 = vxor.u32 %v3699, 2147483648
        %v3732 = vxor.u32 %v3700, 2147483648
        %v3733 = vxor.u32 %v3701, 2147483648
        %v3734 = vmul.f32 %v3702, 1.442695
        %v3735 = vpow.pop %v3734
        %v3736 = vmul.f32 %v3703, 1.442695
        %v3737 = vpow.pop %v3736
        %v3738 = vmul.f32 %v3704, 1.442695
        %v3739 = vpow.pop %v3738
        %v3740 = vmul.f32 %v3705, 1.442695
        %v3741 = vpow.pop %v3740
        %v3742 = vmul.f32 %v3706, 1.442695
        %v3743 = vpow.pop %v3742
        %v3744 = vmul.f32 %v3707, 1.442695
        %v3745 = vpow.pop %v3744
        %v3746 = vmul.f32 %v3708, 1.442695
        %v3747 = vpow.pop %v3746
        %v3748 = vmul.f32 %v3709, 1.442695
        %v3749 = vpow.pop %v3748
        %v3750 = vmul.f32 %v3710, 1.442695
        %v3751 = vpow.pop %v3750
        %v3752 = vmul.f32 %v3711, 1.442695
        %v3753 = vpow.pop %v3752
        %v3754 = vmul.f32 %v3712, 1.442695
        %v3755 = vpow.pop %v3754
        %v3756 = vmul.f32 %v3713, 1.442695
        %v3757 = vpow.pop %v3756
        %v3758 = vmul.f32 %v3714, 1.442695
        %v3759 = vpow.pop %v3758
        %v3760 = vmul.f32 %v3715, 1.442695
        %v3761 = vpow.pop %v3760
        %v3762 = vmul.f32 %v3716, 1.442695
        %v3763 = vpow.pop %v3762
        %v3764 = vmul.f32 %v3717, 1.442695
        %v3765 = vpow.pop %v3764
        %v3766 = vmul.f32 %v3718, 1.442695
        %v3767 = vpow.pop %v3766
        %v3768 = vmul.f32 %v3719, 1.442695
        %v3769 = vpow.pop %v3768
        %v3770 = vmul.f32 %v3720, 1.442695
        %v3771 = vpow.pop %v3770
        %v3772 = vmul.f32 %v3721, 1.442695
        %v3773 = vpow.pop %v3772
        %v3774 = vmul.f32 %v3722, 1.442695
        %v3775 = vpow.pop %v3774
        %v3776 = vmul.f32 %v3723, 1.442695
        %v3777 = vpow.pop %v3776
        %v3778 = vmul.f32 %v3724, 1.442695
        %v3779 = vpow.pop %v3778
        %v3780 = vmul.f32 %v3725, 1.442695
        %v3781 = vpow.pop %v3780
        %v3782 = vmul.f32 %v3726, 1.442695
        %v3783 = vpow.pop %v3782
        %v3784 = vmul.f32 %v3727, 1.442695
        %v3785 = vpow.pop %v3784
        %v3786 = vmul.f32 %v3728, 1.442695
        %v3787 = vpow.pop %v3786
        %v3788 = vmul.f32 %v3729, 1.442695
        %v3789 = vpow.pop %v3788
        %v3790 = vmul.f32 %v3730, 1.442695
        %v3791 = vpow.pop %v3790
        %v3792 = vmul.f32 %v3731, 1.442695
        %v3793 = vpow.pop %v3792
        %v3794 = vmul.f32 %v3732, 1.442695
        %v3795 = vpow.pop %v3794
        %v3796 = vmul.f32 %v3733, 1.442695
        %v3797 = vpow.pop %v3796
        %v3798 = vadd.f32 %v3735, 1.0
        %v3799 = vadd.f32 %v3737, 1.0
        %v3800 = vadd.f32 %v3739, 1.0
        %v3801 = vadd.f32 %v3741, 1.0
        %v3802 = vadd.f32 %v3743, 1.0
        %v3803 = vadd.f32 %v3745, 1.0
        %v3804 = vadd.f32 %v3747, 1.0
        %v3805 = vadd.f32 %v3749, 1.0
        %v3806 = vadd.f32 %v3751, 1.0
        %v3807 = vadd.f32 %v3753, 1.0
        %v3808 = vadd.f32 %v3755, 1.0
        %v3809 = vadd.f32 %v3757, 1.0
        %v3810 = vadd.f32 %v3759, 1.0
        %v3811 = vadd.f32 %v3761, 1.0
        %v3812 = vadd.f32 %v3763, 1.0
        %v3813 = vadd.f32 %v3765, 1.0
        %v3814 = vadd.f32 %v3767, 1.0
        %v3815 = vadd.f32 %v3769, 1.0
        %v3816 = vadd.f32 %v3771, 1.0
        %v3817 = vadd.f32 %v3773, 1.0
        %v3818 = vadd.f32 %v3775, 1.0
        %v3819 = vadd.f32 %v3777, 1.0
        %v3820 = vadd.f32 %v3779, 1.0
        %v3821 = vadd.f32 %v3781, 1.0
        %v3822 = vadd.f32 %v3783, 1.0
        %v3823 = vadd.f32 %v3785, 1.0
        %v3824 = vadd.f32 %v3787, 1.0
        %v3825 = vadd.f32 %v3789, 1.0
        %v3826 = vadd.f32 %v3791, 1.0
        %v3827 = vadd.f32 %v3793, 1.0
        %v3828 = vadd.f32 %v3795, 1.0
        %v3829 = vadd.f32 %v3797, 1.0
        %v3830 = vrcp.pop %v3798
        %v3831 = vmul.f32 1.0, %v3830
        %v3832 = vrcp.pop %v3799
        %v3833 = vmul.f32 1.0, %v3832
        %v3834 = vrcp.pop %v3800
        %v3835 = vmul.f32 1.0, %v3834
        %v3836 = vrcp.pop %v3801
        %v3837 = vmul.f32 1.0, %v3836
        %v3838 = vrcp.pop %v3802
        %v3839 = vmul.f32 1.0, %v3838
        %v3840 = vrcp.pop %v3803
        %v3841 = vmul.f32 1.0, %v3840
        %v3842 = vrcp.pop %v3804
        %v3843 = vmul.f32 1.0, %v3842
        %v3844 = vrcp.pop %v3805
        %v3845 = vmul.f32 1.0, %v3844
        %v3846 = vrcp.pop %v3806
        %v3847 = vmul.f32 1.0, %v3846
        %v3848 = vrcp.pop %v3807
        %v3849 = vmul.f32 1.0, %v3848
        %v3850 = vrcp.pop %v3808
        %v3851 = vmul.f32 1.0, %v3850
        %v3852 = vrcp.pop %v3809
        %v3853 = vmul.f32 1.0, %v3852
        %v3854 = vrcp.pop %v3810
        %v3855 = vmul.f32 1.0, %v3854
        %v3856 = vrcp.pop %v3811
        %v3857 = vmul.f32 1.0, %v3856
        %v3858 = vrcp.pop %v3812
        %v3859 = vmul.f32 1.0, %v3858
        %v3860 = vrcp.pop %v3813
        %v3861 = vmul.f32 1.0, %v3860
        %v3862 = vrcp.pop %v3814
        %v3863 = vmul.f32 1.0, %v3862
        %v3864 = vrcp.pop %v3815
        %v3865 = vmul.f32 1.0, %v3864
        %v3866 = vrcp.pop %v3816
        %v3867 = vmul.f32 1.0, %v3866
        %v3868 = vrcp.pop %v3817
        %v3869 = vmul.f32 1.0, %v3868
        %v3870 = vrcp.pop %v3818
        %v3871 = vmul.f32 1.0, %v3870
        %v3872 = vrcp.pop %v3819
        %v3873 = vmul.f32 1.0, %v3872
        %v3874 = vrcp.pop %v3820
        %v3875 = vmul.f32 1.0, %v3874
        %v3876 = vrcp.pop %v3821
        %v3877 = vmul.f32 1.0, %v3876
        %v3878 = vrcp.pop %v3822
        %v3879 = vmul.f32 1.0, %v3878
        %v3880 = vrcp.pop %v3823
        %v3881 = vmul.f32 1.0, %v3880
        %v3882 = vrcp.pop %v3824
        %v3883 = vmul.f32 1.0, %v3882
        %v3884 = vrcp.pop %v3825
        %v3885 = vmul.f32 1.0, %v3884
        %v3886 = vrcp.pop %v3826
        %v3887 = vmul.f32 1.0, %v3886
        %v3888 = vrcp.pop %v3827
        %v3889 = vmul.f32 1.0, %v3888
        %v3890 = vrcp.pop %v3828
        %v3891 = vmul.f32 1.0, %v3890
        %v3892 = vrcp.pop %v3829
        %v3893 = vmul.f32 1.0, %v3892
        %v3894 = vld [vmem:[%s279] sm:$0xff]
        %v3895 = vld [vmem:[%s279 + $0x8] sm:$0xff]
        %v3896 = vld [vmem:[%s279 + $0x10] sm:$0xff]
        %v3897 = vld [vmem:[%s279 + $0x18] sm:$0xff]
        %v3898 = vld [vmem:[%s279 + $0x20] sm:$0xff]
        %v3899 = vld [vmem:[%s279 + $0x28] sm:$0xff]
        %v3900 = vld [vmem:[%s279 + $0x30] sm:$0xff]
        %v3901 = vld [vmem:[%s279 + $0x38] sm:$0xff]
        %v3902 = vld [vmem:[%s279 + $0x40] sm:$0xff]
        %v3903 = vld [vmem:[%s279 + $0x48] sm:$0xff]
        %v3904 = vld [vmem:[%s279 + $0x50] sm:$0xff]
        %v3905 = vld [vmem:[%s279 + $0x58] sm:$0xff]
        %v3906 = vld [vmem:[%s279 + $0x60] sm:$0xff]
        %v3907 = vld [vmem:[%s279 + $0x68] sm:$0xff]
        %v3908 = vld [vmem:[%s279 + $0x70] sm:$0xff]
        %v3909 = vld [vmem:[%s279 + $0x78] sm:$0xff]
        %v3910 = vld [vmem:[%s279 + $0x80] sm:$0xff]
        %v3911 = vld [vmem:[%s279 + $0x88] sm:$0xff]
        %v3912 = vld [vmem:[%s279 + $0x90] sm:$0xff]
        %v3913 = vld [vmem:[%s279 + $0x98] sm:$0xff]
        %v3914 = vld [vmem:[%s279 + $0xa0] sm:$0xff]
        %v3915 = vld [vmem:[%s279 + $0xa8] sm:$0xff]
        %v3916 = vld [vmem:[%s279 + $0xb0] sm:$0xff]
        %v3917 = vld [vmem:[%s279 + $0xb8] sm:$0xff]
        %v3918 = vld [vmem:[%s279 + $0xc0] sm:$0xff]
        %v3919 = vld [vmem:[%s279 + $0xc8] sm:$0xff]
        %v3920 = vld [vmem:[%s279 + $0xd0] sm:$0xff]
        %v3921 = vld [vmem:[%s279 + $0xd8] sm:$0xff]
        %v3922 = vld [vmem:[%s279 + $0xe0] sm:$0xff]
        %v3923 = vld [vmem:[%s279 + $0xe8] sm:$0xff]
        %v3924 = vld [vmem:[%s279 + $0xf0] sm:$0xff]
        %v3925 = vld [vmem:[%s279 + $0xf8] sm:$0xff]
        %vm3926 = vcmask 261120
        %3927 = vst.msk [vmem:[#allocation3] sm:$0xff] %vm3926, 0.0
        %3928 = vst.msk [vmem:[#allocation3 + $0x8] sm:$0xff] %vm3926, 0.0
        %vm3929 = vcmask 254976
        %3930 = vst.msk [vmem:[#allocation3 + $0x10] sm:$0x3] %vm3929, 0.0
        %s3931 = scalar_lea.vmem [#allocation3], 408
        %3932 = vst.msk [vmem:[%s3931] sm:$0xff] %vm3926, 0.0
        %3933 = vst.msk [vmem:[%s3931 + $0x8] sm:$0xff] %vm3926, 0.0
        %3934 = vst.msk [vmem:[%s3931 + $0x10] sm:$0x3] %vm3929, 0.0
        %vm3935 = vcmask 253952
        %3936 = vst.msk [vmem:[#allocation3] sm:$0x1] %vm3935, 0.0
        %3937 = vst.msk [vmem:[#allocation3 + $0x18] sm:$0x1] %vm3935, 0.0
        %3938 = vst.msk [vmem:[#allocation3 + $0x30] sm:$0x1] %vm3935, 0.0
        %3939 = vst.msk [vmem:[#allocation3 + $0x48] sm:$0x1] %vm3935, 0.0
        %3940 = vst.msk [vmem:[#allocation3 + $0x60] sm:$0x1] %vm3935, 0.0
        %3941 = vst.msk [vmem:[#allocation3 + $0x78] sm:$0x1] %vm3935, 0.0
        %3942 = vst.msk [vmem:[#allocation3 + $0x90] sm:$0x1] %vm3935, 0.0
        %3943 = vst.msk [vmem:[#allocation3 + $0xa8] sm:$0x1] %vm3935, 0.0
        %3944 = vst.msk [vmem:[#allocation3 + $0xc0] sm:$0x1] %vm3935, 0.0
        %3945 = vst.msk [vmem:[#allocation3 + $0xd8] sm:$0x1] %vm3935, 0.0
        %3946 = vst.msk [vmem:[#allocation3 + $0xf0] sm:$0x1] %vm3935, 0.0
        %3947 = vst.msk [vmem:[#allocation3 + $0x108] sm:$0x1] %vm3935, 0.0
        %3948 = vst.msk [vmem:[#allocation3 + $0x120] sm:$0x1] %vm3935, 0.0
        %3949 = vst.msk [vmem:[#allocation3 + $0x138] sm:$0x1] %vm3935, 0.0
        %3950 = vst.msk [vmem:[#allocation3 + $0x150] sm:$0x1] %vm3935, 0.0
        %3951 = vst.msk [vmem:[#allocation3 + $0x168] sm:$0x1] %vm3935, 0.0
        %3952 = vst.msk [vmem:[#allocation3 + $0x180] sm:$0x1] %vm3935, 0.0
        %3953 = vst.msk [vmem:[#allocation3 + $0x198] sm:$0x1] %vm3935, 0.0
        %3954 = vst.msk [vmem:[#allocation3 + $0x11] sm:$0x1] %vm3935, 0.0
        %3955 = vst.msk [vmem:[#allocation3 + $0x29] sm:$0x1] %vm3935, 0.0
        %3956 = vst.msk [vmem:[#allocation3 + $0x41] sm:$0x1] %vm3935, 0.0
        %3957 = vst.msk [vmem:[#allocation3 + $0x59] sm:$0x1] %vm3935, 0.0
        %3958 = vst.msk [vmem:[#allocation3 + $0x71] sm:$0x1] %vm3935, 0.0
        %3959 = vst.msk [vmem:[#allocation3 + $0x89] sm:$0x1] %vm3935, 0.0
        %3960 = vst.msk [vmem:[#allocation3 + $0xa1] sm:$0x1] %vm3935, 0.0
        %3961 = vst.msk [vmem:[#allocation3 + $0xb9] sm:$0x1] %vm3935, 0.0
        %3962 = vst.msk [vmem:[#allocation3 + $0xd1] sm:$0x1] %vm3935, 0.0
        %3963 = vst.msk [vmem:[#allocation3 + $0xe9] sm:$0x1] %vm3935, 0.0
        %3964 = vst.msk [vmem:[#allocation3 + $0x101] sm:$0x1] %vm3935, 0.0
        %3965 = vst.msk [vmem:[#allocation3 + $0x119] sm:$0x1] %vm3935, 0.0
        %3966 = vst.msk [vmem:[#allocation3 + $0x131] sm:$0x1] %vm3935, 0.0
        %3967 = vst.msk [vmem:[#allocation3 + $0x149] sm:$0x1] %vm3935, 0.0
        %3968 = vst.msk [vmem:[#allocation3 + $0x161] sm:$0x1] %vm3935, 0.0
        %3969 = vst.msk [vmem:[#allocation3 + $0x179] sm:$0x1] %vm3935, 0.0
        %3970 = vst.msk [vmem:[#allocation3 + $0x191] sm:$0x1] %vm3935, 0.0
        %3971 = vst.msk [vmem:[#allocation3 + $0x1a9] sm:$0x1] %vm3935, 0.0
        %4004 = vrot.lane.b32.xlu0 %v3894, 32
        %v4005 = vpop.permute.xlu0 %4004
        %4006 = vrot.lane.b32.xlu0 %v3895, 32
        %v4007 = vpop.permute.xlu0 %4006
        %4008 = vrot.lane.b32.xlu0 %v3896, 32
        %v4009 = vpop.permute.xlu0 %4008
        %4010 = vrot.lane.b32.xlu0 %v3897, 32
        %v4011 = vpop.permute.xlu0 %4010
        %4012 = vrot.lane.b32.xlu0 %v3898, 32
        %v4013 = vpop.permute.xlu0 %4012
        %4014 = vrot.lane.b32.xlu0 %v3899, 32
        %v4015 = vpop.permute.xlu0 %4014
        %4016 = vrot.lane.b32.xlu0 %v3900, 32
        %v4017 = vpop.permute.xlu0 %4016
        %4018 = vrot.lane.b32.xlu0 %v3901, 32
        %v4019 = vpop.permute.xlu0 %4018
        %4020 = vrot.lane.b32.xlu0 %v3902, 32
        %v4021 = vpop.permute.xlu0 %4020
        %4022 = vrot.lane.b32.xlu0 %v3903, 32
        %v4023 = vpop.permute.xlu0 %4022
        %4024 = vrot.lane.b32.xlu0 %v3904, 32
        %v4025 = vpop.permute.xlu0 %4024
        %4026 = vrot.lane.b32.xlu0 %v3905, 32
        %v4027 = vpop.permute.xlu0 %4026
        %4028 = vrot.lane.b32.xlu0 %v3906, 32
        %v4029 = vpop.permute.xlu0 %4028
        %4030 = vrot.lane.b32.xlu0 %v3907, 32
        %v4031 = vpop.permute.xlu0 %4030
        %4032 = vrot.lane.b32.xlu0 %v3908, 32
        %v4033 = vpop.permute.xlu0 %4032
        %4034 = vrot.lane.b32.xlu0 %v3909, 32
        %v4035 = vpop.permute.xlu0 %4034
        %4036 = vrot.lane.b32.xlu0 %v3910, 32
        %v4037 = vpop.permute.xlu0 %4036
        %4038 = vrot.lane.b32.xlu0 %v3911, 32
        %v4039 = vpop.permute.xlu0 %4038
        %4040 = vrot.lane.b32.xlu0 %v3912, 32
        %v4041 = vpop.permute.xlu0 %4040
        %4042 = vrot.lane.b32.xlu0 %v3913, 32
        %v4043 = vpop.permute.xlu0 %4042
        %4044 = vrot.lane.b32.xlu0 %v3914, 32
        %v4045 = vpop.permute.xlu0 %4044
        %4046 = vrot.lane.b32.xlu0 %v3915, 32
        %v4047 = vpop.permute.xlu0 %4046
        %4048 = vrot.lane.b32.xlu0 %v3916, 32
        %v4049 = vpop.permute.xlu0 %4048
        %4050 = vrot.lane.b32.xlu0 %v3917, 32
        %v4051 = vpop.permute.xlu0 %4050
        %4052 = vrot.lane.b32.xlu0 %v3918, 32
        %v4053 = vpop.permute.xlu0 %4052
        %4054 = vrot.lane.b32.xlu0 %v3919, 32
        %v4055 = vpop.permute.xlu0 %4054
        %4056 = vrot.lane.b32.xlu0 %v3920, 32
        %v4057 = vpop.permute.xlu0 %4056
        %4058 = vrot.lane.b32.xlu0 %v3921, 32
        %v4059 = vpop.permute.xlu0 %4058
        %4060 = vrot.lane.b32.xlu0 %v3922, 32
        %v4061 = vpop.permute.xlu0 %4060
        %4062 = vrot.lane.b32.xlu0 %v3923, 32
        %v4063 = vpop.permute.xlu0 %4062
        %4064 = vrot.lane.b32.xlu0 %v3924, 32
        %v4065 = vpop.permute.xlu0 %4064
        %4066 = vrot.lane.b32.xlu0 %v3925, 32
        %v4067 = vpop.permute.xlu0 %4066
        %v4100 = vmul.f32 %v3831, %v4005
        %v4101 = vmul.f32 %v3833, %v4007
        %v4102 = vmul.f32 %v3835, %v4009
        %v4103 = vmul.f32 %v3837, %v4011
        %v4104 = vmul.f32 %v3839, %v4013
        %v4105 = vmul.f32 %v3841, %v4015
        %v4106 = vmul.f32 %v3843, %v4017
        %v4107 = vmul.f32 %v3845, %v4019
        %v4108 = vmul.f32 %v3847, %v4021
        %v4109 = vmul.f32 %v3849, %v4023
        %v4110 = vmul.f32 %v3851, %v4025
        %v4111 = vmul.f32 %v3853, %v4027
        %v4112 = vmul.f32 %v3855, %v4029
        %v4113 = vmul.f32 %v3857, %v4031
        %v4114 = vmul.f32 %v3859, %v4033
        %v4115 = vmul.f32 %v3861, %v4035
        %v4116 = vmul.f32 %v3863, %v4037
        %v4117 = vmul.f32 %v3865, %v4039
        %v4118 = vmul.f32 %v3867, %v4041
        %v4119 = vmul.f32 %v3869, %v4043
        %v4120 = vmul.f32 %v3871, %v4045
        %v4121 = vmul.f32 %v3873, %v4047
        %v4122 = vmul.f32 %v3875, %v4049
        %v4123 = vmul.f32 %v3877, %v4051
        %v4124 = vmul.f32 %v3879, %v4053
        %v4125 = vmul.f32 %v3881, %v4055
        %v4126 = vmul.f32 %v3883, %v4057
        %v4127 = vmul.f32 %v3885, %v4059
        %v4128 = vmul.f32 %v3887, %v4061
        %v4129 = vmul.f32 %v3889, %v4063
        %v4130 = vmul.f32 %v3891, %v4065
        %v4131 = vmul.f32 %v3893, %v4067
        %4164 = vrot.lane.b32.xlu0 %v4100, 96
        %v4165 = vpop.permute.xlu0 %4164
        %4166 = vrot.lane.b32.xlu0 %v4101, 96
        %v4167 = vpop.permute.xlu0 %4166
        %4168 = vrot.lane.b32.xlu0 %v4102, 96
        %v4169 = vpop.permute.xlu0 %4168
        %4170 = vrot.lane.b32.xlu0 %v4103, 96
        %v4171 = vpop.permute.xlu0 %4170
        %4172 = vrot.lane.b32.xlu0 %v4104, 96
        %v4173 = vpop.permute.xlu0 %4172
        %4174 = vrot.lane.b32.xlu0 %v4105, 96
        %v4175 = vpop.permute.xlu0 %4174
        %4176 = vrot.lane.b32.xlu0 %v4106, 96
        %v4177 = vpop.permute.xlu0 %4176
        %4178 = vrot.lane.b32.xlu0 %v4107, 96
        %v4179 = vpop.permute.xlu0 %4178
        %4180 = vrot.lane.b32.xlu0 %v4108, 96
        %v4181 = vpop.permute.xlu0 %4180
        %4182 = vrot.lane.b32.xlu0 %v4109, 96
        %v4183 = vpop.permute.xlu0 %4182
        %4184 = vrot.lane.b32.xlu0 %v4110, 96
        %v4185 = vpop.permute.xlu0 %4184
        %4186 = vrot.lane.b32.xlu0 %v4111, 96
        %v4187 = vpop.permute.xlu0 %4186
        %4188 = vrot.lane.b32.xlu0 %v4112, 96
        %v4189 = vpop.permute.xlu0 %4188
        %4190 = vrot.lane.b32.xlu0 %v4113, 96
        %v4191 = vpop.permute.xlu0 %4190
        %4192 = vrot.lane.b32.xlu0 %v4114, 96
        %v4193 = vpop.permute.xlu0 %4192
        %4194 = vrot.lane.b32.xlu0 %v4115, 96
        %v4195 = vpop.permute.xlu0 %4194
        %4196 = vrot.lane.b32.xlu0 %v4116, 96
        %v4197 = vpop.permute.xlu0 %4196
        %4198 = vrot.lane.b32.xlu0 %v4117, 96
        %v4199 = vpop.permute.xlu0 %4198
        %4200 = vrot.lane.b32.xlu0 %v4118, 96
        %v4201 = vpop.permute.xlu0 %4200
        %4202 = vrot.lane.b32.xlu0 %v4119, 96
        %v4203 = vpop.permute.xlu0 %4202
        %4204 = vrot.lane.b32.xlu0 %v4120, 96
        %v4205 = vpop.permute.xlu0 %4204
        %4206 = vrot.lane.b32.xlu0 %v4121, 96
        %v4207 = vpop.permute.xlu0 %4206
        %4208 = vrot.lane.b32.xlu0 %v4122, 96
        %v4209 = vpop.permute.xlu0 %4208
        %4210 = vrot.lane.b32.xlu0 %v4123, 96
        %v4211 = vpop.permute.xlu0 %4210
        %4212 = vrot.lane.b32.xlu0 %v4124, 96
        %v4213 = vpop.permute.xlu0 %4212
        %4214 = vrot.lane.b32.xlu0 %v4125, 96
        %v4215 = vpop.permute.xlu0 %4214
        %4216 = vrot.lane.b32.xlu0 %v4126, 96
        %v4217 = vpop.permute.xlu0 %4216
        %4218 = vrot.lane.b32.xlu0 %v4127, 96
        %v4219 = vpop.permute.xlu0 %4218
        %4220 = vrot.lane.b32.xlu0 %v4128, 96
        %v4221 = vpop.permute.xlu0 %4220
        %4222 = vrot.lane.b32.xlu0 %v4129, 96
        %v4223 = vpop.permute.xlu0 %4222
        %4224 = vrot.lane.b32.xlu0 %v4130, 96
        %v4225 = vpop.permute.xlu0 %4224
        %4226 = vrot.lane.b32.xlu0 %v4131, 96
        %v4227 = vpop.permute.xlu0 %4226
        %s4260 = scalar_lea.vmem [#allocation3], 24
        %4261 = vst.msk [vmem:[%s4260 + $0x1] sm:$0xff] %vm3926, %v4165
        %4262 = vst.msk [vmem:[%s4260 + $0x9] sm:$0xff] %vm3926, %v4167
        %4263 = vst.msk [vmem:[%s4260 + $0x19] sm:$0xff] %vm3926, %v4169
        %4264 = vst.msk [vmem:[%s4260 + $0x21] sm:$0xff] %vm3926, %v4171
        %4265 = vst.msk [vmem:[%s4260 + $0x31] sm:$0xff] %vm3926, %v4173
        %4266 = vst.msk [vmem:[%s4260 + $0x39] sm:$0xff] %vm3926, %v4175
        %4267 = vst.msk [vmem:[%s4260 + $0x49] sm:$0xff] %vm3926, %v4177
        %4268 = vst.msk [vmem:[%s4260 + $0x51] sm:$0xff] %vm3926, %v4179
        %4269 = vst.msk [vmem:[%s4260 + $0x61] sm:$0xff] %vm3926, %v4181
        %4270 = vst.msk [vmem:[%s4260 + $0x69] sm:$0xff] %vm3926, %v4183
        %4271 = vst.msk [vmem:[%s4260 + $0x79] sm:$0xff] %vm3926, %v4185
        %4272 = vst.msk [vmem:[%s4260 + $0x81] sm:$0xff] %vm3926, %v4187
        %4273 = vst.msk [vmem:[%s4260 + $0x91] sm:$0xff] %vm3926, %v4189
        %4274 = vst.msk [vmem:[%s4260 + $0x99] sm:$0xff] %vm3926, %v4191
        %4275 = vst.msk [vmem:[%s4260 + $0xa9] sm:$0xff] %vm3926, %v4193
        %4276 = vst.msk [vmem:[%s4260 + $0xb1] sm:$0xff] %vm3926, %v4195
        %4277 = vst.msk [vmem:[%s4260 + $0xc1] sm:$0xff] %vm3926, %v4197
        %4278 = vst.msk [vmem:[%s4260 + $0xc9] sm:$0xff] %vm3926, %v4199
        %4279 = vst.msk [vmem:[%s4260 + $0xd9] sm:$0xff] %vm3926, %v4201
        %4280 = vst.msk [vmem:[%s4260 + $0xe1] sm:$0xff] %vm3926, %v4203
        %4281 = vst.msk [vmem:[%s4260 + $0xf1] sm:$0xff] %vm3926, %v4205
        %4282 = vst.msk [vmem:[%s4260 + $0xf9] sm:$0xff] %vm3926, %v4207
        %4283 = vst.msk [vmem:[%s4260 + $0x109] sm:$0xff] %vm3926, %v4209
        %4284 = vst.msk [vmem:[%s4260 + $0x111] sm:$0xff] %vm3926, %v4211
        %4285 = vst.msk [vmem:[%s4260 + $0x121] sm:$0xff] %vm3926, %v4213
        %4286 = vst.msk [vmem:[%s4260 + $0x129] sm:$0xff] %vm3926, %v4215
        %4287 = vst.msk [vmem:[%s4260 + $0x139] sm:$0xff] %vm3926, %v4217
        %4288 = vst.msk [vmem:[%s4260 + $0x141] sm:$0xff] %vm3926, %v4219
        %4289 = vst.msk [vmem:[%s4260 + $0x151] sm:$0xff] %vm3926, %v4221
        %4290 = vst.msk [vmem:[%s4260 + $0x159] sm:$0xff] %vm3926, %v4223
        %4291 = vst.msk [vmem:[%s4260 + $0x169] sm:$0xff] %vm3926, %v4225
        %4292 = vst.msk [vmem:[%s4260 + $0x171] sm:$0xff] %vm3926, %v4227
        %v4293 = vld [vmem:[#allocation3] sm:$0xff]
        %v4294 = vld [vmem:[#allocation3 + $0x8] sm:$0xff]
        %v4295 = vld [vmem:[#allocation3 + $0x10] sm:$0x3]
        %v4296 = vld [vmem:[#allocation3 + $0x18] sm:$0xff]
        %v4297 = vld [vmem:[#allocation3 + $0x20] sm:$0xff]
        %v4298 = vld [vmem:[#allocation3 + $0x28] sm:$0x3]
        %v4299 = vld [vmem:[#allocation3 + $0x30] sm:$0xff]
        %v4300 = vld [vmem:[#allocation3 + $0x38] sm:$0xff]
        %v4301 = vld [vmem:[#allocation3 + $0x40] sm:$0x3]
        %v4302 = vld [vmem:[#allocation3 + $0x48] sm:$0xff]
        %v4303 = vld [vmem:[#allocation3 + $0x50] sm:$0xff]
        %v4304 = vld [vmem:[#allocation3 + $0x58] sm:$0x3]
        %v4305 = vld [vmem:[#allocation3 + $0x60] sm:$0xff]
        %v4306 = vld [vmem:[#allocation3 + $0x68] sm:$0xff]
        %v4307 = vld [vmem:[#allocation3 + $0x70] sm:$0x3]
        %v4308 = vld [vmem:[#allocation3 + $0x78] sm:$0xff]
        %v4309 = vld [vmem:[#allocation3 + $0x80] sm:$0xff]
        %v4310 = vld [vmem:[#allocation3 + $0x88] sm:$0x3]
        %v4311 = vld [vmem:[#allocation3 + $0x90] sm:$0xff]
        %v4312 = vld [vmem:[#allocation3 + $0x98] sm:$0xff]
        %v4313 = vld [vmem:[#allocation3 + $0xa0] sm:$0x3]
        %v4314 = vld [vmem:[#allocation3 + $0xa8] sm:$0xff]
        %v4315 = vld [vmem:[#allocation3 + $0xb0] sm:$0xff]
        %v4316 = vld [vmem:[#allocation3 + $0xb8] sm:$0x3]
        %v4317 = vld [vmem:[#allocation3 + $0xc0] sm:$0xff]
        %v4318 = vld [vmem:[#allocation3 + $0xc8] sm:$0xff]
        %v4319 = vld [vmem:[#allocation3 + $0xd0] sm:$0x3]
        %v4320 = vld [vmem:[#allocation3 + $0xd8] sm:$0xff]
        %v4321 = vld [vmem:[#allocation3 + $0xe0] sm:$0xff]
        %v4322 = vld [vmem:[#allocation3 + $0xe8] sm:$0x3]
        %v4323 = vld [vmem:[#allocation3 + $0xf0] sm:$0xff]
        %v4324 = vld [vmem:[#allocation3 + $0xf8] sm:$0xff]
        %v4325 = vld [vmem:[#allocation3 + $0x100] sm:$0x3]
        %v4326 = vld [vmem:[#allocation3 + $0x108] sm:$0xff]
        %v4327 = vld [vmem:[#allocation3 + $0x110] sm:$0xff]
        %v4328 = vld [vmem:[#allocation3 + $0x118] sm:$0x3]
        %v4329 = vld [vmem:[#allocation3 + $0x120] sm:$0xff]
        %v4330 = vld [vmem:[#allocation3 + $0x128] sm:$0xff]
        %v4331 = vld [vmem:[#allocation3 + $0x130] sm:$0x3]
        %v4332 = vld [vmem:[#allocation3 + $0x138] sm:$0xff]
        %v4333 = vld [vmem:[#allocation3 + $0x140] sm:$0xff]
        %v4334 = vld [vmem:[#allocation3 + $0x148] sm:$0x3]
        %v4335 = vld [vmem:[#allocation3 + $0x150] sm:$0xff]
        %v4336 = vld [vmem:[#allocation3 + $0x158] sm:$0xff]
        %v4337 = vld [vmem:[#allocation3 + $0x160] sm:$0x3]
        %v4338 = vld [vmem:[#allocation3 + $0x168] sm:$0xff]
        %v4339 = vld [vmem:[#allocation3 + $0x170] sm:$0xff]
        %v4340 = vld [vmem:[#allocation3 + $0x178] sm:$0x3]
        %v4341 = vld [vmem:[#allocation3 + $0x180] sm:$0xff]
        %v4342 = vld [vmem:[#allocation3 + $0x188] sm:$0xff]
        %v4343 = vld [vmem:[#allocation3 + $0x190] sm:$0x3]
        %v4344 = vld [vmem:[#allocation3 + $0x198] sm:$0xff]
        %v4345 = vld [vmem:[#allocation3 + $0x1a0] sm:$0xff]
        %v4346 = vld [vmem:[#allocation3 + $0x1a8] sm:$0x3]
        %v4347 = vpack.c.bf16 %v4294, %v4293
        %v4348 = vpack.c.bf16 %v4297, %v4296
        %v4349 = vpack.c.bf16 %v4300, %v4299
        %v4350 = vpack.c.bf16 %v4303, %v4302
        %v4351 = vpack.c.bf16 %v4306, %v4305
        %v4352 = vpack.c.bf16 %v4309, %v4308
        %v4353 = vpack.c.bf16 %v4312, %v4311
        %v4354 = vpack.c.bf16 %v4315, %v4314
        %v4355 = vpack.c.bf16 %v4318, %v4317
        %v4356 = vpack.c.bf16 %v4321, %v4320
        %v4357 = vpack.c.bf16 %v4324, %v4323
        %v4358 = vpack.c.bf16 %v4327, %v4326
        %v4359 = vpack.c.bf16 %v4330, %v4329
        %v4360 = vpack.c.bf16 %v4333, %v4332
        %v4361 = vpack.c.bf16 %v4336, %v4335
        %v4362 = vpack.c.bf16 %v4339, %v4338
        %v4379 = vunpack.c.l.b16 %v4347
        %v4380 = vunpack.c.h.b16 %v4347
        %v4381 = vunpack.c.l.b16 %v4348
        %v4382 = vunpack.c.h.b16 %v4348
        %v4383 = vunpack.c.l.b16 %v4349
        %v4384 = vunpack.c.h.b16 %v4349
        %v4385 = vunpack.c.l.b16 %v4350
        %v4386 = vunpack.c.h.b16 %v4350
        %v4387 = vunpack.c.l.b16 %v4351
        %v4388 = vunpack.c.h.b16 %v4351
        %v4389 = vunpack.c.l.b16 %v4352
        %v4390 = vunpack.c.h.b16 %v4352
        %v4391 = vunpack.c.l.b16 %v4353
        %v4392 = vunpack.c.h.b16 %v4353
        %v4393 = vunpack.c.l.b16 %v4354
        %v4394 = vunpack.c.h.b16 %v4354
        %v4395 = vunpack.c.l.b16 %v4355
        %v4396 = vunpack.c.h.b16 %v4355
        %v4397 = vunpack.c.l.b16 %v4356
        %v4398 = vunpack.c.h.b16 %v4356
        %v4399 = vunpack.c.l.b16 %v4357
        %v4400 = vunpack.c.h.b16 %v4357
        %v4401 = vunpack.c.l.b16 %v4358
        %v4402 = vunpack.c.h.b16 %v4358
        %v4403 = vunpack.c.l.b16 %v4359
        %v4404 = vunpack.c.h.b16 %v4359
        %v4405 = vunpack.c.l.b16 %v4360
        %v4406 = vunpack.c.h.b16 %v4360
        %v4407 = vunpack.c.l.b16 %v4361
        %v4408 = vunpack.c.h.b16 %v4361
        %v4409 = vunpack.c.l.b16 %v4362
        %v4410 = vunpack.c.h.b16 %v4362
        %v4411 = vpack.c.b16 %v4379, %v4379
        %v4412 = vpack.c.b16 %v4380, %v4380
        %v4413 = vpack.c.b16 %v4381, %v4381
        %v4414 = vpack.c.b16 %v4382, %v4382
        %v4415 = vpack.c.b16 %v4383, %v4383
        %v4416 = vpack.c.b16 %v4384, %v4384
        %v4417 = vpack.c.b16 %v4385, %v4385
        %v4418 = vpack.c.b16 %v4386, %v4386
        %v4419 = vpack.c.b16 %v4387, %v4387
        %v4420 = vpack.c.b16 %v4388, %v4388
        %v4421 = vpack.c.b16 %v4389, %v4389
        %v4422 = vpack.c.b16 %v4390, %v4390
        %v4423 = vpack.c.b16 %v4391, %v4391
        %v4424 = vpack.c.b16 %v4392, %v4392
        %v4425 = vpack.c.b16 %v4393, %v4393
        %v4426 = vpack.c.b16 %v4394, %v4394
        %v4427 = vpack.c.b16 %v4395, %v4395
        %v4428 = vpack.c.b16 %v4396, %v4396
        %v4429 = vpack.c.b16 %v4397, %v4397
        %v4430 = vpack.c.b16 %v4398, %v4398
        %v4431 = vpack.c.b16 %v4399, %v4399
        %v4432 = vpack.c.b16 %v4400, %v4400
        %v4433 = vpack.c.b16 %v4401, %v4401
        %v4434 = vpack.c.b16 %v4402, %v4402
        %v4435 = vpack.c.b16 %v4403, %v4403
        %v4436 = vpack.c.b16 %v4404, %v4404
        %v4437 = vpack.c.b16 %v4405, %v4405
        %v4438 = vpack.c.b16 %v4406, %v4406
        %v4439 = vpack.c.b16 %v4407, %v4407
        %v4440 = vpack.c.b16 %v4408, %v4408
        %v4441 = vpack.c.b16 %v4409, %v4409
        %v4442 = vpack.c.b16 %v4410, %v4410
        %vm4475 = vcmask 257024
        %4476 = vst.msk [vmem:[#allocation4] sm:$0xf] %vm4475, %v4411
        %4477 = vst.msk [vmem:[#allocation4 + $0xc] sm:$0xf] %vm4475, %v4412
        %4478 = vst.msk [vmem:[#allocation4 + $0x18] sm:$0xf] %vm4475, %v4413
        %4479 = vst.msk [vmem:[#allocation4 + $0x24] sm:$0xf] %vm4475, %v4414
        %4480 = vst.msk [vmem:[#allocation4 + $0x30] sm:$0xf] %vm4475, %v4415
        %4481 = vst.msk [vmem:[#allocation4 + $0x3c] sm:$0xf] %vm4475, %v4416
        %4482 = vst.msk [vmem:[#allocation4 + $0x48] sm:$0xf] %vm4475, %v4417
        %4483 = vst.msk [vmem:[#allocation4 + $0x54] sm:$0xf] %vm4475, %v4418
        %4484 = vst.msk [vmem:[#allocation4 + $0x60] sm:$0xf] %vm4475, %v4419
        %4485 = vst.msk [vmem:[#allocation4 + $0x6c] sm:$0xf] %vm4475, %v4420
        %4486 = vst.msk [vmem:[#allocation4 + $0x78] sm:$0xf] %vm4475, %v4421
        %4487 = vst.msk [vmem:[#allocation4 + $0x84] sm:$0xf] %vm4475, %v4422
        %4488 = vst.msk [vmem:[#allocation4 + $0x90] sm:$0xf] %vm4475, %v4423
        %4489 = vst.msk [vmem:[#allocation4 + $0x9c] sm:$0xf] %vm4475, %v4424
        %4490 = vst.msk [vmem:[#allocation4 + $0xa8] sm:$0xf] %vm4475, %v4425
        %4491 = vst.msk [vmem:[#allocation4 + $0xb4] sm:$0xf] %vm4475, %v4426
        %4492 = vst.msk [vmem:[#allocation4 + $0xc0] sm:$0xf] %vm4475, %v4427
        %4493 = vst.msk [vmem:[#allocation4 + $0xcc] sm:$0xf] %vm4475, %v4428
        %4494 = vst.msk [vmem:[#allocation4 + $0xd8] sm:$0xf] %vm4475, %v4429
        %4495 = vst.msk [vmem:[#allocation4 + $0xe4] sm:$0xf] %vm4475, %v4430
        %4496 = vst.msk [vmem:[#allocation4 + $0xf0] sm:$0xf] %vm4475, %v4431
        %4497 = vst.msk [vmem:[#allocation4 + $0xfc] sm:$0xf] %vm4475, %v4432
        %4498 = vst.msk [vmem:[#allocation4 + $0x108] sm:$0xf] %vm4475, %v4433
        %4499 = vst.msk [vmem:[#allocation4 + $0x114] sm:$0xf] %vm4475, %v4434
        %4500 = vst.msk [vmem:[#allocation4 + $0x120] sm:$0xf] %vm4475, %v4435
        %4501 = vst.msk [vmem:[#allocation4 + $0x12c] sm:$0xf] %vm4475, %v4436
        %4502 = vst.msk [vmem:[#allocation4 + $0x138] sm:$0xf] %vm4475, %v4437
        %4503 = vst.msk [vmem:[#allocation4 + $0x144] sm:$0xf] %vm4475, %v4438
        %4504 = vst.msk [vmem:[#allocation4 + $0x150] sm:$0xf] %vm4475, %v4439
        %4505 = vst.msk [vmem:[#allocation4 + $0x15c] sm:$0xf] %vm4475, %v4440
        %4506 = vst.msk [vmem:[#allocation4 + $0x168] sm:$0xf] %vm4475, %v4441
        %4507 = vst.msk [vmem:[#allocation4 + $0x174] sm:$0xf] %vm4475, %v4442
        %vm4556 = vcmask 1046528
        %v4557 = vrot.slane %v4293, 1
        %v4558 = vrot.slane %v4294, 1
        %v4559 = vsel %vm4556, %v4557, %v4558
        %v4560 = vrot.slane %v4295, 1
        %v4561 = vsel %vm4556, %v4558, %v4560
        %v4562 = vrot.slane %v4296, 1
        %v4563 = vrot.slane %v4297, 1
        %v4564 = vsel %vm4556, %v4562, %v4563
        %v4565 = vrot.slane %v4298, 1
        %v4566 = vsel %vm4556, %v4563, %v4565
        %v4567 = vrot.slane %v4299, 1
        %v4568 = vrot.slane %v4300, 1
        %v4569 = vsel %vm4556, %v4567, %v4568
        %v4570 = vrot.slane %v4301, 1
        %v4571 = vsel %vm4556, %v4568, %v4570
        %v4572 = vrot.slane %v4302, 1
        %v4573 = vrot.slane %v4303, 1
        %v4574 = vsel %vm4556, %v4572, %v4573
        %v4575 = vrot.slane %v4304, 1
        %v4576 = vsel %vm4556, %v4573, %v4575
        %v4577 = vrot.slane %v4305, 1
        %v4578 = vrot.slane %v4306, 1
        %v4579 = vsel %vm4556, %v4577, %v4578
        %v4580 = vrot.slane %v4307, 1
        %v4581 = vsel %vm4556, %v4578, %v4580
        %v4582 = vrot.slane %v4308, 1
        %v4583 = vrot.slane %v4309, 1
        %v4584 = vsel %vm4556, %v4582, %v4583
        %v4585 = vrot.slane %v4310, 1
        %v4586 = vsel %vm4556, %v4583, %v4585
        %v4587 = vrot.slane %v4311, 1
        %v4588 = vrot.slane %v4312, 1
        %v4589 = vsel %vm4556, %v4587, %v4588
        %v4590 = vrot.slane %v4313, 1
        %v4591 = vsel %vm4556, %v4588, %v4590
        %v4592 = vrot.slane %v4314, 1
        %v4593 = vrot.slane %v4315, 1
        %v4594 = vsel %vm4556, %v4592, %v4593
        %v4595 = vrot.slane %v4316, 1
        %v4596 = vsel %vm4556, %v4593, %v4595
        %v4597 = vrot.slane %v4317, 1
        %v4598 = vrot.slane %v4318, 1
        %v4599 = vsel %vm4556, %v4597, %v4598
        %v4600 = vrot.slane %v4319, 1
        %v4601 = vsel %vm4556, %v4598, %v4600
        %v4602 = vrot.slane %v4320, 1
        %v4603 = vrot.slane %v4321, 1
        %v4604 = vsel %vm4556, %v4602, %v4603
        %v4605 = vrot.slane %v4322, 1
        %v4606 = vsel %vm4556, %v4603, %v4605
        %v4607 = vrot.slane %v4323, 1
        %v4608 = vrot.slane %v4324, 1
        %v4609 = vsel %vm4556, %v4607, %v4608
        %v4610 = vrot.slane %v4325, 1
        %v4611 = vsel %vm4556, %v4608, %v4610
        %v4612 = vrot.slane %v4326, 1
        %v4613 = vrot.slane %v4327, 1
        %v4614 = vsel %vm4556, %v4612, %v4613
        %v4615 = vrot.slane %v4328, 1
        %v4616 = vsel %vm4556, %v4613, %v4615
        %v4617 = vrot.slane %v4329, 1
        %v4618 = vrot.slane %v4330, 1
        %v4619 = vsel %vm4556, %v4617, %v4618
        %v4620 = vrot.slane %v4331, 1
        %v4621 = vsel %vm4556, %v4618, %v4620
        %v4622 = vrot.slane %v4332, 1
        %v4623 = vrot.slane %v4333, 1
        %v4624 = vsel %vm4556, %v4622, %v4623
        %v4625 = vrot.slane %v4334, 1
        %v4626 = vsel %vm4556, %v4623, %v4625
        %v4627 = vrot.slane %v4335, 1
        %v4628 = vrot.slane %v4336, 1
        %v4629 = vsel %vm4556, %v4627, %v4628
        %v4630 = vrot.slane %v4337, 1
        %v4631 = vsel %vm4556, %v4628, %v4630
        %v4632 = vrot.slane %v4338, 1
        %v4633 = vrot.slane %v4339, 1
        %v4634 = vsel %vm4556, %v4632, %v4633
        %v4635 = vrot.slane %v4340, 1
        %v4636 = vsel %vm4556, %v4633, %v4635
        %v4669 = vpack.c.bf16 %v4561, %v4559
        %v4670 = vpack.c.bf16 %v4566, %v4564
        %v4671 = vpack.c.bf16 %v4571, %v4569
        %v4672 = vpack.c.bf16 %v4576, %v4574
        %v4673 = vpack.c.bf16 %v4581, %v4579
        %v4674 = vpack.c.bf16 %v4586, %v4584
        %v4675 = vpack.c.bf16 %v4591, %v4589
        %v4676 = vpack.c.bf16 %v4596, %v4594
        %v4677 = vpack.c.bf16 %v4601, %v4599
        %v4678 = vpack.c.bf16 %v4606, %v4604
        %v4679 = vpack.c.bf16 %v4611, %v4609
        %v4680 = vpack.c.bf16 %v4616, %v4614
        %v4681 = vpack.c.bf16 %v4621, %v4619
        %v4682 = vpack.c.bf16 %v4626, %v4624
        %v4683 = vpack.c.bf16 %v4631, %v4629
        %v4684 = vpack.c.bf16 %v4636, %v4634
        %v4701 = vunpack.c.l.b16 %v4669
        %v4702 = vunpack.c.h.b16 %v4669
        %v4703 = vunpack.c.l.b16 %v4670
        %v4704 = vunpack.c.h.b16 %v4670
        %v4705 = vunpack.c.l.b16 %v4671
        %v4706 = vunpack.c.h.b16 %v4671
        %v4707 = vunpack.c.l.b16 %v4672
        %v4708 = vunpack.c.h.b16 %v4672
        %v4709 = vunpack.c.l.b16 %v4673
        %v4710 = vunpack.c.h.b16 %v4673
        %v4711 = vunpack.c.l.b16 %v4674
        %v4712 = vunpack.c.h.b16 %v4674
        %v4713 = vunpack.c.l.b16 %v4675
        %v4714 = vunpack.c.h.b16 %v4675
        %v4715 = vunpack.c.l.b16 %v4676
        %v4716 = vunpack.c.h.b16 %v4676
        %v4717 = vunpack.c.l.b16 %v4677
        %v4718 = vunpack.c.h.b16 %v4677
        %v4719 = vunpack.c.l.b16 %v4678
        %v4720 = vunpack.c.h.b16 %v4678
        %v4721 = vunpack.c.l.b16 %v4679
        %v4722 = vunpack.c.h.b16 %v4679
        %v4723 = vunpack.c.l.b16 %v4680
        %v4724 = vunpack.c.h.b16 %v4680
        %v4725 = vunpack.c.l.b16 %v4681
        %v4726 = vunpack.c.h.b16 %v4681
        %v4727 = vunpack.c.l.b16 %v4682
        %v4728 = vunpack.c.h.b16 %v4682
        %v4729 = vunpack.c.l.b16 %v4683
        %v4730 = vunpack.c.h.b16 %v4683
        %v4731 = vunpack.c.l.b16 %v4684
        %v4732 = vunpack.c.h.b16 %v4684
        %v4733 = vpack.c.b16 %v4701, %v4701
        %v4734 = vpack.c.b16 %v4702, %v4702
        %v4735 = vpack.c.b16 %v4703, %v4703
        %v4736 = vpack.c.b16 %v4704, %v4704
        %v4737 = vpack.c.b16 %v4705, %v4705
        %v4738 = vpack.c.b16 %v4706, %v4706
        %v4739 = vpack.c.b16 %v4707, %v4707
        %v4740 = vpack.c.b16 %v4708, %v4708
        %v4741 = vpack.c.b16 %v4709, %v4709
        %v4742 = vpack.c.b16 %v4710, %v4710
        %v4743 = vpack.c.b16 %v4711, %v4711
        %v4744 = vpack.c.b16 %v4712, %v4712
        %v4745 = vpack.c.b16 %v4713, %v4713
        %v4746 = vpack.c.b16 %v4714, %v4714
        %v4747 = vpack.c.b16 %v4715, %v4715
        %v4748 = vpack.c.b16 %v4716, %v4716
        %v4749 = vpack.c.b16 %v4717, %v4717
        %v4750 = vpack.c.b16 %v4718, %v4718
        %v4751 = vpack.c.b16 %v4719, %v4719
        %v4752 = vpack.c.b16 %v4720, %v4720
        %v4753 = vpack.c.b16 %v4721, %v4721
        %v4754 = vpack.c.b16 %v4722, %v4722
        %v4755 = vpack.c.b16 %v4723, %v4723
        %v4756 = vpack.c.b16 %v4724, %v4724
        %v4757 = vpack.c.b16 %v4725, %v4725
        %v4758 = vpack.c.b16 %v4726, %v4726
        %v4759 = vpack.c.b16 %v4727, %v4727
        %v4760 = vpack.c.b16 %v4728, %v4728
        %v4761 = vpack.c.b16 %v4729, %v4729
        %v4762 = vpack.c.b16 %v4730, %v4730
        %v4763 = vpack.c.b16 %v4731, %v4731
        %v4764 = vpack.c.b16 %v4732, %v4732
        %4765 = vrot.lane.b32.xlu0 %v4733, 32
        %v4766 = vpop.permute.xlu0 %4765
        %4767 = vrot.lane.b32.xlu0 %v4734, 32
        %v4768 = vpop.permute.xlu0 %4767
        %4769 = vrot.lane.b32.xlu0 %v4735, 32
        %v4770 = vpop.permute.xlu0 %4769
        %4771 = vrot.lane.b32.xlu0 %v4736, 32
        %v4772 = vpop.permute.xlu0 %4771
        %4773 = vrot.lane.b32.xlu0 %v4737, 32
        %v4774 = vpop.permute.xlu0 %4773
        %4775 = vrot.lane.b32.xlu0 %v4738, 32
        %v4776 = vpop.permute.xlu0 %4775
        %4777 = vrot.lane.b32.xlu0 %v4739, 32
        %v4778 = vpop.permute.xlu0 %4777
        %4779 = vrot.lane.b32.xlu0 %v4740, 32
        %v4780 = vpop.permute.xlu0 %4779
        %4781 = vrot.lane.b32.xlu0 %v4741, 32
        %v4782 = vpop.permute.xlu0 %4781
        %4783 = vrot.lane.b32.xlu0 %v4742, 32
        %v4784 = vpop.permute.xlu0 %4783
        %4785 = vrot.lane.b32.xlu0 %v4743, 32
        %v4786 = vpop.permute.xlu0 %4785
        %4787 = vrot.lane.b32.xlu0 %v4744, 32
        %v4788 = vpop.permute.xlu0 %4787
        %4789 = vrot.lane.b32.xlu0 %v4745, 32
        %v4790 = vpop.permute.xlu0 %4789
        %4791 = vrot.lane.b32.xlu0 %v4746, 32
        %v4792 = vpop.permute.xlu0 %4791
        %4793 = vrot.lane.b32.xlu0 %v4747, 32
        %v4794 = vpop.permute.xlu0 %4793
        %4795 = vrot.lane.b32.xlu0 %v4748, 32
        %v4796 = vpop.permute.xlu0 %4795
        %4797 = vrot.lane.b32.xlu0 %v4749, 32
        %v4798 = vpop.permute.xlu0 %4797
        %4799 = vrot.lane.b32.xlu0 %v4750, 32
        %v4800 = vpop.permute.xlu0 %4799
        %4801 = vrot.lane.b32.xlu0 %v4751, 32
        %v4802 = vpop.permute.xlu0 %4801
        %4803 = vrot.lane.b32.xlu0 %v4752, 32
        %v4804 = vpop.permute.xlu0 %4803
        %4805 = vrot.lane.b32.xlu0 %v4753, 32
        %v4806 = vpop.permute.xlu0 %4805
        %4807 = vrot.lane.b32.xlu0 %v4754, 32
        %v4808 = vpop.permute.xlu0 %4807
        %4809 = vrot.lane.b32.xlu0 %v4755, 32
        %v4810 = vpop.permute.xlu0 %4809
        %4811 = vrot.lane.b32.xlu0 %v4756, 32
        %v4812 = vpop.permute.xlu0 %4811
        %4813 = vrot.lane.b32.xlu0 %v4757, 32
        %v4814 = vpop.permute.xlu0 %4813
        %4815 = vrot.lane.b32.xlu0 %v4758, 32
        %v4816 = vpop.permute.xlu0 %4815
        %4817 = vrot.lane.b32.xlu0 %v4759, 32
        %v4818 = vpop.permute.xlu0 %4817
        %4819 = vrot.lane.b32.xlu0 %v4760, 32
        %v4820 = vpop.permute.xlu0 %4819
        %4821 = vrot.lane.b32.xlu0 %v4761, 32
        %v4822 = vpop.permute.xlu0 %4821
        %4823 = vrot.lane.b32.xlu0 %v4762, 32
        %v4824 = vpop.permute.xlu0 %4823
        %4825 = vrot.lane.b32.xlu0 %v4763, 32
        %v4826 = vpop.permute.xlu0 %4825
        %4827 = vrot.lane.b32.xlu0 %v4764, 32
        %v4828 = vpop.permute.xlu0 %4827
        %vm4861 = vcmask 519424
        %4862 = vst.msk [vmem:[#allocation4] sm:$0xf] %vm4861, %v4766
        %4863 = vst.msk [vmem:[#allocation4 + $0xc] sm:$0xf] %vm4861, %v4768
        %4864 = vst.msk [vmem:[#allocation4 + $0x18] sm:$0xf] %vm4861, %v4770
        %4865 = vst.msk [vmem:[#allocation4 + $0x24] sm:$0xf] %vm4861, %v4772
        %4866 = vst.msk [vmem:[#allocation4 + $0x30] sm:$0xf] %vm4861, %v4774
        %4867 = vst.msk [vmem:[#allocation4 + $0x3c] sm:$0xf] %vm4861, %v4776
        %4868 = vst.msk [vmem:[#allocation4 + $0x48] sm:$0xf] %vm4861, %v4778
        %4869 = vst.msk [vmem:[#allocation4 + $0x54] sm:$0xf] %vm4861, %v4780
        %4870 = vst.msk [vmem:[#allocation4 + $0x60] sm:$0xf] %vm4861, %v4782
        %4871 = vst.msk [vmem:[#allocation4 + $0x6c] sm:$0xf] %vm4861, %v4784
        %4872 = vst.msk [vmem:[#allocation4 + $0x78] sm:$0xf] %vm4861, %v4786
        %4873 = vst.msk [vmem:[#allocation4 + $0x84] sm:$0xf] %vm4861, %v4788
        %4874 = vst.msk [vmem:[#allocation4 + $0x90] sm:$0xf] %vm4861, %v4790
        %4875 = vst.msk [vmem:[#allocation4 + $0x9c] sm:$0xf] %vm4861, %v4792
        %4876 = vst.msk [vmem:[#allocation4 + $0xa8] sm:$0xf] %vm4861, %v4794
        %4877 = vst.msk [vmem:[#allocation4 + $0xb4] sm:$0xf] %vm4861, %v4796
        %4878 = vst.msk [vmem:[#allocation4 + $0xc0] sm:$0xf] %vm4861, %v4798
        %4879 = vst.msk [vmem:[#allocation4 + $0xcc] sm:$0xf] %vm4861, %v4800
        %4880 = vst.msk [vmem:[#allocation4 + $0xd8] sm:$0xf] %vm4861, %v4802
        %4881 = vst.msk [vmem:[#allocation4 + $0xe4] sm:$0xf] %vm4861, %v4804
        %4882 = vst.msk [vmem:[#allocation4 + $0xf0] sm:$0xf] %vm4861, %v4806
        %4883 = vst.msk [vmem:[#allocation4 + $0xfc] sm:$0xf] %vm4861, %v4808
        %4884 = vst.msk [vmem:[#allocation4 + $0x108] sm:$0xf] %vm4861, %v4810
        %4885 = vst.msk [vmem:[#allocation4 + $0x114] sm:$0xf] %vm4861, %v4812
        %4886 = vst.msk [vmem:[#allocation4 + $0x120] sm:$0xf] %vm4861, %v4814
        %4887 = vst.msk [vmem:[#allocation4 + $0x12c] sm:$0xf] %vm4861, %v4816
        %4888 = vst.msk [vmem:[#allocation4 + $0x138] sm:$0xf] %vm4861, %v4818
        %4889 = vst.msk [vmem:[#allocation4 + $0x144] sm:$0xf] %vm4861, %v4820
        %4890 = vst.msk [vmem:[#allocation4 + $0x150] sm:$0xf] %vm4861, %v4822
        %4891 = vst.msk [vmem:[#allocation4 + $0x15c] sm:$0xf] %vm4861, %v4824
        %4892 = vst.msk [vmem:[#allocation4 + $0x168] sm:$0xf] %vm4861, %v4826
        %4893 = vst.msk [vmem:[#allocation4 + $0x174] sm:$0xf] %vm4861, %v4828
        %vm4894 = vcmask 1045504
        %v4895 = vrot.slane %v4293, 2
        %v4896 = vrot.slane %v4294, 2
        %v4897 = vsel %vm4894, %v4895, %v4896
        %v4898 = vrot.slane %v4295, 2
        %v4899 = vsel %vm4894, %v4896, %v4898
        %v4900 = vrot.slane %v4296, 2
        %v4901 = vrot.slane %v4297, 2
        %v4902 = vsel %vm4894, %v4900, %v4901
        %v4903 = vrot.slane %v4298, 2
        %v4904 = vsel %vm4894, %v4901, %v4903
        %v4905 = vrot.slane %v4299, 2
        %v4906 = vrot.slane %v4300, 2
        %v4907 = vsel %vm4894, %v4905, %v4906
        %v4908 = vrot.slane %v4301, 2
        %v4909 = vsel %vm4894, %v4906, %v4908
        %v4910 = vrot.slane %v4302, 2
        %v4911 = vrot.slane %v4303, 2
        %v4912 = vsel %vm4894, %v4910, %v4911
        %v4913 = vrot.slane %v4304, 2
        %v4914 = vsel %vm4894, %v4911, %v4913
        %v4915 = vrot.slane %v4305, 2
        %v4916 = vrot.slane %v4306, 2
        %v4917 = vsel %vm4894, %v4915, %v4916
        %v4918 = vrot.slane %v4307, 2
        %v4919 = vsel %vm4894, %v4916, %v4918
        %v4920 = vrot.slane %v4308, 2
        %v4921 = vrot.slane %v4309, 2
        %v4922 = vsel %vm4894, %v4920, %v4921
        %v4923 = vrot.slane %v4310, 2
        %v4924 = vsel %vm4894, %v4921, %v4923
        %v4925 = vrot.slane %v4311, 2
        %v4926 = vrot.slane %v4312, 2
        %v4927 = vsel %vm4894, %v4925, %v4926
        %v4928 = vrot.slane %v4313, 2
        %v4929 = vsel %vm4894, %v4926, %v4928
        %v4930 = vrot.slane %v4314, 2
        %v4931 = vrot.slane %v4315, 2
        %v4932 = vsel %vm4894, %v4930, %v4931
        %v4933 = vrot.slane %v4316, 2
        %v4934 = vsel %vm4894, %v4931, %v4933
        %v4935 = vrot.slane %v4317, 2
        %v4936 = vrot.slane %v4318, 2
        %v4937 = vsel %vm4894, %v4935, %v4936
        %v4938 = vrot.slane %v4319, 2
        %v4939 = vsel %vm4894, %v4936, %v4938
        %v4940 = vrot.slane %v4320, 2
        %v4941 = vrot.slane %v4321, 2
        %v4942 = vsel %vm4894, %v4940, %v4941
        %v4943 = vrot.slane %v4322, 2
        %v4944 = vsel %vm4894, %v4941, %v4943
        %v4945 = vrot.slane %v4323, 2
        %v4946 = vrot.slane %v4324, 2
        %v4947 = vsel %vm4894, %v4945, %v4946
        %v4948 = vrot.slane %v4325, 2
        %v4949 = vsel %vm4894, %v4946, %v4948
        %v4950 = vrot.slane %v4326, 2
        %v4951 = vrot.slane %v4327, 2
        %v4952 = vsel %vm4894, %v4950, %v4951
        %v4953 = vrot.slane %v4328, 2
        %v4954 = vsel %vm4894, %v4951, %v4953
        %v4955 = vrot.slane %v4329, 2
        %v4956 = vrot.slane %v4330, 2
        %v4957 = vsel %vm4894, %v4955, %v4956
        %v4958 = vrot.slane %v4331, 2
        %v4959 = vsel %vm4894, %v4956, %v4958
        %v4960 = vrot.slane %v4332, 2
        %v4961 = vrot.slane %v4333, 2
        %v4962 = vsel %vm4894, %v4960, %v4961
        %v4963 = vrot.slane %v4334, 2
        %v4964 = vsel %vm4894, %v4961, %v4963
        %v4965 = vrot.slane %v4335, 2
        %v4966 = vrot.slane %v4336, 2
        %v4967 = vsel %vm4894, %v4965, %v4966
        %v4968 = vrot.slane %v4337, 2
        %v4969 = vsel %vm4894, %v4966, %v4968
        %v4970 = vrot.slane %v4338, 2
        %v4971 = vrot.slane %v4339, 2
        %v4972 = vsel %vm4894, %v4970, %v4971
        %v4973 = vrot.slane %v4340, 2
        %v4974 = vsel %vm4894, %v4971, %v4973
        %v5007 = vpack.c.bf16 %v4899, %v4897
        %v5008 = vpack.c.bf16 %v4904, %v4902
        %v5009 = vpack.c.bf16 %v4909, %v4907
        %v5010 = vpack.c.bf16 %v4914, %v4912
        %v5011 = vpack.c.bf16 %v4919, %v4917
        %v5012 = vpack.c.bf16 %v4924, %v4922
        %v5013 = vpack.c.bf16 %v4929, %v4927
        %v5014 = vpack.c.bf16 %v4934, %v4932
        %v5015 = vpack.c.bf16 %v4939, %v4937
        %v5016 = vpack.c.bf16 %v4944, %v4942
        %v5017 = vpack.c.bf16 %v4949, %v4947
        %v5018 = vpack.c.bf16 %v4954, %v4952
        %v5019 = vpack.c.bf16 %v4959, %v4957
        %v5020 = vpack.c.bf16 %v4964, %v4962
        %v5021 = vpack.c.bf16 %v4969, %v4967
        %v5022 = vpack.c.bf16 %v4974, %v4972
        %v5039 = vunpack.c.l.b16 %v5007
        %v5040 = vunpack.c.h.b16 %v5007
        %v5041 = vunpack.c.l.b16 %v5008
        %v5042 = vunpack.c.h.b16 %v5008
        %v5043 = vunpack.c.l.b16 %v5009
        %v5044 = vunpack.c.h.b16 %v5009
        %v5045 = vunpack.c.l.b16 %v5010
        %v5046 = vunpack.c.h.b16 %v5010
        %v5047 = vunpack.c.l.b16 %v5011
        %v5048 = vunpack.c.h.b16 %v5011
        %v5049 = vunpack.c.l.b16 %v5012
        %v5050 = vunpack.c.h.b16 %v5012
        %v5051 = vunpack.c.l.b16 %v5013
        %v5052 = vunpack.c.h.b16 %v5013
        %v5053 = vunpack.c.l.b16 %v5014
        %v5054 = vunpack.c.h.b16 %v5014
        %v5055 = vunpack.c.l.b16 %v5015
        %v5056 = vunpack.c.h.b16 %v5015
        %v5057 = vunpack.c.l.b16 %v5016
        %v5058 = vunpack.c.h.b16 %v5016
        %v5059 = vunpack.c.l.b16 %v5017
        %v5060 = vunpack.c.h.b16 %v5017
        %v5061 = vunpack.c.l.b16 %v5018
        %v5062 = vunpack.c.h.b16 %v5018
        %v5063 = vunpack.c.l.b16 %v5019
        %v5064 = vunpack.c.h.b16 %v5019
        %v5065 = vunpack.c.l.b16 %v5020
        %v5066 = vunpack.c.h.b16 %v5020
        %v5067 = vunpack.c.l.b16 %v5021
        %v5068 = vunpack.c.h.b16 %v5021
        %v5069 = vunpack.c.l.b16 %v5022
        %v5070 = vunpack.c.h.b16 %v5022
        %v5071 = vpack.c.b16 %v5039, %v5039
        %v5072 = vpack.c.b16 %v5040, %v5040
        %v5073 = vpack.c.b16 %v5041, %v5041
        %v5074 = vpack.c.b16 %v5042, %v5042
        %v5075 = vpack.c.b16 %v5043, %v5043
        %v5076 = vpack.c.b16 %v5044, %v5044
        %v5077 = vpack.c.b16 %v5045, %v5045
        %v5078 = vpack.c.b16 %v5046, %v5046
        %v5079 = vpack.c.b16 %v5047, %v5047
        %v5080 = vpack.c.b16 %v5048, %v5048
        %v5081 = vpack.c.b16 %v5049, %v5049
        %v5082 = vpack.c.b16 %v5050, %v5050
        %v5083 = vpack.c.b16 %v5051, %v5051
        %v5084 = vpack.c.b16 %v5052, %v5052
        %v5085 = vpack.c.b16 %v5053, %v5053
        %v5086 = vpack.c.b16 %v5054, %v5054
        %v5087 = vpack.c.b16 %v5055, %v5055
        %v5088 = vpack.c.b16 %v5056, %v5056
        %v5089 = vpack.c.b16 %v5057, %v5057
        %v5090 = vpack.c.b16 %v5058, %v5058
        %v5091 = vpack.c.b16 %v5059, %v5059
        %v5092 = vpack.c.b16 %v5060, %v5060
        %v5093 = vpack.c.b16 %v5061, %v5061
        %v5094 = vpack.c.b16 %v5062, %v5062
        %v5095 = vpack.c.b16 %v5063, %v5063
        %v5096 = vpack.c.b16 %v5064, %v5064
        %v5097 = vpack.c.b16 %v5065, %v5065
        %v5098 = vpack.c.b16 %v5066, %v5066
        %v5099 = vpack.c.b16 %v5067, %v5067
        %v5100 = vpack.c.b16 %v5068, %v5068
        %v5101 = vpack.c.b16 %v5069, %v5069
        %v5102 = vpack.c.b16 %v5070, %v5070
        %5103 = vrot.lane.b32.xlu0 %v5071, 64
        %v5104 = vpop.permute.xlu0 %5103
        %5105 = vrot.lane.b32.xlu0 %v5072, 64
        %v5106 = vpop.permute.xlu0 %5105
        %5107 = vrot.lane.b32.xlu0 %v5073, 64
        %v5108 = vpop.permute.xlu0 %5107
        %5109 = vrot.lane.b32.xlu0 %v5074, 64
        %v5110 = vpop.permute.xlu0 %5109
        %5111 = vrot.lane.b32.xlu0 %v5075, 64
        %v5112 = vpop.permute.xlu0 %5111
        %5113 = vrot.lane.b32.xlu0 %v5076, 64
        %v5114 = vpop.permute.xlu0 %5113
        %5115 = vrot.lane.b32.xlu0 %v5077, 64
        %v5116 = vpop.permute.xlu0 %5115
        %5117 = vrot.lane.b32.xlu0 %v5078, 64
        %v5118 = vpop.permute.xlu0 %5117
        %5119 = vrot.lane.b32.xlu0 %v5079, 64
        %v5120 = vpop.permute.xlu0 %5119
        %5121 = vrot.lane.b32.xlu0 %v5080, 64
        %v5122 = vpop.permute.xlu0 %5121
        %5123 = vrot.lane.b32.xlu0 %v5081, 64
        %v5124 = vpop.permute.xlu0 %5123
        %5125 = vrot.lane.b32.xlu0 %v5082, 64
        %v5126 = vpop.permute.xlu0 %5125
        %5127 = vrot.lane.b32.xlu0 %v5083, 64
        %v5128 = vpop.permute.xlu0 %5127
        %5129 = vrot.lane.b32.xlu0 %v5084, 64
        %v5130 = vpop.permute.xlu0 %5129
        %5131 = vrot.lane.b32.xlu0 %v5085, 64
        %v5132 = vpop.permute.xlu0 %5131
        %5133 = vrot.lane.b32.xlu0 %v5086, 64
        %v5134 = vpop.permute.xlu0 %5133
        %5135 = vrot.lane.b32.xlu0 %v5087, 64
        %v5136 = vpop.permute.xlu0 %5135
        %5137 = vrot.lane.b32.xlu0 %v5088, 64
        %v5138 = vpop.permute.xlu0 %5137
        %5139 = vrot.lane.b32.xlu0 %v5089, 64
        %v5140 = vpop.permute.xlu0 %5139
        %5141 = vrot.lane.b32.xlu0 %v5090, 64
        %v5142 = vpop.permute.xlu0 %5141
        %5143 = vrot.lane.b32.xlu0 %v5091, 64
        %v5144 = vpop.permute.xlu0 %5143
        %5145 = vrot.lane.b32.xlu0 %v5092, 64
        %v5146 = vpop.permute.xlu0 %5145
        %5147 = vrot.lane.b32.xlu0 %v5093, 64
        %v5148 = vpop.permute.xlu0 %5147
        %5149 = vrot.lane.b32.xlu0 %v5094, 64
        %v5150 = vpop.permute.xlu0 %5149
        %5151 = vrot.lane.b32.xlu0 %v5095, 64
        %v5152 = vpop.permute.xlu0 %5151
        %5153 = vrot.lane.b32.xlu0 %v5096, 64
        %v5154 = vpop.permute.xlu0 %5153
        %5155 = vrot.lane.b32.xlu0 %v5097, 64
        %v5156 = vpop.permute.xlu0 %5155
        %5157 = vrot.lane.b32.xlu0 %v5098, 64
        %v5158 = vpop.permute.xlu0 %5157
        %5159 = vrot.lane.b32.xlu0 %v5099, 64
        %v5160 = vpop.permute.xlu0 %5159
        %5161 = vrot.lane.b32.xlu0 %v5100, 64
        %v5162 = vpop.permute.xlu0 %5161
        %5163 = vrot.lane.b32.xlu0 %v5101, 64
        %v5164 = vpop.permute.xlu0 %5163
        %5165 = vrot.lane.b32.xlu0 %v5102, 64
        %v5166 = vpop.permute.xlu0 %5165
        %vm5199 = vcmask 781824
        %5200 = vst.msk [vmem:[#allocation4] sm:$0xf] %vm5199, %v5104
        %5201 = vst.msk [vmem:[#allocation4 + $0xc] sm:$0xf] %vm5199, %v5106
        %5202 = vst.msk [vmem:[#allocation4 + $0x18] sm:$0xf] %vm5199, %v5108
        %5203 = vst.msk [vmem:[#allocation4 + $0x24] sm:$0xf] %vm5199, %v5110
        %5204 = vst.msk [vmem:[#allocation4 + $0x30] sm:$0xf] %vm5199, %v5112
        %5205 = vst.msk [vmem:[#allocation4 + $0x3c] sm:$0xf] %vm5199, %v5114
        %5206 = vst.msk [vmem:[#allocation4 + $0x48] sm:$0xf] %vm5199, %v5116
        %5207 = vst.msk [vmem:[#allocation4 + $0x54] sm:$0xf] %vm5199, %v5118
        %5208 = vst.msk [vmem:[#allocation4 + $0x60] sm:$0xf] %vm5199, %v5120
        %5209 = vst.msk [vmem:[#allocation4 + $0x6c] sm:$0xf] %vm5199, %v5122
        %5210 = vst.msk [vmem:[#allocation4 + $0x78] sm:$0xf] %vm5199, %v5124
        %5211 = vst.msk [vmem:[#allocation4 + $0x84] sm:$0xf] %vm5199, %v5126
        %5212 = vst.msk [vmem:[#allocation4 + $0x90] sm:$0xf] %vm5199, %v5128
        %5213 = vst.msk [vmem:[#allocation4 + $0x9c] sm:$0xf] %vm5199, %v5130
        %5214 = vst.msk [vmem:[#allocation4 + $0xa8] sm:$0xf] %vm5199, %v5132
        %5215 = vst.msk [vmem:[#allocation4 + $0xb4] sm:$0xf] %vm5199, %v5134
        %5216 = vst.msk [vmem:[#allocation4 + $0xc0] sm:$0xf] %vm5199, %v5136
        %5217 = vst.msk [vmem:[#allocation4 + $0xcc] sm:$0xf] %vm5199, %v5138
        %5218 = vst.msk [vmem:[#allocation4 + $0xd8] sm:$0xf] %vm5199, %v5140
        %5219 = vst.msk [vmem:[#allocation4 + $0xe4] sm:$0xf] %vm5199, %v5142
        %5220 = vst.msk [vmem:[#allocation4 + $0xf0] sm:$0xf] %vm5199, %v5144
        %5221 = vst.msk [vmem:[#allocation4 + $0xfc] sm:$0xf] %vm5199, %v5146
        %5222 = vst.msk [vmem:[#allocation4 + $0x108] sm:$0xf] %vm5199, %v5148
        %5223 = vst.msk [vmem:[#allocation4 + $0x114] sm:$0xf] %vm5199, %v5150
        %5224 = vst.msk [vmem:[#allocation4 + $0x120] sm:$0xf] %vm5199, %v5152
        %5225 = vst.msk [vmem:[#allocation4 + $0x12c] sm:$0xf] %vm5199, %v5154
        %5226 = vst.msk [vmem:[#allocation4 + $0x138] sm:$0xf] %vm5199, %v5156
        %5227 = vst.msk [vmem:[#allocation4 + $0x144] sm:$0xf] %vm5199, %v5158
        %5228 = vst.msk [vmem:[#allocation4 + $0x150] sm:$0xf] %vm5199, %v5160
        %5229 = vst.msk [vmem:[#allocation4 + $0x15c] sm:$0xf] %vm5199, %v5162
        %5230 = vst.msk [vmem:[#allocation4 + $0x168] sm:$0xf] %vm5199, %v5164
        %5231 = vst.msk [vmem:[#allocation4 + $0x174] sm:$0xf] %vm5199, %v5166
        %v5232 = vpack.c.bf16 %v4342, %v4341
        %v5234 = vunpack.c.l.b16 %v5232
        %v5235 = vunpack.c.h.b16 %v5232
        %v5236 = vpack.c.b16 %v5234, %v5234
        %v5237 = vpack.c.b16 %v5235, %v5235
        %5238 = vrot.lane.b32.xlu0 %v4413, 96
        %v5239 = vpop.permute.xlu0 %5238
        %5240 = vrot.lane.b32.xlu0 %v4414, 96
        %v5241 = vpop.permute.xlu0 %5240
        %5242 = vrot.lane.b32.xlu0 %v4415, 96
        %v5243 = vpop.permute.xlu0 %5242
        %5244 = vrot.lane.b32.xlu0 %v4416, 96
        %v5245 = vpop.permute.xlu0 %5244
        %5246 = vrot.lane.b32.xlu0 %v4417, 96
        %v5247 = vpop.permute.xlu0 %5246
        %5248 = vrot.lane.b32.xlu0 %v4418, 96
        %v5249 = vpop.permute.xlu0 %5248
        %5250 = vrot.lane.b32.xlu0 %v4419, 96
        %v5251 = vpop.permute.xlu0 %5250
        %5252 = vrot.lane.b32.xlu0 %v4420, 96
        %v5253 = vpop.permute.xlu0 %5252
        %5254 = vrot.lane.b32.xlu0 %v4421, 96
        %v5255 = vpop.permute.xlu0 %5254
        %5256 = vrot.lane.b32.xlu0 %v4422, 96
        %v5257 = vpop.permute.xlu0 %5256
        %5258 = vrot.lane.b32.xlu0 %v4423, 96
        %v5259 = vpop.permute.xlu0 %5258
        %5260 = vrot.lane.b32.xlu0 %v4424, 96
        %v5261 = vpop.permute.xlu0 %5260
        %5262 = vrot.lane.b32.xlu0 %v4425, 96
        %v5263 = vpop.permute.xlu0 %5262
        %5264 = vrot.lane.b32.xlu0 %v4426, 96
        %v5265 = vpop.permute.xlu0 %5264
        %5266 = vrot.lane.b32.xlu0 %v4427, 96
        %v5267 = vpop.permute.xlu0 %5266
        %5268 = vrot.lane.b32.xlu0 %v4428, 96
        %v5269 = vpop.permute.xlu0 %5268
        %5270 = vrot.lane.b32.xlu0 %v4429, 96
        %v5271 = vpop.permute.xlu0 %5270
        %5272 = vrot.lane.b32.xlu0 %v4430, 96
        %v5273 = vpop.permute.xlu0 %5272
        %5274 = vrot.lane.b32.xlu0 %v4431, 96
        %v5275 = vpop.permute.xlu0 %5274
        %5276 = vrot.lane.b32.xlu0 %v4432, 96
        %v5277 = vpop.permute.xlu0 %5276
        %5278 = vrot.lane.b32.xlu0 %v4433, 96
        %v5279 = vpop.permute.xlu0 %5278
        %5280 = vrot.lane.b32.xlu0 %v4434, 96
        %v5281 = vpop.permute.xlu0 %5280
        %5282 = vrot.lane.b32.xlu0 %v4435, 96
        %v5283 = vpop.permute.xlu0 %5282
        %5284 = vrot.lane.b32.xlu0 %v4436, 96
        %v5285 = vpop.permute.xlu0 %5284
        %5286 = vrot.lane.b32.xlu0 %v4437, 96
        %v5287 = vpop.permute.xlu0 %5286
        %5288 = vrot.lane.b32.xlu0 %v4438, 96
        %v5289 = vpop.permute.xlu0 %5288
        %5290 = vrot.lane.b32.xlu0 %v4439, 96
        %v5291 = vpop.permute.xlu0 %5290
        %5292 = vrot.lane.b32.xlu0 %v4440, 96
        %v5293 = vpop.permute.xlu0 %5292
        %5294 = vrot.lane.b32.xlu0 %v4441, 96
        %v5295 = vpop.permute.xlu0 %5294
        %5296 = vrot.lane.b32.xlu0 %v4442, 96
        %v5297 = vpop.permute.xlu0 %5296
        %5298 = vrot.lane.b32.xlu0 %v5236, 96
        %v5299 = vpop.permute.xlu0 %5298
        %5300 = vrot.lane.b32.xlu0 %v5237, 96
        %v5301 = vpop.permute.xlu0 %5300
        %vm5334 = vcmask 1044224
        %5335 = vst.msk [vmem:[#allocation4] sm:$0xf] %vm5334, %v5239
        %5336 = vst.msk [vmem:[#allocation4 + $0xc] sm:$0xf] %vm5334, %v5241
        %5337 = vst.msk [vmem:[#allocation4 + $0x18] sm:$0xf] %vm5334, %v5243
        %5338 = vst.msk [vmem:[#allocation4 + $0x24] sm:$0xf] %vm5334, %v5245
        %5339 = vst.msk [vmem:[#allocation4 + $0x30] sm:$0xf] %vm5334, %v5247
        %5340 = vst.msk [vmem:[#allocation4 + $0x3c] sm:$0xf] %vm5334, %v5249
        %5341 = vst.msk [vmem:[#allocation4 + $0x48] sm:$0xf] %vm5334, %v5251
        %5342 = vst.msk [vmem:[#allocation4 + $0x54] sm:$0xf] %vm5334, %v5253
        %5343 = vst.msk [vmem:[#allocation4 + $0x60] sm:$0xf] %vm5334, %v5255
        %5344 = vst.msk [vmem:[#allocation4 + $0x6c] sm:$0xf] %vm5334, %v5257
        %5345 = vst.msk [vmem:[#allocation4 + $0x78] sm:$0xf] %vm5334, %v5259
        %5346 = vst.msk [vmem:[#allocation4 + $0x84] sm:$0xf] %vm5334, %v5261
        %5347 = vst.msk [vmem:[#allocation4 + $0x90] sm:$0xf] %vm5334, %v5263
        %5348 = vst.msk [vmem:[#allocation4 + $0x9c] sm:$0xf] %vm5334, %v5265
        %5349 = vst.msk [vmem:[#allocation4 + $0xa8] sm:$0xf] %vm5334, %v5267
        %5350 = vst.msk [vmem:[#allocation4 + $0xb4] sm:$0xf] %vm5334, %v5269
        %5351 = vst.msk [vmem:[#allocation4 + $0xc0] sm:$0xf] %vm5334, %v5271
        %5352 = vst.msk [vmem:[#allocation4 + $0xcc] sm:$0xf] %vm5334, %v5273
        %5353 = vst.msk [vmem:[#allocation4 + $0xd8] sm:$0xf] %vm5334, %v5275
        %5354 = vst.msk [vmem:[#allocation4 + $0xe4] sm:$0xf] %vm5334, %v5277
        %5355 = vst.msk [vmem:[#allocation4 + $0xf0] sm:$0xf] %vm5334, %v5279
        %5356 = vst.msk [vmem:[#allocation4 + $0xfc] sm:$0xf] %vm5334, %v5281
        %5357 = vst.msk [vmem:[#allocation4 + $0x108] sm:$0xf] %vm5334, %v5283
        %5358 = vst.msk [vmem:[#allocation4 + $0x114] sm:$0xf] %vm5334, %v5285
        %5359 = vst.msk [vmem:[#allocation4 + $0x120] sm:$0xf] %vm5334, %v5287
        %5360 = vst.msk [vmem:[#allocation4 + $0x12c] sm:$0xf] %vm5334, %v5289
        %5361 = vst.msk [vmem:[#allocation4 + $0x138] sm:$0xf] %vm5334, %v5291
        %5362 = vst.msk [vmem:[#allocation4 + $0x144] sm:$0xf] %vm5334, %v5293
        %5363 = vst.msk [vmem:[#allocation4 + $0x150] sm:$0xf] %vm5334, %v5295
        %5364 = vst.msk [vmem:[#allocation4 + $0x15c] sm:$0xf] %vm5334, %v5297
        %5365 = vst.msk [vmem:[#allocation4 + $0x168] sm:$0xf] %vm5334, %v5299
        %5366 = vst.msk [vmem:[#allocation4 + $0x174] sm:$0xf] %vm5334, %v5301
        %v5370 = vrot.slane %v4341, 1
        %v5371 = vrot.slane %v4342, 1
        %v5372 = vsel %vm4556, %v5370, %v5371
        %v5373 = vrot.slane %v4343, 1
        %v5374 = vsel %vm4556, %v5371, %v5373
        %v5377 = vpack.c.bf16 %v5374, %v5372
        %v5379 = vunpack.c.l.b16 %v5377
        %v5380 = vunpack.c.h.b16 %v5377
        %v5381 = vpack.c.b16 %v5379, %v5379
        %v5382 = vpack.c.b16 %v5380, %v5380
        %5415 = vst.msk [vmem:[#allocation4 + $0x4] sm:$0xf] %vm4475, %v4735
        %5416 = vst.msk [vmem:[#allocation4 + $0x10] sm:$0xf] %vm4475, %v4736
        %5417 = vst.msk [vmem:[#allocation4 + $0x1c] sm:$0xf] %vm4475, %v4737
        %5418 = vst.msk [vmem:[#allocation4 + $0x28] sm:$0xf] %vm4475, %v4738
        %5419 = vst.msk [vmem:[#allocation4 + $0x34] sm:$0xf] %vm4475, %v4739
        %5420 = vst.msk [vmem:[#allocation4 + $0x40] sm:$0xf] %vm4475, %v4740
        %5421 = vst.msk [vmem:[#allocation4 + $0x4c] sm:$0xf] %vm4475, %v4741
        %5422 = vst.msk [vmem:[#allocation4 + $0x58] sm:$0xf] %vm4475, %v4742
        %5423 = vst.msk [vmem:[#allocation4 + $0x64] sm:$0xf] %vm4475, %v4743
        %5424 = vst.msk [vmem:[#allocation4 + $0x70] sm:$0xf] %vm4475, %v4744
        %5425 = vst.msk [vmem:[#allocation4 + $0x7c] sm:$0xf] %vm4475, %v4745
        %5426 = vst.msk [vmem:[#allocation4 + $0x88] sm:$0xf] %vm4475, %v4746
        %5427 = vst.msk [vmem:[#allocation4 + $0x94] sm:$0xf] %vm4475, %v4747
        %5428 = vst.msk [vmem:[#allocation4 + $0xa0] sm:$0xf] %vm4475, %v4748
        %5429 = vst.msk [vmem:[#allocation4 + $0xac] sm:$0xf] %vm4475, %v4749
        %5430 = vst.msk [vmem:[#allocation4 + $0xb8] sm:$0xf] %vm4475, %v4750
        %5431 = vst.msk [vmem:[#allocation4 + $0xc4] sm:$0xf] %vm4475, %v4751
        %5432 = vst.msk [vmem:[#allocation4 + $0xd0] sm:$0xf] %vm4475, %v4752
        %5433 = vst.msk [vmem:[#allocation4 + $0xdc] sm:$0xf] %vm4475, %v4753
        %5434 = vst.msk [vmem:[#allocation4 + $0xe8] sm:$0xf] %vm4475, %v4754
        %5435 = vst.msk [vmem:[#allocation4 + $0xf4] sm:$0xf] %vm4475, %v4755
        %5436 = vst.msk [vmem:[#allocation4 + $0x100] sm:$0xf] %vm4475, %v4756
        %5437 = vst.msk [vmem:[#allocation4 + $0x10c] sm:$0xf] %vm4475, %v4757
        %5438 = vst.msk [vmem:[#allocation4 + $0x118] sm:$0xf] %vm4475, %v4758
        %5439 = vst.msk [vmem:[#allocation4 + $0x124] sm:$0xf] %vm4475, %v4759
        %5440 = vst.msk [vmem:[#allocation4 + $0x130] sm:$0xf] %vm4475, %v4760
        %5441 = vst.msk [vmem:[#allocation4 + $0x13c] sm:$0xf] %vm4475, %v4761
        %5442 = vst.msk [vmem:[#allocation4 + $0x148] sm:$0xf] %vm4475, %v4762
        %5443 = vst.msk [vmem:[#allocation4 + $0x154] sm:$0xf] %vm4475, %v4763
        %5444 = vst.msk [vmem:[#allocation4 + $0x160] sm:$0xf] %vm4475, %v4764
        %5445 = vst.msk [vmem:[#allocation4 + $0x16c] sm:$0xf] %vm4475, %v5381
        %5446 = vst.msk [vmem:[#allocation4 + $0x178] sm:$0xf] %vm4475, %v5382
        %v5447 = vrot.slane %v4341, 2
        %v5448 = vrot.slane %v4342, 2
        %v5449 = vsel %vm4894, %v5447, %v5448
        %v5450 = vrot.slane %v4343, 2
        %v5451 = vsel %vm4894, %v5448, %v5450
        %v5454 = vpack.c.bf16 %v5451, %v5449
        %v5456 = vunpack.c.l.b16 %v5454
        %v5457 = vunpack.c.h.b16 %v5454
        %v5458 = vpack.c.b16 %v5456, %v5456
        %v5459 = vpack.c.b16 %v5457, %v5457
        %5460 = vrot.lane.b32.xlu0 %v5073, 32
        %v5461 = vpop.permute.xlu0 %5460
        %5462 = vrot.lane.b32.xlu0 %v5074, 32
        %v5463 = vpop.permute.xlu0 %5462
        %5464 = vrot.lane.b32.xlu0 %v5075, 32
        %v5465 = vpop.permute.xlu0 %5464
        %5466 = vrot.lane.b32.xlu0 %v5076, 32
        %v5467 = vpop.permute.xlu0 %5466
        %5468 = vrot.lane.b32.xlu0 %v5077, 32
        %v5469 = vpop.permute.xlu0 %5468
        %5470 = vrot.lane.b32.xlu0 %v5078, 32
        %v5471 = vpop.permute.xlu0 %5470
        %5472 = vrot.lane.b32.xlu0 %v5079, 32
        %v5473 = vpop.permute.xlu0 %5472
        %5474 = vrot.lane.b32.xlu0 %v5080, 32
        %v5475 = vpop.permute.xlu0 %5474
        %5476 = vrot.lane.b32.xlu0 %v5081, 32
        %v5477 = vpop.permute.xlu0 %5476
        %5478 = vrot.lane.b32.xlu0 %v5082, 32
        %v5479 = vpop.permute.xlu0 %5478
        %5480 = vrot.lane.b32.xlu0 %v5083, 32
        %v5481 = vpop.permute.xlu0 %5480
        %5482 = vrot.lane.b32.xlu0 %v5084, 32
        %v5483 = vpop.permute.xlu0 %5482
        %5484 = vrot.lane.b32.xlu0 %v5085, 32
        %v5485 = vpop.permute.xlu0 %5484
        %5486 = vrot.lane.b32.xlu0 %v5086, 32
        %v5487 = vpop.permute.xlu0 %5486
        %5488 = vrot.lane.b32.xlu0 %v5087, 32
        %v5489 = vpop.permute.xlu0 %5488
        %5490 = vrot.lane.b32.xlu0 %v5088, 32
        %v5491 = vpop.permute.xlu0 %5490
        %5492 = vrot.lane.b32.xlu0 %v5089, 32
        %v5493 = vpop.permute.xlu0 %5492
        %5494 = vrot.lane.b32.xlu0 %v5090, 32
        %v5495 = vpop.permute.xlu0 %5494
        %5496 = vrot.lane.b32.xlu0 %v5091, 32
        %v5497 = vpop.permute.xlu0 %5496
        %5498 = vrot.lane.b32.xlu0 %v5092, 32
        %v5499 = vpop.permute.xlu0 %5498
        %5500 = vrot.lane.b32.xlu0 %v5093, 32
        %v5501 = vpop.permute.xlu0 %5500
        %5502 = vrot.lane.b32.xlu0 %v5094, 32
        %v5503 = vpop.permute.xlu0 %5502
        %5504 = vrot.lane.b32.xlu0 %v5095, 32
        %v5505 = vpop.permute.xlu0 %5504
        %5506 = vrot.lane.b32.xlu0 %v5096, 32
        %v5507 = vpop.permute.xlu0 %5506
        %5508 = vrot.lane.b32.xlu0 %v5097, 32
        %v5509 = vpop.permute.xlu0 %5508
        %5510 = vrot.lane.b32.xlu0 %v5098, 32
        %v5511 = vpop.permute.xlu0 %5510
        %5512 = vrot.lane.b32.xlu0 %v5099, 32
        %v5513 = vpop.permute.xlu0 %5512
        %5514 = vrot.lane.b32.xlu0 %v5100, 32
        %v5515 = vpop.permute.xlu0 %5514
        %5516 = vrot.lane.b32.xlu0 %v5101, 32
        %v5517 = vpop.permute.xlu0 %5516
        %5518 = vrot.lane.b32.xlu0 %v5102, 32
        %v5519 = vpop.permute.xlu0 %5518
        %5520 = vrot.lane.b32.xlu0 %v5458, 32
        %v5521 = vpop.permute.xlu0 %5520
        %5522 = vrot.lane.b32.xlu0 %v5459, 32
        %v5523 = vpop.permute.xlu0 %5522
        %5556 = vst.msk [vmem:[#allocation4 + $0x4] sm:$0xf] %vm4861, %v5461
        %5557 = vst.msk [vmem:[#allocation4 + $0x10] sm:$0xf] %vm4861, %v5463
        %5558 = vst.msk [vmem:[#allocation4 + $0x1c] sm:$0xf] %vm4861, %v5465
        %5559 = vst.msk [vmem:[#allocation4 + $0x28] sm:$0xf] %vm4861, %v5467
        %5560 = vst.msk [vmem:[#allocation4 + $0x34] sm:$0xf] %vm4861, %v5469
        %5561 = vst.msk [vmem:[#allocation4 + $0x40] sm:$0xf] %vm4861, %v5471
        %5562 = vst.msk [vmem:[#allocation4 + $0x4c] sm:$0xf] %vm4861, %v5473
        %5563 = vst.msk [vmem:[#allocation4 + $0x58] sm:$0xf] %vm4861, %v5475
        %5564 = vst.msk [vmem:[#allocation4 + $0x64] sm:$0xf] %vm4861, %v5477
        %5565 = vst.msk [vmem:[#allocation4 + $0x70] sm:$0xf] %vm4861, %v5479
        %5566 = vst.msk [vmem:[#allocation4 + $0x7c] sm:$0xf] %vm4861, %v5481
        %5567 = vst.msk [vmem:[#allocation4 + $0x88] sm:$0xf] %vm4861, %v5483
        %5568 = vst.msk [vmem:[#allocation4 + $0x94] sm:$0xf] %vm4861, %v5485
        %5569 = vst.msk [vmem:[#allocation4 + $0xa0] sm:$0xf] %vm4861, %v5487
        %5570 = vst.msk [vmem:[#allocation4 + $0xac] sm:$0xf] %vm4861, %v5489
        %5571 = vst.msk [vmem:[#allocation4 + $0xb8] sm:$0xf] %vm4861, %v5491
        %5572 = vst.msk [vmem:[#allocation4 + $0xc4] sm:$0xf] %vm4861, %v5493
        %5573 = vst.msk [vmem:[#allocation4 + $0xd0] sm:$0xf] %vm4861, %v5495
        %5574 = vst.msk [vmem:[#allocation4 + $0xdc] sm:$0xf] %vm4861, %v5497
        %5575 = vst.msk [vmem:[#allocation4 + $0xe8] sm:$0xf] %vm4861, %v5499
        %5576 = vst.msk [vmem:[#allocation4 + $0xf4] sm:$0xf] %vm4861, %v5501
        %5577 = vst.msk [vmem:[#allocation4 + $0x100] sm:$0xf] %vm4861, %v5503
        %5578 = vst.msk [vmem:[#allocation4 + $0x10c] sm:$0xf] %vm4861, %v5505
        %5579 = vst.msk [vmem:[#allocation4 + $0x118] sm:$0xf] %vm4861, %v5507
        %5580 = vst.msk [vmem:[#allocation4 + $0x124] sm:$0xf] %vm4861, %v5509
        %5581 = vst.msk [vmem:[#allocation4 + $0x130] sm:$0xf] %vm4861, %v5511
        %5582 = vst.msk [vmem:[#allocation4 + $0x13c] sm:$0xf] %vm4861, %v5513
        %5583 = vst.msk [vmem:[#allocation4 + $0x148] sm:$0xf] %vm4861, %v5515
        %5584 = vst.msk [vmem:[#allocation4 + $0x154] sm:$0xf] %vm4861, %v5517
        %5585 = vst.msk [vmem:[#allocation4 + $0x160] sm:$0xf] %vm4861, %v5519
        %5586 = vst.msk [vmem:[#allocation4 + $0x16c] sm:$0xf] %vm4861, %v5521
        %5587 = vst.msk [vmem:[#allocation4 + $0x178] sm:$0xf] %vm4861, %v5523
        %v5588 = vpack.c.bf16 %v4345, %v4344
        %v5590 = vunpack.c.l.b16 %v5588
        %v5591 = vunpack.c.h.b16 %v5588
        %v5592 = vpack.c.b16 %v5590, %v5590
        %v5593 = vpack.c.b16 %v5591, %v5591
        %5594 = vrot.lane.b32.xlu0 %v4415, 64
        %v5595 = vpop.permute.xlu0 %5594
        %5596 = vrot.lane.b32.xlu0 %v4416, 64
        %v5597 = vpop.permute.xlu0 %5596
        %5598 = vrot.lane.b32.xlu0 %v4417, 64
        %v5599 = vpop.permute.xlu0 %5598
        %5600 = vrot.lane.b32.xlu0 %v4418, 64
        %v5601 = vpop.permute.xlu0 %5600
        %5602 = vrot.lane.b32.xlu0 %v4419, 64
        %v5603 = vpop.permute.xlu0 %5602
        %5604 = vrot.lane.b32.xlu0 %v4420, 64
        %v5605 = vpop.permute.xlu0 %5604
        %5606 = vrot.lane.b32.xlu0 %v4421, 64
        %v5607 = vpop.permute.xlu0 %5606
        %5608 = vrot.lane.b32.xlu0 %v4422, 64
        %v5609 = vpop.permute.xlu0 %5608
        %5610 = vrot.lane.b32.xlu0 %v4423, 64
        %v5611 = vpop.permute.xlu0 %5610
        %5612 = vrot.lane.b32.xlu0 %v4424, 64
        %v5613 = vpop.permute.xlu0 %5612
        %5614 = vrot.lane.b32.xlu0 %v4425, 64
        %v5615 = vpop.permute.xlu0 %5614
        %5616 = vrot.lane.b32.xlu0 %v4426, 64
        %v5617 = vpop.permute.xlu0 %5616
        %5618 = vrot.lane.b32.xlu0 %v4427, 64
        %v5619 = vpop.permute.xlu0 %5618
        %5620 = vrot.lane.b32.xlu0 %v4428, 64
        %v5621 = vpop.permute.xlu0 %5620
        %5622 = vrot.lane.b32.xlu0 %v4429, 64
        %v5623 = vpop.permute.xlu0 %5622
        %5624 = vrot.lane.b32.xlu0 %v4430, 64
        %v5625 = vpop.permute.xlu0 %5624
        %5626 = vrot.lane.b32.xlu0 %v4431, 64
        %v5627 = vpop.permute.xlu0 %5626
        %5628 = vrot.lane.b32.xlu0 %v4432, 64
        %v5629 = vpop.permute.xlu0 %5628
        %5630 = vrot.lane.b32.xlu0 %v4433, 64
        %v5631 = vpop.permute.xlu0 %5630
        %5632 = vrot.lane.b32.xlu0 %v4434, 64
        %v5633 = vpop.permute.xlu0 %5632
        %5634 = vrot.lane.b32.xlu0 %v4435, 64
        %v5635 = vpop.permute.xlu0 %5634
        %5636 = vrot.lane.b32.xlu0 %v4436, 64
        %v5637 = vpop.permute.xlu0 %5636
        %5638 = vrot.lane.b32.xlu0 %v4437, 64
        %v5639 = vpop.permute.xlu0 %5638
        %5640 = vrot.lane.b32.xlu0 %v4438, 64
        %v5641 = vpop.permute.xlu0 %5640
        %5642 = vrot.lane.b32.xlu0 %v4439, 64
        %v5643 = vpop.permute.xlu0 %5642
        %5644 = vrot.lane.b32.xlu0 %v4440, 64
        %v5645 = vpop.permute.xlu0 %5644
        %5646 = vrot.lane.b32.xlu0 %v4441, 64
        %v5647 = vpop.permute.xlu0 %5646
        %5648 = vrot.lane.b32.xlu0 %v4442, 64
        %v5649 = vpop.permute.xlu0 %5648
        %5650 = vrot.lane.b32.xlu0 %v5236, 64
        %v5651 = vpop.permute.xlu0 %5650
        %5652 = vrot.lane.b32.xlu0 %v5237, 64
        %v5653 = vpop.permute.xlu0 %5652
        %5654 = vrot.lane.b32.xlu0 %v5592, 64
        %v5655 = vpop.permute.xlu0 %5654
        %5656 = vrot.lane.b32.xlu0 %v5593, 64
        %v5657 = vpop.permute.xlu0 %5656
        %5690 = vst.msk [vmem:[#allocation4 + $0x4] sm:$0xf] %vm5199, %v5595
        %5691 = vst.msk [vmem:[#allocation4 + $0x10] sm:$0xf] %vm5199, %v5597
        %5692 = vst.msk [vmem:[#allocation4 + $0x1c] sm:$0xf] %vm5199, %v5599
        %5693 = vst.msk [vmem:[#allocation4 + $0x28] sm:$0xf] %vm5199, %v5601
        %5694 = vst.msk [vmem:[#allocation4 + $0x34] sm:$0xf] %vm5199, %v5603
        %5695 = vst.msk [vmem:[#allocation4 + $0x40] sm:$0xf] %vm5199, %v5605
        %5696 = vst.msk [vmem:[#allocation4 + $0x4c] sm:$0xf] %vm5199, %v5607
        %5697 = vst.msk [vmem:[#allocation4 + $0x58] sm:$0xf] %vm5199, %v5609
        %5698 = vst.msk [vmem:[#allocation4 + $0x64] sm:$0xf] %vm5199, %v5611
        %5699 = vst.msk [vmem:[#allocation4 + $0x70] sm:$0xf] %vm5199, %v5613
        %5700 = vst.msk [vmem:[#allocation4 + $0x7c] sm:$0xf] %vm5199, %v5615
        %5701 = vst.msk [vmem:[#allocation4 + $0x88] sm:$0xf] %vm5199, %v5617
        %5702 = vst.msk [vmem:[#allocation4 + $0x94] sm:$0xf] %vm5199, %v5619
        %5703 = vst.msk [vmem:[#allocation4 + $0xa0] sm:$0xf] %vm5199, %v5621
        %5704 = vst.msk [vmem:[#allocation4 + $0xac] sm:$0xf] %vm5199, %v5623
        %5705 = vst.msk [vmem:[#allocation4 + $0xb8] sm:$0xf] %vm5199, %v5625
        %5706 = vst.msk [vmem:[#allocation4 + $0xc4] sm:$0xf] %vm5199, %v5627
        %5707 = vst.msk [vmem:[#allocation4 + $0xd0] sm:$0xf] %vm5199, %v5629
        %5708 = vst.msk [vmem:[#allocation4 + $0xdc] sm:$0xf] %vm5199, %v5631
        %5709 = vst.msk [vmem:[#allocation4 + $0xe8] sm:$0xf] %vm5199, %v5633
        %5710 = vst.msk [vmem:[#allocation4 + $0xf4] sm:$0xf] %vm5199, %v5635
        %5711 = vst.msk [vmem:[#allocation4 + $0x100] sm:$0xf] %vm5199, %v5637
        %5712 = vst.msk [vmem:[#allocation4 + $0x10c] sm:$0xf] %vm5199, %v5639
        %5713 = vst.msk [vmem:[#allocation4 + $0x118] sm:$0xf] %vm5199, %v5641
        %5714 = vst.msk [vmem:[#allocation4 + $0x124] sm:$0xf] %vm5199, %v5643
        %5715 = vst.msk [vmem:[#allocation4 + $0x130] sm:$0xf] %vm5199, %v5645
        %5716 = vst.msk [vmem:[#allocation4 + $0x13c] sm:$0xf] %vm5199, %v5647
        %5717 = vst.msk [vmem:[#allocation4 + $0x148] sm:$0xf] %vm5199, %v5649
        %5718 = vst.msk [vmem:[#allocation4 + $0x154] sm:$0xf] %vm5199, %v5651
        %5719 = vst.msk [vmem:[#allocation4 + $0x160] sm:$0xf] %vm5199, %v5653
        %5720 = vst.msk [vmem:[#allocation4 + $0x16c] sm:$0xf] %vm5199, %v5655
        %5721 = vst.msk [vmem:[#allocation4 + $0x178] sm:$0xf] %vm5199, %v5657
        %v5725 = vrot.slane %v4344, 1
        %v5726 = vrot.slane %v4345, 1
        %v5727 = vsel %vm4556, %v5725, %v5726
        %v5728 = vrot.slane %v4346, 1
        %v5729 = vsel %vm4556, %v5726, %v5728
        %v5732 = vpack.c.bf16 %v5729, %v5727
        %v5734 = vunpack.c.l.b16 %v5732
        %v5735 = vunpack.c.h.b16 %v5732
        %v5736 = vpack.c.b16 %v5734, %v5734
        %v5737 = vpack.c.b16 %v5735, %v5735
        %5738 = vrot.lane.b32.xlu0 %v4737, 96
        %v5739 = vpop.permute.xlu0 %5738
        %5740 = vrot.lane.b32.xlu0 %v4738, 96
        %v5741 = vpop.permute.xlu0 %5740
        %5742 = vrot.lane.b32.xlu0 %v4739, 96
        %v5743 = vpop.permute.xlu0 %5742
        %5744 = vrot.lane.b32.xlu0 %v4740, 96
        %v5745 = vpop.permute.xlu0 %5744
        %5746 = vrot.lane.b32.xlu0 %v4741, 96
        %v5747 = vpop.permute.xlu0 %5746
        %5748 = vrot.lane.b32.xlu0 %v4742, 96
        %v5749 = vpop.permute.xlu0 %5748
        %5750 = vrot.lane.b32.xlu0 %v4743, 96
        %v5751 = vpop.permute.xlu0 %5750
        %5752 = vrot.lane.b32.xlu0 %v4744, 96
        %v5753 = vpop.permute.xlu0 %5752
        %5754 = vrot.lane.b32.xlu0 %v4745, 96
        %v5755 = vpop.permute.xlu0 %5754
        %5756 = vrot.lane.b32.xlu0 %v4746, 96
        %v5757 = vpop.permute.xlu0 %5756
        %5758 = vrot.lane.b32.xlu0 %v4747, 96
        %v5759 = vpop.permute.xlu0 %5758
        %5760 = vrot.lane.b32.xlu0 %v4748, 96
        %v5761 = vpop.permute.xlu0 %5760
        %5762 = vrot.lane.b32.xlu0 %v4749, 96
        %v5763 = vpop.permute.xlu0 %5762
        %5764 = vrot.lane.b32.xlu0 %v4750, 96
        %v5765 = vpop.permute.xlu0 %5764
        %5766 = vrot.lane.b32.xlu0 %v4751, 96
        %v5767 = vpop.permute.xlu0 %5766
        %5768 = vrot.lane.b32.xlu0 %v4752, 96
        %v5769 = vpop.permute.xlu0 %5768
        %5770 = vrot.lane.b32.xlu0 %v4753, 96
        %v5771 = vpop.permute.xlu0 %5770
        %5772 = vrot.lane.b32.xlu0 %v4754, 96
        %v5773 = vpop.permute.xlu0 %5772
        %5774 = vrot.lane.b32.xlu0 %v4755, 96
        %v5775 = vpop.permute.xlu0 %5774
        %5776 = vrot.lane.b32.xlu0 %v4756, 96
        %v5777 = vpop.permute.xlu0 %5776
        %5778 = vrot.lane.b32.xlu0 %v4757, 96
        %v5779 = vpop.permute.xlu0 %5778
        %5780 = vrot.lane.b32.xlu0 %v4758, 96
        %v5781 = vpop.permute.xlu0 %5780
        %5782 = vrot.lane.b32.xlu0 %v4759, 96
        %v5783 = vpop.permute.xlu0 %5782
        %5784 = vrot.lane.b32.xlu0 %v4760, 96
        %v5785 = vpop.permute.xlu0 %5784
        %5786 = vrot.lane.b32.xlu0 %v4761, 96
        %v5787 = vpop.permute.xlu0 %5786
        %5788 = vrot.lane.b32.xlu0 %v4762, 96
        %v5789 = vpop.permute.xlu0 %5788
        %5790 = vrot.lane.b32.xlu0 %v4763, 96
        %v5791 = vpop.permute.xlu0 %5790
        %5792 = vrot.lane.b32.xlu0 %v4764, 96
        %v5793 = vpop.permute.xlu0 %5792
        %5794 = vrot.lane.b32.xlu0 %v5381, 96
        %v5795 = vpop.permute.xlu0 %5794
        %5796 = vrot.lane.b32.xlu0 %v5382, 96
        %v5797 = vpop.permute.xlu0 %5796
        %5798 = vrot.lane.b32.xlu0 %v5736, 96
        %v5799 = vpop.permute.xlu0 %5798
        %5800 = vrot.lane.b32.xlu0 %v5737, 96
        %v5801 = vpop.permute.xlu0 %5800
        %5834 = vst.msk [vmem:[#allocation4 + $0x4] sm:$0xf] %vm5334, %v5739
        %5835 = vst.msk [vmem:[#allocation4 + $0x10] sm:$0xf] %vm5334, %v5741
        %5836 = vst.msk [vmem:[#allocation4 + $0x1c] sm:$0xf] %vm5334, %v5743
        %5837 = vst.msk [vmem:[#allocation4 + $0x28] sm:$0xf] %vm5334, %v5745
        %5838 = vst.msk [vmem:[#allocation4 + $0x34] sm:$0xf] %vm5334, %v5747
        %5839 = vst.msk [vmem:[#allocation4 + $0x40] sm:$0xf] %vm5334, %v5749
        %5840 = vst.msk [vmem:[#allocation4 + $0x4c] sm:$0xf] %vm5334, %v5751
        %5841 = vst.msk [vmem:[#allocation4 + $0x58] sm:$0xf] %vm5334, %v5753
        %5842 = vst.msk [vmem:[#allocation4 + $0x64] sm:$0xf] %vm5334, %v5755
        %5843 = vst.msk [vmem:[#allocation4 + $0x70] sm:$0xf] %vm5334, %v5757
        %5844 = vst.msk [vmem:[#allocation4 + $0x7c] sm:$0xf] %vm5334, %v5759
        %5845 = vst.msk [vmem:[#allocation4 + $0x88] sm:$0xf] %vm5334, %v5761
        %5846 = vst.msk [vmem:[#allocation4 + $0x94] sm:$0xf] %vm5334, %v5763
        %5847 = vst.msk [vmem:[#allocation4 + $0xa0] sm:$0xf] %vm5334, %v5765
        %5848 = vst.msk [vmem:[#allocation4 + $0xac] sm:$0xf] %vm5334, %v5767
        %5849 = vst.msk [vmem:[#allocation4 + $0xb8] sm:$0xf] %vm5334, %v5769
        %5850 = vst.msk [vmem:[#allocation4 + $0xc4] sm:$0xf] %vm5334, %v5771
        %5851 = vst.msk [vmem:[#allocation4 + $0xd0] sm:$0xf] %vm5334, %v5773
        %5852 = vst.msk [vmem:[#allocation4 + $0xdc] sm:$0xf] %vm5334, %v5775
        %5853 = vst.msk [vmem:[#allocation4 + $0xe8] sm:$0xf] %vm5334, %v5777
        %5854 = vst.msk [vmem:[#allocation4 + $0xf4] sm:$0xf] %vm5334, %v5779
        %5855 = vst.msk [vmem:[#allocation4 + $0x100] sm:$0xf] %vm5334, %v5781
        %5856 = vst.msk [vmem:[#allocation4 + $0x10c] sm:$0xf] %vm5334, %v5783
        %5857 = vst.msk [vmem:[#allocation4 + $0x118] sm:$0xf] %vm5334, %v5785
        %5858 = vst.msk [vmem:[#allocation4 + $0x124] sm:$0xf] %vm5334, %v5787
        %5859 = vst.msk [vmem:[#allocation4 + $0x130] sm:$0xf] %vm5334, %v5789
        %5860 = vst.msk [vmem:[#allocation4 + $0x13c] sm:$0xf] %vm5334, %v5791
        %5861 = vst.msk [vmem:[#allocation4 + $0x148] sm:$0xf] %vm5334, %v5793
        %5862 = vst.msk [vmem:[#allocation4 + $0x154] sm:$0xf] %vm5334, %v5795
        %5863 = vst.msk [vmem:[#allocation4 + $0x160] sm:$0xf] %vm5334, %v5797
        %5864 = vst.msk [vmem:[#allocation4 + $0x16c] sm:$0xf] %vm5334, %v5799
        %5865 = vst.msk [vmem:[#allocation4 + $0x178] sm:$0xf] %vm5334, %v5801
        %v5866 = vrot.slane %v4344, 2
        %v5867 = vrot.slane %v4345, 2
        %v5868 = vsel %vm4894, %v5866, %v5867
        %v5869 = vrot.slane %v4346, 2
        %v5870 = vsel %vm4894, %v5867, %v5869
        %v5873 = vpack.c.bf16 %v5870, %v5868
        %v5875 = vunpack.c.l.b16 %v5873
        %v5876 = vunpack.c.h.b16 %v5873
        %v5877 = vpack.c.b16 %v5875, %v5875
        %v5878 = vpack.c.b16 %v5876, %v5876
        %5911 = vst.msk [vmem:[#allocation4 + $0x8] sm:$0xf] %vm4475, %v5075
        %5912 = vst.msk [vmem:[#allocation4 + $0x14] sm:$0xf] %vm4475, %v5076
        %5913 = vst.msk [vmem:[#allocation4 + $0x20] sm:$0xf] %vm4475, %v5077
        %5914 = vst.msk [vmem:[#allocation4 + $0x2c] sm:$0xf] %vm4475, %v5078
        %5915 = vst.msk [vmem:[#allocation4 + $0x38] sm:$0xf] %vm4475, %v5079
        %5916 = vst.msk [vmem:[#allocation4 + $0x44] sm:$0xf] %vm4475, %v5080
        %5917 = vst.msk [vmem:[#allocation4 + $0x50] sm:$0xf] %vm4475, %v5081
        %5918 = vst.msk [vmem:[#allocation4 + $0x5c] sm:$0xf] %vm4475, %v5082
        %5919 = vst.msk [vmem:[#allocation4 + $0x68] sm:$0xf] %vm4475, %v5083
        %5920 = vst.msk [vmem:[#allocation4 + $0x74] sm:$0xf] %vm4475, %v5084
        %5921 = vst.msk [vmem:[#allocation4 + $0x80] sm:$0xf] %vm4475, %v5085
        %5922 = vst.msk [vmem:[#allocation4 + $0x8c] sm:$0xf] %vm4475, %v5086
        %5923 = vst.msk [vmem:[#allocation4 + $0x98] sm:$0xf] %vm4475, %v5087
        %5924 = vst.msk [vmem:[#allocation4 + $0xa4] sm:$0xf] %vm4475, %v5088
        %5925 = vst.msk [vmem:[#allocation4 + $0xb0] sm:$0xf] %vm4475, %v5089
        %5926 = vst.msk [vmem:[#allocation4 + $0xbc] sm:$0xf] %vm4475, %v5090
        %5927 = vst.msk [vmem:[#allocation4 + $0xc8] sm:$0xf] %vm4475, %v5091
        %5928 = vst.msk [vmem:[#allocation4 + $0xd4] sm:$0xf] %vm4475, %v5092
        %5929 = vst.msk [vmem:[#allocation4 + $0xe0] sm:$0xf] %vm4475, %v5093
        %5930 = vst.msk [vmem:[#allocation4 + $0xec] sm:$0xf] %vm4475, %v5094
        %5931 = vst.msk [vmem:[#allocation4 + $0xf8] sm:$0xf] %vm4475, %v5095
        %5932 = vst.msk [vmem:[#allocation4 + $0x104] sm:$0xf] %vm4475, %v5096
        %5933 = vst.msk [vmem:[#allocation4 + $0x110] sm:$0xf] %vm4475, %v5097
        %5934 = vst.msk [vmem:[#allocation4 + $0x11c] sm:$0xf] %vm4475, %v5098
        %5935 = vst.msk [vmem:[#allocation4 + $0x128] sm:$0xf] %vm4475, %v5099
        %5936 = vst.msk [vmem:[#allocation4 + $0x134] sm:$0xf] %vm4475, %v5100
        %5937 = vst.msk [vmem:[#allocation4 + $0x140] sm:$0xf] %vm4475, %v5101
        %5938 = vst.msk [vmem:[#allocation4 + $0x14c] sm:$0xf] %vm4475, %v5102
        %5939 = vst.msk [vmem:[#allocation4 + $0x158] sm:$0xf] %vm4475, %v5458
        %5940 = vst.msk [vmem:[#allocation4 + $0x164] sm:$0xf] %vm4475, %v5459
        %5941 = vst.msk [vmem:[#allocation4 + $0x170] sm:$0xf] %vm4475, %v5877
        %5942 = vst.msk [vmem:[#allocation4 + $0x17c] sm:$0xf] %vm4475, %v5878
        %v5943 = vld [vmem:[#allocation4] sm:$0xff]
        %v5944 = vld [vmem:[#allocation4 + $0x8] sm:$0xf]
        %v5945 = vld [vmem:[#allocation4 + $0xc] sm:$0xff]
        %v5946 = vld [vmem:[#allocation4 + $0x14] sm:$0xf]
        %v5947 = vld [vmem:[#allocation4 + $0x18] sm:$0xff]
        %v5948 = vld [vmem:[#allocation4 + $0x20] sm:$0xf]
        %v5949 = vld [vmem:[#allocation4 + $0x24] sm:$0xff]
        %v5950 = vld [vmem:[#allocation4 + $0x2c] sm:$0xf]
        %v5951 = vld [vmem:[#allocation4 + $0x30] sm:$0xff]
        %v5952 = vld [vmem:[#allocation4 + $0x38] sm:$0xf]
        %v5953 = vld [vmem:[#allocation4 + $0x3c] sm:$0xff]
        %v5954 = vld [vmem:[#allocation4 + $0x44] sm:$0xf]
        %v5955 = vld [vmem:[#allocation4 + $0x48] sm:$0xff]
        %v5956 = vld [vmem:[#allocation4 + $0x50] sm:$0xf]
        %v5957 = vld [vmem:[#allocation4 + $0x54] sm:$0xff]
        %v5958 = vld [vmem:[#allocation4 + $0x5c] sm:$0xf]
        %v5959 = vld [vmem:[#allocation4 + $0x60] sm:$0xff]
        %v5960 = vld [vmem:[#allocation4 + $0x68] sm:$0xf]
        %v5961 = vld [vmem:[#allocation4 + $0x6c] sm:$0xff]
        %v5962 = vld [vmem:[#allocation4 + $0x74] sm:$0xf]
        %v5963 = vld [vmem:[#allocation4 + $0x78] sm:$0xff]
        %v5964 = vld [vmem:[#allocation4 + $0x80] sm:$0xf]
        %v5965 = vld [vmem:[#allocation4 + $0x84] sm:$0xff]
        %v5966 = vld [vmem:[#allocation4 + $0x8c] sm:$0xf]
        %v5967 = vld [vmem:[#allocation4 + $0x90] sm:$0xff]
        %v5968 = vld [vmem:[#allocation4 + $0x98] sm:$0xf]
        %v5969 = vld [vmem:[#allocation4 + $0x9c] sm:$0xff]
        %v5970 = vld [vmem:[#allocation4 + $0xa4] sm:$0xf]
        %v5971 = vld [vmem:[#allocation4 + $0xa8] sm:$0xff]
        %v5972 = vld [vmem:[#allocation4 + $0xb0] sm:$0xf]
        %v5973 = vld [vmem:[#allocation4 + $0xb4] sm:$0xff]
        %v5974 = vld [vmem:[#allocation4 + $0xbc] sm:$0xf]
        %v5975 = vld [vmem:[#allocation4 + $0xc0] sm:$0xff]
        %v5976 = vld [vmem:[#allocation4 + $0xc8] sm:$0xf]
        %v5977 = vld [vmem:[#allocation4 + $0xcc] sm:$0xff]
        %v5978 = vld [vmem:[#allocation4 + $0xd4] sm:$0xf]
        %v5979 = vld [vmem:[#allocation4 + $0xd8] sm:$0xff]
        %v5980 = vld [vmem:[#allocation4 + $0xe0] sm:$0xf]
        %v5981 = vld [vmem:[#allocation4 + $0xe4] sm:$0xff]
        %v5982 = vld [vmem:[#allocation4 + $0xec] sm:$0xf]
        %v5983 = vld [vmem:[#allocation4 + $0xf0] sm:$0xff]
        %v5984 = vld [vmem:[#allocation4 + $0xf8] sm:$0xf]
        %v5985 = vld [vmem:[#allocation4 + $0xfc] sm:$0xff]
        %v5986 = vld [vmem:[#allocation4 + $0x104] sm:$0xf]
        %v5987 = vld [vmem:[#allocation4 + $0x108] sm:$0xff]
        %v5988 = vld [vmem:[#allocation4 + $0x110] sm:$0xf]
        %v5989 = vld [vmem:[#allocation4 + $0x114] sm:$0xff]
        %v5990 = vld [vmem:[#allocation4 + $0x11c] sm:$0xf]
        %v5991 = vld [vmem:[#allocation4 + $0x120] sm:$0xff]
        %v5992 = vld [vmem:[#allocation4 + $0x128] sm:$0xf]
        %v5993 = vld [vmem:[#allocation4 + $0x12c] sm:$0xff]
        %v5994 = vld [vmem:[#allocation4 + $0x134] sm:$0xf]
        %v5995 = vld [vmem:[#allocation4 + $0x138] sm:$0xff]
        %v5996 = vld [vmem:[#allocation4 + $0x140] sm:$0xf]
        %v5997 = vld [vmem:[#allocation4 + $0x144] sm:$0xff]
        %v5998 = vld [vmem:[#allocation4 + $0x14c] sm:$0xf]
        %v5999 = vld [vmem:[#allocation4 + $0x150] sm:$0xff]
        %v6000 = vld [vmem:[#allocation4 + $0x158] sm:$0xf]
        %v6001 = vld [vmem:[#allocation4 + $0x15c] sm:$0xff]
        %v6002 = vld [vmem:[#allocation4 + $0x164] sm:$0xf]
        %v6003 = vld [vmem:[#allocation4 + $0x168] sm:$0xff]
        %v6004 = vld [vmem:[#allocation4 + $0x170] sm:$0xf]
        %v6005 = vld [vmem:[#allocation4 + $0x174] sm:$0xff]
        %v6006 = vld [vmem:[#allocation4 + $0x17c] sm:$0xf]
        %v6007 = vld [vmem:[%s4] sm:$0xf]
        %v6008 = vld [vmem:[%s4 + $0x4] sm:$0xf]
        %v6009 = vld [vmem:[%s4 + $0x8] sm:$0xf]
        %v6010 = vld [vmem:[%s4 + $0xc] sm:$0xf]
        %v6011 = vld [vmem:[%s4 + $0x10] sm:$0xf]
        %v6012 = vld [vmem:[%s4 + $0x14] sm:$0xf]
        %v6013 = vld [vmem:[%s4 + $0x18] sm:$0xf]
        %v6014 = vld [vmem:[%s4 + $0x1c] sm:$0xf]
        %v6015 = vld [vmem:[%s4 + $0x20] sm:$0xf]
        %v6016 = vld [vmem:[%s4 + $0x24] sm:$0xf]
        %v6017 = vld [vmem:[%s4 + $0x28] sm:$0xf]
        %v6018 = vld [vmem:[%s4 + $0x2c] sm:$0xf]
        %v6019 = vld [vmem:[%s4 + $0x30] sm:$0xf]
        %v6020 = vld [vmem:[%s4 + $0x34] sm:$0xf]
        %v6021 = vld [vmem:[%s4 + $0x38] sm:$0xf]
        %v6022 = vld [vmem:[%s4 + $0x3c] sm:$0xf]
        %v6023 = vld [vmem:[%s4 + $0x40] sm:$0xf]
        %v6024 = vld [vmem:[%s4 + $0x44] sm:$0xf]
        %v6025 = vld [vmem:[%s4 + $0x48] sm:$0xf]
        %v6026 = vld [vmem:[%s4 + $0x4c] sm:$0xf]
        %v6027 = vld [vmem:[%s4 + $0x50] sm:$0xf]
        %v6028 = vld [vmem:[%s4 + $0x54] sm:$0xf]
        %v6029 = vld [vmem:[%s4 + $0x58] sm:$0xf]
        %v6030 = vld [vmem:[%s4 + $0x5c] sm:$0xf]
        %v6031 = vld [vmem:[%s4 + $0x60] sm:$0xf]
        %v6032 = vld [vmem:[%s4 + $0x64] sm:$0xf]
        %v6033 = vld [vmem:[%s4 + $0x68] sm:$0xf]
        %v6034 = vld [vmem:[%s4 + $0x6c] sm:$0xf]
        %v6035 = vld [vmem:[%s4 + $0x70] sm:$0xf]
        %v6036 = vld [vmem:[%s4 + $0x74] sm:$0xf]
        %v6037 = vld [vmem:[%s4 + $0x78] sm:$0xf]
        %v6038 = vld [vmem:[%s4 + $0x7c] sm:$0xf]
        %v6039 = vld [vmem:[%s4 + $0x80] sm:$0xf]
        %v6040 = vld [vmem:[%s4 + $0x84] sm:$0xf]
        %v6041 = vld [vmem:[%s4 + $0x88] sm:$0xf]
        %v6042 = vld [vmem:[%s4 + $0x8c] sm:$0xf]
        %v6107 = vunpack.c.l.b16 %v5943
        %v6108 = vunpack.c.h.b16 %v5943
        %v6109 = vunpack.c.l.b16 %v5944
        %v6110 = vunpack.c.l.b16 %v5945
        %v6111 = vunpack.c.h.b16 %v5945
        %v6112 = vunpack.c.l.b16 %v5946
        %v6113 = vunpack.c.l.b16 %v5947
        %v6114 = vunpack.c.h.b16 %v5947
        %v6115 = vunpack.c.l.b16 %v5948
        %v6116 = vunpack.c.l.b16 %v5949
        %v6117 = vunpack.c.h.b16 %v5949
        %v6118 = vunpack.c.l.b16 %v5950
        %v6119 = vunpack.c.l.b16 %v5951
        %v6120 = vunpack.c.h.b16 %v5951
        %v6121 = vunpack.c.l.b16 %v5952
        %v6122 = vunpack.c.l.b16 %v5953
        %v6123 = vunpack.c.h.b16 %v5953
        %v6124 = vunpack.c.l.b16 %v5954
        %v6125 = vunpack.c.l.b16 %v5955
        %v6126 = vunpack.c.h.b16 %v5955
        %v6127 = vunpack.c.l.b16 %v5956
        %v6128 = vunpack.c.l.b16 %v5957
        %v6129 = vunpack.c.h.b16 %v5957
        %v6130 = vunpack.c.l.b16 %v5958
        %v6131 = vunpack.c.l.b16 %v5959
        %v6132 = vunpack.c.h.b16 %v5959
        %v6133 = vunpack.c.l.b16 %v5960
        %v6134 = vunpack.c.l.b16 %v5961
        %v6135 = vunpack.c.h.b16 %v5961
        %v6136 = vunpack.c.l.b16 %v5962
        %v6137 = vunpack.c.l.b16 %v5963
        %v6138 = vunpack.c.h.b16 %v5963
        %v6139 = vunpack.c.l.b16 %v5964
        %v6140 = vunpack.c.l.b16 %v5965
        %v6141 = vunpack.c.h.b16 %v5965
        %v6142 = vunpack.c.l.b16 %v5966
        %v6143 = vunpack.c.l.b16 %v5967
        %v6144 = vunpack.c.h.b16 %v5967
        %v6145 = vunpack.c.l.b16 %v5968
        %v6146 = vunpack.c.l.b16 %v5969
        %v6147 = vunpack.c.h.b16 %v5969
        %v6148 = vunpack.c.l.b16 %v5970
        %v6149 = vunpack.c.l.b16 %v5971
        %v6150 = vunpack.c.h.b16 %v5971
        %v6151 = vunpack.c.l.b16 %v5972
        %v6152 = vunpack.c.l.b16 %v5973
        %v6153 = vunpack.c.h.b16 %v5973
        %v6154 = vunpack.c.l.b16 %v5974
        %v6155 = vunpack.c.l.b16 %v5975
        %v6156 = vunpack.c.h.b16 %v5975
        %v6157 = vunpack.c.l.b16 %v5976
        %v6158 = vunpack.c.l.b16 %v5977
        %v6159 = vunpack.c.h.b16 %v5977
        %v6160 = vunpack.c.l.b16 %v5978
        %v6161 = vunpack.c.l.b16 %v5979
        %v6162 = vunpack.c.h.b16 %v5979
        %v6163 = vunpack.c.l.b16 %v5980
        %v6164 = vunpack.c.l.b16 %v5981
        %v6165 = vunpack.c.h.b16 %v5981
        %v6166 = vunpack.c.l.b16 %v5982
        %v6167 = vunpack.c.l.b16 %v5983
        %v6168 = vunpack.c.h.b16 %v5983
        %v6169 = vunpack.c.l.b16 %v5984
        %v6170 = vunpack.c.l.b16 %v5985
        %v6171 = vunpack.c.h.b16 %v5985
        %v6172 = vunpack.c.l.b16 %v5986
        %v6173 = vunpack.c.l.b16 %v5987
        %v6174 = vunpack.c.h.b16 %v5987
        %v6175 = vunpack.c.l.b16 %v5988
        %v6176 = vunpack.c.l.b16 %v5989
        %v6177 = vunpack.c.h.b16 %v5989
        %v6178 = vunpack.c.l.b16 %v5990
        %v6179 = vunpack.c.l.b16 %v5991
        %v6180 = vunpack.c.h.b16 %v5991
        %v6181 = vunpack.c.l.b16 %v5992
        %v6182 = vunpack.c.l.b16 %v5993
        %v6183 = vunpack.c.h.b16 %v5993
        %v6184 = vunpack.c.l.b16 %v5994
        %v6185 = vunpack.c.l.b16 %v5995
        %v6186 = vunpack.c.h.b16 %v5995
        %v6187 = vunpack.c.l.b16 %v5996
        %v6188 = vunpack.c.l.b16 %v5997
        %v6189 = vunpack.c.h.b16 %v5997
        %v6190 = vunpack.c.l.b16 %v5998
        %v6191 = vunpack.c.l.b16 %v5999
        %v6192 = vunpack.c.h.b16 %v5999
        %v6193 = vunpack.c.l.b16 %v6000
        %v6194 = vunpack.c.l.b16 %v6001
        %v6195 = vunpack.c.h.b16 %v6001
        %v6196 = vunpack.c.l.b16 %v6002
        %v6197 = vunpack.c.l.b16 %v6003
        %v6198 = vunpack.c.h.b16 %v6003
        %v6199 = vunpack.c.l.b16 %v6004
        %v6200 = vunpack.c.l.b16 %v6005
        %v6201 = vunpack.c.h.b16 %v6005
        %v6202 = vunpack.c.l.b16 %v6006
        %v6203 = vpack.c.b16 %v6110, %v6107
        %v6204 = vpack.c.b16 %v6111, %v6108
        %v6205 = vpack.c.b16 %v6112, %v6109
        %v6206 = vpack.c.b16 %v6116, %v6113
        %v6207 = vpack.c.b16 %v6117, %v6114
        %v6208 = vpack.c.b16 %v6118, %v6115
        %v6209 = vpack.c.b16 %v6122, %v6119
        %v6210 = vpack.c.b16 %v6123, %v6120
        %v6211 = vpack.c.b16 %v6124, %v6121
        %v6212 = vpack.c.b16 %v6128, %v6125
        %v6213 = vpack.c.b16 %v6129, %v6126
        %v6214 = vpack.c.b16 %v6130, %v6127
        %v6215 = vpack.c.b16 %v6134, %v6131
        %v6216 = vpack.c.b16 %v6135, %v6132
        %v6217 = vpack.c.b16 %v6136, %v6133
        %v6218 = vpack.c.b16 %v6140, %v6137
        %v6219 = vpack.c.b16 %v6141, %v6138
        %v6220 = vpack.c.b16 %v6142, %v6139
        %v6221 = vpack.c.b16 %v6146, %v6143
        %v6222 = vpack.c.b16 %v6147, %v6144
        %v6223 = vpack.c.b16 %v6148, %v6145
        %v6224 = vpack.c.b16 %v6152, %v6149
        %v6225 = vpack.c.b16 %v6153, %v6150
        %v6226 = vpack.c.b16 %v6154, %v6151
        %v6227 = vpack.c.b16 %v6158, %v6155
        %v6228 = vpack.c.b16 %v6159, %v6156
        %v6229 = vpack.c.b16 %v6160, %v6157
        %v6230 = vpack.c.b16 %v6164, %v6161
        %v6231 = vpack.c.b16 %v6165, %v6162
        %v6232 = vpack.c.b16 %v6166, %v6163
        %v6233 = vpack.c.b16 %v6170, %v6167
        %v6234 = vpack.c.b16 %v6171, %v6168
        %v6235 = vpack.c.b16 %v6172, %v6169
        %v6236 = vpack.c.b16 %v6176, %v6173
        %v6237 = vpack.c.b16 %v6177, %v6174
        %v6238 = vpack.c.b16 %v6178, %v6175
        %v6239 = vpack.c.b16 %v6182, %v6179
        %v6240 = vpack.c.b16 %v6183, %v6180
        %v6241 = vpack.c.b16 %v6184, %v6181
        %v6242 = vpack.c.b16 %v6188, %v6185
        %v6243 = vpack.c.b16 %v6189, %v6186
        %v6244 = vpack.c.b16 %v6190, %v6187
        %v6245 = vpack.c.b16 %v6194, %v6191
        %v6246 = vpack.c.b16 %v6195, %v6192
        %v6247 = vpack.c.b16 %v6196, %v6193
        %v6248 = vpack.c.b16 %v6200, %v6197
        %v6249 = vpack.c.b16 %v6201, %v6198
        %v6250 = vpack.c.b16 %v6202, %v6199
        %v6319 = vunpack.c.l.b16 %v6007
        %v6320 = vunpack.c.l.b16 %v6008
        %v6321 = vunpack.c.l.b16 %v6009
        %v6322 = vunpack.c.l.b16 %v6010
        %v6323 = vunpack.c.l.b16 %v6011
        %v6324 = vunpack.c.l.b16 %v6012
        %v6325 = vunpack.c.l.b16 %v6013
        %v6326 = vunpack.c.l.b16 %v6014
        %v6327 = vunpack.c.l.b16 %v6015
        %v6328 = vunpack.c.l.b16 %v6016
        %v6329 = vunpack.c.l.b16 %v6017
        %v6330 = vunpack.c.l.b16 %v6018
        %v6331 = vunpack.c.l.b16 %v6019
        %v6332 = vunpack.c.l.b16 %v6020
        %v6333 = vunpack.c.l.b16 %v6021
        %v6334 = vunpack.c.l.b16 %v6022
        %v6335 = vunpack.c.l.b16 %v6023
        %v6336 = vunpack.c.l.b16 %v6024
        %v6337 = vunpack.c.l.b16 %v6025
        %v6338 = vunpack.c.l.b16 %v6026
        %v6339 = vunpack.c.l.b16 %v6027
        %v6340 = vunpack.c.l.b16 %v6028
        %v6341 = vunpack.c.l.b16 %v6029
        %v6342 = vunpack.c.l.b16 %v6030
        %v6343 = vunpack.c.l.b16 %v6031
        %v6344 = vunpack.c.l.b16 %v6032
        %v6345 = vunpack.c.l.b16 %v6033
        %v6346 = vunpack.c.l.b16 %v6034
        %v6347 = vunpack.c.l.b16 %v6035
        %v6348 = vunpack.c.l.b16 %v6036
        %v6349 = vunpack.c.l.b16 %v6037
        %v6350 = vunpack.c.l.b16 %v6038
        %v6351 = vunpack.c.l.b16 %v6039
        %v6352 = vunpack.c.l.b16 %v6040
        %v6353 = vunpack.c.l.b16 %v6041
        %v6354 = vunpack.c.l.b16 %v6042
        %v6355 = vpack.c.b16 %v6320, %v6319
        %v6356 = vpack.c.b16 %v6322, %v6321
        %v6357 = vpack.c.b16 %v6324, %v6323
        %v6358 = vpack.c.b16 %v6326, %v6325
        %v6359 = vpack.c.b16 %v6328, %v6327
        %v6360 = vpack.c.b16 %v6330, %v6329
        %v6361 = vpack.c.b16 %v6332, %v6331
        %v6362 = vpack.c.b16 %v6334, %v6333
        %v6363 = vpack.c.b16 %v6336, %v6335
        %v6364 = vpack.c.b16 %v6338, %v6337
        %v6365 = vpack.c.b16 %v6340, %v6339
        %v6366 = vpack.c.b16 %v6342, %v6341
        %v6367 = vpack.c.b16 %v6344, %v6343
        %v6368 = vpack.c.b16 %v6346, %v6345
        %v6369 = vpack.c.b16 %v6348, %v6347
        %v6370 = vpack.c.b16 %v6350, %v6349
        %v6371 = vpack.c.b16 %v6352, %v6351
        %v6372 = vpack.c.b16 %v6354, %v6353
        %v6392 = vsel %vm3926, %v6205, 0
        %v6395 = vsel %vm3926, %v6208, 0
        %v6398 = vsel %vm3926, %v6211, 0
        %v6401 = vsel %vm3926, %v6214, 0
        %v6404 = vsel %vm3926, %v6217, 0
        %v6407 = vsel %vm3926, %v6220, 0
        %v6410 = vsel %vm3926, %v6223, 0
        %v6413 = vsel %vm3926, %v6226, 0
        %v6416 = vsel %vm3926, %v6229, 0
        %v6419 = vsel %vm3926, %v6232, 0
        %v6422 = vsel %vm3926, %v6235, 0
        %v6425 = vsel %vm3926, %v6238, 0
        %v6428 = vsel %vm3926, %v6241, 0
        %v6431 = vsel %vm3926, %v6244, 0
        %v6434 = vsel %vm3926, %v6247, 0
        %v6437 = vsel %vm3926, %v6250, 0
        %6439 = vmatprep.subr.bf16.mxu0 0
        %6440 = vmatpush1.bf16.msra.mxu0 %v6362
        %6441 = vmatprep.subr.bf16.mxu0 0
        %6442 = vmatpush1.bf16.msra.mxu0 %v6361
        %6443 = vmatprep.subr.bf16.mxu0 0
        %6444 = vmatpush1.bf16.msra.mxu0 %v6360
        %6445 = vmatprep.subr.bf16.mxu0 0
        %6446 = vmatpush1.bf16.msra.mxu0 %v6359
        %6447 = vmatprep.subr.bf16.mxu0 0
        %6448 = vmatpush1.bf16.msra.mxu0 %v6358
        %6449 = vmatprep.subr.bf16.mxu0 0
        %6450 = vmatpush1.bf16.msra.mxu0 %v6357
        %6451 = vmatprep.subr.bf16.mxu0 0
        %6452 = vmatpush1.bf16.msra.mxu0 %v6356
        %6453 = vmatprep.subr.bf16.mxu0 0
        %6454 = vmatpush1.bf16.msra.mxu0 %v6355
        %6455 = vmatprep.subr.bf16.mxu0 0
        %6456 = vmatpush2.bf16.msra.mxu0 %v6370
        %6457 = vmatprep.subr.bf16.mxu0 0
        %6458 = vmatpush2.bf16.msra.mxu0 %v6369
        %6459 = vmatprep.subr.bf16.mxu0 0
        %6460 = vmatpush2.bf16.msra.mxu0 %v6368
        %6461 = vmatprep.subr.bf16.mxu0 0
        %6462 = vmatpush2.bf16.msra.mxu0 %v6367
        %6463 = vmatprep.subr.bf16.mxu0 0
        %6464 = vmatpush2.bf16.msra.mxu0 %v6366
        %6465 = vmatprep.subr.bf16.mxu0 0
        %6466 = vmatpush2.bf16.msra.mxu0 %v6365
        %6467 = vmatprep.subr.bf16.mxu0 0
        %6468 = vmatpush2.bf16.msra.mxu0 %v6364
        %6469 = vmatprep.subr.bf16.mxu0 0
        %6470 = vmatpush2.bf16.msra.mxu0 %v6363
        %6471 = vmatprep.mubr.bf16.mxu0 %v6204
        %6472 = vmatmul.mubr.bf16.gmra.mxu0 %v6203
        %v6473 = vpop.f32.mrf.mxu0
        %v6474 = vadd.f32 0.0, %v6473
        %v6475 = vpop.f32.mrf.mxu0
        %v6476 = vpop.f32.mrf.mxu0
        %v6477 = vadd.f32 0.0, %v6476
        %v6478 = vpop.f32.mrf.mxu0
        %6479 = vmatprep.mubr.bf16.mxu0 %v6207
        %6480 = vmatmul.mubr.bf16.gmra.mxu0 %v6206
        %v6481 = vpop.f32.mrf.mxu0
        %v6482 = vadd.f32 0.0, %v6481
        %v6483 = vpop.f32.mrf.mxu0
        %v6484 = vpop.f32.mrf.mxu0
        %v6485 = vadd.f32 0.0, %v6484
        %v6486 = vpop.f32.mrf.mxu0
        %6487 = vmatprep.mubr.bf16.mxu0 %v6210
        %6488 = vmatmul.mubr.bf16.gmra.mxu0 %v6209
        %v6489 = vpop.f32.mrf.mxu0
        %v6490 = vadd.f32 0.0, %v6489
        %v6491 = vpop.f32.mrf.mxu0
        %v6492 = vpop.f32.mrf.mxu0
        %v6493 = vadd.f32 0.0, %v6492
        %v6494 = vpop.f32.mrf.mxu0
        %6495 = vmatprep.mubr.bf16.mxu0 %v6213
        %6496 = vmatmul.mubr.bf16.gmra.mxu0 %v6212
        %v6497 = vpop.f32.mrf.mxu0
        %v6498 = vadd.f32 0.0, %v6497
        %v6499 = vpop.f32.mrf.mxu0
        %v6500 = vpop.f32.mrf.mxu0
        %v6501 = vadd.f32 0.0, %v6500
        %v6502 = vpop.f32.mrf.mxu0
        %6503 = vmatprep.mubr.bf16.mxu0 %v6216
        %6504 = vmatmul.mubr.bf16.gmra.mxu0 %v6215
        %v6505 = vpop.f32.mrf.mxu0
        %v6506 = vadd.f32 0.0, %v6505
        %v6507 = vpop.f32.mrf.mxu0
        %v6508 = vpop.f32.mrf.mxu0
        %v6509 = vadd.f32 0.0, %v6508
        %v6510 = vpop.f32.mrf.mxu0
        %6511 = vmatprep.mubr.bf16.mxu0 %v6219
        %6512 = vmatmul.mubr.bf16.gmra.mxu0 %v6218
        %v6513 = vpop.f32.mrf.mxu0
        %v6514 = vadd.f32 0.0, %v6513
        %v6515 = vpop.f32.mrf.mxu0
        %v6516 = vpop.f32.mrf.mxu0
        %v6517 = vadd.f32 0.0, %v6516
        %v6518 = vpop.f32.mrf.mxu0
        %6519 = vmatprep.mubr.bf16.mxu0 %v6222
        %6520 = vmatmul.mubr.bf16.gmra.mxu0 %v6221
        %v6521 = vpop.f32.mrf.mxu0
        %v6522 = vadd.f32 0.0, %v6521
        %v6523 = vpop.f32.mrf.mxu0
        %v6524 = vpop.f32.mrf.mxu0
        %v6525 = vadd.f32 0.0, %v6524
        %v6526 = vpop.f32.mrf.mxu0
        %6527 = vmatprep.mubr.bf16.mxu0 %v6225
        %6528 = vmatmul.mubr.bf16.gmra.mxu0 %v6224
        %v6529 = vpop.f32.mrf.mxu0
        %v6530 = vadd.f32 0.0, %v6529
        %v6531 = vpop.f32.mrf.mxu0
        %v6532 = vpop.f32.mrf.mxu0
        %v6533 = vadd.f32 0.0, %v6532
        %v6534 = vpop.f32.mrf.mxu0
        %6535 = vmatprep.mubr.bf16.mxu0 %v6228
        %6536 = vmatmul.mubr.bf16.gmra.mxu0 %v6227
        %v6537 = vpop.f32.mrf.mxu0
        %v6538 = vadd.f32 0.0, %v6537
        %v6539 = vpop.f32.mrf.mxu0
        %v6540 = vpop.f32.mrf.mxu0
        %v6541 = vadd.f32 0.0, %v6540
        %v6542 = vpop.f32.mrf.mxu0
        %6543 = vmatprep.mubr.bf16.mxu0 %v6231
        %6544 = vmatmul.mubr.bf16.gmra.mxu0 %v6230
        %v6545 = vpop.f32.mrf.mxu0
        %v6546 = vadd.f32 0.0, %v6545
        %v6547 = vpop.f32.mrf.mxu0
        %v6548 = vpop.f32.mrf.mxu0
        %v6549 = vadd.f32 0.0, %v6548
        %v6550 = vpop.f32.mrf.mxu0
        %6551 = vmatprep.mubr.bf16.mxu0 %v6234
        %6552 = vmatmul.mubr.bf16.gmra.mxu0 %v6233
        %v6553 = vpop.f32.mrf.mxu0
        %v6554 = vadd.f32 0.0, %v6553
        %v6555 = vpop.f32.mrf.mxu0
        %v6556 = vpop.f32.mrf.mxu0
        %v6557 = vadd.f32 0.0, %v6556
        %v6558 = vpop.f32.mrf.mxu0
        %6559 = vmatprep.mubr.bf16.mxu0 %v6237
        %6560 = vmatmul.mubr.bf16.gmra.mxu0 %v6236
        %v6561 = vpop.f32.mrf.mxu0
        %v6562 = vadd.f32 0.0, %v6561
        %v6563 = vpop.f32.mrf.mxu0
        %v6564 = vpop.f32.mrf.mxu0
        %v6565 = vadd.f32 0.0, %v6564
        %v6566 = vpop.f32.mrf.mxu0
        %6567 = vmatprep.mubr.bf16.mxu0 %v6240
        %6568 = vmatmul.mubr.bf16.gmra.mxu0 %v6239
        %v6569 = vpop.f32.mrf.mxu0
        %v6570 = vadd.f32 0.0, %v6569
        %v6571 = vpop.f32.mrf.mxu0
        %v6572 = vpop.f32.mrf.mxu0
        %v6573 = vadd.f32 0.0, %v6572
        %v6574 = vpop.f32.mrf.mxu0
        %6575 = vmatprep.mubr.bf16.mxu0 %v6243
        %6576 = vmatmul.mubr.bf16.gmra.mxu0 %v6242
        %v6577 = vpop.f32.mrf.mxu0
        %v6578 = vadd.f32 0.0, %v6577
        %v6579 = vpop.f32.mrf.mxu0
        %v6580 = vpop.f32.mrf.mxu0
        %v6581 = vadd.f32 0.0, %v6580
        %v6582 = vpop.f32.mrf.mxu0
        %6583 = vmatprep.mubr.bf16.mxu0 %v6246
        %6584 = vmatmul.mubr.bf16.gmra.mxu0 %v6245
        %v6585 = vpop.f32.mrf.mxu0
        %v6586 = vadd.f32 0.0, %v6585
        %v6587 = vpop.f32.mrf.mxu0
        %v6588 = vpop.f32.mrf.mxu0
        %v6589 = vadd.f32 0.0, %v6588
        %v6590 = vpop.f32.mrf.mxu0
        %6591 = vmatprep.mubr.bf16.mxu0 %v6249
        %6592 = vmatmul.mubr.bf16.gmra.mxu0 %v6248
        %v6593 = vpop.f32.mrf.mxu0
        %v6594 = vadd.f32 0.0, %v6593
        %v6595 = vpop.f32.mrf.mxu0
        %v6596 = vpop.f32.mrf.mxu0
        %v6597 = vadd.f32 0.0, %v6596
        %v6598 = vpop.f32.mrf.mxu0
        %6599 = vdwg.mxu0
        %6600 = vmatprep.subr.bf16.mxu0 0
        %6601 = vmatpush1.bf16.msra.mxu0 0
        %6602 = vmatprep.subr.bf16.mxu0 0
        %6603 = vmatpush1.bf16.msra.mxu0 0
        %6604 = vmatprep.subr.bf16.mxu0 0
        %6605 = vmatpush1.bf16.msra.mxu0 0
        %6606 = vmatprep.subr.bf16.mxu0 0
        %6607 = vmatpush1.bf16.msra.mxu0 0
        %6608 = vmatprep.subr.bf16.mxu0 0
        %6609 = vmatpush1.bf16.msra.mxu0 0
        %6610 = vmatprep.subr.bf16.mxu0 0
        %6611 = vmatpush1.bf16.msra.mxu0 0
        %6612 = vmatprep.subr.bf16.mxu0 0
        %6613 = vmatpush1.bf16.msra.mxu0 %v6372
        %6614 = vmatprep.subr.bf16.mxu0 0
        %6615 = vmatpush1.bf16.msra.mxu0 %v6371
        %6616 = vmatprep.subr.bf16.mxu0 0
        %6617 = vmatpush2.bf16.msra.mxu0 0
        %6618 = vmatprep.subr.bf16.mxu0 0
        %6619 = vmatpush2.bf16.msra.mxu0 0
        %6620 = vmatprep.subr.bf16.mxu0 0
        %6621 = vmatpush2.bf16.msra.mxu0 0
        %6622 = vmatprep.subr.bf16.mxu0 0
        %6623 = vmatpush2.bf16.msra.mxu0 0
        %6624 = vmatprep.subr.bf16.mxu0 0
        %6625 = vmatpush2.bf16.msra.mxu0 0
        %6626 = vmatprep.subr.bf16.mxu0 0
        %6627 = vmatpush2.bf16.msra.mxu0 0
        %6628 = vmatprep.subr.bf16.mxu0 0
        %6629 = vmatpush2.bf16.msra.mxu0 0
        %6630 = vmatprep.subr.bf16.mxu0 0
        %6631 = vmatpush2.bf16.msra.mxu0 0
        %6632 = vmatprep.mubr.bf16.mxu0 0
        %6633 = vmatmul.mubr.bf16.gmra.mxu0 %v6392
        %v6634 = vpop.f32.mrf.mxu0
        %v6635 = vadd.f32 %v6474, %v6634
        %v6636 = vpop.f32.mrf.mxu0
        %v6637 = vpop.f32.mrf.mxu0
        %v6638 = vadd.f32 %v6477, %v6637
        %v6639 = vpop.f32.mrf.mxu0
        %6640 = vmatprep.mubr.bf16.mxu0 0
        %6641 = vmatmul.mubr.bf16.gmra.mxu0 %v6395
        %v6642 = vpop.f32.mrf.mxu0
        %v6643 = vadd.f32 %v6482, %v6642
        %v6644 = vpop.f32.mrf.mxu0
        %v6645 = vpop.f32.mrf.mxu0
        %v6646 = vadd.f32 %v6485, %v6645
        %v6647 = vpop.f32.mrf.mxu0
        %6648 = vmatprep.mubr.bf16.mxu0 0
        %6649 = vmatmul.mubr.bf16.gmra.mxu0 %v6398
        %v6650 = vpop.f32.mrf.mxu0
        %v6651 = vadd.f32 %v6490, %v6650
        %v6652 = vpop.f32.mrf.mxu0
        %v6653 = vpop.f32.mrf.mxu0
        %v6654 = vadd.f32 %v6493, %v6653
        %v6655 = vpop.f32.mrf.mxu0
        %6656 = vmatprep.mubr.bf16.mxu0 0
        %6657 = vmatmul.mubr.bf16.gmra.mxu0 %v6401
        %v6658 = vpop.f32.mrf.mxu0
        %v6659 = vadd.f32 %v6498, %v6658
        %v6660 = vpop.f32.mrf.mxu0
        %v6661 = vpop.f32.mrf.mxu0
        %v6662 = vadd.f32 %v6501, %v6661
        %v6663 = vpop.f32.mrf.mxu0
        %6664 = vmatprep.mubr.bf16.mxu0 0
        %6665 = vmatmul.mubr.bf16.gmra.mxu0 %v6404
        %v6666 = vpop.f32.mrf.mxu0
        %v6667 = vadd.f32 %v6506, %v6666
        %v6668 = vpop.f32.mrf.mxu0
        %v6669 = vpop.f32.mrf.mxu0
        %v6670 = vadd.f32 %v6509, %v6669
        %v6671 = vpop.f32.mrf.mxu0
        %6672 = vmatprep.mubr.bf16.mxu0 0
        %6673 = vmatmul.mubr.bf16.gmra.mxu0 %v6407
        %v6674 = vpop.f32.mrf.mxu0
        %v6675 = vadd.f32 %v6514, %v6674
        %v6676 = vpop.f32.mrf.mxu0
        %v6677 = vpop.f32.mrf.mxu0
        %v6678 = vadd.f32 %v6517, %v6677
        %v6679 = vpop.f32.mrf.mxu0
        %6680 = vmatprep.mubr.bf16.mxu0 0
        %6681 = vmatmul.mubr.bf16.gmra.mxu0 %v6410
        %v6682 = vpop.f32.mrf.mxu0
        %v6683 = vadd.f32 %v6522, %v6682
        %v6684 = vpop.f32.mrf.mxu0
        %v6685 = vpop.f32.mrf.mxu0
        %v6686 = vadd.f32 %v6525, %v6685
        %v6687 = vpop.f32.mrf.mxu0
        %6688 = vmatprep.mubr.bf16.mxu0 0
        %6689 = vmatmul.mubr.bf16.gmra.mxu0 %v6413
        %v6690 = vpop.f32.mrf.mxu0
        %v6691 = vadd.f32 %v6530, %v6690
        %v6692 = vpop.f32.mrf.mxu0
        %v6693 = vpop.f32.mrf.mxu0
        %v6694 = vadd.f32 %v6533, %v6693
        %v6695 = vpop.f32.mrf.mxu0
        %6696 = vmatprep.mubr.bf16.mxu0 0
        %6697 = vmatmul.mubr.bf16.gmra.mxu0 %v6416
        %v6698 = vpop.f32.mrf.mxu0
        %v6699 = vadd.f32 %v6538, %v6698
        %v6700 = vpop.f32.mrf.mxu0
        %v6701 = vpop.f32.mrf.mxu0
        %v6702 = vadd.f32 %v6541, %v6701
        %v6703 = vpop.f32.mrf.mxu0
        %6704 = vmatprep.mubr.bf16.mxu0 0
        %6705 = vmatmul.mubr.bf16.gmra.mxu0 %v6419
        %v6706 = vpop.f32.mrf.mxu0
        %v6707 = vadd.f32 %v6546, %v6706
        %v6708 = vpop.f32.mrf.mxu0
        %v6709 = vpop.f32.mrf.mxu0
        %v6710 = vadd.f32 %v6549, %v6709
        %v6711 = vpop.f32.mrf.mxu0
        %6712 = vmatprep.mubr.bf16.mxu0 0
        %6713 = vmatmul.mubr.bf16.gmra.mxu0 %v6422
        %v6714 = vpop.f32.mrf.mxu0
        %v6715 = vadd.f32 %v6554, %v6714
        %v6716 = vpop.f32.mrf.mxu0
        %v6717 = vpop.f32.mrf.mxu0
        %v6718 = vadd.f32 %v6557, %v6717
        %v6719 = vpop.f32.mrf.mxu0
        %6720 = vmatprep.mubr.bf16.mxu0 0
        %6721 = vmatmul.mubr.bf16.gmra.mxu0 %v6425
        %v6722 = vpop.f32.mrf.mxu0
        %v6723 = vadd.f32 %v6562, %v6722
        %v6724 = vpop.f32.mrf.mxu0
        %v6725 = vpop.f32.mrf.mxu0
        %v6726 = vadd.f32 %v6565, %v6725
        %v6727 = vpop.f32.mrf.mxu0
        %6728 = vmatprep.mubr.bf16.mxu0 0
        %6729 = vmatmul.mubr.bf16.gmra.mxu0 %v6428
        %v6730 = vpop.f32.mrf.mxu0
        %v6731 = vadd.f32 %v6570, %v6730
        %v6732 = vpop.f32.mrf.mxu0
        %v6733 = vpop.f32.mrf.mxu0
        %v6734 = vadd.f32 %v6573, %v6733
        %v6735 = vpop.f32.mrf.mxu0
        %6736 = vmatprep.mubr.bf16.mxu0 0
        %6737 = vmatmul.mubr.bf16.gmra.mxu0 %v6431
        %v6738 = vpop.f32.mrf.mxu0
        %v6739 = vadd.f32 %v6578, %v6738
        %v6740 = vpop.f32.mrf.mxu0
        %v6741 = vpop.f32.mrf.mxu0
        %v6742 = vadd.f32 %v6581, %v6741
        %v6743 = vpop.f32.mrf.mxu0
        %6744 = vmatprep.mubr.bf16.mxu0 0
        %6745 = vmatmul.mubr.bf16.gmra.mxu0 %v6434
        %v6746 = vpop.f32.mrf.mxu0
        %v6747 = vadd.f32 %v6586, %v6746
        %v6748 = vpop.f32.mrf.mxu0
        %v6749 = vpop.f32.mrf.mxu0
        %v6750 = vadd.f32 %v6589, %v6749
        %v6751 = vpop.f32.mrf.mxu0
        %6752 = vmatprep.mubr.bf16.mxu0 0
        %6753 = vmatmul.mubr.bf16.gmra.mxu0 %v6437
        %v6754 = vpop.f32.mrf.mxu0
        %v6755 = vadd.f32 %v6594, %v6754
        %v6756 = vpop.f32.mrf.mxu0
        %v6757 = vpop.f32.mrf.mxu0
        %v6758 = vadd.f32 %v6597, %v6757
        %v6759 = vpop.f32.mrf.mxu0
        %6760 = vdwg.mxu0
        %6793 = vrot.lane.b32.xlu0 %v6635, 64
        %v6794 = vpop.permute.xlu0 %6793
        %6795 = vrot.lane.b32.xlu0 %v6638, 64
        %v6796 = vpop.permute.xlu0 %6795
        %6797 = vrot.lane.b32.xlu0 %v6643, 64
        %v6798 = vpop.permute.xlu0 %6797
        %6799 = vrot.lane.b32.xlu0 %v6646, 64
        %v6800 = vpop.permute.xlu0 %6799
        %6801 = vrot.lane.b32.xlu0 %v6651, 64
        %v6802 = vpop.permute.xlu0 %6801
        %6803 = vrot.lane.b32.xlu0 %v6654, 64
        %v6804 = vpop.permute.xlu0 %6803
        %6805 = vrot.lane.b32.xlu0 %v6659, 64
        %v6806 = vpop.permute.xlu0 %6805
        %6807 = vrot.lane.b32.xlu0 %v6662, 64
        %v6808 = vpop.permute.xlu0 %6807
        %6809 = vrot.lane.b32.xlu0 %v6667, 64
        %v6810 = vpop.permute.xlu0 %6809
        %6811 = vrot.lane.b32.xlu0 %v6670, 64
        %v6812 = vpop.permute.xlu0 %6811
        %6813 = vrot.lane.b32.xlu0 %v6675, 64
        %v6814 = vpop.permute.xlu0 %6813
        %6815 = vrot.lane.b32.xlu0 %v6678, 64
        %v6816 = vpop.permute.xlu0 %6815
        %6817 = vrot.lane.b32.xlu0 %v6683, 64
        %v6818 = vpop.permute.xlu0 %6817
        %6819 = vrot.lane.b32.xlu0 %v6686, 64
        %v6820 = vpop.permute.xlu0 %6819
        %6821 = vrot.lane.b32.xlu0 %v6691, 64
        %v6822 = vpop.permute.xlu0 %6821
        %6823 = vrot.lane.b32.xlu0 %v6694, 64
        %v6824 = vpop.permute.xlu0 %6823
        %6825 = vrot.lane.b32.xlu0 %v6699, 64
        %v6826 = vpop.permute.xlu0 %6825
        %6827 = vrot.lane.b32.xlu0 %v6702, 64
        %v6828 = vpop.permute.xlu0 %6827
        %6829 = vrot.lane.b32.xlu0 %v6707, 64
        %v6830 = vpop.permute.xlu0 %6829
        %6831 = vrot.lane.b32.xlu0 %v6710, 64
        %v6832 = vpop.permute.xlu0 %6831
        %6833 = vrot.lane.b32.xlu0 %v6715, 64
        %v6834 = vpop.permute.xlu0 %6833
        %6835 = vrot.lane.b32.xlu0 %v6718, 64
        %v6836 = vpop.permute.xlu0 %6835
        %6837 = vrot.lane.b32.xlu0 %v6723, 64
        %v6838 = vpop.permute.xlu0 %6837
        %6839 = vrot.lane.b32.xlu0 %v6726, 64
        %v6840 = vpop.permute.xlu0 %6839
        %6841 = vrot.lane.b32.xlu0 %v6731, 64
        %v6842 = vpop.permute.xlu0 %6841
        %6843 = vrot.lane.b32.xlu0 %v6734, 64
        %v6844 = vpop.permute.xlu0 %6843
        %6845 = vrot.lane.b32.xlu0 %v6739, 64
        %v6846 = vpop.permute.xlu0 %6845
        %6847 = vrot.lane.b32.xlu0 %v6742, 64
        %v6848 = vpop.permute.xlu0 %6847
        %6849 = vrot.lane.b32.xlu0 %v6747, 64
        %v6850 = vpop.permute.xlu0 %6849
        %6851 = vrot.lane.b32.xlu0 %v6750, 64
        %v6852 = vpop.permute.xlu0 %6851
        %6853 = vrot.lane.b32.xlu0 %v6755, 64
        %v6854 = vpop.permute.xlu0 %6853
        %6855 = vrot.lane.b32.xlu0 %v6758, 64
        %v6856 = vpop.permute.xlu0 %6855
        %v6889 = vadd.f32 %v3670, %v6794
        %v6890 = vadd.f32 %v3671, %v6796
        %v6891 = vadd.f32 %v3672, %v6798
        %v6892 = vadd.f32 %v3673, %v6800
        %v6893 = vadd.f32 %v3674, %v6802
        %v6894 = vadd.f32 %v3675, %v6804
        %v6895 = vadd.f32 %v3676, %v6806
        %v6896 = vadd.f32 %v3677, %v6808
        %v6897 = vadd.f32 %v3678, %v6810
        %v6898 = vadd.f32 %v3679, %v6812
        %v6899 = vadd.f32 %v3680, %v6814
        %v6900 = vadd.f32 %v3681, %v6816
        %v6901 = vadd.f32 %v3682, %v6818
        %v6902 = vadd.f32 %v3683, %v6820
        %v6903 = vadd.f32 %v3684, %v6822
        %v6904 = vadd.f32 %v3685, %v6824
        %v6905 = vadd.f32 %v3686, %v6826
        %v6906 = vadd.f32 %v3687, %v6828
        %v6907 = vadd.f32 %v3688, %v6830
        %v6908 = vadd.f32 %v3689, %v6832
        %v6909 = vadd.f32 %v3690, %v6834
        %v6910 = vadd.f32 %v3691, %v6836
        %v6911 = vadd.f32 %v3692, %v6838
        %v6912 = vadd.f32 %v3693, %v6840
        %v6913 = vadd.f32 %v3694, %v6842
        %v6914 = vadd.f32 %v3695, %v6844
        %v6915 = vadd.f32 %v3696, %v6846
        %v6916 = vadd.f32 %v3697, %v6848
        %v6917 = vadd.f32 %v3698, %v6850
        %v6918 = vadd.f32 %v3699, %v6852
        %v6919 = vadd.f32 %v3700, %v6854
        %v6920 = vadd.f32 %v3701, %v6856
        %v6921 = vtanh.pop %v6889
        %v6922 = vtanh.pop %v6890
        %v6923 = vtanh.pop %v6891
        %v6924 = vtanh.pop %v6892
        %v6925 = vtanh.pop %v6893
        %v6926 = vtanh.pop %v6894
        %v6927 = vtanh.pop %v6895
        %v6928 = vtanh.pop %v6896
        %v6929 = vtanh.pop %v6897
        %v6930 = vtanh.pop %v6898
        %v6931 = vtanh.pop %v6899
        %v6932 = vtanh.pop %v6900
        %v6933 = vtanh.pop %v6901
        %v6934 = vtanh.pop %v6902
        %v6935 = vtanh.pop %v6903
        %v6936 = vtanh.pop %v6904
        %v6937 = vtanh.pop %v6905
        %v6938 = vtanh.pop %v6906
        %v6939 = vtanh.pop %v6907
        %v6940 = vtanh.pop %v6908
        %v6941 = vtanh.pop %v6909
        %v6942 = vtanh.pop %v6910
        %v6943 = vtanh.pop %v6911
        %v6944 = vtanh.pop %v6912
        %v6945 = vtanh.pop %v6913
        %v6946 = vtanh.pop %v6914
        %v6947 = vtanh.pop %v6915
        %v6948 = vtanh.pop %v6916
        %v6949 = vtanh.pop %v6917
        %v6950 = vtanh.pop %v6918
        %v6951 = vtanh.pop %v6919
        %v6952 = vtanh.pop %v6920
        %v6953 = vsub.f32 1.0, %v3831
        %v6954 = vsub.f32 1.0, %v3833
        %v6955 = vsub.f32 1.0, %v3835
        %v6956 = vsub.f32 1.0, %v3837
        %v6957 = vsub.f32 1.0, %v3839
        %v6958 = vsub.f32 1.0, %v3841
        %v6959 = vsub.f32 1.0, %v3843
        %v6960 = vsub.f32 1.0, %v3845
        %v6961 = vsub.f32 1.0, %v3847
        %v6962 = vsub.f32 1.0, %v3849
        %v6963 = vsub.f32 1.0, %v3851
        %v6964 = vsub.f32 1.0, %v3853
        %v6965 = vsub.f32 1.0, %v3855
        %v6966 = vsub.f32 1.0, %v3857
        %v6967 = vsub.f32 1.0, %v3859
        %v6968 = vsub.f32 1.0, %v3861
        %v6969 = vsub.f32 1.0, %v3863
        %v6970 = vsub.f32 1.0, %v3865
        %v6971 = vsub.f32 1.0, %v3867
        %v6972 = vsub.f32 1.0, %v3869
        %v6973 = vsub.f32 1.0, %v3871
        %v6974 = vsub.f32 1.0, %v3873
        %v6975 = vsub.f32 1.0, %v3875
        %v6976 = vsub.f32 1.0, %v3877
        %v6977 = vsub.f32 1.0, %v3879
        %v6978 = vsub.f32 1.0, %v3881
        %v6979 = vsub.f32 1.0, %v3883
        %v6980 = vsub.f32 1.0, %v3885
        %v6981 = vsub.f32 1.0, %v3887
        %v6982 = vsub.f32 1.0, %v3889
        %v6983 = vsub.f32 1.0, %v3891
        %v6984 = vsub.f32 1.0, %v3893
        %v6985 = vmul.f32 %v6953, %v3894
        %v6986 = vmul.f32 %v6954, %v3895
        %v6987 = vmul.f32 %v6955, %v3896
        %v6988 = vmul.f32 %v6956, %v3897
        %v6989 = vmul.f32 %v6957, %v3898
        %v6990 = vmul.f32 %v6958, %v3899
        %v6991 = vmul.f32 %v6959, %v3900
        %v6992 = vmul.f32 %v6960, %v3901
        %v6993 = vmul.f32 %v6961, %v3902
        %v6994 = vmul.f32 %v6962, %v3903
        %v6995 = vmul.f32 %v6963, %v3904
        %v6996 = vmul.f32 %v6964, %v3905
        %v6997 = vmul.f32 %v6965, %v3906
        %v6998 = vmul.f32 %v6966, %v3907
        %v6999 = vmul.f32 %v6967, %v3908
        %v7000 = vmul.f32 %v6968, %v3909
        %v7001 = vmul.f32 %v6969, %v3910
        %v7002 = vmul.f32 %v6970, %v3911
        %v7003 = vmul.f32 %v6971, %v3912
        %v7004 = vmul.f32 %v6972, %v3913
        %v7005 = vmul.f32 %v6973, %v3914
        %v7006 = vmul.f32 %v6974, %v3915
        %v7007 = vmul.f32 %v6975, %v3916
        %v7008 = vmul.f32 %v6976, %v3917
        %v7009 = vmul.f32 %v6977, %v3918
        %v7010 = vmul.f32 %v6978, %v3919
        %v7011 = vmul.f32 %v6979, %v3920
        %v7012 = vmul.f32 %v6980, %v3921
        %v7013 = vmul.f32 %v6981, %v3922
        %v7014 = vmul.f32 %v6982, %v3923
        %v7015 = vmul.f32 %v6983, %v3924
        %v7016 = vmul.f32 %v6984, %v3925
        %7049 = vrot.lane.b32.xlu0 %v6921, 64
        %v7050 = vpop.permute.xlu0 %7049
        %7051 = vrot.lane.b32.xlu0 %v6922, 64
        %v7052 = vpop.permute.xlu0 %7051
        %7053 = vrot.lane.b32.xlu0 %v6923, 64
        %v7054 = vpop.permute.xlu0 %7053
        %7055 = vrot.lane.b32.xlu0 %v6924, 64
        %v7056 = vpop.permute.xlu0 %7055
        %7057 = vrot.lane.b32.xlu0 %v6925, 64
        %v7058 = vpop.permute.xlu0 %7057
        %7059 = vrot.lane.b32.xlu0 %v6926, 64
        %v7060 = vpop.permute.xlu0 %7059
        %7061 = vrot.lane.b32.xlu0 %v6927, 64
        %v7062 = vpop.permute.xlu0 %7061
        %7063 = vrot.lane.b32.xlu0 %v6928, 64
        %v7064 = vpop.permute.xlu0 %7063
        %7065 = vrot.lane.b32.xlu0 %v6929, 64
        %v7066 = vpop.permute.xlu0 %7065
        %7067 = vrot.lane.b32.xlu0 %v6930, 64
        %v7068 = vpop.permute.xlu0 %7067
        %7069 = vrot.lane.b32.xlu0 %v6931, 64
        %v7070 = vpop.permute.xlu0 %7069
        %7071 = vrot.lane.b32.xlu0 %v6932, 64
        %v7072 = vpop.permute.xlu0 %7071
        %7073 = vrot.lane.b32.xlu0 %v6933, 64
        %v7074 = vpop.permute.xlu0 %7073
        %7075 = vrot.lane.b32.xlu0 %v6934, 64
        %v7076 = vpop.permute.xlu0 %7075
        %7077 = vrot.lane.b32.xlu0 %v6935, 64
        %v7078 = vpop.permute.xlu0 %7077
        %7079 = vrot.lane.b32.xlu0 %v6936, 64
        %v7080 = vpop.permute.xlu0 %7079
        %7081 = vrot.lane.b32.xlu0 %v6937, 64
        %v7082 = vpop.permute.xlu0 %7081
        %7083 = vrot.lane.b32.xlu0 %v6938, 64
        %v7084 = vpop.permute.xlu0 %7083
        %7085 = vrot.lane.b32.xlu0 %v6939, 64
        %v7086 = vpop.permute.xlu0 %7085
        %7087 = vrot.lane.b32.xlu0 %v6940, 64
        %v7088 = vpop.permute.xlu0 %7087
        %7089 = vrot.lane.b32.xlu0 %v6941, 64
        %v7090 = vpop.permute.xlu0 %7089
        %7091 = vrot.lane.b32.xlu0 %v6942, 64
        %v7092 = vpop.permute.xlu0 %7091
        %7093 = vrot.lane.b32.xlu0 %v6943, 64
        %v7094 = vpop.permute.xlu0 %7093
        %7095 = vrot.lane.b32.xlu0 %v6944, 64
        %v7096 = vpop.permute.xlu0 %7095
        %7097 = vrot.lane.b32.xlu0 %v6945, 64
        %v7098 = vpop.permute.xlu0 %7097
        %7099 = vrot.lane.b32.xlu0 %v6946, 64
        %v7100 = vpop.permute.xlu0 %7099
        %7101 = vrot.lane.b32.xlu0 %v6947, 64
        %v7102 = vpop.permute.xlu0 %7101
        %7103 = vrot.lane.b32.xlu0 %v6948, 64
        %v7104 = vpop.permute.xlu0 %7103
        %7105 = vrot.lane.b32.xlu0 %v6949, 64
        %v7106 = vpop.permute.xlu0 %7105
        %7107 = vrot.lane.b32.xlu0 %v6950, 64
        %v7108 = vpop.permute.xlu0 %7107
        %7109 = vrot.lane.b32.xlu0 %v6951, 64
        %v7110 = vpop.permute.xlu0 %7109
        %7111 = vrot.lane.b32.xlu0 %v6952, 64
        %v7112 = vpop.permute.xlu0 %7111
        %v7145 = vmul.f32 %v3831, %v7050
        %v7146 = vmul.f32 %v3833, %v7052
        %v7147 = vmul.f32 %v3835, %v7054
        %v7148 = vmul.f32 %v3837, %v7056
        %v7149 = vmul.f32 %v3839, %v7058
        %v7150 = vmul.f32 %v3841, %v7060
        %v7151 = vmul.f32 %v3843, %v7062
        %v7152 = vmul.f32 %v3845, %v7064
        %v7153 = vmul.f32 %v3847, %v7066
        %v7154 = vmul.f32 %v3849, %v7068
        %v7155 = vmul.f32 %v3851, %v7070
        %v7156 = vmul.f32 %v3853, %v7072
        %v7157 = vmul.f32 %v3855, %v7074
        %v7158 = vmul.f32 %v3857, %v7076
        %v7159 = vmul.f32 %v3859, %v7078
        %v7160 = vmul.f32 %v3861, %v7080
        %v7161 = vmul.f32 %v3863, %v7082
        %v7162 = vmul.f32 %v3865, %v7084
        %v7163 = vmul.f32 %v3867, %v7086
        %v7164 = vmul.f32 %v3869, %v7088
        %v7165 = vmul.f32 %v3871, %v7090
        %v7166 = vmul.f32 %v3873, %v7092
        %v7167 = vmul.f32 %v3875, %v7094
        %v7168 = vmul.f32 %v3877, %v7096
        %v7169 = vmul.f32 %v3879, %v7098
        %v7170 = vmul.f32 %v3881, %v7100
        %v7171 = vmul.f32 %v3883, %v7102
        %v7172 = vmul.f32 %v3885, %v7104
        %v7173 = vmul.f32 %v3887, %v7106
        %v7174 = vmul.f32 %v3889, %v7108
        %v7175 = vmul.f32 %v3891, %v7110
        %v7176 = vmul.f32 %v3893, %v7112
        %v7177 = vadd.f32 %v6985, %v7145
        %v7178 = vadd.f32 %v6986, %v7146
        %v7179 = vadd.f32 %v6987, %v7147
        %v7180 = vadd.f32 %v6988, %v7148
        %v7181 = vadd.f32 %v6989, %v7149
        %v7182 = vadd.f32 %v6990, %v7150
        %v7183 = vadd.f32 %v6991, %v7151
        %v7184 = vadd.f32 %v6992, %v7152
        %v7185 = vadd.f32 %v6993, %v7153
        %v7186 = vadd.f32 %v6994, %v7154
        %v7187 = vadd.f32 %v6995, %v7155
        %v7188 = vadd.f32 %v6996, %v7156
        %v7189 = vadd.f32 %v6997, %v7157
        %v7190 = vadd.f32 %v6998, %v7158
        %v7191 = vadd.f32 %v6999, %v7159
        %v7192 = vadd.f32 %v7000, %v7160
        %v7193 = vadd.f32 %v7001, %v7161
        %v7194 = vadd.f32 %v7002, %v7162
        %v7195 = vadd.f32 %v7003, %v7163
        %v7196 = vadd.f32 %v7004, %v7164
        %v7197 = vadd.f32 %v7005, %v7165
        %v7198 = vadd.f32 %v7006, %v7166
        %v7199 = vadd.f32 %v7007, %v7167
        %v7200 = vadd.f32 %v7008, %v7168
        %v7201 = vadd.f32 %v7009, %v7169
        %v7202 = vadd.f32 %v7010, %v7170
        %v7203 = vadd.f32 %v7011, %v7171
        %v7204 = vadd.f32 %v7012, %v7172
        %v7205 = vadd.f32 %v7013, %v7173
        %v7206 = vadd.f32 %v7014, %v7174
        %v7207 = vadd.f32 %v7015, %v7175
        %v7208 = vadd.f32 %v7016, %v7176
        %7209 = vst.msk [vmem:[%s274] sm:$0xff] %vm3926, %v7177
        %7210 = vst.msk [vmem:[%s274 + $0x8] sm:$0xff] %vm3926, %v7178
        %7211 = vst.msk [vmem:[%s274 + $0x10] sm:$0xff] %vm3926, %v7179
        %7212 = vst.msk [vmem:[%s274 + $0x18] sm:$0xff] %vm3926, %v7180
        %7213 = vst.msk [vmem:[%s274 + $0x20] sm:$0xff] %vm3926, %v7181
        %7214 = vst.msk [vmem:[%s274 + $0x28] sm:$0xff] %vm3926, %v7182
        %7215 = vst.msk [vmem:[%s274 + $0x30] sm:$0xff] %vm3926, %v7183
        %7216 = vst.msk [vmem:[%s274 + $0x38] sm:$0xff] %vm3926, %v7184
        %7217 = vst.msk [vmem:[%s274 + $0x40] sm:$0xff] %vm3926, %v7185
        %7218 = vst.msk [vmem:[%s274 + $0x48] sm:$0xff] %vm3926, %v7186
        %7219 = vst.msk [vmem:[%s274 + $0x50] sm:$0xff] %vm3926, %v7187
        %7220 = vst.msk [vmem:[%s274 + $0x58] sm:$0xff] %vm3926, %v7188
        %7221 = vst.msk [vmem:[%s274 + $0x60] sm:$0xff] %vm3926, %v7189
        %7222 = vst.msk [vmem:[%s274 + $0x68] sm:$0xff] %vm3926, %v7190
        %7223 = vst.msk [vmem:[%s274 + $0x70] sm:$0xff] %vm3926, %v7191
        %7224 = vst.msk [vmem:[%s274 + $0x78] sm:$0xff] %vm3926, %v7192
        %7225 = vst.msk [vmem:[%s274 + $0x80] sm:$0xff] %vm3926, %v7193
        %7226 = vst.msk [vmem:[%s274 + $0x88] sm:$0xff] %vm3926, %v7194
        %7227 = vst.msk [vmem:[%s274 + $0x90] sm:$0xff] %vm3926, %v7195
        %7228 = vst.msk [vmem:[%s274 + $0x98] sm:$0xff] %vm3926, %v7196
        %7229 = vst.msk [vmem:[%s274 + $0xa0] sm:$0xff] %vm3926, %v7197
        %7230 = vst.msk [vmem:[%s274 + $0xa8] sm:$0xff] %vm3926, %v7198
        %7231 = vst.msk [vmem:[%s274 + $0xb0] sm:$0xff] %vm3926, %v7199
        %7232 = vst.msk [vmem:[%s274 + $0xb8] sm:$0xff] %vm3926, %v7200
        %7233 = vst.msk [vmem:[%s274 + $0xc0] sm:$0xff] %vm3926, %v7201
        %7234 = vst.msk [vmem:[%s274 + $0xc8] sm:$0xff] %vm3926, %v7202
        %7235 = vst.msk [vmem:[%s274 + $0xd0] sm:$0xff] %vm3926, %v7203
        %7236 = vst.msk [vmem:[%s274 + $0xd8] sm:$0xff] %vm3926, %v7204
        %7237 = vst.msk [vmem:[%s274 + $0xe0] sm:$0xff] %vm3926, %v7205
        %7238 = vst.msk [vmem:[%s274 + $0xe8] sm:$0xff] %vm3926, %v7206
        %7239 = vst.msk [vmem:[%s274 + $0xf0] sm:$0xff] %vm3926, %v7207
        %7240 = vst.msk [vmem:[%s274 + $0xf8] sm:$0xff] %vm3926, %v7208
        %s7241 = sand.u32 %s169, 1
        %s7242 = scalar_lea.sflag [#allocation6], %s7241
        %s7243 = sand.u32 %s169, 1
        %s7244 = smul.addr %s7243, 256
        %s7245 = scalar_lea.vmem [#allocation5], %s7244
        // Predicated region
        $region45: #{conv_gru_pallas.1} parent=43 // pred_check
          %p7246 = pneg %p179
        $region46: #{conv_gru_pallas.1} parent=43 // pred_check_branch
          %7248 = sbr.rel (%p7246) target = $region48
        $region47: #{conv_gru_pallas.1} parent=43 // pred_region
          %s7250 = ssub.s32 4096, 4096
          %7251 = vsyncadd %s7242, %s7250
          %s7252 = smul.addr %s20, 32
          %s7253 = smul.addr %s7252, 128
          %s7254 = scalar_lea.hbm %s6, %s7253
          %s7255 = sshll.u32 %s7245, 4
          %s7256 = int_to_ptr.vmem [resolvable:$true] %s7255
          %7261 = dma.vmem_to_hbm [thread:$0]  %s7256, 4096, %s7254, %s7242, 128, 128, 8
        $region48: #{conv_gru_pallas.1} parent=43 // pred_fallthru
          _
      $region44: #{conv_gru_pallas.1} parent=5 // pred_fallthru
        _
      %p7262 = scmp.le.s32.totalorder 2, %s15
      // Predicated region
      $region49: #{conv_gru_pallas.1} parent=5 // pred_check
        %p7263 = pneg %p7262
      $region50: #{conv_gru_pallas.1} parent=5 // pred_check_branch
        %7265 = sbr.rel (%p7263) target = $region52
      $region51: #{conv_gru_pallas.1} parent=5 // pred_region
        %s7266 = ssub.s32 %s15, 2
        // Predicated region
        $region53: #{conv_gru_pallas.1} parent=51 // pred_check
          %p7267 = pneg %p185
        $region54: #{conv_gru_pallas.1} parent=51 // pred_check_branch
          %7269 = sbr.rel (%p7267) target = $region56
        $region55: #{conv_gru_pallas.1} parent=51 // pred_region
          %s7270 = sand.u32 %s170, 1
          %s7271 = scalar_lea.sflag [#allocation6], %s7270
          %s7272 = sand.u32 %s170, 1
          %s7273 = smul.addr %s7272, 256
          %s7274 = scalar_lea.vmem [#allocation5], %s7273
          %7275 = dma.done %s7271, 4096
        $region56: #{conv_gru_pallas.1} parent=51 // pred_fallthru
          _
      $region52: #{conv_gru_pallas.1} parent=5 // pred_fallthru
        _
    $region6: #{conv_gru_pallas.1} parent=1 // loop_footer
      %s19 = sadd.s32 1, %s15
    $region7: #{conv_gru_pallas.1} parent=1 // loop_footer_branch
      %14 = sbr.rel target = $region3
    $region8: #{conv_gru_pallas.1} parent=1 // loop_exit
      _
    %7276 = vsyncpa [#allocation6], 1
    %s7277 = scalar_lea.sflag [#allocation6], 1
    %7278 = vsyncpa %s7277, 1

</llo_original>
